<compile_context>
chip_gen: v5e
topology: v5e:2x2
jax: 0.10.0
libtpu: 0.0.40
codegen_flags: <defaults>
</compile_context>

<pallas_src>
import numpy as np
import jax
import jax.numpy as jnp
from jax import lax
from jax.experimental import pallas as pl
from jax.experimental.pallas import tpu as pltpu


C_PAD = 16                     # every layer's channel dim is zero-padded to 16
IMG_H = IMG_W = 16
IMG_Q = IMG_H * IMG_W          # 256 lanes per image

# conv layers in forward order (each contributes 9 consecutive weight tiles)
_CONV_LAYERS = ['e1a', 'e1b', 'e2a', 'e2b', 'd1a', 'd1b', 'd2a', 'd2b', 'd3']
_DECONV_LAYERS = ['up1', 'up2']          # each contributes 4 tiles
_BIAS_ORDER = ['e1a', 'e1b', 'e2a', 'e2b', 'd1a', 'd1b',
               'up1', 'd2a', 'd2b', 'up2', 'd3']


# ----------------------------------------------------------------------------
# Fused CAE kernel (B_blk images per grid step, everything stays in VMEM)
# ----------------------------------------------------------------------------
def _cae_kernel(x_ref, w_ref, b_ref, p1_ref, p2_ref, u1_ref, u2_ref, o_ref):
    f32 = jnp.float32
    B = x_ref.shape[0]

    def w_masks(W, Q):
        # column masks for the left / right taps (dx == 0 / dx == 2)
        col = lax.broadcasted_iota(jnp.int32, (1, 1, Q), 2) & (W - 1)
        return col != 0, col != (W - 1)

    def chan_mm(w2d, act):
        # (16,16) weight applied per image: (B,16,16) x (B,16,Q) -> (B,16,Q)
        wb = jnp.broadcast_to(w2d, (B, C_PAD, C_PAD))
        return lax.dot_general(wb, act,
                               dimension_numbers=(((2,), (1,)), ((0,), (0,))),
                               preferred_element_type=f32)

    def spatial_mm(act, m2d):
        # shared spatial mixing matrix: (B,16,Q) x (Q,R) -> (B,16,R)
        Bb, C, Q = act.shape
        R = m2d.shape[-1]
        y = jnp.dot(act.reshape(Bb * C, Q), m2d, preferred_element_type=f32)
        return y.reshape(Bb, C, R)

    def conv3x3(act, W, tap_base, bias_idx, relu, masks):
        # 3x3 'same' conv = 9 accumulated K=16 matmuls on lane-shifted slices.
        Bb, C, Q = act.shape
        pad = W + 1                               # covers |delta| <= W+1
        zeros = jnp.zeros((Bb, C, pad), f32)
        xp = jnp.concatenate([zeros, act, zeros], axis=-1)
        mask_l, mask_r = masks
        acc = jnp.zeros((Bb, C, Q), f32)
        for dy in range(3):
            for dx in range(3):
                delta = (dy - 1) * W + (dx - 1)
                lo = pad + delta
                sl = xp[:, :, lo:lo + Q]          # static lane slice
                if dx == 0:
                    sl = jnp.where(mask_l, sl, 0.0)
                elif dx == 2:
                    sl = jnp.where(mask_r, sl, 0.0)
                acc = acc + chan_mm(w_ref[tap_base + dy * 3 + dx], sl)
        y = acc + b_ref[bias_idx]                 # (16,1) broadcast over lanes
        return jnp.maximum(y, 0.0) if relu else y

    def avgpool2(act, p_ref):
        return spatial_mm(act, p_ref[...])

    def deconv2x2(act, tap_base, bias_idx, u_ref):
        # ConvTranspose2d(k=2, s=2): per tap, channel-mix then spatial scatter.
        Bb, C, Qs = act.shape
        Qb = u_ref.shape[-1]
        acc = jnp.zeros((Bb, C, Qb), f32)
        for t in range(4):
            z = chan_mm(w_ref[tap_base + t], act)
            acc = acc + spatial_mm(z, u_ref[t])
        return acc + b_ref[bias_idx]

    m16 = w_masks(16, 256)
    m8 = w_masks(8, 64)
    m4 = w_masks(4, 16)

    # lift the lane-dense input (B,256) to the padded-channel layout (B,16,256)
    x0 = x_ref[...]
    x = jnp.concatenate(
        [x0[:, None, :], jnp.zeros((B, C_PAD - 1, IMG_Q), f32)], axis=1)

    # ---- encoder ----
    x = conv3x3(x, 16, 0, 0, True, m16)      # 16x16, 1->16
    x = conv3x3(x, 16, 9, 1, True, m16)      # 16x16, 16->16
    x = avgpool2(x, p1_ref)                  # -> 8x8
    x = conv3x3(x, 8, 18, 2, True, m8)       # 8x8, 16->8
    x = conv3x3(x, 8, 27, 3, True, m8)       # 8x8, 8->8
    x = avgpool2(x, p2_ref)                  # -> 4x4
    # ---- decoder ----
    x = conv3x3(x, 4, 36, 4, True, m4)       # 4x4, 8->8
    x = conv3x3(x, 4, 45, 5, True, m4)       # 4x4, 8->8
    x = deconv2x2(x, 81, 6, u1_ref)          # -> 8x8, 8->8
    x = conv3x3(x, 8, 54, 7, True, m8)       # 8x8, 8->16
    x = conv3x3(x, 8, 63, 8, True, m8)       # 8x8, 16->16
    x = deconv2x2(x, 85, 9, u2_ref)          # -> 16x16, 16->16
    x = conv3x3(x, 16, 72, 10, False, m16)   # 16x16, 16->1

    o_ref[...] = x[:, 0, :]                  # channel 0, lane-dense (B,256)


# ----------------------------------------------------------------------------
# Parameter packing & constant spatial matrices
# ----------------------------------------------------------------------------
def _pack_params(p):
    tiles = []
    for name in _CONV_LAYERS:
        w, _ = p[name]                          # (3, 3, Cin, Cout)  HWIO
        cin, cout = w.shape[2], w.shape[3]
        for dy in range(3):
            for dx in range(3):
                t = jnp.zeros((C_PAD, C_PAD), jnp.float32)
                tiles.append(t.at[:cout, :cin].set(
                    w[dy, dx].T.astype(jnp.float32)))
    for name in _DECONV_LAYERS:
        w, _ = p[name]                          # (Cin, Cout, 2, 2) torch layout
        cin, cout = w.shape[0], w.shape[1]
        for di in range(2):
            for dj in range(2):
                t = jnp.zeros((C_PAD, C_PAD), jnp.float32)
                tiles.append(t.at[:cout, :cin].set(
                    w[:, :, di, dj].T.astype(jnp.float32)))
    w_all = jnp.stack(tiles)                    # (89, 16, 16)

    rows = []
    for name in _BIAS_ORDER:
        b = p[name][1].astype(jnp.float32)
        rows.append(jnp.zeros((C_PAD,), jnp.float32).at[:b.shape[0]].set(b))
    b_all = jnp.stack(rows).reshape(len(_BIAS_ORDER), C_PAD, 1)   # (11,16,1)
    return w_all, b_all


def _pool_matrix(H, W):
    P = np.zeros((H * W, (H // 2) * (W // 2)), np.float32)
    for h in range(H):
        for w in range(W):
            P[h * W + w, (h // 2) * (W // 2) + (w // 2)] = 0.25
    return jnp.asarray(P)


def _upsample_matrices(Hs, Ws):
    Wb = 2 * Ws
    U = np.zeros((4, Hs * Ws, (2 * Hs) * Wb), np.float32)
    for di in range(2):
        for dj in range(2):
            t = di * 2 + dj
            for i in range(Hs):
                for j in range(Ws):
                    U[t, i * Ws + j, (2 * i + di) * Wb + (2 * j + dj)] = 1.0
    return jnp.asarray(U)


# ----------------------------------------------------------------------------
# Wrapper: single pallas_call over a batch-blocked grid
# ----------------------------------------------------------------------------
def cae_forward(x_nchw, p, block_batch=None):
    N = x_nchw.shape[0]
    x = x_nchw.astype(jnp.float32).reshape(N, IMG_Q)     # C=1 -> free reshape

    if block_batch is None:
        block_batch = N if N <= 8 else 8
    b_blk = block_batch
    n_pad = (-N) % b_blk
    if n_pad:
        x = jnp.concatenate([x, jnp.zeros((n_pad, IMG_Q), jnp.float32)], axis=0)
    n_tot = N + n_pad

    w_all, b_all = _pack_params(p)
    p1 = _pool_matrix(16, 16)            # (256, 64)
    p2 = _pool_matrix(8, 8)              # (64, 16)
    u1 = _upsample_matrices(4, 4)        # (4, 16, 64)
    u2 = _upsample_matrices(8, 8)        # (4, 64, 256)

    const_specs = [
        pl.BlockSpec(w_all.shape, lambda n: (0, 0, 0)),
        pl.BlockSpec(b_all.shape, lambda n: (0, 0, 0)),
        pl.BlockSpec(p1.shape, lambda n: (0, 0)),
        pl.BlockSpec(p2.shape, lambda n: (0, 0)),
        pl.BlockSpec(u1.shape, lambda n: (0, 0, 0)),
        pl.BlockSpec(u2.shape, lambda n: (0, 0, 0)),
    ]

    out = pl.pallas_call(
        _cae_kernel,
        out_shape=jax.ShapeDtypeStruct((n_tot, IMG_Q), jnp.float32),
        grid_spec=pltpu.PrefetchScalarGridSpec(
            num_scalar_prefetch=0,
            grid=(n_tot // b_blk,),
            in_specs=[pl.BlockSpec((b_blk, IMG_Q), lambda n: (n, 0))]
                     + const_specs,
            out_specs=pl.BlockSpec((b_blk, IMG_Q), lambda n: (n, 0)),
        ),
        compiler_params=pltpu.CompilerParams(
            dimension_semantics=("parallel",)),
    )(x, w_all, b_all, p1, p2, u1, u2)

    out = out[:N].reshape(N, 1, IMG_H, IMG_W)
    # torch.squeeze drops the channel dim (and the batch dim when N == 1)
    return jnp.squeeze(out)


# ----------------------------------------------------------------------------
# Pure-JAX reference (uses the raw, un-packed parameters)
# ----------------------------------------------------------------------------
def _ref_conv(x, w, b, relu):
    y = lax.conv_general_dilated(x, w, (1, 1), 'SAME',
                                 dimension_numbers=('NHWC', 'HWIO', 'NHWC')) + b
    return jnp.maximum(y, 0.0) if relu else y


def _ref_pool(x):
    N, H, W, C = x.shape
    return x.reshape(N, H // 2, 2, W // 2, 2, C).mean(axis=(2, 4))


def _ref_deconv(x, w, b):
    y = jnp.einsum('nhwi,iokl->nhkwlo', x, w)
    N, H, _, W, _, Co = y.shape
    return y.reshape(N, 2 * H, 2 * W, Co) + b


def cae_forward_ref(x_nchw, p):
    x = jnp.transpose(x_nchw, (0, 2, 3, 1)).astype(jnp.float32)
    x = _ref_conv(x, *p['e1a'], True); x = _ref_conv(x, *p['e1b'], True)
    x = _ref_pool(x)
    x = _ref_conv(x, *p['e2a'], True); x = _ref_conv(x, *p['e2b'], True)
    x = _ref_pool(x)
    x = _ref_conv(x, *p['d1a'], True); x = _ref_conv(x, *p['d1b'], True)
    x = _ref_deconv(x, *p['up1'])
    x = _ref_conv(x, *p['d2a'], True); x = _ref_conv(x, *p['d2b'], True)
    x = _ref_deconv(x, *p['up2'])
    x = _ref_conv(x, *p['d3'], False)
    x = jnp.transpose(x, (0, 3, 1, 2))
    return jnp.squeeze(x)


# ----------------------------------------------------------------------------
# Deterministic parameter init (synthetic; shapes match the PyTorch module)
# ----------------------------------------------------------------------------
def init_params(key):
    def conv_p(k, cin, cout):
        k1, k2 = jax.random.split(k)
        w = jax.random.normal(k1, (3, 3, cin, cout), jnp.float32) * 0.1   # HWIO
        b = jax.random.normal(k2, (cout,), jnp.float32) * 0.01
        return w, b

    def deconv_p(k, cin, cout):
        k1, k2 = jax.random.split(k)
        w = jax.random.normal(k1, (cin, cout, 2, 2), jnp.float32) * 0.1   # torch
        b = jax.random.normal(k2, (cout,), jnp.float32) * 0.01
        return w, b

    ks = jax.random.split(key, 11)
    return {
        'e1a': conv_p(ks[0], 1, 16),  'e1b': conv_p(ks[1], 16, 16),
        'e2a': conv_p(ks[2], 16, 8),  'e2b': conv_p(ks[3], 8, 8),
        'd1a': conv_p(ks[4], 8, 8),   'd1b': conv_p(ks[5], 8, 8),
        'up1': deconv_p(ks[6], 8, 8),
        'd2a': conv_p(ks[7], 8, 16),  'd2b': conv_p(ks[8], 16, 16),
        'up2': deconv_p(ks[9], 16, 16),
        'd3':  conv_p(ks[10], 16, 1),
    }


if __name__ == "__main__":
    root = jax.random.PRNGKey(0)
    k_params, k_x = jax.random.split(root)
    params = init_params(k_params)

    # small input consistent with the module: NCHW, 1 input channel
    x = jax.random.normal(k_x, (2, 1, 16, 16), jnp.float32)

    out = jax.jit(cae_forward)(x, params)
    out = jax.block_until_ready(out)

    ref = cae_forward_ref(x, params)
    assert out.shape == (2, 16, 16), out.shape
    assert jnp.allclose(out, ref, atol=1e-4, rtol=1e-4), "mismatch vs reference"

    print("KERNEL_OK")
</pallas_src>

<mosaic_0001>
module attributes {stable_mosaic.version = 11 : i64} {
  func.func @_cae_kernel(%arg0: i32, %arg1: memref<2x256xf32, #tpu.memory_space<vmem>>, %arg2: memref<89x16x16xf32, #tpu.memory_space<vmem>>, %arg3: memref<11x16x1xf32, #tpu.memory_space<vmem>>, %arg4: memref<256x64xf32, #tpu.memory_space<vmem>>, %arg5: memref<64x16xf32, #tpu.memory_space<vmem>>, %arg6: memref<4x16x64xf32, #tpu.memory_space<vmem>>, %arg7: memref<4x64x256xf32, #tpu.memory_space<vmem>>, %arg8: memref<2x256xf32, #tpu.memory_space<vmem>>) attributes {dimension_semantics = [#tpu.dimension_semantics<parallel>], iteration_bounds = array<i64: 1>, scalar_prefetch = 0 : i64, scratch_operands = 0 : i64, tpu.core_type = #tpu.core_type<tc>, window_params = [{transform_indices = @transform_0, window_bounds = array<i64: 2, 256>}, {pipeline_mode = #tpu.pipeline_mode<synchronous>, transform_indices = @transform_1, window_bounds = array<i64: 89, 16, 16>}, {pipeline_mode = #tpu.pipeline_mode<synchronous>, transform_indices = @transform_2, window_bounds = array<i64: 11, 16, 1>}, {pipeline_mode = #tpu.pipeline_mode<synchronous>, transform_indices = @transform_3, window_bounds = array<i64: 256, 64>}, {pipeline_mode = #tpu.pipeline_mode<synchronous>, transform_indices = @transform_4, window_bounds = array<i64: 64, 16>}, {pipeline_mode = #tpu.pipeline_mode<synchronous>, transform_indices = @transform_5, window_bounds = array<i64: 4, 16, 64>}, {pipeline_mode = #tpu.pipeline_mode<synchronous>, transform_indices = @transform_6, window_bounds = array<i64: 4, 64, 256>}, {transform_indices = @transform_7, window_bounds = array<i64: 2, 256>}]} {
    %0 = tpu.iota {dimensions = array<i32: 2>} : vector<1x1x256xi32>
    %c15_i32 = arith.constant 15 : i32
    %1 = vector.broadcast %c15_i32 : i32 to vector<1x1x256xi32>
    %2 = arith.andi %0, %1 : vector<1x1x256xi32>
    %c0_i32 = arith.constant 0 : i32
    %3 = vector.broadcast %c0_i32 : i32 to vector<1x1x256xi32>
    %4 = arith.cmpi ne, %2, %3 : vector<1x1x256xi32>
    %c15_i32_0 = arith.constant 15 : i32
    %5 = vector.broadcast %c15_i32_0 : i32 to vector<1x1x256xi32>
    %6 = arith.cmpi ne, %2, %5 : vector<1x1x256xi32>
    %7 = tpu.iota {dimensions = array<i32: 2>} : vector<1x1x64xi32>
    %c7_i32 = arith.constant 7 : i32
    %8 = vector.broadcast %c7_i32 : i32 to vector<1x1x64xi32>
    %9 = arith.andi %7, %8 : vector<1x1x64xi32>
    %c0_i32_1 = arith.constant 0 : i32
    %10 = vector.broadcast %c0_i32_1 : i32 to vector<1x1x64xi32>
    %11 = arith.cmpi ne, %9, %10 : vector<1x1x64xi32>
    %c7_i32_2 = arith.constant 7 : i32
    %12 = vector.broadcast %c7_i32_2 : i32 to vector<1x1x64xi32>
    %13 = arith.cmpi ne, %9, %12 : vector<1x1x64xi32>
    %14 = tpu.iota {dimensions = array<i32: 2>} : vector<1x1x16xi32>
    %c3_i32 = arith.constant 3 : i32
    %15 = vector.broadcast %c3_i32 : i32 to vector<1x1x16xi32>
    %16 = arith.andi %14, %15 : vector<1x1x16xi32>
    %c0_i32_3 = arith.constant 0 : i32
    %17 = vector.broadcast %c0_i32_3 : i32 to vector<1x1x16xi32>
    %18 = arith.cmpi ne, %16, %17 : vector<1x1x16xi32>
    %c3_i32_4 = arith.constant 3 : i32
    %19 = vector.broadcast %c3_i32_4 : i32 to vector<1x1x16xi32>
    %20 = arith.cmpi ne, %16, %19 : vector<1x1x16xi32>
    %c0 = arith.constant 0 : index
    %c0_5 = arith.constant 0 : index
    %21 = vector.load %arg1[%c0, %c0_5] : memref<2x256xf32, #tpu.memory_space<vmem>>, vector<2x256xf32>
    %22 = vector.shape_cast %21 : vector<2x256xf32> to vector<2x1x256xf32>
    %cst = arith.constant 0.000000e+00 : f32
    %23 = vector.broadcast %cst : f32 to vector<2x15x256xf32>
    %24 = tpu.concatenate %22, %23 in 1 : vector<2x1x256xf32>, vector<2x15x256xf32> -> vector<2x16x256xf32>
    %cst_6 = arith.constant 0.000000e+00 : f32
    %25 = vector.broadcast %cst_6 : f32 to vector<2x16x17xf32>
    %26 = tpu.concatenate %25, %24, %25 in 2 : vector<2x16x17xf32>, vector<2x16x256xf32>, vector<2x16x17xf32> -> vector<2x16x290xf32>
    %cst_7 = arith.constant 0.000000e+00 : f32
    %27 = vector.broadcast %cst_7 : f32 to vector<2x16x256xf32>
    %28 = vector.extract_strided_slice %26 {offsets = [0, 0, 0], sizes = [2, 16, 256], strides = [1, 1, 1]} : vector<2x16x290xf32> to vector<2x16x256xf32>
    %cst_8 = arith.constant 0.000000e+00 : f32
    %29 = vector.shape_cast %4 : vector<1x1x256xi1> to vector<1x1x256xi1>
    %30 = vector.broadcast %29 : vector<1x1x256xi1> to vector<2x16x256xi1>
    %31 = vector.broadcast %cst_8 : f32 to vector<2x16x256xf32>
    %32 = arith.select %30, %28, %31 : vector<2x16x256xi1>, vector<2x16x256xf32>
    %c0_9 = arith.constant 0 : index
    %c0_10 = arith.constant 0 : index
    %c0_11 = arith.constant 0 : index
    %33 = vector.load %arg2[%c0_9, %c0_10, %c0_11] : memref<89x16x16xf32, #tpu.memory_space<vmem>>, vector<1x16x16xf32>
    %34 = vector.shape_cast %33 : vector<1x16x16xf32> to vector<16x16xf32>
    %35 = vector.shape_cast %34 : vector<16x16xf32> to vector<1x16x16xf32>
    %36 = vector.broadcast %35 : vector<1x16x16xf32> to vector<2x16x16xf32>
    %cst_12 = arith.constant dense<0.000000e+00> : vector<2x16x256xf32>
    %37 = tpu.matmul %36, %32, %cst_12 {dimension_numbers = #tpu.dot_dimension_numbers<[2], [1], [1], [2], [0, 0, 0, 1, 1, 2], [0], [0]>} : vector<2x16x16xf32>, vector<2x16x256xf32>, vector<2x16x256xf32> -> vector<2x16x256xf32>
    %38 = arith.addf %27, %37 : vector<2x16x256xf32>
    %39 = vector.extract_strided_slice %26 {offsets = [0, 0, 1], sizes = [2, 16, 256], strides = [1, 1, 1]} : vector<2x16x290xf32> to vector<2x16x256xf32>
    %c1 = arith.constant 1 : index
    %c0_13 = arith.constant 0 : index
    %c0_14 = arith.constant 0 : index
    %40 = vector.load %arg2[%c1, %c0_13, %c0_14] : memref<89x16x16xf32, #tpu.memory_space<vmem>>, vector<1x16x16xf32>
    %41 = vector.shape_cast %40 : vector<1x16x16xf32> to vector<16x16xf32>
    %42 = vector.shape_cast %41 : vector<16x16xf32> to vector<1x16x16xf32>
    %43 = vector.broadcast %42 : vector<1x16x16xf32> to vector<2x16x16xf32>
    %cst_15 = arith.constant dense<0.000000e+00> : vector<2x16x256xf32>
    %44 = tpu.matmul %43, %39, %cst_15 {dimension_numbers = #tpu.dot_dimension_numbers<[2], [1], [1], [2], [0, 0, 0, 1, 1, 2], [0], [0]>} : vector<2x16x16xf32>, vector<2x16x256xf32>, vector<2x16x256xf32> -> vector<2x16x256xf32>
    %45 = arith.addf %38, %44 : vector<2x16x256xf32>
    %46 = vector.extract_strided_slice %26 {offsets = [0, 0, 2], sizes = [2, 16, 256], strides = [1, 1, 1]} : vector<2x16x290xf32> to vector<2x16x256xf32>
    %cst_16 = arith.constant 0.000000e+00 : f32
    %47 = vector.shape_cast %6 : vector<1x1x256xi1> to vector<1x1x256xi1>
    %48 = vector.broadcast %47 : vector<1x1x256xi1> to vector<2x16x256xi1>
    %49 = vector.broadcast %cst_16 : f32 to vector<2x16x256xf32>
    %50 = arith.select %48, %46, %49 : vector<2x16x256xi1>, vector<2x16x256xf32>
    %c2 = arith.constant 2 : index
    %c0_17 = arith.constant 0 : index
    %c0_18 = arith.constant 0 : index
    %51 = vector.load %arg2[%c2, %c0_17, %c0_18] : memref<89x16x16xf32, #tpu.memory_space<vmem>>, vector<1x16x16xf32>
    %52 = vector.shape_cast %51 : vector<1x16x16xf32> to vector<16x16xf32>
    %53 = vector.shape_cast %52 : vector<16x16xf32> to vector<1x16x16xf32>
    %54 = vector.broadcast %53 : vector<1x16x16xf32> to vector<2x16x16xf32>
    %cst_19 = arith.constant dense<0.000000e+00> : vector<2x16x256xf32>
    %55 = tpu.matmul %54, %50, %cst_19 {dimension_numbers = #tpu.dot_dimension_numbers<[2], [1], [1], [2], [0, 0, 0, 1, 1, 2], [0], [0]>} : vector<2x16x16xf32>, vector<2x16x256xf32>, vector<2x16x256xf32> -> vector<2x16x256xf32>
    %56 = arith.addf %45, %55 : vector<2x16x256xf32>
    %57 = vector.extract_strided_slice %26 {offsets = [0, 0, 16], sizes = [2, 16, 256], strides = [1, 1, 1]} : vector<2x16x290xf32> to vector<2x16x256xf32>
    %cst_20 = arith.constant 0.000000e+00 : f32
    %58 = vector.shape_cast %4 : vector<1x1x256xi1> to vector<1x1x256xi1>
    %59 = vector.broadcast %58 : vector<1x1x256xi1> to vector<2x16x256xi1>
    %60 = vector.broadcast %cst_20 : f32 to vector<2x16x256xf32>
    %61 = arith.select %59, %57, %60 : vector<2x16x256xi1>, vector<2x16x256xf32>
    %c3 = arith.constant 3 : index
    %c0_21 = arith.constant 0 : index
    %c0_22 = arith.constant 0 : index
    %62 = vector.load %arg2[%c3, %c0_21, %c0_22] : memref<89x16x16xf32, #tpu.memory_space<vmem>>, vector<1x16x16xf32>
    %63 = vector.shape_cast %62 : vector<1x16x16xf32> to vector<16x16xf32>
    %64 = vector.shape_cast %63 : vector<16x16xf32> to vector<1x16x16xf32>
    %65 = vector.broadcast %64 : vector<1x16x16xf32> to vector<2x16x16xf32>
    %cst_23 = arith.constant dense<0.000000e+00> : vector<2x16x256xf32>
    %66 = tpu.matmul %65, %61, %cst_23 {dimension_numbers = #tpu.dot_dimension_numbers<[2], [1], [1], [2], [0, 0, 0, 1, 1, 2], [0], [0]>} : vector<2x16x16xf32>, vector<2x16x256xf32>, vector<2x16x256xf32> -> vector<2x16x256xf32>
    %67 = arith.addf %56, %66 : vector<2x16x256xf32>
    %68 = vector.extract_strided_slice %26 {offsets = [0, 0, 17], sizes = [2, 16, 256], strides = [1, 1, 1]} : vector<2x16x290xf32> to vector<2x16x256xf32>
    %c4 = arith.constant 4 : index
    %c0_24 = arith.constant 0 : index
    %c0_25 = arith.constant 0 : index
    %69 = vector.load %arg2[%c4, %c0_24, %c0_25] : memref<89x16x16xf32, #tpu.memory_space<vmem>>, vector<1x16x16xf32>
    %70 = vector.shape_cast %69 : vector<1x16x16xf32> to vector<16x16xf32>
    %71 = vector.shape_cast %70 : vector<16x16xf32> to vector<1x16x16xf32>
    %72 = vector.broadcast %71 : vector<1x16x16xf32> to vector<2x16x16xf32>
    %cst_26 = arith.constant dense<0.000000e+00> : vector<2x16x256xf32>
    %73 = tpu.matmul %72, %68, %cst_26 {dimension_numbers = #tpu.dot_dimension_numbers<[2], [1], [1], [2], [0, 0, 0, 1, 1, 2], [0], [0]>} : vector<2x16x16xf32>, vector<2x16x256xf32>, vector<2x16x256xf32> -> vector<2x16x256xf32>
    %74 = arith.addf %67, %73 : vector<2x16x256xf32>
    %75 = vector.extract_strided_slice %26 {offsets = [0, 0, 18], sizes = [2, 16, 256], strides = [1, 1, 1]} : vector<2x16x290xf32> to vector<2x16x256xf32>
    %cst_27 = arith.constant 0.000000e+00 : f32
    %76 = vector.shape_cast %6 : vector<1x1x256xi1> to vector<1x1x256xi1>
    %77 = vector.broadcast %76 : vector<1x1x256xi1> to vector<2x16x256xi1>
    %78 = vector.broadcast %cst_27 : f32 to vector<2x16x256xf32>
    %79 = arith.select %77, %75, %78 : vector<2x16x256xi1>, vector<2x16x256xf32>
    %c5 = arith.constant 5 : index
    %c0_28 = arith.constant 0 : index
    %c0_29 = arith.constant 0 : index
    %80 = vector.load %arg2[%c5, %c0_28, %c0_29] : memref<89x16x16xf32, #tpu.memory_space<vmem>>, vector<1x16x16xf32>
    %81 = vector.shape_cast %80 : vector<1x16x16xf32> to vector<16x16xf32>
    %82 = vector.shape_cast %81 : vector<16x16xf32> to vector<1x16x16xf32>
    %83 = vector.broadcast %82 : vector<1x16x16xf32> to vector<2x16x16xf32>
    %cst_30 = arith.constant dense<0.000000e+00> : vector<2x16x256xf32>
    %84 = tpu.matmul %83, %79, %cst_30 {dimension_numbers = #tpu.dot_dimension_numbers<[2], [1], [1], [2], [0, 0, 0, 1, 1, 2], [0], [0]>} : vector<2x16x16xf32>, vector<2x16x256xf32>, vector<2x16x256xf32> -> vector<2x16x256xf32>
    %85 = arith.addf %74, %84 : vector<2x16x256xf32>
    %86 = vector.extract_strided_slice %26 {offsets = [0, 0, 32], sizes = [2, 16, 256], strides = [1, 1, 1]} : vector<2x16x290xf32> to vector<2x16x256xf32>
    %cst_31 = arith.constant 0.000000e+00 : f32
    %87 = vector.shape_cast %4 : vector<1x1x256xi1> to vector<1x1x256xi1>
    %88 = vector.broadcast %87 : vector<1x1x256xi1> to vector<2x16x256xi1>
    %89 = vector.broadcast %cst_31 : f32 to vector<2x16x256xf32>
    %90 = arith.select %88, %86, %89 : vector<2x16x256xi1>, vector<2x16x256xf32>
    %c6 = arith.constant 6 : index
    %c0_32 = arith.constant 0 : index
    %c0_33 = arith.constant 0 : index
    %91 = vector.load %arg2[%c6, %c0_32, %c0_33] : memref<89x16x16xf32, #tpu.memory_space<vmem>>, vector<1x16x16xf32>
    %92 = vector.shape_cast %91 : vector<1x16x16xf32> to vector<16x16xf32>
    %93 = vector.shape_cast %92 : vector<16x16xf32> to vector<1x16x16xf32>
    %94 = vector.broadcast %93 : vector<1x16x16xf32> to vector<2x16x16xf32>
    %cst_34 = arith.constant dense<0.000000e+00> : vector<2x16x256xf32>
    %95 = tpu.matmul %94, %90, %cst_34 {dimension_numbers = #tpu.dot_dimension_numbers<[2], [1], [1], [2], [0, 0, 0, 1, 1, 2], [0], [0]>} : vector<2x16x16xf32>, vector<2x16x256xf32>, vector<2x16x256xf32> -> vector<2x16x256xf32>
    %96 = arith.addf %85, %95 : vector<2x16x256xf32>
    %97 = vector.extract_strided_slice %26 {offsets = [0, 0, 33], sizes = [2, 16, 256], strides = [1, 1, 1]} : vector<2x16x290xf32> to vector<2x16x256xf32>
    %c7 = arith.constant 7 : index
    %c0_35 = arith.constant 0 : index
    %c0_36 = arith.constant 0 : index
    %98 = vector.load %arg2[%c7, %c0_35, %c0_36] : memref<89x16x16xf32, #tpu.memory_space<vmem>>, vector<1x16x16xf32>
    %99 = vector.shape_cast %98 : vector<1x16x16xf32> to vector<16x16xf32>
    %100 = vector.shape_cast %99 : vector<16x16xf32> to vector<1x16x16xf32>
    %101 = vector.broadcast %100 : vector<1x16x16xf32> to vector<2x16x16xf32>
    %cst_37 = arith.constant dense<0.000000e+00> : vector<2x16x256xf32>
    %102 = tpu.matmul %101, %97, %cst_37 {dimension_numbers = #tpu.dot_dimension_numbers<[2], [1], [1], [2], [0, 0, 0, 1, 1, 2], [0], [0]>} : vector<2x16x16xf32>, vector<2x16x256xf32>, vector<2x16x256xf32> -> vector<2x16x256xf32>
    %103 = arith.addf %96, %102 : vector<2x16x256xf32>
    %104 = vector.extract_strided_slice %26 {offsets = [0, 0, 34], sizes = [2, 16, 256], strides = [1, 1, 1]} : vector<2x16x290xf32> to vector<2x16x256xf32>
    %cst_38 = arith.constant 0.000000e+00 : f32
    %105 = vector.shape_cast %6 : vector<1x1x256xi1> to vector<1x1x256xi1>
    %106 = vector.broadcast %105 : vector<1x1x256xi1> to vector<2x16x256xi1>
    %107 = vector.broadcast %cst_38 : f32 to vector<2x16x256xf32>
    %108 = arith.select %106, %104, %107 : vector<2x16x256xi1>, vector<2x16x256xf32>
    %c8 = arith.constant 8 : index
    %c0_39 = arith.constant 0 : index
    %c0_40 = arith.constant 0 : index
    %109 = vector.load %arg2[%c8, %c0_39, %c0_40] : memref<89x16x16xf32, #tpu.memory_space<vmem>>, vector<1x16x16xf32>
    %110 = vector.shape_cast %109 : vector<1x16x16xf32> to vector<16x16xf32>
    %111 = vector.shape_cast %110 : vector<16x16xf32> to vector<1x16x16xf32>
    %112 = vector.broadcast %111 : vector<1x16x16xf32> to vector<2x16x16xf32>
    %cst_41 = arith.constant dense<0.000000e+00> : vector<2x16x256xf32>
    %113 = tpu.matmul %112, %108, %cst_41 {dimension_numbers = #tpu.dot_dimension_numbers<[2], [1], [1], [2], [0, 0, 0, 1, 1, 2], [0], [0]>} : vector<2x16x16xf32>, vector<2x16x256xf32>, vector<2x16x256xf32> -> vector<2x16x256xf32>
    %114 = arith.addf %103, %113 : vector<2x16x256xf32>
    %c0_42 = arith.constant 0 : index
    %c0_43 = arith.constant 0 : index
    %c0_44 = arith.constant 0 : index
    %115 = vector.load %arg3[%c0_42, %c0_43, %c0_44] : memref<11x16x1xf32, #tpu.memory_space<vmem>>, vector<1x16x1xf32>
    %116 = vector.shape_cast %115 : vector<1x16x1xf32> to vector<16x1xf32>
    %117 = vector.shape_cast %116 : vector<16x1xf32> to vector<1x16x1xf32>
    %118 = vector.broadcast %117 : vector<1x16x1xf32> to vector<2x16x256xf32>
    %119 = arith.addf %114, %118 : vector<2x16x256xf32>
    %cst_45 = arith.constant 0.000000e+00 : f32
    %120 = vector.broadcast %cst_45 : f32 to vector<2x16x256xf32>
    %121 = arith.maximumf %119, %120 : vector<2x16x256xf32>
    %cst_46 = arith.constant 0.000000e+00 : f32
    %122 = vector.broadcast %cst_46 : f32 to vector<2x16x17xf32>
    %123 = tpu.concatenate %122, %121, %122 in 2 : vector<2x16x17xf32>, vector<2x16x256xf32>, vector<2x16x17xf32> -> vector<2x16x290xf32>
    %cst_47 = arith.constant 0.000000e+00 : f32
    %124 = vector.broadcast %cst_47 : f32 to vector<2x16x256xf32>
    %125 = vector.extract_strided_slice %123 {offsets = [0, 0, 0], sizes = [2, 16, 256], strides = [1, 1, 1]} : vector<2x16x290xf32> to vector<2x16x256xf32>
    %cst_48 = arith.constant 0.000000e+00 : f32
    %126 = vector.shape_cast %4 : vector<1x1x256xi1> to vector<1x1x256xi1>
    %127 = vector.broadcast %126 : vector<1x1x256xi1> to vector<2x16x256xi1>
    %128 = vector.broadcast %cst_48 : f32 to vector<2x16x256xf32>
    %129 = arith.select %127, %125, %128 : vector<2x16x256xi1>, vector<2x16x256xf32>
    %c9 = arith.constant 9 : index
    %c0_49 = arith.constant 0 : index
    %c0_50 = arith.constant 0 : index
    %130 = vector.load %arg2[%c9, %c0_49, %c0_50] : memref<89x16x16xf32, #tpu.memory_space<vmem>>, vector<1x16x16xf32>
    %131 = vector.shape_cast %130 : vector<1x16x16xf32> to vector<16x16xf32>
    %132 = vector.shape_cast %131 : vector<16x16xf32> to vector<1x16x16xf32>
    %133 = vector.broadcast %132 : vector<1x16x16xf32> to vector<2x16x16xf32>
    %cst_51 = arith.constant dense<0.000000e+00> : vector<2x16x256xf32>
    %134 = tpu.matmul %133, %129, %cst_51 {dimension_numbers = #tpu.dot_dimension_numbers<[2], [1], [1], [2], [0, 0, 0, 1, 1, 2], [0], [0]>} : vector<2x16x16xf32>, vector<2x16x256xf32>, vector<2x16x256xf32> -> vector<2x16x256xf32>
    %135 = arith.addf %124, %134 : vector<2x16x256xf32>
    %136 = vector.extract_strided_slice %123 {offsets = [0, 0, 1], sizes = [2, 16, 256], strides = [1, 1, 1]} : vector<2x16x290xf32> to vector<2x16x256xf32>
    %c10 = arith.constant 10 : index
    %c0_52 = arith.constant 0 : index
    %c0_53 = arith.constant 0 : index
    %137 = vector.load %arg2[%c10, %c0_52, %c0_53] : memref<89x16x16xf32, #tpu.memory_space<vmem>>, vector<1x16x16xf32>
    %138 = vector.shape_cast %137 : vector<1x16x16xf32> to vector<16x16xf32>
    %139 = vector.shape_cast %138 : vector<16x16xf32> to vector<1x16x16xf32>
    %140 = vector.broadcast %139 : vector<1x16x16xf32> to vector<2x16x16xf32>
    %cst_54 = arith.constant dense<0.000000e+00> : vector<2x16x256xf32>
    %141 = tpu.matmul %140, %136, %cst_54 {dimension_numbers = #tpu.dot_dimension_numbers<[2], [1], [1], [2], [0, 0, 0, 1, 1, 2], [0], [0]>} : vector<2x16x16xf32>, vector<2x16x256xf32>, vector<2x16x256xf32> -> vector<2x16x256xf32>
    %142 = arith.addf %135, %141 : vector<2x16x256xf32>
    %143 = vector.extract_strided_slice %123 {offsets = [0, 0, 2], sizes = [2, 16, 256], strides = [1, 1, 1]} : vector<2x16x290xf32> to vector<2x16x256xf32>
    %cst_55 = arith.constant 0.000000e+00 : f32
    %144 = vector.shape_cast %6 : vector<1x1x256xi1> to vector<1x1x256xi1>
    %145 = vector.broadcast %144 : vector<1x1x256xi1> to vector<2x16x256xi1>
    %146 = vector.broadcast %cst_55 : f32 to vector<2x16x256xf32>
    %147 = arith.select %145, %143, %146 : vector<2x16x256xi1>, vector<2x16x256xf32>
    %c11 = arith.constant 11 : index
    %c0_56 = arith.constant 0 : index
    %c0_57 = arith.constant 0 : index
    %148 = vector.load %arg2[%c11, %c0_56, %c0_57] : memref<89x16x16xf32, #tpu.memory_space<vmem>>, vector<1x16x16xf32>
    %149 = vector.shape_cast %148 : vector<1x16x16xf32> to vector<16x16xf32>
    %150 = vector.shape_cast %149 : vector<16x16xf32> to vector<1x16x16xf32>
    %151 = vector.broadcast %150 : vector<1x16x16xf32> to vector<2x16x16xf32>
    %cst_58 = arith.constant dense<0.000000e+00> : vector<2x16x256xf32>
    %152 = tpu.matmul %151, %147, %cst_58 {dimension_numbers = #tpu.dot_dimension_numbers<[2], [1], [1], [2], [0, 0, 0, 1, 1, 2], [0], [0]>} : vector<2x16x16xf32>, vector<2x16x256xf32>, vector<2x16x256xf32> -> vector<2x16x256xf32>
    %153 = arith.addf %142, %152 : vector<2x16x256xf32>
    %154 = vector.extract_strided_slice %123 {offsets = [0, 0, 16], sizes = [2, 16, 256], strides = [1, 1, 1]} : vector<2x16x290xf32> to vector<2x16x256xf32>
    %cst_59 = arith.constant 0.000000e+00 : f32
    %155 = vector.shape_cast %4 : vector<1x1x256xi1> to vector<1x1x256xi1>
    %156 = vector.broadcast %155 : vector<1x1x256xi1> to vector<2x16x256xi1>
    %157 = vector.broadcast %cst_59 : f32 to vector<2x16x256xf32>
    %158 = arith.select %156, %154, %157 : vector<2x16x256xi1>, vector<2x16x256xf32>
    %c12 = arith.constant 12 : index
    %c0_60 = arith.constant 0 : index
    %c0_61 = arith.constant 0 : index
    %159 = vector.load %arg2[%c12, %c0_60, %c0_61] : memref<89x16x16xf32, #tpu.memory_space<vmem>>, vector<1x16x16xf32>
    %160 = vector.shape_cast %159 : vector<1x16x16xf32> to vector<16x16xf32>
    %161 = vector.shape_cast %160 : vector<16x16xf32> to vector<1x16x16xf32>
    %162 = vector.broadcast %161 : vector<1x16x16xf32> to vector<2x16x16xf32>
    %cst_62 = arith.constant dense<0.000000e+00> : vector<2x16x256xf32>
    %163 = tpu.matmul %162, %158, %cst_62 {dimension_numbers = #tpu.dot_dimension_numbers<[2], [1], [1], [2], [0, 0, 0, 1, 1, 2], [0], [0]>} : vector<2x16x16xf32>, vector<2x16x256xf32>, vector<2x16x256xf32> -> vector<2x16x256xf32>
    %164 = arith.addf %153, %163 : vector<2x16x256xf32>
    %165 = vector.extract_strided_slice %123 {offsets = [0, 0, 17], sizes = [2, 16, 256], strides = [1, 1, 1]} : vector<2x16x290xf32> to vector<2x16x256xf32>
    %c13 = arith.constant 13 : index
    %c0_63 = arith.constant 0 : index
    %c0_64 = arith.constant 0 : index
    %166 = vector.load %arg2[%c13, %c0_63, %c0_64] : memref<89x16x16xf32, #tpu.memory_space<vmem>>, vector<1x16x16xf32>
    %167 = vector.shape_cast %166 : vector<1x16x16xf32> to vector<16x16xf32>
    %168 = vector.shape_cast %167 : vector<16x16xf32> to vector<1x16x16xf32>
    %169 = vector.broadcast %168 : vector<1x16x16xf32> to vector<2x16x16xf32>
    %cst_65 = arith.constant dense<0.000000e+00> : vector<2x16x256xf32>
    %170 = tpu.matmul %169, %165, %cst_65 {dimension_numbers = #tpu.dot_dimension_numbers<[2], [1], [1], [2], [0, 0, 0, 1, 1, 2], [0], [0]>} : vector<2x16x16xf32>, vector<2x16x256xf32>, vector<2x16x256xf32> -> vector<2x16x256xf32>
    %171 = arith.addf %164, %170 : vector<2x16x256xf32>
    %172 = vector.extract_strided_slice %123 {offsets = [0, 0, 18], sizes = [2, 16, 256], strides = [1, 1, 1]} : vector<2x16x290xf32> to vector<2x16x256xf32>
    %cst_66 = arith.constant 0.000000e+00 : f32
    %173 = vector.shape_cast %6 : vector<1x1x256xi1> to vector<1x1x256xi1>
    %174 = vector.broadcast %173 : vector<1x1x256xi1> to vector<2x16x256xi1>
    %175 = vector.broadcast %cst_66 : f32 to vector<2x16x256xf32>
    %176 = arith.select %174, %172, %175 : vector<2x16x256xi1>, vector<2x16x256xf32>
    %c14 = arith.constant 14 : index
    %c0_67 = arith.constant 0 : index
    %c0_68 = arith.constant 0 : index
    %177 = vector.load %arg2[%c14, %c0_67, %c0_68] : memref<89x16x16xf32, #tpu.memory_space<vmem>>, vector<1x16x16xf32>
    %178 = vector.shape_cast %177 : vector<1x16x16xf32> to vector<16x16xf32>
    %179 = vector.shape_cast %178 : vector<16x16xf32> to vector<1x16x16xf32>
    %180 = vector.broadcast %179 : vector<1x16x16xf32> to vector<2x16x16xf32>
    %cst_69 = arith.constant dense<0.000000e+00> : vector<2x16x256xf32>
    %181 = tpu.matmul %180, %176, %cst_69 {dimension_numbers = #tpu.dot_dimension_numbers<[2], [1], [1], [2], [0, 0, 0, 1, 1, 2], [0], [0]>} : vector<2x16x16xf32>, vector<2x16x256xf32>, vector<2x16x256xf32> -> vector<2x16x256xf32>
    %182 = arith.addf %171, %181 : vector<2x16x256xf32>
    %183 = vector.extract_strided_slice %123 {offsets = [0, 0, 32], sizes = [2, 16, 256], strides = [1, 1, 1]} : vector<2x16x290xf32> to vector<2x16x256xf32>
    %cst_70 = arith.constant 0.000000e+00 : f32
    %184 = vector.shape_cast %4 : vector<1x1x256xi1> to vector<1x1x256xi1>
    %185 = vector.broadcast %184 : vector<1x1x256xi1> to vector<2x16x256xi1>
    %186 = vector.broadcast %cst_70 : f32 to vector<2x16x256xf32>
    %187 = arith.select %185, %183, %186 : vector<2x16x256xi1>, vector<2x16x256xf32>
    %c15 = arith.constant 15 : index
    %c0_71 = arith.constant 0 : index
    %c0_72 = arith.constant 0 : index
    %188 = vector.load %arg2[%c15, %c0_71, %c0_72] : memref<89x16x16xf32, #tpu.memory_space<vmem>>, vector<1x16x16xf32>
    %189 = vector.shape_cast %188 : vector<1x16x16xf32> to vector<16x16xf32>
    %190 = vector.shape_cast %189 : vector<16x16xf32> to vector<1x16x16xf32>
    %191 = vector.broadcast %190 : vector<1x16x16xf32> to vector<2x16x16xf32>
    %cst_73 = arith.constant dense<0.000000e+00> : vector<2x16x256xf32>
    %192 = tpu.matmul %191, %187, %cst_73 {dimension_numbers = #tpu.dot_dimension_numbers<[2], [1], [1], [2], [0, 0, 0, 1, 1, 2], [0], [0]>} : vector<2x16x16xf32>, vector<2x16x256xf32>, vector<2x16x256xf32> -> vector<2x16x256xf32>
    %193 = arith.addf %182, %192 : vector<2x16x256xf32>
    %194 = vector.extract_strided_slice %123 {offsets = [0, 0, 33], sizes = [2, 16, 256], strides = [1, 1, 1]} : vector<2x16x290xf32> to vector<2x16x256xf32>
    %c16 = arith.constant 16 : index
    %c0_74 = arith.constant 0 : index
    %c0_75 = arith.constant 0 : index
    %195 = vector.load %arg2[%c16, %c0_74, %c0_75] : memref<89x16x16xf32, #tpu.memory_space<vmem>>, vector<1x16x16xf32>
    %196 = vector.shape_cast %195 : vector<1x16x16xf32> to vector<16x16xf32>
    %197 = vector.shape_cast %196 : vector<16x16xf32> to vector<1x16x16xf32>
    %198 = vector.broadcast %197 : vector<1x16x16xf32> to vector<2x16x16xf32>
    %cst_76 = arith.constant dense<0.000000e+00> : vector<2x16x256xf32>
    %199 = tpu.matmul %198, %194, %cst_76 {dimension_numbers = #tpu.dot_dimension_numbers<[2], [1], [1], [2], [0, 0, 0, 1, 1, 2], [0], [0]>} : vector<2x16x16xf32>, vector<2x16x256xf32>, vector<2x16x256xf32> -> vector<2x16x256xf32>
    %200 = arith.addf %193, %199 : vector<2x16x256xf32>
    %201 = vector.extract_strided_slice %123 {offsets = [0, 0, 34], sizes = [2, 16, 256], strides = [1, 1, 1]} : vector<2x16x290xf32> to vector<2x16x256xf32>
    %cst_77 = arith.constant 0.000000e+00 : f32
    %202 = vector.shape_cast %6 : vector<1x1x256xi1> to vector<1x1x256xi1>
    %203 = vector.broadcast %202 : vector<1x1x256xi1> to vector<2x16x256xi1>
    %204 = vector.broadcast %cst_77 : f32 to vector<2x16x256xf32>
    %205 = arith.select %203, %201, %204 : vector<2x16x256xi1>, vector<2x16x256xf32>
    %c17 = arith.constant 17 : index
    %c0_78 = arith.constant 0 : index
    %c0_79 = arith.constant 0 : index
    %206 = vector.load %arg2[%c17, %c0_78, %c0_79] : memref<89x16x16xf32, #tpu.memory_space<vmem>>, vector<1x16x16xf32>
    %207 = vector.shape_cast %206 : vector<1x16x16xf32> to vector<16x16xf32>
    %208 = vector.shape_cast %207 : vector<16x16xf32> to vector<1x16x16xf32>
    %209 = vector.broadcast %208 : vector<1x16x16xf32> to vector<2x16x16xf32>
    %cst_80 = arith.constant dense<0.000000e+00> : vector<2x16x256xf32>
    %210 = tpu.matmul %209, %205, %cst_80 {dimension_numbers = #tpu.dot_dimension_numbers<[2], [1], [1], [2], [0, 0, 0, 1, 1, 2], [0], [0]>} : vector<2x16x16xf32>, vector<2x16x256xf32>, vector<2x16x256xf32> -> vector<2x16x256xf32>
    %211 = arith.addf %200, %210 : vector<2x16x256xf32>
    %c1_81 = arith.constant 1 : index
    %c0_82 = arith.constant 0 : index
    %c0_83 = arith.constant 0 : index
    %212 = vector.load %arg3[%c1_81, %c0_82, %c0_83] : memref<11x16x1xf32, #tpu.memory_space<vmem>>, vector<1x16x1xf32>
    %213 = vector.shape_cast %212 : vector<1x16x1xf32> to vector<16x1xf32>
    %214 = vector.shape_cast %213 : vector<16x1xf32> to vector<1x16x1xf32>
    %215 = vector.broadcast %214 : vector<1x16x1xf32> to vector<2x16x256xf32>
    %216 = arith.addf %211, %215 : vector<2x16x256xf32>
    %cst_84 = arith.constant 0.000000e+00 : f32
    %217 = vector.broadcast %cst_84 : f32 to vector<2x16x256xf32>
    %218 = arith.maximumf %216, %217 : vector<2x16x256xf32>
    %c0_85 = arith.constant 0 : index
    %c0_86 = arith.constant 0 : index
    %219 = vector.load %arg4[%c0_85, %c0_86] : memref<256x64xf32, #tpu.memory_space<vmem>>, vector<256x64xf32>
    %220 = vector.shape_cast %218 : vector<2x16x256xf32> to vector<32x256xf32>
    %cst_87 = arith.constant dense<0.000000e+00> : vector<32x64xf32>
    %221 = tpu.matmul %220, %219, %cst_87 {dimension_numbers = #tpu.dot_dimension_numbers<[1], [0], [0], [1], [0, 0, 1, 1], [], []>} : vector<32x256xf32>, vector<256x64xf32>, vector<32x64xf32> -> vector<32x64xf32>
    %222 = vector.shape_cast %221 : vector<32x64xf32> to vector<2x16x64xf32>
    %cst_88 = arith.constant 0.000000e+00 : f32
    %223 = vector.broadcast %cst_88 : f32 to vector<2x16x9xf32>
    %224 = tpu.concatenate %223, %222, %223 in 2 : vector<2x16x9xf32>, vector<2x16x64xf32>, vector<2x16x9xf32> -> vector<2x16x82xf32>
    %cst_89 = arith.constant 0.000000e+00 : f32
    %225 = vector.broadcast %cst_89 : f32 to vector<2x16x64xf32>
    %226 = vector.extract_strided_slice %224 {offsets = [0, 0, 0], sizes = [2, 16, 64], strides = [1, 1, 1]} : vector<2x16x82xf32> to vector<2x16x64xf32>
    %cst_90 = arith.constant 0.000000e+00 : f32
    %227 = vector.shape_cast %11 : vector<1x1x64xi1> to vector<1x1x64xi1>
    %228 = vector.broadcast %227 : vector<1x1x64xi1> to vector<2x16x64xi1>
    %229 = vector.broadcast %cst_90 : f32 to vector<2x16x64xf32>
    %230 = arith.select %228, %226, %229 : vector<2x16x64xi1>, vector<2x16x64xf32>
    %c18 = arith.constant 18 : index
    %c0_91 = arith.constant 0 : index
    %c0_92 = arith.constant 0 : index
    %231 = vector.load %arg2[%c18, %c0_91, %c0_92] : memref<89x16x16xf32, #tpu.memory_space<vmem>>, vector<1x16x16xf32>
    %232 = vector.shape_cast %231 : vector<1x16x16xf32> to vector<16x16xf32>
    %233 = vector.shape_cast %232 : vector<16x16xf32> to vector<1x16x16xf32>
    %234 = vector.broadcast %233 : vector<1x16x16xf32> to vector<2x16x16xf32>
    %cst_93 = arith.constant dense<0.000000e+00> : vector<2x16x64xf32>
    %235 = tpu.matmul %234, %230, %cst_93 {dimension_numbers = #tpu.dot_dimension_numbers<[2], [1], [1], [2], [0, 0, 0, 1, 1, 2], [0], [0]>} : vector<2x16x16xf32>, vector<2x16x64xf32>, vector<2x16x64xf32> -> vector<2x16x64xf32>
    %236 = arith.addf %225, %235 : vector<2x16x64xf32>
    %237 = vector.extract_strided_slice %224 {offsets = [0, 0, 1], sizes = [2, 16, 64], strides = [1, 1, 1]} : vector<2x16x82xf32> to vector<2x16x64xf32>
    %c19 = arith.constant 19 : index
    %c0_94 = arith.constant 0 : index
    %c0_95 = arith.constant 0 : index
    %238 = vector.load %arg2[%c19, %c0_94, %c0_95] : memref<89x16x16xf32, #tpu.memory_space<vmem>>, vector<1x16x16xf32>
    %239 = vector.shape_cast %238 : vector<1x16x16xf32> to vector<16x16xf32>
    %240 = vector.shape_cast %239 : vector<16x16xf32> to vector<1x16x16xf32>
    %241 = vector.broadcast %240 : vector<1x16x16xf32> to vector<2x16x16xf32>
    %cst_96 = arith.constant dense<0.000000e+00> : vector<2x16x64xf32>
    %242 = tpu.matmul %241, %237, %cst_96 {dimension_numbers = #tpu.dot_dimension_numbers<[2], [1], [1], [2], [0, 0, 0, 1, 1, 2], [0], [0]>} : vector<2x16x16xf32>, vector<2x16x64xf32>, vector<2x16x64xf32> -> vector<2x16x64xf32>
    %243 = arith.addf %236, %242 : vector<2x16x64xf32>
    %244 = vector.extract_strided_slice %224 {offsets = [0, 0, 2], sizes = [2, 16, 64], strides = [1, 1, 1]} : vector<2x16x82xf32> to vector<2x16x64xf32>
    %cst_97 = arith.constant 0.000000e+00 : f32
    %245 = vector.shape_cast %13 : vector<1x1x64xi1> to vector<1x1x64xi1>
    %246 = vector.broadcast %245 : vector<1x1x64xi1> to vector<2x16x64xi1>
    %247 = vector.broadcast %cst_97 : f32 to vector<2x16x64xf32>
    %248 = arith.select %246, %244, %247 : vector<2x16x64xi1>, vector<2x16x64xf32>
    %c20 = arith.constant 20 : index
    %c0_98 = arith.constant 0 : index
    %c0_99 = arith.constant 0 : index
    %249 = vector.load %arg2[%c20, %c0_98, %c0_99] : memref<89x16x16xf32, #tpu.memory_space<vmem>>, vector<1x16x16xf32>
    %250 = vector.shape_cast %249 : vector<1x16x16xf32> to vector<16x16xf32>
    %251 = vector.shape_cast %250 : vector<16x16xf32> to vector<1x16x16xf32>
    %252 = vector.broadcast %251 : vector<1x16x16xf32> to vector<2x16x16xf32>
    %cst_100 = arith.constant dense<0.000000e+00> : vector<2x16x64xf32>
    %253 = tpu.matmul %252, %248, %cst_100 {dimension_numbers = #tpu.dot_dimension_numbers<[2], [1], [1], [2], [0, 0, 0, 1, 1, 2], [0], [0]>} : vector<2x16x16xf32>, vector<2x16x64xf32>, vector<2x16x64xf32> -> vector<2x16x64xf32>
    %254 = arith.addf %243, %253 : vector<2x16x64xf32>
    %255 = vector.extract_strided_slice %224 {offsets = [0, 0, 8], sizes = [2, 16, 64], strides = [1, 1, 1]} : vector<2x16x82xf32> to vector<2x16x64xf32>
    %cst_101 = arith.constant 0.000000e+00 : f32
    %256 = vector.shape_cast %11 : vector<1x1x64xi1> to vector<1x1x64xi1>
    %257 = vector.broadcast %256 : vector<1x1x64xi1> to vector<2x16x64xi1>
    %258 = vector.broadcast %cst_101 : f32 to vector<2x16x64xf32>
    %259 = arith.select %257, %255, %258 : vector<2x16x64xi1>, vector<2x16x64xf32>
    %c21 = arith.constant 21 : index
    %c0_102 = arith.constant 0 : index
    %c0_103 = arith.constant 0 : index
    %260 = vector.load %arg2[%c21, %c0_102, %c0_103] : memref<89x16x16xf32, #tpu.memory_space<vmem>>, vector<1x16x16xf32>
    %261 = vector.shape_cast %260 : vector<1x16x16xf32> to vector<16x16xf32>
    %262 = vector.shape_cast %261 : vector<16x16xf32> to vector<1x16x16xf32>
    %263 = vector.broadcast %262 : vector<1x16x16xf32> to vector<2x16x16xf32>
    %cst_104 = arith.constant dense<0.000000e+00> : vector<2x16x64xf32>
    %264 = tpu.matmul %263, %259, %cst_104 {dimension_numbers = #tpu.dot_dimension_numbers<[2], [1], [1], [2], [0, 0, 0, 1, 1, 2], [0], [0]>} : vector<2x16x16xf32>, vector<2x16x64xf32>, vector<2x16x64xf32> -> vector<2x16x64xf32>
    %265 = arith.addf %254, %264 : vector<2x16x64xf32>
    %266 = vector.extract_strided_slice %224 {offsets = [0, 0, 9], sizes = [2, 16, 64], strides = [1, 1, 1]} : vector<2x16x82xf32> to vector<2x16x64xf32>
    %c22 = arith.constant 22 : index
    %c0_105 = arith.constant 0 : index
    %c0_106 = arith.constant 0 : index
    %267 = vector.load %arg2[%c22, %c0_105, %c0_106] : memref<89x16x16xf32, #tpu.memory_space<vmem>>, vector<1x16x16xf32>
    %268 = vector.shape_cast %267 : vector<1x16x16xf32> to vector<16x16xf32>
    %269 = vector.shape_cast %268 : vector<16x16xf32> to vector<1x16x16xf32>
    %270 = vector.broadcast %269 : vector<1x16x16xf32> to vector<2x16x16xf32>
    %cst_107 = arith.constant dense<0.000000e+00> : vector<2x16x64xf32>
    %271 = tpu.matmul %270, %266, %cst_107 {dimension_numbers = #tpu.dot_dimension_numbers<[2], [1], [1], [2], [0, 0, 0, 1, 1, 2], [0], [0]>} : vector<2x16x16xf32>, vector<2x16x64xf32>, vector<2x16x64xf32> -> vector<2x16x64xf32>
    %272 = arith.addf %265, %271 : vector<2x16x64xf32>
    %273 = vector.extract_strided_slice %224 {offsets = [0, 0, 10], sizes = [2, 16, 64], strides = [1, 1, 1]} : vector<2x16x82xf32> to vector<2x16x64xf32>
    %cst_108 = arith.constant 0.000000e+00 : f32
    %274 = vector.shape_cast %13 : vector<1x1x64xi1> to vector<1x1x64xi1>
    %275 = vector.broadcast %274 : vector<1x1x64xi1> to vector<2x16x64xi1>
    %276 = vector.broadcast %cst_108 : f32 to vector<2x16x64xf32>
    %277 = arith.select %275, %273, %276 : vector<2x16x64xi1>, vector<2x16x64xf32>
    %c23 = arith.constant 23 : index
    %c0_109 = arith.constant 0 : index
    %c0_110 = arith.constant 0 : index
    %278 = vector.load %arg2[%c23, %c0_109, %c0_110] : memref<89x16x16xf32, #tpu.memory_space<vmem>>, vector<1x16x16xf32>
    %279 = vector.shape_cast %278 : vector<1x16x16xf32> to vector<16x16xf32>
    %280 = vector.shape_cast %279 : vector<16x16xf32> to vector<1x16x16xf32>
    %281 = vector.broadcast %280 : vector<1x16x16xf32> to vector<2x16x16xf32>
    %cst_111 = arith.constant dense<0.000000e+00> : vector<2x16x64xf32>
    %282 = tpu.matmul %281, %277, %cst_111 {dimension_numbers = #tpu.dot_dimension_numbers<[2], [1], [1], [2], [0, 0, 0, 1, 1, 2], [0], [0]>} : vector<2x16x16xf32>, vector<2x16x64xf32>, vector<2x16x64xf32> -> vector<2x16x64xf32>
    %283 = arith.addf %272, %282 : vector<2x16x64xf32>
    %284 = vector.extract_strided_slice %224 {offsets = [0, 0, 16], sizes = [2, 16, 64], strides = [1, 1, 1]} : vector<2x16x82xf32> to vector<2x16x64xf32>
    %cst_112 = arith.constant 0.000000e+00 : f32
    %285 = vector.shape_cast %11 : vector<1x1x64xi1> to vector<1x1x64xi1>
    %286 = vector.broadcast %285 : vector<1x1x64xi1> to vector<2x16x64xi1>
    %287 = vector.broadcast %cst_112 : f32 to vector<2x16x64xf32>
    %288 = arith.select %286, %284, %287 : vector<2x16x64xi1>, vector<2x16x64xf32>
    %c24 = arith.constant 24 : index
    %c0_113 = arith.constant 0 : index
    %c0_114 = arith.constant 0 : index
    %289 = vector.load %arg2[%c24, %c0_113, %c0_114] : memref<89x16x16xf32, #tpu.memory_space<vmem>>, vector<1x16x16xf32>
    %290 = vector.shape_cast %289 : vector<1x16x16xf32> to vector<16x16xf32>
    %291 = vector.shape_cast %290 : vector<16x16xf32> to vector<1x16x16xf32>
    %292 = vector.broadcast %291 : vector<1x16x16xf32> to vector<2x16x16xf32>
    %cst_115 = arith.constant dense<0.000000e+00> : vector<2x16x64xf32>
    %293 = tpu.matmul %292, %288, %cst_115 {dimension_numbers = #tpu.dot_dimension_numbers<[2], [1], [1], [2], [0, 0, 0, 1, 1, 2], [0], [0]>} : vector<2x16x16xf32>, vector<2x16x64xf32>, vector<2x16x64xf32> -> vector<2x16x64xf32>
    %294 = arith.addf %283, %293 : vector<2x16x64xf32>
    %295 = vector.extract_strided_slice %224 {offsets = [0, 0, 17], sizes = [2, 16, 64], strides = [1, 1, 1]} : vector<2x16x82xf32> to vector<2x16x64xf32>
    %c25 = arith.constant 25 : index
    %c0_116 = arith.constant 0 : index
    %c0_117 = arith.constant 0 : index
    %296 = vector.load %arg2[%c25, %c0_116, %c0_117] : memref<89x16x16xf32, #tpu.memory_space<vmem>>, vector<1x16x16xf32>
    %297 = vector.shape_cast %296 : vector<1x16x16xf32> to vector<16x16xf32>
    %298 = vector.shape_cast %297 : vector<16x16xf32> to vector<1x16x16xf32>
    %299 = vector.broadcast %298 : vector<1x16x16xf32> to vector<2x16x16xf32>
    %cst_118 = arith.constant dense<0.000000e+00> : vector<2x16x64xf32>
    %300 = tpu.matmul %299, %295, %cst_118 {dimension_numbers = #tpu.dot_dimension_numbers<[2], [1], [1], [2], [0, 0, 0, 1, 1, 2], [0], [0]>} : vector<2x16x16xf32>, vector<2x16x64xf32>, vector<2x16x64xf32> -> vector<2x16x64xf32>
    %301 = arith.addf %294, %300 : vector<2x16x64xf32>
    %302 = vector.extract_strided_slice %224 {offsets = [0, 0, 18], sizes = [2, 16, 64], strides = [1, 1, 1]} : vector<2x16x82xf32> to vector<2x16x64xf32>
    %cst_119 = arith.constant 0.000000e+00 : f32
    %303 = vector.shape_cast %13 : vector<1x1x64xi1> to vector<1x1x64xi1>
    %304 = vector.broadcast %303 : vector<1x1x64xi1> to vector<2x16x64xi1>
    %305 = vector.broadcast %cst_119 : f32 to vector<2x16x64xf32>
    %306 = arith.select %304, %302, %305 : vector<2x16x64xi1>, vector<2x16x64xf32>
    %c26 = arith.constant 26 : index
    %c0_120 = arith.constant 0 : index
    %c0_121 = arith.constant 0 : index
    %307 = vector.load %arg2[%c26, %c0_120, %c0_121] : memref<89x16x16xf32, #tpu.memory_space<vmem>>, vector<1x16x16xf32>
    %308 = vector.shape_cast %307 : vector<1x16x16xf32> to vector<16x16xf32>
    %309 = vector.shape_cast %308 : vector<16x16xf32> to vector<1x16x16xf32>
    %310 = vector.broadcast %309 : vector<1x16x16xf32> to vector<2x16x16xf32>
    %cst_122 = arith.constant dense<0.000000e+00> : vector<2x16x64xf32>
    %311 = tpu.matmul %310, %306, %cst_122 {dimension_numbers = #tpu.dot_dimension_numbers<[2], [1], [1], [2], [0, 0, 0, 1, 1, 2], [0], [0]>} : vector<2x16x16xf32>, vector<2x16x64xf32>, vector<2x16x64xf32> -> vector<2x16x64xf32>
    %312 = arith.addf %301, %311 : vector<2x16x64xf32>
    %c2_123 = arith.constant 2 : index
    %c0_124 = arith.constant 0 : index
    %c0_125 = arith.constant 0 : index
    %313 = vector.load %arg3[%c2_123, %c0_124, %c0_125] : memref<11x16x1xf32, #tpu.memory_space<vmem>>, vector<1x16x1xf32>
    %314 = vector.shape_cast %313 : vector<1x16x1xf32> to vector<16x1xf32>
    %315 = vector.shape_cast %314 : vector<16x1xf32> to vector<1x16x1xf32>
    %316 = vector.broadcast %315 : vector<1x16x1xf32> to vector<2x16x64xf32>
    %317 = arith.addf %312, %316 : vector<2x16x64xf32>
    %cst_126 = arith.constant 0.000000e+00 : f32
    %318 = vector.broadcast %cst_126 : f32 to vector<2x16x64xf32>
    %319 = arith.maximumf %317, %318 : vector<2x16x64xf32>
    %cst_127 = arith.constant 0.000000e+00 : f32
    %320 = vector.broadcast %cst_127 : f32 to vector<2x16x9xf32>
    %321 = tpu.concatenate %320, %319, %320 in 2 : vector<2x16x9xf32>, vector<2x16x64xf32>, vector<2x16x9xf32> -> vector<2x16x82xf32>
    %cst_128 = arith.constant 0.000000e+00 : f32
    %322 = vector.broadcast %cst_128 : f32 to vector<2x16x64xf32>
    %323 = vector.extract_strided_slice %321 {offsets = [0, 0, 0], sizes = [2, 16, 64], strides = [1, 1, 1]} : vector<2x16x82xf32> to vector<2x16x64xf32>
    %cst_129 = arith.constant 0.000000e+00 : f32
    %324 = vector.shape_cast %11 : vector<1x1x64xi1> to vector<1x1x64xi1>
    %325 = vector.broadcast %324 : vector<1x1x64xi1> to vector<2x16x64xi1>
    %326 = vector.broadcast %cst_129 : f32 to vector<2x16x64xf32>
    %327 = arith.select %325, %323, %326 : vector<2x16x64xi1>, vector<2x16x64xf32>
    %c27 = arith.constant 27 : index
    %c0_130 = arith.constant 0 : index
    %c0_131 = arith.constant 0 : index
    %328 = vector.load %arg2[%c27, %c0_130, %c0_131] : memref<89x16x16xf32, #tpu.memory_space<vmem>>, vector<1x16x16xf32>
    %329 = vector.shape_cast %328 : vector<1x16x16xf32> to vector<16x16xf32>
    %330 = vector.shape_cast %329 : vector<16x16xf32> to vector<1x16x16xf32>
    %331 = vector.broadcast %330 : vector<1x16x16xf32> to vector<2x16x16xf32>
    %cst_132 = arith.constant dense<0.000000e+00> : vector<2x16x64xf32>
    %332 = tpu.matmul %331, %327, %cst_132 {dimension_numbers = #tpu.dot_dimension_numbers<[2], [1], [1], [2], [0, 0, 0, 1, 1, 2], [0], [0]>} : vector<2x16x16xf32>, vector<2x16x64xf32>, vector<2x16x64xf32> -> vector<2x16x64xf32>
    %333 = arith.addf %322, %332 : vector<2x16x64xf32>
    %334 = vector.extract_strided_slice %321 {offsets = [0, 0, 1], sizes = [2, 16, 64], strides = [1, 1, 1]} : vector<2x16x82xf32> to vector<2x16x64xf32>
    %c28 = arith.constant 28 : index
    %c0_133 = arith.constant 0 : index
    %c0_134 = arith.constant 0 : index
    %335 = vector.load %arg2[%c28, %c0_133, %c0_134] : memref<89x16x16xf32, #tpu.memory_space<vmem>>, vector<1x16x16xf32>
    %336 = vector.shape_cast %335 : vector<1x16x16xf32> to vector<16x16xf32>
    %337 = vector.shape_cast %336 : vector<16x16xf32> to vector<1x16x16xf32>
    %338 = vector.broadcast %337 : vector<1x16x16xf32> to vector<2x16x16xf32>
    %cst_135 = arith.constant dense<0.000000e+00> : vector<2x16x64xf32>
    %339 = tpu.matmul %338, %334, %cst_135 {dimension_numbers = #tpu.dot_dimension_numbers<[2], [1], [1], [2], [0, 0, 0, 1, 1, 2], [0], [0]>} : vector<2x16x16xf32>, vector<2x16x64xf32>, vector<2x16x64xf32> -> vector<2x16x64xf32>
    %340 = arith.addf %333, %339 : vector<2x16x64xf32>
    %341 = vector.extract_strided_slice %321 {offsets = [0, 0, 2], sizes = [2, 16, 64], strides = [1, 1, 1]} : vector<2x16x82xf32> to vector<2x16x64xf32>
    %cst_136 = arith.constant 0.000000e+00 : f32
    %342 = vector.shape_cast %13 : vector<1x1x64xi1> to vector<1x1x64xi1>
    %343 = vector.broadcast %342 : vector<1x1x64xi1> to vector<2x16x64xi1>
    %344 = vector.broadcast %cst_136 : f32 to vector<2x16x64xf32>
    %345 = arith.select %343, %341, %344 : vector<2x16x64xi1>, vector<2x16x64xf32>
    %c29 = arith.constant 29 : index
    %c0_137 = arith.constant 0 : index
    %c0_138 = arith.constant 0 : index
    %346 = vector.load %arg2[%c29, %c0_137, %c0_138] : memref<89x16x16xf32, #tpu.memory_space<vmem>>, vector<1x16x16xf32>
    %347 = vector.shape_cast %346 : vector<1x16x16xf32> to vector<16x16xf32>
    %348 = vector.shape_cast %347 : vector<16x16xf32> to vector<1x16x16xf32>
    %349 = vector.broadcast %348 : vector<1x16x16xf32> to vector<2x16x16xf32>
    %cst_139 = arith.constant dense<0.000000e+00> : vector<2x16x64xf32>
    %350 = tpu.matmul %349, %345, %cst_139 {dimension_numbers = #tpu.dot_dimension_numbers<[2], [1], [1], [2], [0, 0, 0, 1, 1, 2], [0], [0]>} : vector<2x16x16xf32>, vector<2x16x64xf32>, vector<2x16x64xf32> -> vector<2x16x64xf32>
    %351 = arith.addf %340, %350 : vector<2x16x64xf32>
    %352 = vector.extract_strided_slice %321 {offsets = [0, 0, 8], sizes = [2, 16, 64], strides = [1, 1, 1]} : vector<2x16x82xf32> to vector<2x16x64xf32>
    %cst_140 = arith.constant 0.000000e+00 : f32
    %353 = vector.shape_cast %11 : vector<1x1x64xi1> to vector<1x1x64xi1>
    %354 = vector.broadcast %353 : vector<1x1x64xi1> to vector<2x16x64xi1>
    %355 = vector.broadcast %cst_140 : f32 to vector<2x16x64xf32>
    %356 = arith.select %354, %352, %355 : vector<2x16x64xi1>, vector<2x16x64xf32>
    %c30 = arith.constant 30 : index
    %c0_141 = arith.constant 0 : index
    %c0_142 = arith.constant 0 : index
    %357 = vector.load %arg2[%c30, %c0_141, %c0_142] : memref<89x16x16xf32, #tpu.memory_space<vmem>>, vector<1x16x16xf32>
    %358 = vector.shape_cast %357 : vector<1x16x16xf32> to vector<16x16xf32>
    %359 = vector.shape_cast %358 : vector<16x16xf32> to vector<1x16x16xf32>
    %360 = vector.broadcast %359 : vector<1x16x16xf32> to vector<2x16x16xf32>
    %cst_143 = arith.constant dense<0.000000e+00> : vector<2x16x64xf32>
    %361 = tpu.matmul %360, %356, %cst_143 {dimension_numbers = #tpu.dot_dimension_numbers<[2], [1], [1], [2], [0, 0, 0, 1, 1, 2], [0], [0]>} : vector<2x16x16xf32>, vector<2x16x64xf32>, vector<2x16x64xf32> -> vector<2x16x64xf32>
    %362 = arith.addf %351, %361 : vector<2x16x64xf32>
    %363 = vector.extract_strided_slice %321 {offsets = [0, 0, 9], sizes = [2, 16, 64], strides = [1, 1, 1]} : vector<2x16x82xf32> to vector<2x16x64xf32>
    %c31 = arith.constant 31 : index
    %c0_144 = arith.constant 0 : index
    %c0_145 = arith.constant 0 : index
    %364 = vector.load %arg2[%c31, %c0_144, %c0_145] : memref<89x16x16xf32, #tpu.memory_space<vmem>>, vector<1x16x16xf32>
    %365 = vector.shape_cast %364 : vector<1x16x16xf32> to vector<16x16xf32>
    %366 = vector.shape_cast %365 : vector<16x16xf32> to vector<1x16x16xf32>
    %367 = vector.broadcast %366 : vector<1x16x16xf32> to vector<2x16x16xf32>
    %cst_146 = arith.constant dense<0.000000e+00> : vector<2x16x64xf32>
    %368 = tpu.matmul %367, %363, %cst_146 {dimension_numbers = #tpu.dot_dimension_numbers<[2], [1], [1], [2], [0, 0, 0, 1, 1, 2], [0], [0]>} : vector<2x16x16xf32>, vector<2x16x64xf32>, vector<2x16x64xf32> -> vector<2x16x64xf32>
    %369 = arith.addf %362, %368 : vector<2x16x64xf32>
    %370 = vector.extract_strided_slice %321 {offsets = [0, 0, 10], sizes = [2, 16, 64], strides = [1, 1, 1]} : vector<2x16x82xf32> to vector<2x16x64xf32>
    %cst_147 = arith.constant 0.000000e+00 : f32
    %371 = vector.shape_cast %13 : vector<1x1x64xi1> to vector<1x1x64xi1>
    %372 = vector.broadcast %371 : vector<1x1x64xi1> to vector<2x16x64xi1>
    %373 = vector.broadcast %cst_147 : f32 to vector<2x16x64xf32>
    %374 = arith.select %372, %370, %373 : vector<2x16x64xi1>, vector<2x16x64xf32>
    %c32 = arith.constant 32 : index
    %c0_148 = arith.constant 0 : index
    %c0_149 = arith.constant 0 : index
    %375 = vector.load %arg2[%c32, %c0_148, %c0_149] : memref<89x16x16xf32, #tpu.memory_space<vmem>>, vector<1x16x16xf32>
    %376 = vector.shape_cast %375 : vector<1x16x16xf32> to vector<16x16xf32>
    %377 = vector.shape_cast %376 : vector<16x16xf32> to vector<1x16x16xf32>
    %378 = vector.broadcast %377 : vector<1x16x16xf32> to vector<2x16x16xf32>
    %cst_150 = arith.constant dense<0.000000e+00> : vector<2x16x64xf32>
    %379 = tpu.matmul %378, %374, %cst_150 {dimension_numbers = #tpu.dot_dimension_numbers<[2], [1], [1], [2], [0, 0, 0, 1, 1, 2], [0], [0]>} : vector<2x16x16xf32>, vector<2x16x64xf32>, vector<2x16x64xf32> -> vector<2x16x64xf32>
    %380 = arith.addf %369, %379 : vector<2x16x64xf32>
    %381 = vector.extract_strided_slice %321 {offsets = [0, 0, 16], sizes = [2, 16, 64], strides = [1, 1, 1]} : vector<2x16x82xf32> to vector<2x16x64xf32>
    %cst_151 = arith.constant 0.000000e+00 : f32
    %382 = vector.shape_cast %11 : vector<1x1x64xi1> to vector<1x1x64xi1>
    %383 = vector.broadcast %382 : vector<1x1x64xi1> to vector<2x16x64xi1>
    %384 = vector.broadcast %cst_151 : f32 to vector<2x16x64xf32>
    %385 = arith.select %383, %381, %384 : vector<2x16x64xi1>, vector<2x16x64xf32>
    %c33 = arith.constant 33 : index
    %c0_152 = arith.constant 0 : index
    %c0_153 = arith.constant 0 : index
    %386 = vector.load %arg2[%c33, %c0_152, %c0_153] : memref<89x16x16xf32, #tpu.memory_space<vmem>>, vector<1x16x16xf32>
    %387 = vector.shape_cast %386 : vector<1x16x16xf32> to vector<16x16xf32>
    %388 = vector.shape_cast %387 : vector<16x16xf32> to vector<1x16x16xf32>
    %389 = vector.broadcast %388 : vector<1x16x16xf32> to vector<2x16x16xf32>
    %cst_154 = arith.constant dense<0.000000e+00> : vector<2x16x64xf32>
    %390 = tpu.matmul %389, %385, %cst_154 {dimension_numbers = #tpu.dot_dimension_numbers<[2], [1], [1], [2], [0, 0, 0, 1, 1, 2], [0], [0]>} : vector<2x16x16xf32>, vector<2x16x64xf32>, vector<2x16x64xf32> -> vector<2x16x64xf32>
    %391 = arith.addf %380, %390 : vector<2x16x64xf32>
    %392 = vector.extract_strided_slice %321 {offsets = [0, 0, 17], sizes = [2, 16, 64], strides = [1, 1, 1]} : vector<2x16x82xf32> to vector<2x16x64xf32>
    %c34 = arith.constant 34 : index
    %c0_155 = arith.constant 0 : index
    %c0_156 = arith.constant 0 : index
    %393 = vector.load %arg2[%c34, %c0_155, %c0_156] : memref<89x16x16xf32, #tpu.memory_space<vmem>>, vector<1x16x16xf32>
    %394 = vector.shape_cast %393 : vector<1x16x16xf32> to vector<16x16xf32>
    %395 = vector.shape_cast %394 : vector<16x16xf32> to vector<1x16x16xf32>
    %396 = vector.broadcast %395 : vector<1x16x16xf32> to vector<2x16x16xf32>
    %cst_157 = arith.constant dense<0.000000e+00> : vector<2x16x64xf32>
    %397 = tpu.matmul %396, %392, %cst_157 {dimension_numbers = #tpu.dot_dimension_numbers<[2], [1], [1], [2], [0, 0, 0, 1, 1, 2], [0], [0]>} : vector<2x16x16xf32>, vector<2x16x64xf32>, vector<2x16x64xf32> -> vector<2x16x64xf32>
    %398 = arith.addf %391, %397 : vector<2x16x64xf32>
    %399 = vector.extract_strided_slice %321 {offsets = [0, 0, 18], sizes = [2, 16, 64], strides = [1, 1, 1]} : vector<2x16x82xf32> to vector<2x16x64xf32>
    %cst_158 = arith.constant 0.000000e+00 : f32
    %400 = vector.shape_cast %13 : vector<1x1x64xi1> to vector<1x1x64xi1>
    %401 = vector.broadcast %400 : vector<1x1x64xi1> to vector<2x16x64xi1>
    %402 = vector.broadcast %cst_158 : f32 to vector<2x16x64xf32>
    %403 = arith.select %401, %399, %402 : vector<2x16x64xi1>, vector<2x16x64xf32>
    %c35 = arith.constant 35 : index
    %c0_159 = arith.constant 0 : index
    %c0_160 = arith.constant 0 : index
    %404 = vector.load %arg2[%c35, %c0_159, %c0_160] : memref<89x16x16xf32, #tpu.memory_space<vmem>>, vector<1x16x16xf32>
    %405 = vector.shape_cast %404 : vector<1x16x16xf32> to vector<16x16xf32>
    %406 = vector.shape_cast %405 : vector<16x16xf32> to vector<1x16x16xf32>
    %407 = vector.broadcast %406 : vector<1x16x16xf32> to vector<2x16x16xf32>
    %cst_161 = arith.constant dense<0.000000e+00> : vector<2x16x64xf32>
    %408 = tpu.matmul %407, %403, %cst_161 {dimension_numbers = #tpu.dot_dimension_numbers<[2], [1], [1], [2], [0, 0, 0, 1, 1, 2], [0], [0]>} : vector<2x16x16xf32>, vector<2x16x64xf32>, vector<2x16x64xf32> -> vector<2x16x64xf32>
    %409 = arith.addf %398, %408 : vector<2x16x64xf32>
    %c3_162 = arith.constant 3 : index
    %c0_163 = arith.constant 0 : index
    %c0_164 = arith.constant 0 : index
    %410 = vector.load %arg3[%c3_162, %c0_163, %c0_164] : memref<11x16x1xf32, #tpu.memory_space<vmem>>, vector<1x16x1xf32>
    %411 = vector.shape_cast %410 : vector<1x16x1xf32> to vector<16x1xf32>
    %412 = vector.shape_cast %411 : vector<16x1xf32> to vector<1x16x1xf32>
    %413 = vector.broadcast %412 : vector<1x16x1xf32> to vector<2x16x64xf32>
    %414 = arith.addf %409, %413 : vector<2x16x64xf32>
    %cst_165 = arith.constant 0.000000e+00 : f32
    %415 = vector.broadcast %cst_165 : f32 to vector<2x16x64xf32>
    %416 = arith.maximumf %414, %415 : vector<2x16x64xf32>
    %c0_166 = arith.constant 0 : index
    %c0_167 = arith.constant 0 : index
    %417 = vector.load %arg5[%c0_166, %c0_167] : memref<64x16xf32, #tpu.memory_space<vmem>>, vector<64x16xf32>
    %418 = vector.shape_cast %416 : vector<2x16x64xf32> to vector<32x64xf32>
    %cst_168 = arith.constant dense<0.000000e+00> : vector<32x16xf32>
    %419 = tpu.matmul %418, %417, %cst_168 {dimension_numbers = #tpu.dot_dimension_numbers<[1], [0], [0], [1], [0, 0, 1, 1], [], []>} : vector<32x64xf32>, vector<64x16xf32>, vector<32x16xf32> -> vector<32x16xf32>
    %420 = vector.shape_cast %419 : vector<32x16xf32> to vector<2x16x16xf32>
    %cst_169 = arith.constant 0.000000e+00 : f32
    %421 = vector.broadcast %cst_169 : f32 to vector<2x16x5xf32>
    %422 = tpu.concatenate %421, %420, %421 in 2 : vector<2x16x5xf32>, vector<2x16x16xf32>, vector<2x16x5xf32> -> vector<2x16x26xf32>
    %cst_170 = arith.constant 0.000000e+00 : f32
    %423 = vector.broadcast %cst_170 : f32 to vector<2x16x16xf32>
    %424 = vector.extract_strided_slice %422 {offsets = [0, 0, 0], sizes = [2, 16, 16], strides = [1, 1, 1]} : vector<2x16x26xf32> to vector<2x16x16xf32>
    %cst_171 = arith.constant 0.000000e+00 : f32
    %425 = vector.shape_cast %18 : vector<1x1x16xi1> to vector<1x1x16xi1>
    %426 = vector.broadcast %425 : vector<1x1x16xi1> to vector<2x16x16xi1>
    %427 = vector.broadcast %cst_171 : f32 to vector<2x16x16xf32>
    %428 = arith.select %426, %424, %427 : vector<2x16x16xi1>, vector<2x16x16xf32>
    %c36 = arith.constant 36 : index
    %c0_172 = arith.constant 0 : index
    %c0_173 = arith.constant 0 : index
    %429 = vector.load %arg2[%c36, %c0_172, %c0_173] : memref<89x16x16xf32, #tpu.memory_space<vmem>>, vector<1x16x16xf32>
    %430 = vector.shape_cast %429 : vector<1x16x16xf32> to vector<16x16xf32>
    %431 = vector.shape_cast %430 : vector<16x16xf32> to vector<1x16x16xf32>
    %432 = vector.broadcast %431 : vector<1x16x16xf32> to vector<2x16x16xf32>
    %cst_174 = arith.constant dense<0.000000e+00> : vector<2x16x16xf32>
    %433 = tpu.matmul %432, %428, %cst_174 {dimension_numbers = #tpu.dot_dimension_numbers<[2], [1], [1], [2], [0, 0, 0, 1, 1, 2], [0], [0]>} : vector<2x16x16xf32>, vector<2x16x16xf32>, vector<2x16x16xf32> -> vector<2x16x16xf32>
    %434 = arith.addf %423, %433 : vector<2x16x16xf32>
    %435 = vector.extract_strided_slice %422 {offsets = [0, 0, 1], sizes = [2, 16, 16], strides = [1, 1, 1]} : vector<2x16x26xf32> to vector<2x16x16xf32>
    %c37 = arith.constant 37 : index
    %c0_175 = arith.constant 0 : index
    %c0_176 = arith.constant 0 : index
    %436 = vector.load %arg2[%c37, %c0_175, %c0_176] : memref<89x16x16xf32, #tpu.memory_space<vmem>>, vector<1x16x16xf32>
    %437 = vector.shape_cast %436 : vector<1x16x16xf32> to vector<16x16xf32>
    %438 = vector.shape_cast %437 : vector<16x16xf32> to vector<1x16x16xf32>
    %439 = vector.broadcast %438 : vector<1x16x16xf32> to vector<2x16x16xf32>
    %cst_177 = arith.constant dense<0.000000e+00> : vector<2x16x16xf32>
    %440 = tpu.matmul %439, %435, %cst_177 {dimension_numbers = #tpu.dot_dimension_numbers<[2], [1], [1], [2], [0, 0, 0, 1, 1, 2], [0], [0]>} : vector<2x16x16xf32>, vector<2x16x16xf32>, vector<2x16x16xf32> -> vector<2x16x16xf32>
    %441 = arith.addf %434, %440 : vector<2x16x16xf32>
    %442 = vector.extract_strided_slice %422 {offsets = [0, 0, 2], sizes = [2, 16, 16], strides = [1, 1, 1]} : vector<2x16x26xf32> to vector<2x16x16xf32>
    %cst_178 = arith.constant 0.000000e+00 : f32
    %443 = vector.shape_cast %20 : vector<1x1x16xi1> to vector<1x1x16xi1>
    %444 = vector.broadcast %443 : vector<1x1x16xi1> to vector<2x16x16xi1>
    %445 = vector.broadcast %cst_178 : f32 to vector<2x16x16xf32>
    %446 = arith.select %444, %442, %445 : vector<2x16x16xi1>, vector<2x16x16xf32>
    %c38 = arith.constant 38 : index
    %c0_179 = arith.constant 0 : index
    %c0_180 = arith.constant 0 : index
    %447 = vector.load %arg2[%c38, %c0_179, %c0_180] : memref<89x16x16xf32, #tpu.memory_space<vmem>>, vector<1x16x16xf32>
    %448 = vector.shape_cast %447 : vector<1x16x16xf32> to vector<16x16xf32>
    %449 = vector.shape_cast %448 : vector<16x16xf32> to vector<1x16x16xf32>
    %450 = vector.broadcast %449 : vector<1x16x16xf32> to vector<2x16x16xf32>
    %cst_181 = arith.constant dense<0.000000e+00> : vector<2x16x16xf32>
    %451 = tpu.matmul %450, %446, %cst_181 {dimension_numbers = #tpu.dot_dimension_numbers<[2], [1], [1], [2], [0, 0, 0, 1, 1, 2], [0], [0]>} : vector<2x16x16xf32>, vector<2x16x16xf32>, vector<2x16x16xf32> -> vector<2x16x16xf32>
    %452 = arith.addf %441, %451 : vector<2x16x16xf32>
    %453 = vector.extract_strided_slice %422 {offsets = [0, 0, 4], sizes = [2, 16, 16], strides = [1, 1, 1]} : vector<2x16x26xf32> to vector<2x16x16xf32>
    %cst_182 = arith.constant 0.000000e+00 : f32
    %454 = vector.shape_cast %18 : vector<1x1x16xi1> to vector<1x1x16xi1>
    %455 = vector.broadcast %454 : vector<1x1x16xi1> to vector<2x16x16xi1>
    %456 = vector.broadcast %cst_182 : f32 to vector<2x16x16xf32>
    %457 = arith.select %455, %453, %456 : vector<2x16x16xi1>, vector<2x16x16xf32>
    %c39 = arith.constant 39 : index
    %c0_183 = arith.constant 0 : index
    %c0_184 = arith.constant 0 : index
    %458 = vector.load %arg2[%c39, %c0_183, %c0_184] : memref<89x16x16xf32, #tpu.memory_space<vmem>>, vector<1x16x16xf32>
    %459 = vector.shape_cast %458 : vector<1x16x16xf32> to vector<16x16xf32>
    %460 = vector.shape_cast %459 : vector<16x16xf32> to vector<1x16x16xf32>
    %461 = vector.broadcast %460 : vector<1x16x16xf32> to vector<2x16x16xf32>
    %cst_185 = arith.constant dense<0.000000e+00> : vector<2x16x16xf32>
    %462 = tpu.matmul %461, %457, %cst_185 {dimension_numbers = #tpu.dot_dimension_numbers<[2], [1], [1], [2], [0, 0, 0, 1, 1, 2], [0], [0]>} : vector<2x16x16xf32>, vector<2x16x16xf32>, vector<2x16x16xf32> -> vector<2x16x16xf32>
    %463 = arith.addf %452, %462 : vector<2x16x16xf32>
    %464 = vector.extract_strided_slice %422 {offsets = [0, 0, 5], sizes = [2, 16, 16], strides = [1, 1, 1]} : vector<2x16x26xf32> to vector<2x16x16xf32>
    %c40 = arith.constant 40 : index
    %c0_186 = arith.constant 0 : index
    %c0_187 = arith.constant 0 : index
    %465 = vector.load %arg2[%c40, %c0_186, %c0_187] : memref<89x16x16xf32, #tpu.memory_space<vmem>>, vector<1x16x16xf32>
    %466 = vector.shape_cast %465 : vector<1x16x16xf32> to vector<16x16xf32>
    %467 = vector.shape_cast %466 : vector<16x16xf32> to vector<1x16x16xf32>
    %468 = vector.broadcast %467 : vector<1x16x16xf32> to vector<2x16x16xf32>
    %cst_188 = arith.constant dense<0.000000e+00> : vector<2x16x16xf32>
    %469 = tpu.matmul %468, %464, %cst_188 {dimension_numbers = #tpu.dot_dimension_numbers<[2], [1], [1], [2], [0, 0, 0, 1, 1, 2], [0], [0]>} : vector<2x16x16xf32>, vector<2x16x16xf32>, vector<2x16x16xf32> -> vector<2x16x16xf32>
    %470 = arith.addf %463, %469 : vector<2x16x16xf32>
    %471 = vector.extract_strided_slice %422 {offsets = [0, 0, 6], sizes = [2, 16, 16], strides = [1, 1, 1]} : vector<2x16x26xf32> to vector<2x16x16xf32>
    %cst_189 = arith.constant 0.000000e+00 : f32
    %472 = vector.shape_cast %20 : vector<1x1x16xi1> to vector<1x1x16xi1>
    %473 = vector.broadcast %472 : vector<1x1x16xi1> to vector<2x16x16xi1>
    %474 = vector.broadcast %cst_189 : f32 to vector<2x16x16xf32>
    %475 = arith.select %473, %471, %474 : vector<2x16x16xi1>, vector<2x16x16xf32>
    %c41 = arith.constant 41 : index
    %c0_190 = arith.constant 0 : index
    %c0_191 = arith.constant 0 : index
    %476 = vector.load %arg2[%c41, %c0_190, %c0_191] : memref<89x16x16xf32, #tpu.memory_space<vmem>>, vector<1x16x16xf32>
    %477 = vector.shape_cast %476 : vector<1x16x16xf32> to vector<16x16xf32>
    %478 = vector.shape_cast %477 : vector<16x16xf32> to vector<1x16x16xf32>
    %479 = vector.broadcast %478 : vector<1x16x16xf32> to vector<2x16x16xf32>
    %cst_192 = arith.constant dense<0.000000e+00> : vector<2x16x16xf32>
    %480 = tpu.matmul %479, %475, %cst_192 {dimension_numbers = #tpu.dot_dimension_numbers<[2], [1], [1], [2], [0, 0, 0, 1, 1, 2], [0], [0]>} : vector<2x16x16xf32>, vector<2x16x16xf32>, vector<2x16x16xf32> -> vector<2x16x16xf32>
    %481 = arith.addf %470, %480 : vector<2x16x16xf32>
    %482 = vector.extract_strided_slice %422 {offsets = [0, 0, 8], sizes = [2, 16, 16], strides = [1, 1, 1]} : vector<2x16x26xf32> to vector<2x16x16xf32>
    %cst_193 = arith.constant 0.000000e+00 : f32
    %483 = vector.shape_cast %18 : vector<1x1x16xi1> to vector<1x1x16xi1>
    %484 = vector.broadcast %483 : vector<1x1x16xi1> to vector<2x16x16xi1>
    %485 = vector.broadcast %cst_193 : f32 to vector<2x16x16xf32>
    %486 = arith.select %484, %482, %485 : vector<2x16x16xi1>, vector<2x16x16xf32>
    %c42 = arith.constant 42 : index
    %c0_194 = arith.constant 0 : index
    %c0_195 = arith.constant 0 : index
    %487 = vector.load %arg2[%c42, %c0_194, %c0_195] : memref<89x16x16xf32, #tpu.memory_space<vmem>>, vector<1x16x16xf32>
    %488 = vector.shape_cast %487 : vector<1x16x16xf32> to vector<16x16xf32>
    %489 = vector.shape_cast %488 : vector<16x16xf32> to vector<1x16x16xf32>
    %490 = vector.broadcast %489 : vector<1x16x16xf32> to vector<2x16x16xf32>
    %cst_196 = arith.constant dense<0.000000e+00> : vector<2x16x16xf32>
    %491 = tpu.matmul %490, %486, %cst_196 {dimension_numbers = #tpu.dot_dimension_numbers<[2], [1], [1], [2], [0, 0, 0, 1, 1, 2], [0], [0]>} : vector<2x16x16xf32>, vector<2x16x16xf32>, vector<2x16x16xf32> -> vector<2x16x16xf32>
    %492 = arith.addf %481, %491 : vector<2x16x16xf32>
    %493 = vector.extract_strided_slice %422 {offsets = [0, 0, 9], sizes = [2, 16, 16], strides = [1, 1, 1]} : vector<2x16x26xf32> to vector<2x16x16xf32>
    %c43 = arith.constant 43 : index
    %c0_197 = arith.constant 0 : index
    %c0_198 = arith.constant 0 : index
    %494 = vector.load %arg2[%c43, %c0_197, %c0_198] : memref<89x16x16xf32, #tpu.memory_space<vmem>>, vector<1x16x16xf32>
    %495 = vector.shape_cast %494 : vector<1x16x16xf32> to vector<16x16xf32>
    %496 = vector.shape_cast %495 : vector<16x16xf32> to vector<1x16x16xf32>
    %497 = vector.broadcast %496 : vector<1x16x16xf32> to vector<2x16x16xf32>
    %cst_199 = arith.constant dense<0.000000e+00> : vector<2x16x16xf32>
    %498 = tpu.matmul %497, %493, %cst_199 {dimension_numbers = #tpu.dot_dimension_numbers<[2], [1], [1], [2], [0, 0, 0, 1, 1, 2], [0], [0]>} : vector<2x16x16xf32>, vector<2x16x16xf32>, vector<2x16x16xf32> -> vector<2x16x16xf32>
    %499 = arith.addf %492, %498 : vector<2x16x16xf32>
    %500 = vector.extract_strided_slice %422 {offsets = [0, 0, 10], sizes = [2, 16, 16], strides = [1, 1, 1]} : vector<2x16x26xf32> to vector<2x16x16xf32>
    %cst_200 = arith.constant 0.000000e+00 : f32
    %501 = vector.shape_cast %20 : vector<1x1x16xi1> to vector<1x1x16xi1>
    %502 = vector.broadcast %501 : vector<1x1x16xi1> to vector<2x16x16xi1>
    %503 = vector.broadcast %cst_200 : f32 to vector<2x16x16xf32>
    %504 = arith.select %502, %500, %503 : vector<2x16x16xi1>, vector<2x16x16xf32>
    %c44 = arith.constant 44 : index
    %c0_201 = arith.constant 0 : index
    %c0_202 = arith.constant 0 : index
    %505 = vector.load %arg2[%c44, %c0_201, %c0_202] : memref<89x16x16xf32, #tpu.memory_space<vmem>>, vector<1x16x16xf32>
    %506 = vector.shape_cast %505 : vector<1x16x16xf32> to vector<16x16xf32>
    %507 = vector.shape_cast %506 : vector<16x16xf32> to vector<1x16x16xf32>
    %508 = vector.broadcast %507 : vector<1x16x16xf32> to vector<2x16x16xf32>
    %cst_203 = arith.constant dense<0.000000e+00> : vector<2x16x16xf32>
    %509 = tpu.matmul %508, %504, %cst_203 {dimension_numbers = #tpu.dot_dimension_numbers<[2], [1], [1], [2], [0, 0, 0, 1, 1, 2], [0], [0]>} : vector<2x16x16xf32>, vector<2x16x16xf32>, vector<2x16x16xf32> -> vector<2x16x16xf32>
    %510 = arith.addf %499, %509 : vector<2x16x16xf32>
    %c4_204 = arith.constant 4 : index
    %c0_205 = arith.constant 0 : index
    %c0_206 = arith.constant 0 : index
    %511 = vector.load %arg3[%c4_204, %c0_205, %c0_206] : memref<11x16x1xf32, #tpu.memory_space<vmem>>, vector<1x16x1xf32>
    %512 = vector.shape_cast %511 : vector<1x16x1xf32> to vector<16x1xf32>
    %513 = vector.shape_cast %512 : vector<16x1xf32> to vector<1x16x1xf32>
    %514 = vector.broadcast %513 : vector<1x16x1xf32> to vector<2x16x16xf32>
    %515 = arith.addf %510, %514 : vector<2x16x16xf32>
    %cst_207 = arith.constant 0.000000e+00 : f32
    %516 = vector.broadcast %cst_207 : f32 to vector<2x16x16xf32>
    %517 = arith.maximumf %515, %516 : vector<2x16x16xf32>
    %cst_208 = arith.constant 0.000000e+00 : f32
    %518 = vector.broadcast %cst_208 : f32 to vector<2x16x5xf32>
    %519 = tpu.concatenate %518, %517, %518 in 2 : vector<2x16x5xf32>, vector<2x16x16xf32>, vector<2x16x5xf32> -> vector<2x16x26xf32>
    %cst_209 = arith.constant 0.000000e+00 : f32
    %520 = vector.broadcast %cst_209 : f32 to vector<2x16x16xf32>
    %521 = vector.extract_strided_slice %519 {offsets = [0, 0, 0], sizes = [2, 16, 16], strides = [1, 1, 1]} : vector<2x16x26xf32> to vector<2x16x16xf32>
    %cst_210 = arith.constant 0.000000e+00 : f32
    %522 = vector.shape_cast %18 : vector<1x1x16xi1> to vector<1x1x16xi1>
    %523 = vector.broadcast %522 : vector<1x1x16xi1> to vector<2x16x16xi1>
    %524 = vector.broadcast %cst_210 : f32 to vector<2x16x16xf32>
    %525 = arith.select %523, %521, %524 : vector<2x16x16xi1>, vector<2x16x16xf32>
    %c45 = arith.constant 45 : index
    %c0_211 = arith.constant 0 : index
    %c0_212 = arith.constant 0 : index
    %526 = vector.load %arg2[%c45, %c0_211, %c0_212] : memref<89x16x16xf32, #tpu.memory_space<vmem>>, vector<1x16x16xf32>
    %527 = vector.shape_cast %526 : vector<1x16x16xf32> to vector<16x16xf32>
    %528 = vector.shape_cast %527 : vector<16x16xf32> to vector<1x16x16xf32>
    %529 = vector.broadcast %528 : vector<1x16x16xf32> to vector<2x16x16xf32>
    %cst_213 = arith.constant dense<0.000000e+00> : vector<2x16x16xf32>
    %530 = tpu.matmul %529, %525, %cst_213 {dimension_numbers = #tpu.dot_dimension_numbers<[2], [1], [1], [2], [0, 0, 0, 1, 1, 2], [0], [0]>} : vector<2x16x16xf32>, vector<2x16x16xf32>, vector<2x16x16xf32> -> vector<2x16x16xf32>
    %531 = arith.addf %520, %530 : vector<2x16x16xf32>
    %532 = vector.extract_strided_slice %519 {offsets = [0, 0, 1], sizes = [2, 16, 16], strides = [1, 1, 1]} : vector<2x16x26xf32> to vector<2x16x16xf32>
    %c46 = arith.constant 46 : index
    %c0_214 = arith.constant 0 : index
    %c0_215 = arith.constant 0 : index
    %533 = vector.load %arg2[%c46, %c0_214, %c0_215] : memref<89x16x16xf32, #tpu.memory_space<vmem>>, vector<1x16x16xf32>
    %534 = vector.shape_cast %533 : vector<1x16x16xf32> to vector<16x16xf32>
    %535 = vector.shape_cast %534 : vector<16x16xf32> to vector<1x16x16xf32>
    %536 = vector.broadcast %535 : vector<1x16x16xf32> to vector<2x16x16xf32>
    %cst_216 = arith.constant dense<0.000000e+00> : vector<2x16x16xf32>
    %537 = tpu.matmul %536, %532, %cst_216 {dimension_numbers = #tpu.dot_dimension_numbers<[2], [1], [1], [2], [0, 0, 0, 1, 1, 2], [0], [0]>} : vector<2x16x16xf32>, vector<2x16x16xf32>, vector<2x16x16xf32> -> vector<2x16x16xf32>
    %538 = arith.addf %531, %537 : vector<2x16x16xf32>
    %539 = vector.extract_strided_slice %519 {offsets = [0, 0, 2], sizes = [2, 16, 16], strides = [1, 1, 1]} : vector<2x16x26xf32> to vector<2x16x16xf32>
    %cst_217 = arith.constant 0.000000e+00 : f32
    %540 = vector.shape_cast %20 : vector<1x1x16xi1> to vector<1x1x16xi1>
    %541 = vector.broadcast %540 : vector<1x1x16xi1> to vector<2x16x16xi1>
    %542 = vector.broadcast %cst_217 : f32 to vector<2x16x16xf32>
    %543 = arith.select %541, %539, %542 : vector<2x16x16xi1>, vector<2x16x16xf32>
    %c47 = arith.constant 47 : index
    %c0_218 = arith.constant 0 : index
    %c0_219 = arith.constant 0 : index
    %544 = vector.load %arg2[%c47, %c0_218, %c0_219] : memref<89x16x16xf32, #tpu.memory_space<vmem>>, vector<1x16x16xf32>
    %545 = vector.shape_cast %544 : vector<1x16x16xf32> to vector<16x16xf32>
    %546 = vector.shape_cast %545 : vector<16x16xf32> to vector<1x16x16xf32>
    %547 = vector.broadcast %546 : vector<1x16x16xf32> to vector<2x16x16xf32>
    %cst_220 = arith.constant dense<0.000000e+00> : vector<2x16x16xf32>
    %548 = tpu.matmul %547, %543, %cst_220 {dimension_numbers = #tpu.dot_dimension_numbers<[2], [1], [1], [2], [0, 0, 0, 1, 1, 2], [0], [0]>} : vector<2x16x16xf32>, vector<2x16x16xf32>, vector<2x16x16xf32> -> vector<2x16x16xf32>
    %549 = arith.addf %538, %548 : vector<2x16x16xf32>
    %550 = vector.extract_strided_slice %519 {offsets = [0, 0, 4], sizes = [2, 16, 16], strides = [1, 1, 1]} : vector<2x16x26xf32> to vector<2x16x16xf32>
    %cst_221 = arith.constant 0.000000e+00 : f32
    %551 = vector.shape_cast %18 : vector<1x1x16xi1> to vector<1x1x16xi1>
    %552 = vector.broadcast %551 : vector<1x1x16xi1> to vector<2x16x16xi1>
    %553 = vector.broadcast %cst_221 : f32 to vector<2x16x16xf32>
    %554 = arith.select %552, %550, %553 : vector<2x16x16xi1>, vector<2x16x16xf32>
    %c48 = arith.constant 48 : index
    %c0_222 = arith.constant 0 : index
    %c0_223 = arith.constant 0 : index
    %555 = vector.load %arg2[%c48, %c0_222, %c0_223] : memref<89x16x16xf32, #tpu.memory_space<vmem>>, vector<1x16x16xf32>
    %556 = vector.shape_cast %555 : vector<1x16x16xf32> to vector<16x16xf32>
    %557 = vector.shape_cast %556 : vector<16x16xf32> to vector<1x16x16xf32>
    %558 = vector.broadcast %557 : vector<1x16x16xf32> to vector<2x16x16xf32>
    %cst_224 = arith.constant dense<0.000000e+00> : vector<2x16x16xf32>
    %559 = tpu.matmul %558, %554, %cst_224 {dimension_numbers = #tpu.dot_dimension_numbers<[2], [1], [1], [2], [0, 0, 0, 1, 1, 2], [0], [0]>} : vector<2x16x16xf32>, vector<2x16x16xf32>, vector<2x16x16xf32> -> vector<2x16x16xf32>
    %560 = arith.addf %549, %559 : vector<2x16x16xf32>
    %561 = vector.extract_strided_slice %519 {offsets = [0, 0, 5], sizes = [2, 16, 16], strides = [1, 1, 1]} : vector<2x16x26xf32> to vector<2x16x16xf32>
    %c49 = arith.constant 49 : index
    %c0_225 = arith.constant 0 : index
    %c0_226 = arith.constant 0 : index
    %562 = vector.load %arg2[%c49, %c0_225, %c0_226] : memref<89x16x16xf32, #tpu.memory_space<vmem>>, vector<1x16x16xf32>
    %563 = vector.shape_cast %562 : vector<1x16x16xf32> to vector<16x16xf32>
    %564 = vector.shape_cast %563 : vector<16x16xf32> to vector<1x16x16xf32>
    %565 = vector.broadcast %564 : vector<1x16x16xf32> to vector<2x16x16xf32>
    %cst_227 = arith.constant dense<0.000000e+00> : vector<2x16x16xf32>
    %566 = tpu.matmul %565, %561, %cst_227 {dimension_numbers = #tpu.dot_dimension_numbers<[2], [1], [1], [2], [0, 0, 0, 1, 1, 2], [0], [0]>} : vector<2x16x16xf32>, vector<2x16x16xf32>, vector<2x16x16xf32> -> vector<2x16x16xf32>
    %567 = arith.addf %560, %566 : vector<2x16x16xf32>
    %568 = vector.extract_strided_slice %519 {offsets = [0, 0, 6], sizes = [2, 16, 16], strides = [1, 1, 1]} : vector<2x16x26xf32> to vector<2x16x16xf32>
    %cst_228 = arith.constant 0.000000e+00 : f32
    %569 = vector.shape_cast %20 : vector<1x1x16xi1> to vector<1x1x16xi1>
    %570 = vector.broadcast %569 : vector<1x1x16xi1> to vector<2x16x16xi1>
    %571 = vector.broadcast %cst_228 : f32 to vector<2x16x16xf32>
    %572 = arith.select %570, %568, %571 : vector<2x16x16xi1>, vector<2x16x16xf32>
    %c50 = arith.constant 50 : index
    %c0_229 = arith.constant 0 : index
    %c0_230 = arith.constant 0 : index
    %573 = vector.load %arg2[%c50, %c0_229, %c0_230] : memref<89x16x16xf32, #tpu.memory_space<vmem>>, vector<1x16x16xf32>
    %574 = vector.shape_cast %573 : vector<1x16x16xf32> to vector<16x16xf32>
    %575 = vector.shape_cast %574 : vector<16x16xf32> to vector<1x16x16xf32>
    %576 = vector.broadcast %575 : vector<1x16x16xf32> to vector<2x16x16xf32>
    %cst_231 = arith.constant dense<0.000000e+00> : vector<2x16x16xf32>
    %577 = tpu.matmul %576, %572, %cst_231 {dimension_numbers = #tpu.dot_dimension_numbers<[2], [1], [1], [2], [0, 0, 0, 1, 1, 2], [0], [0]>} : vector<2x16x16xf32>, vector<2x16x16xf32>, vector<2x16x16xf32> -> vector<2x16x16xf32>
    %578 = arith.addf %567, %577 : vector<2x16x16xf32>
    %579 = vector.extract_strided_slice %519 {offsets = [0, 0, 8], sizes = [2, 16, 16], strides = [1, 1, 1]} : vector<2x16x26xf32> to vector<2x16x16xf32>
    %cst_232 = arith.constant 0.000000e+00 : f32
    %580 = vector.shape_cast %18 : vector<1x1x16xi1> to vector<1x1x16xi1>
    %581 = vector.broadcast %580 : vector<1x1x16xi1> to vector<2x16x16xi1>
    %582 = vector.broadcast %cst_232 : f32 to vector<2x16x16xf32>
    %583 = arith.select %581, %579, %582 : vector<2x16x16xi1>, vector<2x16x16xf32>
    %c51 = arith.constant 51 : index
    %c0_233 = arith.constant 0 : index
    %c0_234 = arith.constant 0 : index
    %584 = vector.load %arg2[%c51, %c0_233, %c0_234] : memref<89x16x16xf32, #tpu.memory_space<vmem>>, vector<1x16x16xf32>
    %585 = vector.shape_cast %584 : vector<1x16x16xf32> to vector<16x16xf32>
    %586 = vector.shape_cast %585 : vector<16x16xf32> to vector<1x16x16xf32>
    %587 = vector.broadcast %586 : vector<1x16x16xf32> to vector<2x16x16xf32>
    %cst_235 = arith.constant dense<0.000000e+00> : vector<2x16x16xf32>
    %588 = tpu.matmul %587, %583, %cst_235 {dimension_numbers = #tpu.dot_dimension_numbers<[2], [1], [1], [2], [0, 0, 0, 1, 1, 2], [0], [0]>} : vector<2x16x16xf32>, vector<2x16x16xf32>, vector<2x16x16xf32> -> vector<2x16x16xf32>
    %589 = arith.addf %578, %588 : vector<2x16x16xf32>
    %590 = vector.extract_strided_slice %519 {offsets = [0, 0, 9], sizes = [2, 16, 16], strides = [1, 1, 1]} : vector<2x16x26xf32> to vector<2x16x16xf32>
    %c52 = arith.constant 52 : index
    %c0_236 = arith.constant 0 : index
    %c0_237 = arith.constant 0 : index
    %591 = vector.load %arg2[%c52, %c0_236, %c0_237] : memref<89x16x16xf32, #tpu.memory_space<vmem>>, vector<1x16x16xf32>
    %592 = vector.shape_cast %591 : vector<1x16x16xf32> to vector<16x16xf32>
    %593 = vector.shape_cast %592 : vector<16x16xf32> to vector<1x16x16xf32>
    %594 = vector.broadcast %593 : vector<1x16x16xf32> to vector<2x16x16xf32>
    %cst_238 = arith.constant dense<0.000000e+00> : vector<2x16x16xf32>
    %595 = tpu.matmul %594, %590, %cst_238 {dimension_numbers = #tpu.dot_dimension_numbers<[2], [1], [1], [2], [0, 0, 0, 1, 1, 2], [0], [0]>} : vector<2x16x16xf32>, vector<2x16x16xf32>, vector<2x16x16xf32> -> vector<2x16x16xf32>
    %596 = arith.addf %589, %595 : vector<2x16x16xf32>
    %597 = vector.extract_strided_slice %519 {offsets = [0, 0, 10], sizes = [2, 16, 16], strides = [1, 1, 1]} : vector<2x16x26xf32> to vector<2x16x16xf32>
    %cst_239 = arith.constant 0.000000e+00 : f32
    %598 = vector.shape_cast %20 : vector<1x1x16xi1> to vector<1x1x16xi1>
    %599 = vector.broadcast %598 : vector<1x1x16xi1> to vector<2x16x16xi1>
    %600 = vector.broadcast %cst_239 : f32 to vector<2x16x16xf32>
    %601 = arith.select %599, %597, %600 : vector<2x16x16xi1>, vector<2x16x16xf32>
    %c53 = arith.constant 53 : index
    %c0_240 = arith.constant 0 : index
    %c0_241 = arith.constant 0 : index
    %602 = vector.load %arg2[%c53, %c0_240, %c0_241] : memref<89x16x16xf32, #tpu.memory_space<vmem>>, vector<1x16x16xf32>
    %603 = vector.shape_cast %602 : vector<1x16x16xf32> to vector<16x16xf32>
    %604 = vector.shape_cast %603 : vector<16x16xf32> to vector<1x16x16xf32>
    %605 = vector.broadcast %604 : vector<1x16x16xf32> to vector<2x16x16xf32>
    %cst_242 = arith.constant dense<0.000000e+00> : vector<2x16x16xf32>
    %606 = tpu.matmul %605, %601, %cst_242 {dimension_numbers = #tpu.dot_dimension_numbers<[2], [1], [1], [2], [0, 0, 0, 1, 1, 2], [0], [0]>} : vector<2x16x16xf32>, vector<2x16x16xf32>, vector<2x16x16xf32> -> vector<2x16x16xf32>
    %607 = arith.addf %596, %606 : vector<2x16x16xf32>
    %c5_243 = arith.constant 5 : index
    %c0_244 = arith.constant 0 : index
    %c0_245 = arith.constant 0 : index
    %608 = vector.load %arg3[%c5_243, %c0_244, %c0_245] : memref<11x16x1xf32, #tpu.memory_space<vmem>>, vector<1x16x1xf32>
    %609 = vector.shape_cast %608 : vector<1x16x1xf32> to vector<16x1xf32>
    %610 = vector.shape_cast %609 : vector<16x1xf32> to vector<1x16x1xf32>
    %611 = vector.broadcast %610 : vector<1x16x1xf32> to vector<2x16x16xf32>
    %612 = arith.addf %607, %611 : vector<2x16x16xf32>
    %cst_246 = arith.constant 0.000000e+00 : f32
    %613 = vector.broadcast %cst_246 : f32 to vector<2x16x16xf32>
    %614 = arith.maximumf %612, %613 : vector<2x16x16xf32>
    %cst_247 = arith.constant 0.000000e+00 : f32
    %615 = vector.broadcast %cst_247 : f32 to vector<2x16x64xf32>
    %c81 = arith.constant 81 : index
    %c0_248 = arith.constant 0 : index
    %c0_249 = arith.constant 0 : index
    %616 = vector.load %arg2[%c81, %c0_248, %c0_249] : memref<89x16x16xf32, #tpu.memory_space<vmem>>, vector<1x16x16xf32>
    %617 = vector.shape_cast %616 : vector<1x16x16xf32> to vector<16x16xf32>
    %618 = vector.shape_cast %617 : vector<16x16xf32> to vector<1x16x16xf32>
    %619 = vector.broadcast %618 : vector<1x16x16xf32> to vector<2x16x16xf32>
    %cst_250 = arith.constant dense<0.000000e+00> : vector<2x16x16xf32>
    %620 = tpu.matmul %619, %614, %cst_250 {dimension_numbers = #tpu.dot_dimension_numbers<[2], [1], [1], [2], [0, 0, 0, 1, 1, 2], [0], [0]>} : vector<2x16x16xf32>, vector<2x16x16xf32>, vector<2x16x16xf32> -> vector<2x16x16xf32>
    %c0_251 = arith.constant 0 : index
    %c0_252 = arith.constant 0 : index
    %c0_253 = arith.constant 0 : index
    %621 = vector.load %arg6[%c0_251, %c0_252, %c0_253] : memref<4x16x64xf32, #tpu.memory_space<vmem>>, vector<1x16x64xf32>
    %622 = vector.shape_cast %621 : vector<1x16x64xf32> to vector<16x64xf32>
    %623 = vector.shape_cast %620 : vector<2x16x16xf32> to vector<32x16xf32>
    %cst_254 = arith.constant dense<0.000000e+00> : vector<32x64xf32>
    %624 = tpu.matmul %623, %622, %cst_254 {dimension_numbers = #tpu.dot_dimension_numbers<[1], [0], [0], [1], [0, 0, 1, 1], [], []>} : vector<32x16xf32>, vector<16x64xf32>, vector<32x64xf32> -> vector<32x64xf32>
    %625 = vector.shape_cast %624 : vector<32x64xf32> to vector<2x16x64xf32>
    %626 = arith.addf %615, %625 : vector<2x16x64xf32>
    %c82 = arith.constant 82 : index
    %c0_255 = arith.constant 0 : index
    %c0_256 = arith.constant 0 : index
    %627 = vector.load %arg2[%c82, %c0_255, %c0_256] : memref<89x16x16xf32, #tpu.memory_space<vmem>>, vector<1x16x16xf32>
    %628 = vector.shape_cast %627 : vector<1x16x16xf32> to vector<16x16xf32>
    %629 = vector.shape_cast %628 : vector<16x16xf32> to vector<1x16x16xf32>
    %630 = vector.broadcast %629 : vector<1x16x16xf32> to vector<2x16x16xf32>
    %cst_257 = arith.constant dense<0.000000e+00> : vector<2x16x16xf32>
    %631 = tpu.matmul %630, %614, %cst_257 {dimension_numbers = #tpu.dot_dimension_numbers<[2], [1], [1], [2], [0, 0, 0, 1, 1, 2], [0], [0]>} : vector<2x16x16xf32>, vector<2x16x16xf32>, vector<2x16x16xf32> -> vector<2x16x16xf32>
    %c1_258 = arith.constant 1 : index
    %c0_259 = arith.constant 0 : index
    %c0_260 = arith.constant 0 : index
    %632 = vector.load %arg6[%c1_258, %c0_259, %c0_260] : memref<4x16x64xf32, #tpu.memory_space<vmem>>, vector<1x16x64xf32>
    %633 = vector.shape_cast %632 : vector<1x16x64xf32> to vector<16x64xf32>
    %634 = vector.shape_cast %631 : vector<2x16x16xf32> to vector<32x16xf32>
    %cst_261 = arith.constant dense<0.000000e+00> : vector<32x64xf32>
    %635 = tpu.matmul %634, %633, %cst_261 {dimension_numbers = #tpu.dot_dimension_numbers<[1], [0], [0], [1], [0, 0, 1, 1], [], []>} : vector<32x16xf32>, vector<16x64xf32>, vector<32x64xf32> -> vector<32x64xf32>
    %636 = vector.shape_cast %635 : vector<32x64xf32> to vector<2x16x64xf32>
    %637 = arith.addf %626, %636 : vector<2x16x64xf32>
    %c83 = arith.constant 83 : index
    %c0_262 = arith.constant 0 : index
    %c0_263 = arith.constant 0 : index
    %638 = vector.load %arg2[%c83, %c0_262, %c0_263] : memref<89x16x16xf32, #tpu.memory_space<vmem>>, vector<1x16x16xf32>
    %639 = vector.shape_cast %638 : vector<1x16x16xf32> to vector<16x16xf32>
    %640 = vector.shape_cast %639 : vector<16x16xf32> to vector<1x16x16xf32>
    %641 = vector.broadcast %640 : vector<1x16x16xf32> to vector<2x16x16xf32>
    %cst_264 = arith.constant dense<0.000000e+00> : vector<2x16x16xf32>
    %642 = tpu.matmul %641, %614, %cst_264 {dimension_numbers = #tpu.dot_dimension_numbers<[2], [1], [1], [2], [0, 0, 0, 1, 1, 2], [0], [0]>} : vector<2x16x16xf32>, vector<2x16x16xf32>, vector<2x16x16xf32> -> vector<2x16x16xf32>
    %c2_265 = arith.constant 2 : index
    %c0_266 = arith.constant 0 : index
    %c0_267 = arith.constant 0 : index
    %643 = vector.load %arg6[%c2_265, %c0_266, %c0_267] : memref<4x16x64xf32, #tpu.memory_space<vmem>>, vector<1x16x64xf32>
    %644 = vector.shape_cast %643 : vector<1x16x64xf32> to vector<16x64xf32>
    %645 = vector.shape_cast %642 : vector<2x16x16xf32> to vector<32x16xf32>
    %cst_268 = arith.constant dense<0.000000e+00> : vector<32x64xf32>
    %646 = tpu.matmul %645, %644, %cst_268 {dimension_numbers = #tpu.dot_dimension_numbers<[1], [0], [0], [1], [0, 0, 1, 1], [], []>} : vector<32x16xf32>, vector<16x64xf32>, vector<32x64xf32> -> vector<32x64xf32>
    %647 = vector.shape_cast %646 : vector<32x64xf32> to vector<2x16x64xf32>
    %648 = arith.addf %637, %647 : vector<2x16x64xf32>
    %c84 = arith.constant 84 : index
    %c0_269 = arith.constant 0 : index
    %c0_270 = arith.constant 0 : index
    %649 = vector.load %arg2[%c84, %c0_269, %c0_270] : memref<89x16x16xf32, #tpu.memory_space<vmem>>, vector<1x16x16xf32>
    %650 = vector.shape_cast %649 : vector<1x16x16xf32> to vector<16x16xf32>
    %651 = vector.shape_cast %650 : vector<16x16xf32> to vector<1x16x16xf32>
    %652 = vector.broadcast %651 : vector<1x16x16xf32> to vector<2x16x16xf32>
    %cst_271 = arith.constant dense<0.000000e+00> : vector<2x16x16xf32>
    %653 = tpu.matmul %652, %614, %cst_271 {dimension_numbers = #tpu.dot_dimension_numbers<[2], [1], [1], [2], [0, 0, 0, 1, 1, 2], [0], [0]>} : vector<2x16x16xf32>, vector<2x16x16xf32>, vector<2x16x16xf32> -> vector<2x16x16xf32>
    %c3_272 = arith.constant 3 : index
    %c0_273 = arith.constant 0 : index
    %c0_274 = arith.constant 0 : index
    %654 = vector.load %arg6[%c3_272, %c0_273, %c0_274] : memref<4x16x64xf32, #tpu.memory_space<vmem>>, vector<1x16x64xf32>
    %655 = vector.shape_cast %654 : vector<1x16x64xf32> to vector<16x64xf32>
    %656 = vector.shape_cast %653 : vector<2x16x16xf32> to vector<32x16xf32>
    %cst_275 = arith.constant dense<0.000000e+00> : vector<32x64xf32>
    %657 = tpu.matmul %656, %655, %cst_275 {dimension_numbers = #tpu.dot_dimension_numbers<[1], [0], [0], [1], [0, 0, 1, 1], [], []>} : vector<32x16xf32>, vector<16x64xf32>, vector<32x64xf32> -> vector<32x64xf32>
    %658 = vector.shape_cast %657 : vector<32x64xf32> to vector<2x16x64xf32>
    %659 = arith.addf %648, %658 : vector<2x16x64xf32>
    %c6_276 = arith.constant 6 : index
    %c0_277 = arith.constant 0 : index
    %c0_278 = arith.constant 0 : index
    %660 = vector.load %arg3[%c6_276, %c0_277, %c0_278] : memref<11x16x1xf32, #tpu.memory_space<vmem>>, vector<1x16x1xf32>
    %661 = vector.shape_cast %660 : vector<1x16x1xf32> to vector<16x1xf32>
    %662 = vector.shape_cast %661 : vector<16x1xf32> to vector<1x16x1xf32>
    %663 = vector.broadcast %662 : vector<1x16x1xf32> to vector<2x16x64xf32>
    %664 = arith.addf %659, %663 : vector<2x16x64xf32>
    %cst_279 = arith.constant 0.000000e+00 : f32
    %665 = vector.broadcast %cst_279 : f32 to vector<2x16x9xf32>
    %666 = tpu.concatenate %665, %664, %665 in 2 : vector<2x16x9xf32>, vector<2x16x64xf32>, vector<2x16x9xf32> -> vector<2x16x82xf32>
    %cst_280 = arith.constant 0.000000e+00 : f32
    %667 = vector.broadcast %cst_280 : f32 to vector<2x16x64xf32>
    %668 = vector.extract_strided_slice %666 {offsets = [0, 0, 0], sizes = [2, 16, 64], strides = [1, 1, 1]} : vector<2x16x82xf32> to vector<2x16x64xf32>
    %cst_281 = arith.constant 0.000000e+00 : f32
    %669 = vector.shape_cast %11 : vector<1x1x64xi1> to vector<1x1x64xi1>
    %670 = vector.broadcast %669 : vector<1x1x64xi1> to vector<2x16x64xi1>
    %671 = vector.broadcast %cst_281 : f32 to vector<2x16x64xf32>
    %672 = arith.select %670, %668, %671 : vector<2x16x64xi1>, vector<2x16x64xf32>
    %c54 = arith.constant 54 : index
    %c0_282 = arith.constant 0 : index
    %c0_283 = arith.constant 0 : index
    %673 = vector.load %arg2[%c54, %c0_282, %c0_283] : memref<89x16x16xf32, #tpu.memory_space<vmem>>, vector<1x16x16xf32>
    %674 = vector.shape_cast %673 : vector<1x16x16xf32> to vector<16x16xf32>
    %675 = vector.shape_cast %674 : vector<16x16xf32> to vector<1x16x16xf32>
    %676 = vector.broadcast %675 : vector<1x16x16xf32> to vector<2x16x16xf32>
    %cst_284 = arith.constant dense<0.000000e+00> : vector<2x16x64xf32>
    %677 = tpu.matmul %676, %672, %cst_284 {dimension_numbers = #tpu.dot_dimension_numbers<[2], [1], [1], [2], [0, 0, 0, 1, 1, 2], [0], [0]>} : vector<2x16x16xf32>, vector<2x16x64xf32>, vector<2x16x64xf32> -> vector<2x16x64xf32>
    %678 = arith.addf %667, %677 : vector<2x16x64xf32>
    %679 = vector.extract_strided_slice %666 {offsets = [0, 0, 1], sizes = [2, 16, 64], strides = [1, 1, 1]} : vector<2x16x82xf32> to vector<2x16x64xf32>
    %c55 = arith.constant 55 : index
    %c0_285 = arith.constant 0 : index
    %c0_286 = arith.constant 0 : index
    %680 = vector.load %arg2[%c55, %c0_285, %c0_286] : memref<89x16x16xf32, #tpu.memory_space<vmem>>, vector<1x16x16xf32>
    %681 = vector.shape_cast %680 : vector<1x16x16xf32> to vector<16x16xf32>
    %682 = vector.shape_cast %681 : vector<16x16xf32> to vector<1x16x16xf32>
    %683 = vector.broadcast %682 : vector<1x16x16xf32> to vector<2x16x16xf32>
    %cst_287 = arith.constant dense<0.000000e+00> : vector<2x16x64xf32>
    %684 = tpu.matmul %683, %679, %cst_287 {dimension_numbers = #tpu.dot_dimension_numbers<[2], [1], [1], [2], [0, 0, 0, 1, 1, 2], [0], [0]>} : vector<2x16x16xf32>, vector<2x16x64xf32>, vector<2x16x64xf32> -> vector<2x16x64xf32>
    %685 = arith.addf %678, %684 : vector<2x16x64xf32>
    %686 = vector.extract_strided_slice %666 {offsets = [0, 0, 2], sizes = [2, 16, 64], strides = [1, 1, 1]} : vector<2x16x82xf32> to vector<2x16x64xf32>
    %cst_288 = arith.constant 0.000000e+00 : f32
    %687 = vector.shape_cast %13 : vector<1x1x64xi1> to vector<1x1x64xi1>
    %688 = vector.broadcast %687 : vector<1x1x64xi1> to vector<2x16x64xi1>
    %689 = vector.broadcast %cst_288 : f32 to vector<2x16x64xf32>
    %690 = arith.select %688, %686, %689 : vector<2x16x64xi1>, vector<2x16x64xf32>
    %c56 = arith.constant 56 : index
    %c0_289 = arith.constant 0 : index
    %c0_290 = arith.constant 0 : index
    %691 = vector.load %arg2[%c56, %c0_289, %c0_290] : memref<89x16x16xf32, #tpu.memory_space<vmem>>, vector<1x16x16xf32>
    %692 = vector.shape_cast %691 : vector<1x16x16xf32> to vector<16x16xf32>
    %693 = vector.shape_cast %692 : vector<16x16xf32> to vector<1x16x16xf32>
    %694 = vector.broadcast %693 : vector<1x16x16xf32> to vector<2x16x16xf32>
    %cst_291 = arith.constant dense<0.000000e+00> : vector<2x16x64xf32>
    %695 = tpu.matmul %694, %690, %cst_291 {dimension_numbers = #tpu.dot_dimension_numbers<[2], [1], [1], [2], [0, 0, 0, 1, 1, 2], [0], [0]>} : vector<2x16x16xf32>, vector<2x16x64xf32>, vector<2x16x64xf32> -> vector<2x16x64xf32>
    %696 = arith.addf %685, %695 : vector<2x16x64xf32>
    %697 = vector.extract_strided_slice %666 {offsets = [0, 0, 8], sizes = [2, 16, 64], strides = [1, 1, 1]} : vector<2x16x82xf32> to vector<2x16x64xf32>
    %cst_292 = arith.constant 0.000000e+00 : f32
    %698 = vector.shape_cast %11 : vector<1x1x64xi1> to vector<1x1x64xi1>
    %699 = vector.broadcast %698 : vector<1x1x64xi1> to vector<2x16x64xi1>
    %700 = vector.broadcast %cst_292 : f32 to vector<2x16x64xf32>
    %701 = arith.select %699, %697, %700 : vector<2x16x64xi1>, vector<2x16x64xf32>
    %c57 = arith.constant 57 : index
    %c0_293 = arith.constant 0 : index
    %c0_294 = arith.constant 0 : index
    %702 = vector.load %arg2[%c57, %c0_293, %c0_294] : memref<89x16x16xf32, #tpu.memory_space<vmem>>, vector<1x16x16xf32>
    %703 = vector.shape_cast %702 : vector<1x16x16xf32> to vector<16x16xf32>
    %704 = vector.shape_cast %703 : vector<16x16xf32> to vector<1x16x16xf32>
    %705 = vector.broadcast %704 : vector<1x16x16xf32> to vector<2x16x16xf32>
    %cst_295 = arith.constant dense<0.000000e+00> : vector<2x16x64xf32>
    %706 = tpu.matmul %705, %701, %cst_295 {dimension_numbers = #tpu.dot_dimension_numbers<[2], [1], [1], [2], [0, 0, 0, 1, 1, 2], [0], [0]>} : vector<2x16x16xf32>, vector<2x16x64xf32>, vector<2x16x64xf32> -> vector<2x16x64xf32>
    %707 = arith.addf %696, %706 : vector<2x16x64xf32>
    %708 = vector.extract_strided_slice %666 {offsets = [0, 0, 9], sizes = [2, 16, 64], strides = [1, 1, 1]} : vector<2x16x82xf32> to vector<2x16x64xf32>
    %c58 = arith.constant 58 : index
    %c0_296 = arith.constant 0 : index
    %c0_297 = arith.constant 0 : index
    %709 = vector.load %arg2[%c58, %c0_296, %c0_297] : memref<89x16x16xf32, #tpu.memory_space<vmem>>, vector<1x16x16xf32>
    %710 = vector.shape_cast %709 : vector<1x16x16xf32> to vector<16x16xf32>
    %711 = vector.shape_cast %710 : vector<16x16xf32> to vector<1x16x16xf32>
    %712 = vector.broadcast %711 : vector<1x16x16xf32> to vector<2x16x16xf32>
    %cst_298 = arith.constant dense<0.000000e+00> : vector<2x16x64xf32>
    %713 = tpu.matmul %712, %708, %cst_298 {dimension_numbers = #tpu.dot_dimension_numbers<[2], [1], [1], [2], [0, 0, 0, 1, 1, 2], [0], [0]>} : vector<2x16x16xf32>, vector<2x16x64xf32>, vector<2x16x64xf32> -> vector<2x16x64xf32>
    %714 = arith.addf %707, %713 : vector<2x16x64xf32>
    %715 = vector.extract_strided_slice %666 {offsets = [0, 0, 10], sizes = [2, 16, 64], strides = [1, 1, 1]} : vector<2x16x82xf32> to vector<2x16x64xf32>
    %cst_299 = arith.constant 0.000000e+00 : f32
    %716 = vector.shape_cast %13 : vector<1x1x64xi1> to vector<1x1x64xi1>
    %717 = vector.broadcast %716 : vector<1x1x64xi1> to vector<2x16x64xi1>
    %718 = vector.broadcast %cst_299 : f32 to vector<2x16x64xf32>
    %719 = arith.select %717, %715, %718 : vector<2x16x64xi1>, vector<2x16x64xf32>
    %c59 = arith.constant 59 : index
    %c0_300 = arith.constant 0 : index
    %c0_301 = arith.constant 0 : index
    %720 = vector.load %arg2[%c59, %c0_300, %c0_301] : memref<89x16x16xf32, #tpu.memory_space<vmem>>, vector<1x16x16xf32>
    %721 = vector.shape_cast %720 : vector<1x16x16xf32> to vector<16x16xf32>
    %722 = vector.shape_cast %721 : vector<16x16xf32> to vector<1x16x16xf32>
    %723 = vector.broadcast %722 : vector<1x16x16xf32> to vector<2x16x16xf32>
    %cst_302 = arith.constant dense<0.000000e+00> : vector<2x16x64xf32>
    %724 = tpu.matmul %723, %719, %cst_302 {dimension_numbers = #tpu.dot_dimension_numbers<[2], [1], [1], [2], [0, 0, 0, 1, 1, 2], [0], [0]>} : vector<2x16x16xf32>, vector<2x16x64xf32>, vector<2x16x64xf32> -> vector<2x16x64xf32>
    %725 = arith.addf %714, %724 : vector<2x16x64xf32>
    %726 = vector.extract_strided_slice %666 {offsets = [0, 0, 16], sizes = [2, 16, 64], strides = [1, 1, 1]} : vector<2x16x82xf32> to vector<2x16x64xf32>
    %cst_303 = arith.constant 0.000000e+00 : f32
    %727 = vector.shape_cast %11 : vector<1x1x64xi1> to vector<1x1x64xi1>
    %728 = vector.broadcast %727 : vector<1x1x64xi1> to vector<2x16x64xi1>
    %729 = vector.broadcast %cst_303 : f32 to vector<2x16x64xf32>
    %730 = arith.select %728, %726, %729 : vector<2x16x64xi1>, vector<2x16x64xf32>
    %c60 = arith.constant 60 : index
    %c0_304 = arith.constant 0 : index
    %c0_305 = arith.constant 0 : index
    %731 = vector.load %arg2[%c60, %c0_304, %c0_305] : memref<89x16x16xf32, #tpu.memory_space<vmem>>, vector<1x16x16xf32>
    %732 = vector.shape_cast %731 : vector<1x16x16xf32> to vector<16x16xf32>
    %733 = vector.shape_cast %732 : vector<16x16xf32> to vector<1x16x16xf32>
    %734 = vector.broadcast %733 : vector<1x16x16xf32> to vector<2x16x16xf32>
    %cst_306 = arith.constant dense<0.000000e+00> : vector<2x16x64xf32>
    %735 = tpu.matmul %734, %730, %cst_306 {dimension_numbers = #tpu.dot_dimension_numbers<[2], [1], [1], [2], [0, 0, 0, 1, 1, 2], [0], [0]>} : vector<2x16x16xf32>, vector<2x16x64xf32>, vector<2x16x64xf32> -> vector<2x16x64xf32>
    %736 = arith.addf %725, %735 : vector<2x16x64xf32>
    %737 = vector.extract_strided_slice %666 {offsets = [0, 0, 17], sizes = [2, 16, 64], strides = [1, 1, 1]} : vector<2x16x82xf32> to vector<2x16x64xf32>
    %c61 = arith.constant 61 : index
    %c0_307 = arith.constant 0 : index
    %c0_308 = arith.constant 0 : index
    %738 = vector.load %arg2[%c61, %c0_307, %c0_308] : memref<89x16x16xf32, #tpu.memory_space<vmem>>, vector<1x16x16xf32>
    %739 = vector.shape_cast %738 : vector<1x16x16xf32> to vector<16x16xf32>
    %740 = vector.shape_cast %739 : vector<16x16xf32> to vector<1x16x16xf32>
    %741 = vector.broadcast %740 : vector<1x16x16xf32> to vector<2x16x16xf32>
    %cst_309 = arith.constant dense<0.000000e+00> : vector<2x16x64xf32>
    %742 = tpu.matmul %741, %737, %cst_309 {dimension_numbers = #tpu.dot_dimension_numbers<[2], [1], [1], [2], [0, 0, 0, 1, 1, 2], [0], [0]>} : vector<2x16x16xf32>, vector<2x16x64xf32>, vector<2x16x64xf32> -> vector<2x16x64xf32>
    %743 = arith.addf %736, %742 : vector<2x16x64xf32>
    %744 = vector.extract_strided_slice %666 {offsets = [0, 0, 18], sizes = [2, 16, 64], strides = [1, 1, 1]} : vector<2x16x82xf32> to vector<2x16x64xf32>
    %cst_310 = arith.constant 0.000000e+00 : f32
    %745 = vector.shape_cast %13 : vector<1x1x64xi1> to vector<1x1x64xi1>
    %746 = vector.broadcast %745 : vector<1x1x64xi1> to vector<2x16x64xi1>
    %747 = vector.broadcast %cst_310 : f32 to vector<2x16x64xf32>
    %748 = arith.select %746, %744, %747 : vector<2x16x64xi1>, vector<2x16x64xf32>
    %c62 = arith.constant 62 : index
    %c0_311 = arith.constant 0 : index
    %c0_312 = arith.constant 0 : index
    %749 = vector.load %arg2[%c62, %c0_311, %c0_312] : memref<89x16x16xf32, #tpu.memory_space<vmem>>, vector<1x16x16xf32>
    %750 = vector.shape_cast %749 : vector<1x16x16xf32> to vector<16x16xf32>
    %751 = vector.shape_cast %750 : vector<16x16xf32> to vector<1x16x16xf32>
    %752 = vector.broadcast %751 : vector<1x16x16xf32> to vector<2x16x16xf32>
    %cst_313 = arith.constant dense<0.000000e+00> : vector<2x16x64xf32>
    %753 = tpu.matmul %752, %748, %cst_313 {dimension_numbers = #tpu.dot_dimension_numbers<[2], [1], [1], [2], [0, 0, 0, 1, 1, 2], [0], [0]>} : vector<2x16x16xf32>, vector<2x16x64xf32>, vector<2x16x64xf32> -> vector<2x16x64xf32>
    %754 = arith.addf %743, %753 : vector<2x16x64xf32>
    %c7_314 = arith.constant 7 : index
    %c0_315 = arith.constant 0 : index
    %c0_316 = arith.constant 0 : index
    %755 = vector.load %arg3[%c7_314, %c0_315, %c0_316] : memref<11x16x1xf32, #tpu.memory_space<vmem>>, vector<1x16x1xf32>
    %756 = vector.shape_cast %755 : vector<1x16x1xf32> to vector<16x1xf32>
    %757 = vector.shape_cast %756 : vector<16x1xf32> to vector<1x16x1xf32>
    %758 = vector.broadcast %757 : vector<1x16x1xf32> to vector<2x16x64xf32>
    %759 = arith.addf %754, %758 : vector<2x16x64xf32>
    %cst_317 = arith.constant 0.000000e+00 : f32
    %760 = vector.broadcast %cst_317 : f32 to vector<2x16x64xf32>
    %761 = arith.maximumf %759, %760 : vector<2x16x64xf32>
    %cst_318 = arith.constant 0.000000e+00 : f32
    %762 = vector.broadcast %cst_318 : f32 to vector<2x16x9xf32>
    %763 = tpu.concatenate %762, %761, %762 in 2 : vector<2x16x9xf32>, vector<2x16x64xf32>, vector<2x16x9xf32> -> vector<2x16x82xf32>
    %cst_319 = arith.constant 0.000000e+00 : f32
    %764 = vector.broadcast %cst_319 : f32 to vector<2x16x64xf32>
    %765 = vector.extract_strided_slice %763 {offsets = [0, 0, 0], sizes = [2, 16, 64], strides = [1, 1, 1]} : vector<2x16x82xf32> to vector<2x16x64xf32>
    %cst_320 = arith.constant 0.000000e+00 : f32
    %766 = vector.shape_cast %11 : vector<1x1x64xi1> to vector<1x1x64xi1>
    %767 = vector.broadcast %766 : vector<1x1x64xi1> to vector<2x16x64xi1>
    %768 = vector.broadcast %cst_320 : f32 to vector<2x16x64xf32>
    %769 = arith.select %767, %765, %768 : vector<2x16x64xi1>, vector<2x16x64xf32>
    %c63 = arith.constant 63 : index
    %c0_321 = arith.constant 0 : index
    %c0_322 = arith.constant 0 : index
    %770 = vector.load %arg2[%c63, %c0_321, %c0_322] : memref<89x16x16xf32, #tpu.memory_space<vmem>>, vector<1x16x16xf32>
    %771 = vector.shape_cast %770 : vector<1x16x16xf32> to vector<16x16xf32>
    %772 = vector.shape_cast %771 : vector<16x16xf32> to vector<1x16x16xf32>
    %773 = vector.broadcast %772 : vector<1x16x16xf32> to vector<2x16x16xf32>
    %cst_323 = arith.constant dense<0.000000e+00> : vector<2x16x64xf32>
    %774 = tpu.matmul %773, %769, %cst_323 {dimension_numbers = #tpu.dot_dimension_numbers<[2], [1], [1], [2], [0, 0, 0, 1, 1, 2], [0], [0]>} : vector<2x16x16xf32>, vector<2x16x64xf32>, vector<2x16x64xf32> -> vector<2x16x64xf32>
    %775 = arith.addf %764, %774 : vector<2x16x64xf32>
    %776 = vector.extract_strided_slice %763 {offsets = [0, 0, 1], sizes = [2, 16, 64], strides = [1, 1, 1]} : vector<2x16x82xf32> to vector<2x16x64xf32>
    %c64 = arith.constant 64 : index
    %c0_324 = arith.constant 0 : index
    %c0_325 = arith.constant 0 : index
    %777 = vector.load %arg2[%c64, %c0_324, %c0_325] : memref<89x16x16xf32, #tpu.memory_space<vmem>>, vector<1x16x16xf32>
    %778 = vector.shape_cast %777 : vector<1x16x16xf32> to vector<16x16xf32>
    %779 = vector.shape_cast %778 : vector<16x16xf32> to vector<1x16x16xf32>
    %780 = vector.broadcast %779 : vector<1x16x16xf32> to vector<2x16x16xf32>
    %cst_326 = arith.constant dense<0.000000e+00> : vector<2x16x64xf32>
    %781 = tpu.matmul %780, %776, %cst_326 {dimension_numbers = #tpu.dot_dimension_numbers<[2], [1], [1], [2], [0, 0, 0, 1, 1, 2], [0], [0]>} : vector<2x16x16xf32>, vector<2x16x64xf32>, vector<2x16x64xf32> -> vector<2x16x64xf32>
    %782 = arith.addf %775, %781 : vector<2x16x64xf32>
    %783 = vector.extract_strided_slice %763 {offsets = [0, 0, 2], sizes = [2, 16, 64], strides = [1, 1, 1]} : vector<2x16x82xf32> to vector<2x16x64xf32>
    %cst_327 = arith.constant 0.000000e+00 : f32
    %784 = vector.shape_cast %13 : vector<1x1x64xi1> to vector<1x1x64xi1>
    %785 = vector.broadcast %784 : vector<1x1x64xi1> to vector<2x16x64xi1>
    %786 = vector.broadcast %cst_327 : f32 to vector<2x16x64xf32>
    %787 = arith.select %785, %783, %786 : vector<2x16x64xi1>, vector<2x16x64xf32>
    %c65 = arith.constant 65 : index
    %c0_328 = arith.constant 0 : index
    %c0_329 = arith.constant 0 : index
    %788 = vector.load %arg2[%c65, %c0_328, %c0_329] : memref<89x16x16xf32, #tpu.memory_space<vmem>>, vector<1x16x16xf32>
    %789 = vector.shape_cast %788 : vector<1x16x16xf32> to vector<16x16xf32>
    %790 = vector.shape_cast %789 : vector<16x16xf32> to vector<1x16x16xf32>
    %791 = vector.broadcast %790 : vector<1x16x16xf32> to vector<2x16x16xf32>
    %cst_330 = arith.constant dense<0.000000e+00> : vector<2x16x64xf32>
    %792 = tpu.matmul %791, %787, %cst_330 {dimension_numbers = #tpu.dot_dimension_numbers<[2], [1], [1], [2], [0, 0, 0, 1, 1, 2], [0], [0]>} : vector<2x16x16xf32>, vector<2x16x64xf32>, vector<2x16x64xf32> -> vector<2x16x64xf32>
    %793 = arith.addf %782, %792 : vector<2x16x64xf32>
    %794 = vector.extract_strided_slice %763 {offsets = [0, 0, 8], sizes = [2, 16, 64], strides = [1, 1, 1]} : vector<2x16x82xf32> to vector<2x16x64xf32>
    %cst_331 = arith.constant 0.000000e+00 : f32
    %795 = vector.shape_cast %11 : vector<1x1x64xi1> to vector<1x1x64xi1>
    %796 = vector.broadcast %795 : vector<1x1x64xi1> to vector<2x16x64xi1>
    %797 = vector.broadcast %cst_331 : f32 to vector<2x16x64xf32>
    %798 = arith.select %796, %794, %797 : vector<2x16x64xi1>, vector<2x16x64xf32>
    %c66 = arith.constant 66 : index
    %c0_332 = arith.constant 0 : index
    %c0_333 = arith.constant 0 : index
    %799 = vector.load %arg2[%c66, %c0_332, %c0_333] : memref<89x16x16xf32, #tpu.memory_space<vmem>>, vector<1x16x16xf32>
    %800 = vector.shape_cast %799 : vector<1x16x16xf32> to vector<16x16xf32>
    %801 = vector.shape_cast %800 : vector<16x16xf32> to vector<1x16x16xf32>
    %802 = vector.broadcast %801 : vector<1x16x16xf32> to vector<2x16x16xf32>
    %cst_334 = arith.constant dense<0.000000e+00> : vector<2x16x64xf32>
    %803 = tpu.matmul %802, %798, %cst_334 {dimension_numbers = #tpu.dot_dimension_numbers<[2], [1], [1], [2], [0, 0, 0, 1, 1, 2], [0], [0]>} : vector<2x16x16xf32>, vector<2x16x64xf32>, vector<2x16x64xf32> -> vector<2x16x64xf32>
    %804 = arith.addf %793, %803 : vector<2x16x64xf32>
    %805 = vector.extract_strided_slice %763 {offsets = [0, 0, 9], sizes = [2, 16, 64], strides = [1, 1, 1]} : vector<2x16x82xf32> to vector<2x16x64xf32>
    %c67 = arith.constant 67 : index
    %c0_335 = arith.constant 0 : index
    %c0_336 = arith.constant 0 : index
    %806 = vector.load %arg2[%c67, %c0_335, %c0_336] : memref<89x16x16xf32, #tpu.memory_space<vmem>>, vector<1x16x16xf32>
    %807 = vector.shape_cast %806 : vector<1x16x16xf32> to vector<16x16xf32>
    %808 = vector.shape_cast %807 : vector<16x16xf32> to vector<1x16x16xf32>
    %809 = vector.broadcast %808 : vector<1x16x16xf32> to vector<2x16x16xf32>
    %cst_337 = arith.constant dense<0.000000e+00> : vector<2x16x64xf32>
    %810 = tpu.matmul %809, %805, %cst_337 {dimension_numbers = #tpu.dot_dimension_numbers<[2], [1], [1], [2], [0, 0, 0, 1, 1, 2], [0], [0]>} : vector<2x16x16xf32>, vector<2x16x64xf32>, vector<2x16x64xf32> -> vector<2x16x64xf32>
    %811 = arith.addf %804, %810 : vector<2x16x64xf32>
    %812 = vector.extract_strided_slice %763 {offsets = [0, 0, 10], sizes = [2, 16, 64], strides = [1, 1, 1]} : vector<2x16x82xf32> to vector<2x16x64xf32>
    %cst_338 = arith.constant 0.000000e+00 : f32
    %813 = vector.shape_cast %13 : vector<1x1x64xi1> to vector<1x1x64xi1>
    %814 = vector.broadcast %813 : vector<1x1x64xi1> to vector<2x16x64xi1>
    %815 = vector.broadcast %cst_338 : f32 to vector<2x16x64xf32>
    %816 = arith.select %814, %812, %815 : vector<2x16x64xi1>, vector<2x16x64xf32>
    %c68 = arith.constant 68 : index
    %c0_339 = arith.constant 0 : index
    %c0_340 = arith.constant 0 : index
    %817 = vector.load %arg2[%c68, %c0_339, %c0_340] : memref<89x16x16xf32, #tpu.memory_space<vmem>>, vector<1x16x16xf32>
    %818 = vector.shape_cast %817 : vector<1x16x16xf32> to vector<16x16xf32>
    %819 = vector.shape_cast %818 : vector<16x16xf32> to vector<1x16x16xf32>
    %820 = vector.broadcast %819 : vector<1x16x16xf32> to vector<2x16x16xf32>
    %cst_341 = arith.constant dense<0.000000e+00> : vector<2x16x64xf32>
    %821 = tpu.matmul %820, %816, %cst_341 {dimension_numbers = #tpu.dot_dimension_numbers<[2], [1], [1], [2], [0, 0, 0, 1, 1, 2], [0], [0]>} : vector<2x16x16xf32>, vector<2x16x64xf32>, vector<2x16x64xf32> -> vector<2x16x64xf32>
    %822 = arith.addf %811, %821 : vector<2x16x64xf32>
    %823 = vector.extract_strided_slice %763 {offsets = [0, 0, 16], sizes = [2, 16, 64], strides = [1, 1, 1]} : vector<2x16x82xf32> to vector<2x16x64xf32>
    %cst_342 = arith.constant 0.000000e+00 : f32
    %824 = vector.shape_cast %11 : vector<1x1x64xi1> to vector<1x1x64xi1>
    %825 = vector.broadcast %824 : vector<1x1x64xi1> to vector<2x16x64xi1>
    %826 = vector.broadcast %cst_342 : f32 to vector<2x16x64xf32>
    %827 = arith.select %825, %823, %826 : vector<2x16x64xi1>, vector<2x16x64xf32>
    %c69 = arith.constant 69 : index
    %c0_343 = arith.constant 0 : index
    %c0_344 = arith.constant 0 : index
    %828 = vector.load %arg2[%c69, %c0_343, %c0_344] : memref<89x16x16xf32, #tpu.memory_space<vmem>>, vector<1x16x16xf32>
    %829 = vector.shape_cast %828 : vector<1x16x16xf32> to vector<16x16xf32>
    %830 = vector.shape_cast %829 : vector<16x16xf32> to vector<1x16x16xf32>
    %831 = vector.broadcast %830 : vector<1x16x16xf32> to vector<2x16x16xf32>
    %cst_345 = arith.constant dense<0.000000e+00> : vector<2x16x64xf32>
    %832 = tpu.matmul %831, %827, %cst_345 {dimension_numbers = #tpu.dot_dimension_numbers<[2], [1], [1], [2], [0, 0, 0, 1, 1, 2], [0], [0]>} : vector<2x16x16xf32>, vector<2x16x64xf32>, vector<2x16x64xf32> -> vector<2x16x64xf32>
    %833 = arith.addf %822, %832 : vector<2x16x64xf32>
    %834 = vector.extract_strided_slice %763 {offsets = [0, 0, 17], sizes = [2, 16, 64], strides = [1, 1, 1]} : vector<2x16x82xf32> to vector<2x16x64xf32>
    %c70 = arith.constant 70 : index
    %c0_346 = arith.constant 0 : index
    %c0_347 = arith.constant 0 : index
    %835 = vector.load %arg2[%c70, %c0_346, %c0_347] : memref<89x16x16xf32, #tpu.memory_space<vmem>>, vector<1x16x16xf32>
    %836 = vector.shape_cast %835 : vector<1x16x16xf32> to vector<16x16xf32>
    %837 = vector.shape_cast %836 : vector<16x16xf32> to vector<1x16x16xf32>
    %838 = vector.broadcast %837 : vector<1x16x16xf32> to vector<2x16x16xf32>
    %cst_348 = arith.constant dense<0.000000e+00> : vector<2x16x64xf32>
    %839 = tpu.matmul %838, %834, %cst_348 {dimension_numbers = #tpu.dot_dimension_numbers<[2], [1], [1], [2], [0, 0, 0, 1, 1, 2], [0], [0]>} : vector<2x16x16xf32>, vector<2x16x64xf32>, vector<2x16x64xf32> -> vector<2x16x64xf32>
    %840 = arith.addf %833, %839 : vector<2x16x64xf32>
    %841 = vector.extract_strided_slice %763 {offsets = [0, 0, 18], sizes = [2, 16, 64], strides = [1, 1, 1]} : vector<2x16x82xf32> to vector<2x16x64xf32>
    %cst_349 = arith.constant 0.000000e+00 : f32
    %842 = vector.shape_cast %13 : vector<1x1x64xi1> to vector<1x1x64xi1>
    %843 = vector.broadcast %842 : vector<1x1x64xi1> to vector<2x16x64xi1>
    %844 = vector.broadcast %cst_349 : f32 to vector<2x16x64xf32>
    %845 = arith.select %843, %841, %844 : vector<2x16x64xi1>, vector<2x16x64xf32>
    %c71 = arith.constant 71 : index
    %c0_350 = arith.constant 0 : index
    %c0_351 = arith.constant 0 : index
    %846 = vector.load %arg2[%c71, %c0_350, %c0_351] : memref<89x16x16xf32, #tpu.memory_space<vmem>>, vector<1x16x16xf32>
    %847 = vector.shape_cast %846 : vector<1x16x16xf32> to vector<16x16xf32>
    %848 = vector.shape_cast %847 : vector<16x16xf32> to vector<1x16x16xf32>
    %849 = vector.broadcast %848 : vector<1x16x16xf32> to vector<2x16x16xf32>
    %cst_352 = arith.constant dense<0.000000e+00> : vector<2x16x64xf32>
    %850 = tpu.matmul %849, %845, %cst_352 {dimension_numbers = #tpu.dot_dimension_numbers<[2], [1], [1], [2], [0, 0, 0, 1, 1, 2], [0], [0]>} : vector<2x16x16xf32>, vector<2x16x64xf32>, vector<2x16x64xf32> -> vector<2x16x64xf32>
    %851 = arith.addf %840, %850 : vector<2x16x64xf32>
    %c8_353 = arith.constant 8 : index
    %c0_354 = arith.constant 0 : index
    %c0_355 = arith.constant 0 : index
    %852 = vector.load %arg3[%c8_353, %c0_354, %c0_355] : memref<11x16x1xf32, #tpu.memory_space<vmem>>, vector<1x16x1xf32>
    %853 = vector.shape_cast %852 : vector<1x16x1xf32> to vector<16x1xf32>
    %854 = vector.shape_cast %853 : vector<16x1xf32> to vector<1x16x1xf32>
    %855 = vector.broadcast %854 : vector<1x16x1xf32> to vector<2x16x64xf32>
    %856 = arith.addf %851, %855 : vector<2x16x64xf32>
    %cst_356 = arith.constant 0.000000e+00 : f32
    %857 = vector.broadcast %cst_356 : f32 to vector<2x16x64xf32>
    %858 = arith.maximumf %856, %857 : vector<2x16x64xf32>
    %cst_357 = arith.constant 0.000000e+00 : f32
    %859 = vector.broadcast %cst_357 : f32 to vector<2x16x256xf32>
    %c85 = arith.constant 85 : index
    %c0_358 = arith.constant 0 : index
    %c0_359 = arith.constant 0 : index
    %860 = vector.load %arg2[%c85, %c0_358, %c0_359] : memref<89x16x16xf32, #tpu.memory_space<vmem>>, vector<1x16x16xf32>
    %861 = vector.shape_cast %860 : vector<1x16x16xf32> to vector<16x16xf32>
    %862 = vector.shape_cast %861 : vector<16x16xf32> to vector<1x16x16xf32>
    %863 = vector.broadcast %862 : vector<1x16x16xf32> to vector<2x16x16xf32>
    %cst_360 = arith.constant dense<0.000000e+00> : vector<2x16x64xf32>
    %864 = tpu.matmul %863, %858, %cst_360 {dimension_numbers = #tpu.dot_dimension_numbers<[2], [1], [1], [2], [0, 0, 0, 1, 1, 2], [0], [0]>} : vector<2x16x16xf32>, vector<2x16x64xf32>, vector<2x16x64xf32> -> vector<2x16x64xf32>
    %c0_361 = arith.constant 0 : index
    %c0_362 = arith.constant 0 : index
    %c0_363 = arith.constant 0 : index
    %865 = vector.load %arg7[%c0_361, %c0_362, %c0_363] : memref<4x64x256xf32, #tpu.memory_space<vmem>>, vector<1x64x256xf32>
    %866 = vector.shape_cast %865 : vector<1x64x256xf32> to vector<64x256xf32>
    %867 = vector.shape_cast %864 : vector<2x16x64xf32> to vector<32x64xf32>
    %cst_364 = arith.constant dense<0.000000e+00> : vector<32x256xf32>
    %868 = tpu.matmul %867, %866, %cst_364 {dimension_numbers = #tpu.dot_dimension_numbers<[1], [0], [0], [1], [0, 0, 1, 1], [], []>} : vector<32x64xf32>, vector<64x256xf32>, vector<32x256xf32> -> vector<32x256xf32>
    %869 = vector.shape_cast %868 : vector<32x256xf32> to vector<2x16x256xf32>
    %870 = arith.addf %859, %869 : vector<2x16x256xf32>
    %c86 = arith.constant 86 : index
    %c0_365 = arith.constant 0 : index
    %c0_366 = arith.constant 0 : index
    %871 = vector.load %arg2[%c86, %c0_365, %c0_366] : memref<89x16x16xf32, #tpu.memory_space<vmem>>, vector<1x16x16xf32>
    %872 = vector.shape_cast %871 : vector<1x16x16xf32> to vector<16x16xf32>
    %873 = vector.shape_cast %872 : vector<16x16xf32> to vector<1x16x16xf32>
    %874 = vector.broadcast %873 : vector<1x16x16xf32> to vector<2x16x16xf32>
    %cst_367 = arith.constant dense<0.000000e+00> : vector<2x16x64xf32>
    %875 = tpu.matmul %874, %858, %cst_367 {dimension_numbers = #tpu.dot_dimension_numbers<[2], [1], [1], [2], [0, 0, 0, 1, 1, 2], [0], [0]>} : vector<2x16x16xf32>, vector<2x16x64xf32>, vector<2x16x64xf32> -> vector<2x16x64xf32>
    %c1_368 = arith.constant 1 : index
    %c0_369 = arith.constant 0 : index
    %c0_370 = arith.constant 0 : index
    %876 = vector.load %arg7[%c1_368, %c0_369, %c0_370] : memref<4x64x256xf32, #tpu.memory_space<vmem>>, vector<1x64x256xf32>
    %877 = vector.shape_cast %876 : vector<1x64x256xf32> to vector<64x256xf32>
    %878 = vector.shape_cast %875 : vector<2x16x64xf32> to vector<32x64xf32>
    %cst_371 = arith.constant dense<0.000000e+00> : vector<32x256xf32>
    %879 = tpu.matmul %878, %877, %cst_371 {dimension_numbers = #tpu.dot_dimension_numbers<[1], [0], [0], [1], [0, 0, 1, 1], [], []>} : vector<32x64xf32>, vector<64x256xf32>, vector<32x256xf32> -> vector<32x256xf32>
    %880 = vector.shape_cast %879 : vector<32x256xf32> to vector<2x16x256xf32>
    %881 = arith.addf %870, %880 : vector<2x16x256xf32>
    %c87 = arith.constant 87 : index
    %c0_372 = arith.constant 0 : index
    %c0_373 = arith.constant 0 : index
    %882 = vector.load %arg2[%c87, %c0_372, %c0_373] : memref<89x16x16xf32, #tpu.memory_space<vmem>>, vector<1x16x16xf32>
    %883 = vector.shape_cast %882 : vector<1x16x16xf32> to vector<16x16xf32>
    %884 = vector.shape_cast %883 : vector<16x16xf32> to vector<1x16x16xf32>
    %885 = vector.broadcast %884 : vector<1x16x16xf32> to vector<2x16x16xf32>
    %cst_374 = arith.constant dense<0.000000e+00> : vector<2x16x64xf32>
    %886 = tpu.matmul %885, %858, %cst_374 {dimension_numbers = #tpu.dot_dimension_numbers<[2], [1], [1], [2], [0, 0, 0, 1, 1, 2], [0], [0]>} : vector<2x16x16xf32>, vector<2x16x64xf32>, vector<2x16x64xf32> -> vector<2x16x64xf32>
    %c2_375 = arith.constant 2 : index
    %c0_376 = arith.constant 0 : index
    %c0_377 = arith.constant 0 : index
    %887 = vector.load %arg7[%c2_375, %c0_376, %c0_377] : memref<4x64x256xf32, #tpu.memory_space<vmem>>, vector<1x64x256xf32>
    %888 = vector.shape_cast %887 : vector<1x64x256xf32> to vector<64x256xf32>
    %889 = vector.shape_cast %886 : vector<2x16x64xf32> to vector<32x64xf32>
    %cst_378 = arith.constant dense<0.000000e+00> : vector<32x256xf32>
    %890 = tpu.matmul %889, %888, %cst_378 {dimension_numbers = #tpu.dot_dimension_numbers<[1], [0], [0], [1], [0, 0, 1, 1], [], []>} : vector<32x64xf32>, vector<64x256xf32>, vector<32x256xf32> -> vector<32x256xf32>
    %891 = vector.shape_cast %890 : vector<32x256xf32> to vector<2x16x256xf32>
    %892 = arith.addf %881, %891 : vector<2x16x256xf32>
    %c88 = arith.constant 88 : index
    %c0_379 = arith.constant 0 : index
    %c0_380 = arith.constant 0 : index
    %893 = vector.load %arg2[%c88, %c0_379, %c0_380] : memref<89x16x16xf32, #tpu.memory_space<vmem>>, vector<1x16x16xf32>
    %894 = vector.shape_cast %893 : vector<1x16x16xf32> to vector<16x16xf32>
    %895 = vector.shape_cast %894 : vector<16x16xf32> to vector<1x16x16xf32>
    %896 = vector.broadcast %895 : vector<1x16x16xf32> to vector<2x16x16xf32>
    %cst_381 = arith.constant dense<0.000000e+00> : vector<2x16x64xf32>
    %897 = tpu.matmul %896, %858, %cst_381 {dimension_numbers = #tpu.dot_dimension_numbers<[2], [1], [1], [2], [0, 0, 0, 1, 1, 2], [0], [0]>} : vector<2x16x16xf32>, vector<2x16x64xf32>, vector<2x16x64xf32> -> vector<2x16x64xf32>
    %c3_382 = arith.constant 3 : index
    %c0_383 = arith.constant 0 : index
    %c0_384 = arith.constant 0 : index
    %898 = vector.load %arg7[%c3_382, %c0_383, %c0_384] : memref<4x64x256xf32, #tpu.memory_space<vmem>>, vector<1x64x256xf32>
    %899 = vector.shape_cast %898 : vector<1x64x256xf32> to vector<64x256xf32>
    %900 = vector.shape_cast %897 : vector<2x16x64xf32> to vector<32x64xf32>
    %cst_385 = arith.constant dense<0.000000e+00> : vector<32x256xf32>
    %901 = tpu.matmul %900, %899, %cst_385 {dimension_numbers = #tpu.dot_dimension_numbers<[1], [0], [0], [1], [0, 0, 1, 1], [], []>} : vector<32x64xf32>, vector<64x256xf32>, vector<32x256xf32> -> vector<32x256xf32>
    %902 = vector.shape_cast %901 : vector<32x256xf32> to vector<2x16x256xf32>
    %903 = arith.addf %892, %902 : vector<2x16x256xf32>
    %c9_386 = arith.constant 9 : index
    %c0_387 = arith.constant 0 : index
    %c0_388 = arith.constant 0 : index
    %904 = vector.load %arg3[%c9_386, %c0_387, %c0_388] : memref<11x16x1xf32, #tpu.memory_space<vmem>>, vector<1x16x1xf32>
    %905 = vector.shape_cast %904 : vector<1x16x1xf32> to vector<16x1xf32>
    %906 = vector.shape_cast %905 : vector<16x1xf32> to vector<1x16x1xf32>
    %907 = vector.broadcast %906 : vector<1x16x1xf32> to vector<2x16x256xf32>
    %908 = arith.addf %903, %907 : vector<2x16x256xf32>
    %cst_389 = arith.constant 0.000000e+00 : f32
    %909 = vector.broadcast %cst_389 : f32 to vector<2x16x17xf32>
    %910 = tpu.concatenate %909, %908, %909 in 2 : vector<2x16x17xf32>, vector<2x16x256xf32>, vector<2x16x17xf32> -> vector<2x16x290xf32>
    %cst_390 = arith.constant 0.000000e+00 : f32
    %911 = vector.broadcast %cst_390 : f32 to vector<2x16x256xf32>
    %912 = vector.extract_strided_slice %910 {offsets = [0, 0, 0], sizes = [2, 16, 256], strides = [1, 1, 1]} : vector<2x16x290xf32> to vector<2x16x256xf32>
    %cst_391 = arith.constant 0.000000e+00 : f32
    %913 = vector.shape_cast %4 : vector<1x1x256xi1> to vector<1x1x256xi1>
    %914 = vector.broadcast %913 : vector<1x1x256xi1> to vector<2x16x256xi1>
    %915 = vector.broadcast %cst_391 : f32 to vector<2x16x256xf32>
    %916 = arith.select %914, %912, %915 : vector<2x16x256xi1>, vector<2x16x256xf32>
    %c72 = arith.constant 72 : index
    %c0_392 = arith.constant 0 : index
    %c0_393 = arith.constant 0 : index
    %917 = vector.load %arg2[%c72, %c0_392, %c0_393] : memref<89x16x16xf32, #tpu.memory_space<vmem>>, vector<1x16x16xf32>
    %918 = vector.shape_cast %917 : vector<1x16x16xf32> to vector<16x16xf32>
    %919 = vector.shape_cast %918 : vector<16x16xf32> to vector<1x16x16xf32>
    %920 = vector.broadcast %919 : vector<1x16x16xf32> to vector<2x16x16xf32>
    %cst_394 = arith.constant dense<0.000000e+00> : vector<2x16x256xf32>
    %921 = tpu.matmul %920, %916, %cst_394 {dimension_numbers = #tpu.dot_dimension_numbers<[2], [1], [1], [2], [0, 0, 0, 1, 1, 2], [0], [0]>} : vector<2x16x16xf32>, vector<2x16x256xf32>, vector<2x16x256xf32> -> vector<2x16x256xf32>
    %922 = arith.addf %911, %921 : vector<2x16x256xf32>
    %923 = vector.extract_strided_slice %910 {offsets = [0, 0, 1], sizes = [2, 16, 256], strides = [1, 1, 1]} : vector<2x16x290xf32> to vector<2x16x256xf32>
    %c73 = arith.constant 73 : index
    %c0_395 = arith.constant 0 : index
    %c0_396 = arith.constant 0 : index
    %924 = vector.load %arg2[%c73, %c0_395, %c0_396] : memref<89x16x16xf32, #tpu.memory_space<vmem>>, vector<1x16x16xf32>
    %925 = vector.shape_cast %924 : vector<1x16x16xf32> to vector<16x16xf32>
    %926 = vector.shape_cast %925 : vector<16x16xf32> to vector<1x16x16xf32>
    %927 = vector.broadcast %926 : vector<1x16x16xf32> to vector<2x16x16xf32>
    %cst_397 = arith.constant dense<0.000000e+00> : vector<2x16x256xf32>
    %928 = tpu.matmul %927, %923, %cst_397 {dimension_numbers = #tpu.dot_dimension_numbers<[2], [1], [1], [2], [0, 0, 0, 1, 1, 2], [0], [0]>} : vector<2x16x16xf32>, vector<2x16x256xf32>, vector<2x16x256xf32> -> vector<2x16x256xf32>
    %929 = arith.addf %922, %928 : vector<2x16x256xf32>
    %930 = vector.extract_strided_slice %910 {offsets = [0, 0, 2], sizes = [2, 16, 256], strides = [1, 1, 1]} : vector<2x16x290xf32> to vector<2x16x256xf32>
    %cst_398 = arith.constant 0.000000e+00 : f32
    %931 = vector.shape_cast %6 : vector<1x1x256xi1> to vector<1x1x256xi1>
    %932 = vector.broadcast %931 : vector<1x1x256xi1> to vector<2x16x256xi1>
    %933 = vector.broadcast %cst_398 : f32 to vector<2x16x256xf32>
    %934 = arith.select %932, %930, %933 : vector<2x16x256xi1>, vector<2x16x256xf32>
    %c74 = arith.constant 74 : index
    %c0_399 = arith.constant 0 : index
    %c0_400 = arith.constant 0 : index
    %935 = vector.load %arg2[%c74, %c0_399, %c0_400] : memref<89x16x16xf32, #tpu.memory_space<vmem>>, vector<1x16x16xf32>
    %936 = vector.shape_cast %935 : vector<1x16x16xf32> to vector<16x16xf32>
    %937 = vector.shape_cast %936 : vector<16x16xf32> to vector<1x16x16xf32>
    %938 = vector.broadcast %937 : vector<1x16x16xf32> to vector<2x16x16xf32>
    %cst_401 = arith.constant dense<0.000000e+00> : vector<2x16x256xf32>
    %939 = tpu.matmul %938, %934, %cst_401 {dimension_numbers = #tpu.dot_dimension_numbers<[2], [1], [1], [2], [0, 0, 0, 1, 1, 2], [0], [0]>} : vector<2x16x16xf32>, vector<2x16x256xf32>, vector<2x16x256xf32> -> vector<2x16x256xf32>
    %940 = arith.addf %929, %939 : vector<2x16x256xf32>
    %941 = vector.extract_strided_slice %910 {offsets = [0, 0, 16], sizes = [2, 16, 256], strides = [1, 1, 1]} : vector<2x16x290xf32> to vector<2x16x256xf32>
    %cst_402 = arith.constant 0.000000e+00 : f32
    %942 = vector.shape_cast %4 : vector<1x1x256xi1> to vector<1x1x256xi1>
    %943 = vector.broadcast %942 : vector<1x1x256xi1> to vector<2x16x256xi1>
    %944 = vector.broadcast %cst_402 : f32 to vector<2x16x256xf32>
    %945 = arith.select %943, %941, %944 : vector<2x16x256xi1>, vector<2x16x256xf32>
    %c75 = arith.constant 75 : index
    %c0_403 = arith.constant 0 : index
    %c0_404 = arith.constant 0 : index
    %946 = vector.load %arg2[%c75, %c0_403, %c0_404] : memref<89x16x16xf32, #tpu.memory_space<vmem>>, vector<1x16x16xf32>
    %947 = vector.shape_cast %946 : vector<1x16x16xf32> to vector<16x16xf32>
    %948 = vector.shape_cast %947 : vector<16x16xf32> to vector<1x16x16xf32>
    %949 = vector.broadcast %948 : vector<1x16x16xf32> to vector<2x16x16xf32>
    %cst_405 = arith.constant dense<0.000000e+00> : vector<2x16x256xf32>
    %950 = tpu.matmul %949, %945, %cst_405 {dimension_numbers = #tpu.dot_dimension_numbers<[2], [1], [1], [2], [0, 0, 0, 1, 1, 2], [0], [0]>} : vector<2x16x16xf32>, vector<2x16x256xf32>, vector<2x16x256xf32> -> vector<2x16x256xf32>
    %951 = arith.addf %940, %950 : vector<2x16x256xf32>
    %952 = vector.extract_strided_slice %910 {offsets = [0, 0, 17], sizes = [2, 16, 256], strides = [1, 1, 1]} : vector<2x16x290xf32> to vector<2x16x256xf32>
    %c76 = arith.constant 76 : index
    %c0_406 = arith.constant 0 : index
    %c0_407 = arith.constant 0 : index
    %953 = vector.load %arg2[%c76, %c0_406, %c0_407] : memref<89x16x16xf32, #tpu.memory_space<vmem>>, vector<1x16x16xf32>
    %954 = vector.shape_cast %953 : vector<1x16x16xf32> to vector<16x16xf32>
    %955 = vector.shape_cast %954 : vector<16x16xf32> to vector<1x16x16xf32>
    %956 = vector.broadcast %955 : vector<1x16x16xf32> to vector<2x16x16xf32>
    %cst_408 = arith.constant dense<0.000000e+00> : vector<2x16x256xf32>
    %957 = tpu.matmul %956, %952, %cst_408 {dimension_numbers = #tpu.dot_dimension_numbers<[2], [1], [1], [2], [0, 0, 0, 1, 1, 2], [0], [0]>} : vector<2x16x16xf32>, vector<2x16x256xf32>, vector<2x16x256xf32> -> vector<2x16x256xf32>
    %958 = arith.addf %951, %957 : vector<2x16x256xf32>
    %959 = vector.extract_strided_slice %910 {offsets = [0, 0, 18], sizes = [2, 16, 256], strides = [1, 1, 1]} : vector<2x16x290xf32> to vector<2x16x256xf32>
    %cst_409 = arith.constant 0.000000e+00 : f32
    %960 = vector.shape_cast %6 : vector<1x1x256xi1> to vector<1x1x256xi1>
    %961 = vector.broadcast %960 : vector<1x1x256xi1> to vector<2x16x256xi1>
    %962 = vector.broadcast %cst_409 : f32 to vector<2x16x256xf32>
    %963 = arith.select %961, %959, %962 : vector<2x16x256xi1>, vector<2x16x256xf32>
    %c77 = arith.constant 77 : index
    %c0_410 = arith.constant 0 : index
    %c0_411 = arith.constant 0 : index
    %964 = vector.load %arg2[%c77, %c0_410, %c0_411] : memref<89x16x16xf32, #tpu.memory_space<vmem>>, vector<1x16x16xf32>
    %965 = vector.shape_cast %964 : vector<1x16x16xf32> to vector<16x16xf32>
    %966 = vector.shape_cast %965 : vector<16x16xf32> to vector<1x16x16xf32>
    %967 = vector.broadcast %966 : vector<1x16x16xf32> to vector<2x16x16xf32>
    %cst_412 = arith.constant dense<0.000000e+00> : vector<2x16x256xf32>
    %968 = tpu.matmul %967, %963, %cst_412 {dimension_numbers = #tpu.dot_dimension_numbers<[2], [1], [1], [2], [0, 0, 0, 1, 1, 2], [0], [0]>} : vector<2x16x16xf32>, vector<2x16x256xf32>, vector<2x16x256xf32> -> vector<2x16x256xf32>
    %969 = arith.addf %958, %968 : vector<2x16x256xf32>
    %970 = vector.extract_strided_slice %910 {offsets = [0, 0, 32], sizes = [2, 16, 256], strides = [1, 1, 1]} : vector<2x16x290xf32> to vector<2x16x256xf32>
    %cst_413 = arith.constant 0.000000e+00 : f32
    %971 = vector.shape_cast %4 : vector<1x1x256xi1> to vector<1x1x256xi1>
    %972 = vector.broadcast %971 : vector<1x1x256xi1> to vector<2x16x256xi1>
    %973 = vector.broadcast %cst_413 : f32 to vector<2x16x256xf32>
    %974 = arith.select %972, %970, %973 : vector<2x16x256xi1>, vector<2x16x256xf32>
    %c78 = arith.constant 78 : index
    %c0_414 = arith.constant 0 : index
    %c0_415 = arith.constant 0 : index
    %975 = vector.load %arg2[%c78, %c0_414, %c0_415] : memref<89x16x16xf32, #tpu.memory_space<vmem>>, vector<1x16x16xf32>
    %976 = vector.shape_cast %975 : vector<1x16x16xf32> to vector<16x16xf32>
    %977 = vector.shape_cast %976 : vector<16x16xf32> to vector<1x16x16xf32>
    %978 = vector.broadcast %977 : vector<1x16x16xf32> to vector<2x16x16xf32>
    %cst_416 = arith.constant dense<0.000000e+00> : vector<2x16x256xf32>
    %979 = tpu.matmul %978, %974, %cst_416 {dimension_numbers = #tpu.dot_dimension_numbers<[2], [1], [1], [2], [0, 0, 0, 1, 1, 2], [0], [0]>} : vector<2x16x16xf32>, vector<2x16x256xf32>, vector<2x16x256xf32> -> vector<2x16x256xf32>
    %980 = arith.addf %969, %979 : vector<2x16x256xf32>
    %981 = vector.extract_strided_slice %910 {offsets = [0, 0, 33], sizes = [2, 16, 256], strides = [1, 1, 1]} : vector<2x16x290xf32> to vector<2x16x256xf32>
    %c79 = arith.constant 79 : index
    %c0_417 = arith.constant 0 : index
    %c0_418 = arith.constant 0 : index
    %982 = vector.load %arg2[%c79, %c0_417, %c0_418] : memref<89x16x16xf32, #tpu.memory_space<vmem>>, vector<1x16x16xf32>
    %983 = vector.shape_cast %982 : vector<1x16x16xf32> to vector<16x16xf32>
    %984 = vector.shape_cast %983 : vector<16x16xf32> to vector<1x16x16xf32>
    %985 = vector.broadcast %984 : vector<1x16x16xf32> to vector<2x16x16xf32>
    %cst_419 = arith.constant dense<0.000000e+00> : vector<2x16x256xf32>
    %986 = tpu.matmul %985, %981, %cst_419 {dimension_numbers = #tpu.dot_dimension_numbers<[2], [1], [1], [2], [0, 0, 0, 1, 1, 2], [0], [0]>} : vector<2x16x16xf32>, vector<2x16x256xf32>, vector<2x16x256xf32> -> vector<2x16x256xf32>
    %987 = arith.addf %980, %986 : vector<2x16x256xf32>
    %988 = vector.extract_strided_slice %910 {offsets = [0, 0, 34], sizes = [2, 16, 256], strides = [1, 1, 1]} : vector<2x16x290xf32> to vector<2x16x256xf32>
    %cst_420 = arith.constant 0.000000e+00 : f32
    %989 = vector.shape_cast %6 : vector<1x1x256xi1> to vector<1x1x256xi1>
    %990 = vector.broadcast %989 : vector<1x1x256xi1> to vector<2x16x256xi1>
    %991 = vector.broadcast %cst_420 : f32 to vector<2x16x256xf32>
    %992 = arith.select %990, %988, %991 : vector<2x16x256xi1>, vector<2x16x256xf32>
    %c80 = arith.constant 80 : index
    %c0_421 = arith.constant 0 : index
    %c0_422 = arith.constant 0 : index
    %993 = vector.load %arg2[%c80, %c0_421, %c0_422] : memref<89x16x16xf32, #tpu.memory_space<vmem>>, vector<1x16x16xf32>
    %994 = vector.shape_cast %993 : vector<1x16x16xf32> to vector<16x16xf32>
    %995 = vector.shape_cast %994 : vector<16x16xf32> to vector<1x16x16xf32>
    %996 = vector.broadcast %995 : vector<1x16x16xf32> to vector<2x16x16xf32>
    %cst_423 = arith.constant dense<0.000000e+00> : vector<2x16x256xf32>
    %997 = tpu.matmul %996, %992, %cst_423 {dimension_numbers = #tpu.dot_dimension_numbers<[2], [1], [1], [2], [0, 0, 0, 1, 1, 2], [0], [0]>} : vector<2x16x16xf32>, vector<2x16x256xf32>, vector<2x16x256xf32> -> vector<2x16x256xf32>
    %998 = arith.addf %987, %997 : vector<2x16x256xf32>
    %c10_424 = arith.constant 10 : index
    %c0_425 = arith.constant 0 : index
    %c0_426 = arith.constant 0 : index
    %999 = vector.load %arg3[%c10_424, %c0_425, %c0_426] : memref<11x16x1xf32, #tpu.memory_space<vmem>>, vector<1x16x1xf32>
    %1000 = vector.shape_cast %999 : vector<1x16x1xf32> to vector<16x1xf32>
    %1001 = vector.shape_cast %1000 : vector<16x1xf32> to vector<1x16x1xf32>
    %1002 = vector.broadcast %1001 : vector<1x16x1xf32> to vector<2x16x256xf32>
    %1003 = arith.addf %998, %1002 : vector<2x16x256xf32>
    %1004 = vector.extract_strided_slice %1003 {offsets = [0, 0, 0], sizes = [2, 1, 256], strides = [1, 1, 1]} : vector<2x16x256xf32> to vector<2x1x256xf32>
    %1005 = vector.shape_cast %1004 : vector<2x1x256xf32> to vector<2x256xf32>
    %c0_427 = arith.constant 0 : index
    %c0_428 = arith.constant 0 : index
    %1006 = vector.load %arg8[%c0_427, %c0_428] : memref<2x256xf32, #tpu.memory_space<vmem>>, vector<2x256xf32>
    tpu.vector_store %arg8[%c0_427, %c0_428], %1005 {strides = array<i32>} : memref<2x256xf32, #tpu.memory_space<vmem>>, vector<2x256xf32>,
    return
  }
  func.func @transform_0(%arg0: i32) -> (i32, i32) {
    %c0_i32 = arith.constant 0 : i32
    %c0_i32_0 = arith.constant 0 : i32
    return %arg0, %c0_i32 : i32, i32
  }
  func.func @transform_1(%arg0: i32) -> (i32, i32, i32) {
    %c0_i32 = arith.constant 0 : i32
    %c0_i32_0 = arith.constant 0 : i32
    %c0_i32_1 = arith.constant 0 : i32
    %c0_i32_2 = arith.constant 0 : i32
    return %c0_i32, %c0_i32_0, %c0_i32_1 : i32, i32, i32
  }
  func.func @transform_2(%arg0: i32) -> (i32, i32, i32) {
    %c0_i32 = arith.constant 0 : i32
    %c0_i32_0 = arith.constant 0 : i32
    %c0_i32_1 = arith.constant 0 : i32
    %c0_i32_2 = arith.constant 0 : i32
    return %c0_i32, %c0_i32_0, %c0_i32_1 : i32, i32, i32
  }
  func.func @transform_3(%arg0: i32) -> (i32, i32) {
    %c0_i32 = arith.constant 0 : i32
    %c0_i32_0 = arith.constant 0 : i32
    %c0_i32_1 = arith.constant 0 : i32
    return %c0_i32, %c0_i32_0 : i32, i32
  }
  func.func @transform_4(%arg0: i32) -> (i32, i32) {
    %c0_i32 = arith.constant 0 : i32
    %c0_i32_0 = arith.constant 0 : i32
    %c0_i32_1 = arith.constant 0 : i32
    return %c0_i32, %c0_i32_0 : i32, i32
  }
  func.func @transform_5(%arg0: i32) -> (i32, i32, i32) {
    %c0_i32 = arith.constant 0 : i32
    %c0_i32_0 = arith.constant 0 : i32
    %c0_i32_1 = arith.constant 0 : i32
    %c0_i32_2 = arith.constant 0 : i32
    return %c0_i32, %c0_i32_0, %c0_i32_1 : i32, i32, i32
  }
  func.func @transform_6(%arg0: i32) -> (i32, i32, i32) {
    %c0_i32 = arith.constant 0 : i32
    %c0_i32_0 = arith.constant 0 : i32
    %c0_i32_1 = arith.constant 0 : i32
    %c0_i32_2 = arith.constant 0 : i32
    return %c0_i32, %c0_i32_0, %c0_i32_1 : i32, i32, i32
  }
  func.func @transform_7(%arg0: i32) -> (i32, i32) {
    %c0_i32 = arith.constant 0 : i32
    %c0_i32_0 = arith.constant 0 : i32
    return %arg0, %c0_i32 : i32, i32
  }
}

</mosaic_0001>

<llo_original>
// kernel: cae_forward.1
$region0: #{cae_forward.1}
  #allocation0 [shape = 'u32[]', space=smem, size = 0x4, offset = 0x4, fixed_abs, tag = 'smem constant byte address 0x4 - core index']
  #allocation1 [shape = 'u32[72,128]{1,0:T(1,128)}', space=vmem, size = 0x9000, scoped, tag = 'internal scratch']
  %s0 = inlined_call_operand.vmem [shape: f32[2,256], index: 0, kind: input, shape index: {}]
  %s1 = inlined_call_operand.vmem [shape: f32[89,16,16], index: 1, kind: input, shape index: {}]
  %s2 = inlined_call_operand.vmem [shape: f32[11,16,1], index: 2, kind: input, shape index: {}]
  %s3 = inlined_call_operand.vmem [shape: f32[256,64], index: 3, kind: input, shape index: {}]
  %s4 = inlined_call_operand.vmem [shape: f32[64,16], index: 4, kind: input, shape index: {}]
  %s5 = inlined_call_operand.vmem [shape: f32[4,16,64], index: 5, kind: input, shape index: {}]
  %s6 = inlined_call_operand.vmem [shape: f32[4,64,256], index: 6, kind: input, shape index: {}]
  %s7 = inlined_call_operand.vmem [shape: f32[2,256], index: 7, kind: output, shape index: {}]
  %s8 = sld [smem:[#allocation0]]
  $region38: #{cae_forward.1} parent=0
    _
  %s10 = ssub.s32 1, %s8
  %s11 = scalar_select 0, %s10, %s8
  // Predicated region
  $region2: #{cae_forward.1} parent=0 // pred_check
    _
  $region3: #{cae_forward.1} parent=0 // pred_check_branch
    %13 = sbr.rel (0) target = $region5
  $region4: #{cae_forward.1} parent=0 // pred_region
    _
  $region5: #{cae_forward.1} parent=0 // pred_fallthru
    _
  // Predicated region
  $region6: #{cae_forward.1} parent=0 // pred_check
    _
  $region7: #{cae_forward.1} parent=0 // pred_check_branch
    %15 = sbr.rel (0) target = $region9
  $region8: #{cae_forward.1} parent=0 // pred_region
    _
  $region9: #{cae_forward.1} parent=0 // pred_fallthru
    _
  // Predicated region
  $region10: #{cae_forward.1} parent=0 // pred_check
    _
  $region11: #{cae_forward.1} parent=0 // pred_check_branch
    %17 = sbr.rel (0) target = $region13
  $region12: #{cae_forward.1} parent=0 // pred_region
    _
  $region13: #{cae_forward.1} parent=0 // pred_fallthru
    _
  // Predicated region
  $region14: #{cae_forward.1} parent=0 // pred_check
    _
  $region15: #{cae_forward.1} parent=0 // pred_check_branch
    %19 = sbr.rel (0) target = $region17
  $region16: #{cae_forward.1} parent=0 // pred_region
    _
  $region17: #{cae_forward.1} parent=0 // pred_fallthru
    _
  // Predicated region
  $region18: #{cae_forward.1} parent=0 // pred_check
    _
  $region19: #{cae_forward.1} parent=0 // pred_check_branch
    %21 = sbr.rel (0) target = $region21
  $region20: #{cae_forward.1} parent=0 // pred_region
    _
  $region21: #{cae_forward.1} parent=0 // pred_fallthru
    _
  // Predicated region
  $region22: #{cae_forward.1} parent=0 // pred_check
    _
  $region23: #{cae_forward.1} parent=0 // pred_check_branch
    %23 = sbr.rel (0) target = $region25
  $region24: #{cae_forward.1} parent=0 // pred_region
    _
  $region25: #{cae_forward.1} parent=0 // pred_fallthru
    _
  // Predicated region
  $region26: #{cae_forward.1} parent=0 // pred_check
    _
  $region27: #{cae_forward.1} parent=0 // pred_check_branch
    %25 = sbr.rel (0) target = $region29
  $region28: #{cae_forward.1} parent=0 // pred_region
    _
  $region29: #{cae_forward.1} parent=0 // pred_fallthru
    _
  %v26 = vlaneseq
  %v27 = vand.u32 %v26, 127
  %v28 = vadd.s32 %v27, 128
  %v29 = vand.u32 %v27, 15
  %v30 = vand.u32 %v28, 15
  %vm31 = vcmp.ne.s32.totalorder %v29, 0
  %vm32 = vcmp.ne.s32.totalorder %v30, 0
  %vm33 = vcmp.ne.s32.totalorder %v29, 15
  %vm34 = vcmp.ne.s32.totalorder %v30, 15
  %v35 = vand.u32 %v27, 7
  %vm36 = vcmp.ne.s32.totalorder %v35, 0
  %vm37 = vcmp.ne.s32.totalorder %v35, 7
  %v38 = vand.u32 %v27, 3
  %vm39 = vcmp.ne.s32.totalorder %v38, 0
  %vm40 = vcmp.ne.s32.totalorder %v38, 3
  %v41 = vld [vmem:[%s0] sm:$0xf]
  %v43 = vrot.slane %v41, 1
  %v44 = vrot.slane %v41, 2
  %v45 = vrot.slane %v41, 3
  %vm46 = vcmask 1040384
  %v47 = vsel %vm46, %v41, %v43
  %vm48 = vcmask 1042434
  %v49 = vsel %vm48, %v44, %v45
  %vm50 = vcmask 1041408
  %v51 = vsel %vm50, %v47, %v49
  %vm52 = vcmask 1041409
  %v53 = vsel %vm52, %v41, %v43
  %vm54 = vcmask 1043459
  %v55 = vsel %vm54, %v44, %v45
  %vm56 = vcmask 1042433
  %v57 = vsel %vm56, %v53, %v55
  %v58 = vrot.slane %v57, 1
  %v59 = vperm.slane %v51, 0
  %v60 = vperm.slane %v51, 1
  %v61 = vperm.slane %v58, 0
  %v62 = vperm.slane %v58, 1
  %v67 = vsel %vm46, %v59, 0.0
  %v68 = vsel %vm46, %v60, 0.0
  %v69 = vsel %vm46, %v61, 0.0
  %v70 = vsel %vm46, %v62, 0.0
  %76 = vrot.lane.b32.xlu0 %v67, 17
  %v77 = vpop.permute.xlu0 %76
  %78 = vrot.lane.b32.xlu0 %v68, 17
  %v79 = vpop.permute.xlu0 %78
  %80 = vrot.lane.b32.xlu0 0.0, 17
  %v81 = vpop.permute.xlu0 %80
  %82 = vrot.lane.b32.xlu0 %v69, 17
  %v83 = vpop.permute.xlu0 %82
  %84 = vrot.lane.b32.xlu0 %v70, 17
  %v85 = vpop.permute.xlu0 %84
  %vm86 = vcmask 138240
  %v87 = vsel %vm86, %v77, %v79
  %v88 = vsel %vm86, %v83, %v85
  %v96 = vsel %vm86, 0.0, %v77
  %v97 = vsel %vm86, 0.0, %v81
  %v98 = vsel %vm86, 0.0, %v83
  %v99 = vsel %vm86, %v79, 0.0
  %v100 = vsel %vm86, %v81, 0.0
  %v101 = vsel %vm86, %v85, 0.0
  %v102 = vsel %vm31, 1, 0
  %v103 = vsel %vm32, 1, 0
  %vm104 = vcmp.eq.s32.totalorder %v102, 1
  %vm105 = vcmp.eq.s32.totalorder %v103, 1
  %v106 = vsel %vm104, %v96, 0.0
  %v107 = vsel %vm105, %v87, 0.0
  %v108 = vsel %vm104, %v97, 0.0
  %v109 = vsel %vm105, %v81, 0.0
  %v110 = vsel %vm104, %v98, 0.0
  %v111 = vsel %vm105, %v88, 0.0
  %v112 = vld [vmem:[%s1] sm:$0xff]
  %v113 = vld [vmem:[%s1 + $0x8] sm:$0xff]
  %s114 = scalar_lea.vmem %s1, 16
  %v115 = vld [vmem:[%s114] sm:$0xff]
  %v116 = vld [vmem:[%s114 + $0x8] sm:$0xff]
  %121 = vrot.lane.b32.xlu0 %v96, 127
  %v122 = vpop.permute.xlu0 %121
  %123 = vrot.lane.b32.xlu0 %v87, 127
  %v124 = vpop.permute.xlu0 %123
  %125 = vrot.lane.b32.xlu0 %v99, 127
  %v126 = vpop.permute.xlu0 %125
  %127 = vrot.lane.b32.xlu0 %v97, 127
  %v128 = vpop.permute.xlu0 %127
  %129 = vrot.lane.b32.xlu0 %v81, 127
  %v130 = vpop.permute.xlu0 %129
  %131 = vrot.lane.b32.xlu0 %v100, 127
  %v132 = vpop.permute.xlu0 %131
  %vm133 = vcmask 1039360
  %v134 = vsel %vm133, %v122, %v124
  %v135 = vsel %vm133, %v124, %v126
  %v136 = vsel %vm133, %v128, %v130
  %v137 = vsel %vm133, %v130, %v132
  %vm142 = vcmask 130048
  %v144 = vsel %vm142, %v115, 0
  %v147 = vsel %vm142, %v116, 0
  %149 = vmatpush.msra.mxu0 0.0
  %150 = vmatpush.msra.mxu0 0.0
  %151 = vmatpush.msra.mxu0 0.0
  %152 = vmatpush.msra.mxu0 0.0
  %153 = vmatpush.msra.mxu0 0.0
  %154 = vmatpush.msra.mxu0 0.0
  %155 = vmatpush.msra.mxu0 0.0
  %156 = vmatpush.msra.mxu0 0.0
  %157 = vmatpush.msra.mxu0 0.0
  %158 = vmatpush.msra.mxu0 0.0
  %159 = vmatpush.msra.mxu0 0.0
  %160 = vmatpush.msra.mxu0 0.0
  %161 = vmatpush.msra.mxu0 0.0
  %162 = vmatpush.msra.mxu0 0.0
  %163 = vmatpush.msra.mxu0 %v136
  %164 = vmatpush.msra.mxu0 %v134
  %165 = vmatmul.f32.gmra.mxu0 %v144
  %v166 = vpop.f32.mrf.mxu0
  %v167 = vadd.f32 0.0, %v166
  %168 = vmatmul.f32.gmra.mxu0 %v147
  %v169 = vpop.f32.mrf.mxu0
  %v170 = vadd.f32 0.0, %v169
  %171 = vdwg.mxu0
  %172 = vmatpush.msra.mxu0 0.0
  %173 = vmatpush.msra.mxu0 0.0
  %174 = vmatpush.msra.mxu0 0.0
  %175 = vmatpush.msra.mxu0 0.0
  %176 = vmatpush.msra.mxu0 0.0
  %177 = vmatpush.msra.mxu0 0.0
  %178 = vmatpush.msra.mxu0 0.0
  %179 = vmatpush.msra.mxu0 0.0
  %180 = vmatpush.msra.mxu0 0.0
  %181 = vmatpush.msra.mxu0 0.0
  %182 = vmatpush.msra.mxu0 0.0
  %183 = vmatpush.msra.mxu0 0.0
  %184 = vmatpush.msra.mxu0 0.0
  %185 = vmatpush.msra.mxu0 0.0
  %186 = vmatpush.msra.mxu0 %v137
  %187 = vmatpush.msra.mxu0 %v135
  %188 = vmatmul.f32.gmra.mxu0 %v144
  %v189 = vpop.f32.mrf.mxu0
  %v190 = vadd.f32 0.0, %v189
  %191 = vmatmul.f32.gmra.mxu0 %v147
  %v192 = vpop.f32.mrf.mxu0
  %v193 = vadd.f32 0.0, %v192
  %194 = vdwg.mxu0
  %197 = vrot.lane.b32.xlu0 %v98, 127
  %v198 = vpop.permute.xlu0 %197
  %199 = vrot.lane.b32.xlu0 %v88, 127
  %v200 = vpop.permute.xlu0 %199
  %201 = vrot.lane.b32.xlu0 %v101, 127
  %v202 = vpop.permute.xlu0 %201
  %v203 = vsel %vm133, %v198, %v200
  %v204 = vsel %vm133, %v200, %v202
  %207 = vmatpush.msra.mxu0 0.0
  %208 = vmatpush.msra.mxu0 0.0
  %209 = vmatpush.msra.mxu0 0.0
  %210 = vmatpush.msra.mxu0 0.0
  %211 = vmatpush.msra.mxu0 0.0
  %212 = vmatpush.msra.mxu0 0.0
  %213 = vmatpush.msra.mxu0 0.0
  %214 = vmatpush.msra.mxu0 0.0
  %215 = vmatpush.msra.mxu0 0.0
  %216 = vmatpush.msra.mxu0 0.0
  %217 = vmatpush.msra.mxu0 0.0
  %218 = vmatpush.msra.mxu0 0.0
  %219 = vmatpush.msra.mxu0 0.0
  %220 = vmatpush.msra.mxu0 0.0
  %221 = vmatpush.msra.mxu0 %v136
  %222 = vmatpush.msra.mxu0 %v203
  %223 = vmatmul.f32.gmra.mxu0 %v144
  %v224 = vpop.f32.mrf.mxu0
  %v225 = vadd.f32 0.0, %v224
  %226 = vmatmul.f32.gmra.mxu0 %v147
  %v227 = vpop.f32.mrf.mxu0
  %v228 = vadd.f32 0.0, %v227
  %229 = vdwg.mxu0
  %230 = vmatpush.msra.mxu0 0.0
  %231 = vmatpush.msra.mxu0 0.0
  %232 = vmatpush.msra.mxu0 0.0
  %233 = vmatpush.msra.mxu0 0.0
  %234 = vmatpush.msra.mxu0 0.0
  %235 = vmatpush.msra.mxu0 0.0
  %236 = vmatpush.msra.mxu0 0.0
  %237 = vmatpush.msra.mxu0 0.0
  %238 = vmatpush.msra.mxu0 0.0
  %239 = vmatpush.msra.mxu0 0.0
  %240 = vmatpush.msra.mxu0 0.0
  %241 = vmatpush.msra.mxu0 0.0
  %242 = vmatpush.msra.mxu0 0.0
  %243 = vmatpush.msra.mxu0 0.0
  %244 = vmatpush.msra.mxu0 %v137
  %245 = vmatpush.msra.mxu0 %v204
  %246 = vmatmul.f32.gmra.mxu0 %v144
  %v247 = vpop.f32.mrf.mxu0
  %v248 = vadd.f32 0.0, %v247
  %249 = vmatmul.f32.gmra.mxu0 %v147
  %v250 = vpop.f32.mrf.mxu0
  %v251 = vadd.f32 0.0, %v250
  %252 = vdwg.mxu0
  %v254 = vsel %vm142, %v112, 0
  %v257 = vsel %vm142, %v113, 0
  %259 = vmatpush.msra.mxu0 0.0
  %260 = vmatpush.msra.mxu0 0.0
  %261 = vmatpush.msra.mxu0 0.0
  %262 = vmatpush.msra.mxu0 0.0
  %263 = vmatpush.msra.mxu0 0.0
  %264 = vmatpush.msra.mxu0 0.0
  %265 = vmatpush.msra.mxu0 0.0
  %266 = vmatpush.msra.mxu0 0.0
  %267 = vmatpush.msra.mxu0 0.0
  %268 = vmatpush.msra.mxu0 0.0
  %269 = vmatpush.msra.mxu0 0.0
  %270 = vmatpush.msra.mxu0 0.0
  %271 = vmatpush.msra.mxu0 0.0
  %272 = vmatpush.msra.mxu0 0.0
  %273 = vmatpush.msra.mxu0 %v108
  %274 = vmatpush.msra.mxu0 %v106
  %275 = vmatmul.f32.gmra.mxu0 %v254
  %v276 = vpop.f32.mrf.mxu0
  %v277 = vadd.f32 %v167, %v276
  %278 = vmatmul.f32.gmra.mxu0 %v257
  %v279 = vpop.f32.mrf.mxu0
  %v280 = vadd.f32 %v170, %v279
  %281 = vdwg.mxu0
  %282 = vmatpush.msra.mxu0 0.0
  %283 = vmatpush.msra.mxu0 0.0
  %284 = vmatpush.msra.mxu0 0.0
  %285 = vmatpush.msra.mxu0 0.0
  %286 = vmatpush.msra.mxu0 0.0
  %287 = vmatpush.msra.mxu0 0.0
  %288 = vmatpush.msra.mxu0 0.0
  %289 = vmatpush.msra.mxu0 0.0
  %290 = vmatpush.msra.mxu0 0.0
  %291 = vmatpush.msra.mxu0 0.0
  %292 = vmatpush.msra.mxu0 0.0
  %293 = vmatpush.msra.mxu0 0.0
  %294 = vmatpush.msra.mxu0 0.0
  %295 = vmatpush.msra.mxu0 0.0
  %296 = vmatpush.msra.mxu0 %v109
  %297 = vmatpush.msra.mxu0 %v107
  %298 = vmatmul.f32.gmra.mxu0 %v254
  %v299 = vpop.f32.mrf.mxu0
  %v300 = vadd.f32 %v190, %v299
  %301 = vmatmul.f32.gmra.mxu0 %v257
  %v302 = vpop.f32.mrf.mxu0
  %v303 = vadd.f32 %v193, %v302
  %304 = vdwg.mxu0
  %305 = vmatpush.msra.mxu0 0.0
  %306 = vmatpush.msra.mxu0 0.0
  %307 = vmatpush.msra.mxu0 0.0
  %308 = vmatpush.msra.mxu0 0.0
  %309 = vmatpush.msra.mxu0 0.0
  %310 = vmatpush.msra.mxu0 0.0
  %311 = vmatpush.msra.mxu0 0.0
  %312 = vmatpush.msra.mxu0 0.0
  %313 = vmatpush.msra.mxu0 0.0
  %314 = vmatpush.msra.mxu0 0.0
  %315 = vmatpush.msra.mxu0 0.0
  %316 = vmatpush.msra.mxu0 0.0
  %317 = vmatpush.msra.mxu0 0.0
  %318 = vmatpush.msra.mxu0 0.0
  %319 = vmatpush.msra.mxu0 %v108
  %320 = vmatpush.msra.mxu0 %v110
  %321 = vmatmul.f32.gmra.mxu0 %v254
  %v322 = vpop.f32.mrf.mxu0
  %v323 = vadd.f32 %v225, %v322
  %324 = vmatmul.f32.gmra.mxu0 %v257
  %v325 = vpop.f32.mrf.mxu0
  %v326 = vadd.f32 %v228, %v325
  %327 = vdwg.mxu0
  %328 = vmatpush.msra.mxu0 0.0
  %329 = vmatpush.msra.mxu0 0.0
  %330 = vmatpush.msra.mxu0 0.0
  %331 = vmatpush.msra.mxu0 0.0
  %332 = vmatpush.msra.mxu0 0.0
  %333 = vmatpush.msra.mxu0 0.0
  %334 = vmatpush.msra.mxu0 0.0
  %335 = vmatpush.msra.mxu0 0.0
  %336 = vmatpush.msra.mxu0 0.0
  %337 = vmatpush.msra.mxu0 0.0
  %338 = vmatpush.msra.mxu0 0.0
  %339 = vmatpush.msra.mxu0 0.0
  %340 = vmatpush.msra.mxu0 0.0
  %341 = vmatpush.msra.mxu0 0.0
  %342 = vmatpush.msra.mxu0 %v109
  %343 = vmatpush.msra.mxu0 %v111
  %344 = vmatmul.f32.gmra.mxu0 %v254
  %v345 = vpop.f32.mrf.mxu0
  %v346 = vadd.f32 %v248, %v345
  %347 = vmatmul.f32.gmra.mxu0 %v257
  %v348 = vpop.f32.mrf.mxu0
  %v349 = vadd.f32 %v251, %v348
  %350 = vdwg.mxu0
  %v351 = vsel %vm33, 1, 0
  %v352 = vsel %vm34, 1, 0
  %vm353 = vcmp.eq.s32.totalorder %v351, 1
  %vm354 = vcmp.eq.s32.totalorder %v352, 1
  %355 = vrot.lane.b32.xlu0 %v96, 126
  %v356 = vpop.permute.xlu0 %355
  %357 = vrot.lane.b32.xlu0 %v87, 126
  %v358 = vpop.permute.xlu0 %357
  %359 = vrot.lane.b32.xlu0 %v99, 126
  %v360 = vpop.permute.xlu0 %359
  %361 = vrot.lane.b32.xlu0 %v97, 126
  %v362 = vpop.permute.xlu0 %361
  %363 = vrot.lane.b32.xlu0 %v81, 126
  %v364 = vpop.permute.xlu0 %363
  %365 = vrot.lane.b32.xlu0 %v100, 126
  %v366 = vpop.permute.xlu0 %365
  %367 = vrot.lane.b32.xlu0 %v98, 126
  %v368 = vpop.permute.xlu0 %367
  %369 = vrot.lane.b32.xlu0 %v88, 126
  %v370 = vpop.permute.xlu0 %369
  %371 = vrot.lane.b32.xlu0 %v101, 126
  %v372 = vpop.permute.xlu0 %371
  %vm373 = vcmask 1031168
  %v374 = vsel %vm373, %v356, %v358
  %v375 = vsel %vm373, %v358, %v360
  %v376 = vsel %vm373, %v362, %v364
  %v377 = vsel %vm373, %v364, %v366
  %v378 = vsel %vm373, %v368, %v370
  %v379 = vsel %vm373, %v370, %v372
  %v386 = vsel %vm353, %v374, 0.0
  %v387 = vsel %vm354, %v375, 0.0
  %v388 = vsel %vm353, %v376, 0.0
  %v389 = vsel %vm354, %v377, 0.0
  %v390 = vsel %vm353, %v378, 0.0
  %v391 = vsel %vm354, %v379, 0.0
  %s392 = scalar_lea.vmem %s1, 32
  %v393 = vld [vmem:[%s392] sm:$0xff]
  %v394 = vld [vmem:[%s392 + $0x8] sm:$0xff]
  %v396 = vsel %vm142, %v393, 0
  %v399 = vsel %vm142, %v394, 0
  %401 = vmatpush.msra.mxu0 0.0
  %402 = vmatpush.msra.mxu0 0.0
  %403 = vmatpush.msra.mxu0 0.0
  %404 = vmatpush.msra.mxu0 0.0
  %405 = vmatpush.msra.mxu0 0.0
  %406 = vmatpush.msra.mxu0 0.0
  %407 = vmatpush.msra.mxu0 0.0
  %408 = vmatpush.msra.mxu0 0.0
  %409 = vmatpush.msra.mxu0 0.0
  %410 = vmatpush.msra.mxu0 0.0
  %411 = vmatpush.msra.mxu0 0.0
  %412 = vmatpush.msra.mxu0 0.0
  %413 = vmatpush.msra.mxu0 0.0
  %414 = vmatpush.msra.mxu0 0.0
  %415 = vmatpush.msra.mxu0 %v388
  %416 = vmatpush.msra.mxu0 %v386
  %417 = vmatmul.f32.gmra.mxu0 %v396
  %v418 = vpop.f32.mrf.mxu0
  %v419 = vadd.f32 0.0, %v418
  %420 = vmatmul.f32.gmra.mxu0 %v399
  %v421 = vpop.f32.mrf.mxu0
  %v422 = vadd.f32 0.0, %v421
  %423 = vdwg.mxu0
  %424 = vmatpush.msra.mxu0 0.0
  %425 = vmatpush.msra.mxu0 0.0
  %426 = vmatpush.msra.mxu0 0.0
  %427 = vmatpush.msra.mxu0 0.0
  %428 = vmatpush.msra.mxu0 0.0
  %429 = vmatpush.msra.mxu0 0.0
  %430 = vmatpush.msra.mxu0 0.0
  %431 = vmatpush.msra.mxu0 0.0
  %432 = vmatpush.msra.mxu0 0.0
  %433 = vmatpush.msra.mxu0 0.0
  %434 = vmatpush.msra.mxu0 0.0
  %435 = vmatpush.msra.mxu0 0.0
  %436 = vmatpush.msra.mxu0 0.0
  %437 = vmatpush.msra.mxu0 0.0
  %438 = vmatpush.msra.mxu0 %v389
  %439 = vmatpush.msra.mxu0 %v387
  %440 = vmatmul.f32.gmra.mxu0 %v396
  %v441 = vpop.f32.mrf.mxu0
  %v442 = vadd.f32 0.0, %v441
  %443 = vmatmul.f32.gmra.mxu0 %v399
  %v444 = vpop.f32.mrf.mxu0
  %v445 = vadd.f32 0.0, %v444
  %446 = vdwg.mxu0
  %447 = vmatpush.msra.mxu0 0.0
  %448 = vmatpush.msra.mxu0 0.0
  %449 = vmatpush.msra.mxu0 0.0
  %450 = vmatpush.msra.mxu0 0.0
  %451 = vmatpush.msra.mxu0 0.0
  %452 = vmatpush.msra.mxu0 0.0
  %453 = vmatpush.msra.mxu0 0.0
  %454 = vmatpush.msra.mxu0 0.0
  %455 = vmatpush.msra.mxu0 0.0
  %456 = vmatpush.msra.mxu0 0.0
  %457 = vmatpush.msra.mxu0 0.0
  %458 = vmatpush.msra.mxu0 0.0
  %459 = vmatpush.msra.mxu0 0.0
  %460 = vmatpush.msra.mxu0 0.0
  %461 = vmatpush.msra.mxu0 %v388
  %462 = vmatpush.msra.mxu0 %v390
  %463 = vmatmul.f32.gmra.mxu0 %v396
  %v464 = vpop.f32.mrf.mxu0
  %v465 = vadd.f32 0.0, %v464
  %466 = vmatmul.f32.gmra.mxu0 %v399
  %v467 = vpop.f32.mrf.mxu0
  %v468 = vadd.f32 0.0, %v467
  %469 = vdwg.mxu0
  %470 = vmatpush.msra.mxu0 0.0
  %471 = vmatpush.msra.mxu0 0.0
  %472 = vmatpush.msra.mxu0 0.0
  %473 = vmatpush.msra.mxu0 0.0
  %474 = vmatpush.msra.mxu0 0.0
  %475 = vmatpush.msra.mxu0 0.0
  %476 = vmatpush.msra.mxu0 0.0
  %477 = vmatpush.msra.mxu0 0.0
  %478 = vmatpush.msra.mxu0 0.0
  %479 = vmatpush.msra.mxu0 0.0
  %480 = vmatpush.msra.mxu0 0.0
  %481 = vmatpush.msra.mxu0 0.0
  %482 = vmatpush.msra.mxu0 0.0
  %483 = vmatpush.msra.mxu0 0.0
  %484 = vmatpush.msra.mxu0 %v389
  %485 = vmatpush.msra.mxu0 %v391
  %486 = vmatmul.f32.gmra.mxu0 %v396
  %v487 = vpop.f32.mrf.mxu0
  %v488 = vadd.f32 0.0, %v487
  %489 = vmatmul.f32.gmra.mxu0 %v399
  %v490 = vpop.f32.mrf.mxu0
  %v491 = vadd.f32 0.0, %v490
  %492 = vdwg.mxu0
  %v493 = vadd.f32 %v277, %v419
  %v494 = vadd.f32 %v300, %v442
  %v495 = vadd.f32 %v280, %v422
  %v496 = vadd.f32 %v303, %v445
  %v497 = vadd.f32 %v323, %v465
  %v498 = vadd.f32 %v346, %v488
  %v499 = vadd.f32 %v326, %v468
  %v500 = vadd.f32 %v349, %v491
  %501 = vrot.lane.b32.xlu0 %v96, 112
  %v502 = vpop.permute.xlu0 %501
  %503 = vrot.lane.b32.xlu0 %v87, 112
  %v504 = vpop.permute.xlu0 %503
  %505 = vrot.lane.b32.xlu0 %v99, 112
  %v506 = vpop.permute.xlu0 %505
  %507 = vrot.lane.b32.xlu0 %v97, 112
  %v508 = vpop.permute.xlu0 %507
  %509 = vrot.lane.b32.xlu0 %v81, 112
  %v510 = vpop.permute.xlu0 %509
  %511 = vrot.lane.b32.xlu0 %v100, 112
  %v512 = vpop.permute.xlu0 %511
  %513 = vrot.lane.b32.xlu0 %v98, 112
  %v514 = vpop.permute.xlu0 %513
  %515 = vrot.lane.b32.xlu0 %v88, 112
  %v516 = vpop.permute.xlu0 %515
  %517 = vrot.lane.b32.xlu0 %v101, 112
  %v518 = vpop.permute.xlu0 %517
  %vm519 = vcmask 916480
  %v520 = vsel %vm519, %v502, %v504
  %v521 = vsel %vm519, %v504, %v506
  %v522 = vsel %vm519, %v508, %v510
  %v523 = vsel %vm519, %v510, %v512
  %v524 = vsel %vm519, %v514, %v516
  %v525 = vsel %vm519, %v516, %v518
  %v532 = vsel %vm104, %v520, 0.0
  %v533 = vsel %vm105, %v521, 0.0
  %v534 = vsel %vm104, %v522, 0.0
  %v535 = vsel %vm105, %v523, 0.0
  %v536 = vsel %vm104, %v524, 0.0
  %v537 = vsel %vm105, %v525, 0.0
  %s538 = scalar_lea.vmem %s1, 48
  %v539 = vld [vmem:[%s538] sm:$0xff]
  %v540 = vld [vmem:[%s538 + $0x8] sm:$0xff]
  %v542 = vsel %vm142, %v539, 0
  %v545 = vsel %vm142, %v540, 0
  %547 = vmatpush.msra.mxu0 0.0
  %548 = vmatpush.msra.mxu0 0.0
  %549 = vmatpush.msra.mxu0 0.0
  %550 = vmatpush.msra.mxu0 0.0
  %551 = vmatpush.msra.mxu0 0.0
  %552 = vmatpush.msra.mxu0 0.0
  %553 = vmatpush.msra.mxu0 0.0
  %554 = vmatpush.msra.mxu0 0.0
  %555 = vmatpush.msra.mxu0 0.0
  %556 = vmatpush.msra.mxu0 0.0
  %557 = vmatpush.msra.mxu0 0.0
  %558 = vmatpush.msra.mxu0 0.0
  %559 = vmatpush.msra.mxu0 0.0
  %560 = vmatpush.msra.mxu0 0.0
  %561 = vmatpush.msra.mxu0 %v534
  %562 = vmatpush.msra.mxu0 %v532
  %563 = vmatmul.f32.gmra.mxu0 %v542
  %v564 = vpop.f32.mrf.mxu0
  %v565 = vadd.f32 0.0, %v564
  %566 = vmatmul.f32.gmra.mxu0 %v545
  %v567 = vpop.f32.mrf.mxu0
  %v568 = vadd.f32 0.0, %v567
  %569 = vdwg.mxu0
  %570 = vmatpush.msra.mxu0 0.0
  %571 = vmatpush.msra.mxu0 0.0
  %572 = vmatpush.msra.mxu0 0.0
  %573 = vmatpush.msra.mxu0 0.0
  %574 = vmatpush.msra.mxu0 0.0
  %575 = vmatpush.msra.mxu0 0.0
  %576 = vmatpush.msra.mxu0 0.0
  %577 = vmatpush.msra.mxu0 0.0
  %578 = vmatpush.msra.mxu0 0.0
  %579 = vmatpush.msra.mxu0 0.0
  %580 = vmatpush.msra.mxu0 0.0
  %581 = vmatpush.msra.mxu0 0.0
  %582 = vmatpush.msra.mxu0 0.0
  %583 = vmatpush.msra.mxu0 0.0
  %584 = vmatpush.msra.mxu0 %v535
  %585 = vmatpush.msra.mxu0 %v533
  %586 = vmatmul.f32.gmra.mxu0 %v542
  %v587 = vpop.f32.mrf.mxu0
  %v588 = vadd.f32 0.0, %v587
  %589 = vmatmul.f32.gmra.mxu0 %v545
  %v590 = vpop.f32.mrf.mxu0
  %v591 = vadd.f32 0.0, %v590
  %592 = vdwg.mxu0
  %593 = vmatpush.msra.mxu0 0.0
  %594 = vmatpush.msra.mxu0 0.0
  %595 = vmatpush.msra.mxu0 0.0
  %596 = vmatpush.msra.mxu0 0.0
  %597 = vmatpush.msra.mxu0 0.0
  %598 = vmatpush.msra.mxu0 0.0
  %599 = vmatpush.msra.mxu0 0.0
  %600 = vmatpush.msra.mxu0 0.0
  %601 = vmatpush.msra.mxu0 0.0
  %602 = vmatpush.msra.mxu0 0.0
  %603 = vmatpush.msra.mxu0 0.0
  %604 = vmatpush.msra.mxu0 0.0
  %605 = vmatpush.msra.mxu0 0.0
  %606 = vmatpush.msra.mxu0 0.0
  %607 = vmatpush.msra.mxu0 %v534
  %608 = vmatpush.msra.mxu0 %v536
  %609 = vmatmul.f32.gmra.mxu0 %v542
  %v610 = vpop.f32.mrf.mxu0
  %v611 = vadd.f32 0.0, %v610
  %612 = vmatmul.f32.gmra.mxu0 %v545
  %v613 = vpop.f32.mrf.mxu0
  %v614 = vadd.f32 0.0, %v613
  %615 = vdwg.mxu0
  %616 = vmatpush.msra.mxu0 0.0
  %617 = vmatpush.msra.mxu0 0.0
  %618 = vmatpush.msra.mxu0 0.0
  %619 = vmatpush.msra.mxu0 0.0
  %620 = vmatpush.msra.mxu0 0.0
  %621 = vmatpush.msra.mxu0 0.0
  %622 = vmatpush.msra.mxu0 0.0
  %623 = vmatpush.msra.mxu0 0.0
  %624 = vmatpush.msra.mxu0 0.0
  %625 = vmatpush.msra.mxu0 0.0
  %626 = vmatpush.msra.mxu0 0.0
  %627 = vmatpush.msra.mxu0 0.0
  %628 = vmatpush.msra.mxu0 0.0
  %629 = vmatpush.msra.mxu0 0.0
  %630 = vmatpush.msra.mxu0 %v535
  %631 = vmatpush.msra.mxu0 %v537
  %632 = vmatmul.f32.gmra.mxu0 %v542
  %v633 = vpop.f32.mrf.mxu0
  %v634 = vadd.f32 0.0, %v633
  %635 = vmatmul.f32.gmra.mxu0 %v545
  %v636 = vpop.f32.mrf.mxu0
  %v637 = vadd.f32 0.0, %v636
  %638 = vdwg.mxu0
  %v639 = vadd.f32 %v493, %v565
  %v640 = vadd.f32 %v494, %v588
  %v641 = vadd.f32 %v495, %v568
  %v642 = vadd.f32 %v496, %v591
  %v643 = vadd.f32 %v497, %v611
  %v644 = vadd.f32 %v498, %v634
  %v645 = vadd.f32 %v499, %v614
  %v646 = vadd.f32 %v500, %v637
  %s647 = scalar_lea.vmem %s1, 64
  %v648 = vld [vmem:[%s647] sm:$0xff]
  %v649 = vld [vmem:[%s647 + $0x8] sm:$0xff]
  %650 = vrot.lane.b32.xlu0 %v96, 111
  %v651 = vpop.permute.xlu0 %650
  %652 = vrot.lane.b32.xlu0 %v87, 111
  %v653 = vpop.permute.xlu0 %652
  %654 = vrot.lane.b32.xlu0 %v99, 111
  %v655 = vpop.permute.xlu0 %654
  %656 = vrot.lane.b32.xlu0 %v97, 111
  %v657 = vpop.permute.xlu0 %656
  %658 = vrot.lane.b32.xlu0 %v81, 111
  %v659 = vpop.permute.xlu0 %658
  %660 = vrot.lane.b32.xlu0 %v100, 111
  %v661 = vpop.permute.xlu0 %660
  %vm662 = vcmask 908288
  %v663 = vsel %vm662, %v651, %v653
  %v664 = vsel %vm662, %v653, %v655
  %v665 = vsel %vm662, %v657, %v659
  %v666 = vsel %vm662, %v659, %v661
  %v672 = vsel %vm142, %v648, 0
  %v675 = vsel %vm142, %v649, 0
  %677 = vmatpush.msra.mxu0 0.0
  %678 = vmatpush.msra.mxu0 0.0
  %679 = vmatpush.msra.mxu0 0.0
  %680 = vmatpush.msra.mxu0 0.0
  %681 = vmatpush.msra.mxu0 0.0
  %682 = vmatpush.msra.mxu0 0.0
  %683 = vmatpush.msra.mxu0 0.0
  %684 = vmatpush.msra.mxu0 0.0
  %685 = vmatpush.msra.mxu0 0.0
  %686 = vmatpush.msra.mxu0 0.0
  %687 = vmatpush.msra.mxu0 0.0
  %688 = vmatpush.msra.mxu0 0.0
  %689 = vmatpush.msra.mxu0 0.0
  %690 = vmatpush.msra.mxu0 0.0
  %691 = vmatpush.msra.mxu0 %v665
  %692 = vmatpush.msra.mxu0 %v663
  %693 = vmatmul.f32.gmra.mxu0 %v672
  %v694 = vpop.f32.mrf.mxu0
  %v695 = vadd.f32 0.0, %v694
  %696 = vmatmul.f32.gmra.mxu0 %v675
  %v697 = vpop.f32.mrf.mxu0
  %v698 = vadd.f32 0.0, %v697
  %699 = vdwg.mxu0
  %700 = vmatpush.msra.mxu0 0.0
  %701 = vmatpush.msra.mxu0 0.0
  %702 = vmatpush.msra.mxu0 0.0
  %703 = vmatpush.msra.mxu0 0.0
  %704 = vmatpush.msra.mxu0 0.0
  %705 = vmatpush.msra.mxu0 0.0
  %706 = vmatpush.msra.mxu0 0.0
  %707 = vmatpush.msra.mxu0 0.0
  %708 = vmatpush.msra.mxu0 0.0
  %709 = vmatpush.msra.mxu0 0.0
  %710 = vmatpush.msra.mxu0 0.0
  %711 = vmatpush.msra.mxu0 0.0
  %712 = vmatpush.msra.mxu0 0.0
  %713 = vmatpush.msra.mxu0 0.0
  %714 = vmatpush.msra.mxu0 %v666
  %715 = vmatpush.msra.mxu0 %v664
  %716 = vmatmul.f32.gmra.mxu0 %v672
  %v717 = vpop.f32.mrf.mxu0
  %v718 = vadd.f32 0.0, %v717
  %719 = vmatmul.f32.gmra.mxu0 %v675
  %v720 = vpop.f32.mrf.mxu0
  %v721 = vadd.f32 0.0, %v720
  %722 = vdwg.mxu0
  %723 = vrot.lane.b32.xlu0 %v98, 111
  %v724 = vpop.permute.xlu0 %723
  %725 = vrot.lane.b32.xlu0 %v88, 111
  %v726 = vpop.permute.xlu0 %725
  %727 = vrot.lane.b32.xlu0 %v101, 111
  %v728 = vpop.permute.xlu0 %727
  %v729 = vsel %vm662, %v724, %v726
  %v730 = vsel %vm662, %v726, %v728
  %733 = vmatpush.msra.mxu0 0.0
  %734 = vmatpush.msra.mxu0 0.0
  %735 = vmatpush.msra.mxu0 0.0
  %736 = vmatpush.msra.mxu0 0.0
  %737 = vmatpush.msra.mxu0 0.0
  %738 = vmatpush.msra.mxu0 0.0
  %739 = vmatpush.msra.mxu0 0.0
  %740 = vmatpush.msra.mxu0 0.0
  %741 = vmatpush.msra.mxu0 0.0
  %742 = vmatpush.msra.mxu0 0.0
  %743 = vmatpush.msra.mxu0 0.0
  %744 = vmatpush.msra.mxu0 0.0
  %745 = vmatpush.msra.mxu0 0.0
  %746 = vmatpush.msra.mxu0 0.0
  %747 = vmatpush.msra.mxu0 %v665
  %748 = vmatpush.msra.mxu0 %v729
  %749 = vmatmul.f32.gmra.mxu0 %v672
  %v750 = vpop.f32.mrf.mxu0
  %v751 = vadd.f32 0.0, %v750
  %752 = vmatmul.f32.gmra.mxu0 %v675
  %v753 = vpop.f32.mrf.mxu0
  %v754 = vadd.f32 0.0, %v753
  %755 = vdwg.mxu0
  %756 = vmatpush.msra.mxu0 0.0
  %757 = vmatpush.msra.mxu0 0.0
  %758 = vmatpush.msra.mxu0 0.0
  %759 = vmatpush.msra.mxu0 0.0
  %760 = vmatpush.msra.mxu0 0.0
  %761 = vmatpush.msra.mxu0 0.0
  %762 = vmatpush.msra.mxu0 0.0
  %763 = vmatpush.msra.mxu0 0.0
  %764 = vmatpush.msra.mxu0 0.0
  %765 = vmatpush.msra.mxu0 0.0
  %766 = vmatpush.msra.mxu0 0.0
  %767 = vmatpush.msra.mxu0 0.0
  %768 = vmatpush.msra.mxu0 0.0
  %769 = vmatpush.msra.mxu0 0.0
  %770 = vmatpush.msra.mxu0 %v666
  %771 = vmatpush.msra.mxu0 %v730
  %772 = vmatmul.f32.gmra.mxu0 %v672
  %v773 = vpop.f32.mrf.mxu0
  %v774 = vadd.f32 0.0, %v773
  %775 = vmatmul.f32.gmra.mxu0 %v675
  %v776 = vpop.f32.mrf.mxu0
  %v777 = vadd.f32 0.0, %v776
  %778 = vdwg.mxu0
  %v779 = vadd.f32 %v639, %v695
  %v780 = vadd.f32 %v640, %v718
  %v781 = vadd.f32 %v641, %v698
  %v782 = vadd.f32 %v642, %v721
  %v783 = vadd.f32 %v643, %v751
  %v784 = vadd.f32 %v644, %v774
  %v785 = vadd.f32 %v645, %v754
  %v786 = vadd.f32 %v646, %v777
  %787 = vrot.lane.b32.xlu0 %v96, 110
  %v788 = vpop.permute.xlu0 %787
  %789 = vrot.lane.b32.xlu0 %v87, 110
  %v790 = vpop.permute.xlu0 %789
  %791 = vrot.lane.b32.xlu0 %v99, 110
  %v792 = vpop.permute.xlu0 %791
  %793 = vrot.lane.b32.xlu0 %v97, 110
  %v794 = vpop.permute.xlu0 %793
  %795 = vrot.lane.b32.xlu0 %v81, 110
  %v796 = vpop.permute.xlu0 %795
  %797 = vrot.lane.b32.xlu0 %v100, 110
  %v798 = vpop.permute.xlu0 %797
  %799 = vrot.lane.b32.xlu0 %v98, 110
  %v800 = vpop.permute.xlu0 %799
  %801 = vrot.lane.b32.xlu0 %v88, 110
  %v802 = vpop.permute.xlu0 %801
  %803 = vrot.lane.b32.xlu0 %v101, 110
  %v804 = vpop.permute.xlu0 %803
  %vm805 = vcmask 900096
  %v806 = vsel %vm805, %v788, %v790
  %v807 = vsel %vm805, %v790, %v792
  %v808 = vsel %vm805, %v794, %v796
  %v809 = vsel %vm805, %v796, %v798
  %v810 = vsel %vm805, %v800, %v802
  %v811 = vsel %vm805, %v802, %v804
  %v818 = vsel %vm353, %v806, 0.0
  %v819 = vsel %vm354, %v807, 0.0
  %v820 = vsel %vm353, %v808, 0.0
  %v821 = vsel %vm354, %v809, 0.0
  %v822 = vsel %vm353, %v810, 0.0
  %v823 = vsel %vm354, %v811, 0.0
  %s824 = scalar_lea.vmem %s1, 80
  %v825 = vld [vmem:[%s824] sm:$0xff]
  %v826 = vld [vmem:[%s824 + $0x8] sm:$0xff]
  %v828 = vsel %vm142, %v825, 0
  %v831 = vsel %vm142, %v826, 0
  %833 = vmatpush.msra.mxu0 0.0
  %834 = vmatpush.msra.mxu0 0.0
  %835 = vmatpush.msra.mxu0 0.0
  %836 = vmatpush.msra.mxu0 0.0
  %837 = vmatpush.msra.mxu0 0.0
  %838 = vmatpush.msra.mxu0 0.0
  %839 = vmatpush.msra.mxu0 0.0
  %840 = vmatpush.msra.mxu0 0.0
  %841 = vmatpush.msra.mxu0 0.0
  %842 = vmatpush.msra.mxu0 0.0
  %843 = vmatpush.msra.mxu0 0.0
  %844 = vmatpush.msra.mxu0 0.0
  %845 = vmatpush.msra.mxu0 0.0
  %846 = vmatpush.msra.mxu0 0.0
  %847 = vmatpush.msra.mxu0 %v820
  %848 = vmatpush.msra.mxu0 %v818
  %849 = vmatmul.f32.gmra.mxu0 %v828
  %v850 = vpop.f32.mrf.mxu0
  %v851 = vadd.f32 0.0, %v850
  %852 = vmatmul.f32.gmra.mxu0 %v831
  %v853 = vpop.f32.mrf.mxu0
  %v854 = vadd.f32 0.0, %v853
  %855 = vdwg.mxu0
  %856 = vmatpush.msra.mxu0 0.0
  %857 = vmatpush.msra.mxu0 0.0
  %858 = vmatpush.msra.mxu0 0.0
  %859 = vmatpush.msra.mxu0 0.0
  %860 = vmatpush.msra.mxu0 0.0
  %861 = vmatpush.msra.mxu0 0.0
  %862 = vmatpush.msra.mxu0 0.0
  %863 = vmatpush.msra.mxu0 0.0
  %864 = vmatpush.msra.mxu0 0.0
  %865 = vmatpush.msra.mxu0 0.0
  %866 = vmatpush.msra.mxu0 0.0
  %867 = vmatpush.msra.mxu0 0.0
  %868 = vmatpush.msra.mxu0 0.0
  %869 = vmatpush.msra.mxu0 0.0
  %870 = vmatpush.msra.mxu0 %v821
  %871 = vmatpush.msra.mxu0 %v819
  %872 = vmatmul.f32.gmra.mxu0 %v828
  %v873 = vpop.f32.mrf.mxu0
  %v874 = vadd.f32 0.0, %v873
  %875 = vmatmul.f32.gmra.mxu0 %v831
  %v876 = vpop.f32.mrf.mxu0
  %v877 = vadd.f32 0.0, %v876
  %878 = vdwg.mxu0
  %879 = vmatpush.msra.mxu0 0.0
  %880 = vmatpush.msra.mxu0 0.0
  %881 = vmatpush.msra.mxu0 0.0
  %882 = vmatpush.msra.mxu0 0.0
  %883 = vmatpush.msra.mxu0 0.0
  %884 = vmatpush.msra.mxu0 0.0
  %885 = vmatpush.msra.mxu0 0.0
  %886 = vmatpush.msra.mxu0 0.0
  %887 = vmatpush.msra.mxu0 0.0
  %888 = vmatpush.msra.mxu0 0.0
  %889 = vmatpush.msra.mxu0 0.0
  %890 = vmatpush.msra.mxu0 0.0
  %891 = vmatpush.msra.mxu0 0.0
  %892 = vmatpush.msra.mxu0 0.0
  %893 = vmatpush.msra.mxu0 %v820
  %894 = vmatpush.msra.mxu0 %v822
  %895 = vmatmul.f32.gmra.mxu0 %v828
  %v896 = vpop.f32.mrf.mxu0
  %v897 = vadd.f32 0.0, %v896
  %898 = vmatmul.f32.gmra.mxu0 %v831
  %v899 = vpop.f32.mrf.mxu0
  %v900 = vadd.f32 0.0, %v899
  %901 = vdwg.mxu0
  %902 = vmatpush.msra.mxu0 0.0
  %903 = vmatpush.msra.mxu0 0.0
  %904 = vmatpush.msra.mxu0 0.0
  %905 = vmatpush.msra.mxu0 0.0
  %906 = vmatpush.msra.mxu0 0.0
  %907 = vmatpush.msra.mxu0 0.0
  %908 = vmatpush.msra.mxu0 0.0
  %909 = vmatpush.msra.mxu0 0.0
  %910 = vmatpush.msra.mxu0 0.0
  %911 = vmatpush.msra.mxu0 0.0
  %912 = vmatpush.msra.mxu0 0.0
  %913 = vmatpush.msra.mxu0 0.0
  %914 = vmatpush.msra.mxu0 0.0
  %915 = vmatpush.msra.mxu0 0.0
  %916 = vmatpush.msra.mxu0 %v821
  %917 = vmatpush.msra.mxu0 %v823
  %918 = vmatmul.f32.gmra.mxu0 %v828
  %v919 = vpop.f32.mrf.mxu0
  %v920 = vadd.f32 0.0, %v919
  %921 = vmatmul.f32.gmra.mxu0 %v831
  %v922 = vpop.f32.mrf.mxu0
  %v923 = vadd.f32 0.0, %v922
  %924 = vdwg.mxu0
  %v925 = vadd.f32 %v779, %v851
  %v926 = vadd.f32 %v780, %v874
  %v927 = vadd.f32 %v781, %v854
  %v928 = vadd.f32 %v782, %v877
  %v929 = vadd.f32 %v783, %v897
  %v930 = vadd.f32 %v784, %v920
  %v931 = vadd.f32 %v785, %v900
  %v932 = vadd.f32 %v786, %v923
  %933 = vrot.lane.b32.xlu0 %v96, 96
  %v934 = vpop.permute.xlu0 %933
  %935 = vrot.lane.b32.xlu0 %v87, 96
  %v936 = vpop.permute.xlu0 %935
  %937 = vrot.lane.b32.xlu0 %v99, 96
  %v938 = vpop.permute.xlu0 %937
  %939 = vrot.lane.b32.xlu0 %v97, 96
  %v940 = vpop.permute.xlu0 %939
  %941 = vrot.lane.b32.xlu0 %v81, 96
  %v942 = vpop.permute.xlu0 %941
  %943 = vrot.lane.b32.xlu0 %v100, 96
  %v944 = vpop.permute.xlu0 %943
  %945 = vrot.lane.b32.xlu0 %v98, 96
  %v946 = vpop.permute.xlu0 %945
  %947 = vrot.lane.b32.xlu0 %v88, 96
  %v948 = vpop.permute.xlu0 %947
  %949 = vrot.lane.b32.xlu0 %v101, 96
  %v950 = vpop.permute.xlu0 %949
  %vm951 = vcmask 785408
  %v952 = vsel %vm951, %v934, %v936
  %v953 = vsel %vm951, %v936, %v938
  %v954 = vsel %vm951, %v940, %v942
  %v955 = vsel %vm951, %v942, %v944
  %v956 = vsel %vm951, %v946, %v948
  %v957 = vsel %vm951, %v948, %v950
  %v964 = vsel %vm104, %v952, 0.0
  %v965 = vsel %vm105, %v953, 0.0
  %v966 = vsel %vm104, %v954, 0.0
  %v967 = vsel %vm105, %v955, 0.0
  %v968 = vsel %vm104, %v956, 0.0
  %v969 = vsel %vm105, %v957, 0.0
  %s970 = scalar_lea.vmem %s1, 96
  %v971 = vld [vmem:[%s970] sm:$0xff]
  %v972 = vld [vmem:[%s970 + $0x8] sm:$0xff]
  %v974 = vsel %vm142, %v971, 0
  %v977 = vsel %vm142, %v972, 0
  %979 = vmatpush.msra.mxu0 0.0
  %980 = vmatpush.msra.mxu0 0.0
  %981 = vmatpush.msra.mxu0 0.0
  %982 = vmatpush.msra.mxu0 0.0
  %983 = vmatpush.msra.mxu0 0.0
  %984 = vmatpush.msra.mxu0 0.0
  %985 = vmatpush.msra.mxu0 0.0
  %986 = vmatpush.msra.mxu0 0.0
  %987 = vmatpush.msra.mxu0 0.0
  %988 = vmatpush.msra.mxu0 0.0
  %989 = vmatpush.msra.mxu0 0.0
  %990 = vmatpush.msra.mxu0 0.0
  %991 = vmatpush.msra.mxu0 0.0
  %992 = vmatpush.msra.mxu0 0.0
  %993 = vmatpush.msra.mxu0 %v966
  %994 = vmatpush.msra.mxu0 %v964
  %995 = vmatmul.f32.gmra.mxu0 %v974
  %v996 = vpop.f32.mrf.mxu0
  %v997 = vadd.f32 0.0, %v996
  %998 = vmatmul.f32.gmra.mxu0 %v977
  %v999 = vpop.f32.mrf.mxu0
  %v1000 = vadd.f32 0.0, %v999
  %1001 = vdwg.mxu0
  %1002 = vmatpush.msra.mxu0 0.0
  %1003 = vmatpush.msra.mxu0 0.0
  %1004 = vmatpush.msra.mxu0 0.0
  %1005 = vmatpush.msra.mxu0 0.0
  %1006 = vmatpush.msra.mxu0 0.0
  %1007 = vmatpush.msra.mxu0 0.0
  %1008 = vmatpush.msra.mxu0 0.0
  %1009 = vmatpush.msra.mxu0 0.0
  %1010 = vmatpush.msra.mxu0 0.0
  %1011 = vmatpush.msra.mxu0 0.0
  %1012 = vmatpush.msra.mxu0 0.0
  %1013 = vmatpush.msra.mxu0 0.0
  %1014 = vmatpush.msra.mxu0 0.0
  %1015 = vmatpush.msra.mxu0 0.0
  %1016 = vmatpush.msra.mxu0 %v967
  %1017 = vmatpush.msra.mxu0 %v965
  %1018 = vmatmul.f32.gmra.mxu0 %v974
  %v1019 = vpop.f32.mrf.mxu0
  %v1020 = vadd.f32 0.0, %v1019
  %1021 = vmatmul.f32.gmra.mxu0 %v977
  %v1022 = vpop.f32.mrf.mxu0
  %v1023 = vadd.f32 0.0, %v1022
  %1024 = vdwg.mxu0
  %1025 = vmatpush.msra.mxu0 0.0
  %1026 = vmatpush.msra.mxu0 0.0
  %1027 = vmatpush.msra.mxu0 0.0
  %1028 = vmatpush.msra.mxu0 0.0
  %1029 = vmatpush.msra.mxu0 0.0
  %1030 = vmatpush.msra.mxu0 0.0
  %1031 = vmatpush.msra.mxu0 0.0
  %1032 = vmatpush.msra.mxu0 0.0
  %1033 = vmatpush.msra.mxu0 0.0
  %1034 = vmatpush.msra.mxu0 0.0
  %1035 = vmatpush.msra.mxu0 0.0
  %1036 = vmatpush.msra.mxu0 0.0
  %1037 = vmatpush.msra.mxu0 0.0
  %1038 = vmatpush.msra.mxu0 0.0
  %1039 = vmatpush.msra.mxu0 %v966
  %1040 = vmatpush.msra.mxu0 %v968
  %1041 = vmatmul.f32.gmra.mxu0 %v974
  %v1042 = vpop.f32.mrf.mxu0
  %v1043 = vadd.f32 0.0, %v1042
  %1044 = vmatmul.f32.gmra.mxu0 %v977
  %v1045 = vpop.f32.mrf.mxu0
  %v1046 = vadd.f32 0.0, %v1045
  %1047 = vdwg.mxu0
  %1048 = vmatpush.msra.mxu0 0.0
  %1049 = vmatpush.msra.mxu0 0.0
  %1050 = vmatpush.msra.mxu0 0.0
  %1051 = vmatpush.msra.mxu0 0.0
  %1052 = vmatpush.msra.mxu0 0.0
  %1053 = vmatpush.msra.mxu0 0.0
  %1054 = vmatpush.msra.mxu0 0.0
  %1055 = vmatpush.msra.mxu0 0.0
  %1056 = vmatpush.msra.mxu0 0.0
  %1057 = vmatpush.msra.mxu0 0.0
  %1058 = vmatpush.msra.mxu0 0.0
  %1059 = vmatpush.msra.mxu0 0.0
  %1060 = vmatpush.msra.mxu0 0.0
  %1061 = vmatpush.msra.mxu0 0.0
  %1062 = vmatpush.msra.mxu0 %v967
  %1063 = vmatpush.msra.mxu0 %v969
  %1064 = vmatmul.f32.gmra.mxu0 %v974
  %v1065 = vpop.f32.mrf.mxu0
  %v1066 = vadd.f32 0.0, %v1065
  %1067 = vmatmul.f32.gmra.mxu0 %v977
  %v1068 = vpop.f32.mrf.mxu0
  %v1069 = vadd.f32 0.0, %v1068
  %1070 = vdwg.mxu0
  %v1071 = vadd.f32 %v925, %v997
  %v1072 = vadd.f32 %v926, %v1020
  %v1073 = vadd.f32 %v927, %v1000
  %v1074 = vadd.f32 %v928, %v1023
  %v1075 = vadd.f32 %v929, %v1043
  %v1076 = vadd.f32 %v930, %v1066
  %v1077 = vadd.f32 %v931, %v1046
  %v1078 = vadd.f32 %v932, %v1069
  %s1079 = scalar_lea.vmem %s1, 112
  %v1080 = vld [vmem:[%s1079] sm:$0xff]
  %v1081 = vld [vmem:[%s1079 + $0x8] sm:$0xff]
  %1082 = vrot.lane.b32.xlu0 %v96, 95
  %v1083 = vpop.permute.xlu0 %1082
  %1084 = vrot.lane.b32.xlu0 %v87, 95
  %v1085 = vpop.permute.xlu0 %1084
  %1086 = vrot.lane.b32.xlu0 %v99, 95
  %v1087 = vpop.permute.xlu0 %1086
  %1088 = vrot.lane.b32.xlu0 %v97, 95
  %v1089 = vpop.permute.xlu0 %1088
  %1090 = vrot.lane.b32.xlu0 %v81, 95
  %v1091 = vpop.permute.xlu0 %1090
  %1092 = vrot.lane.b32.xlu0 %v100, 95
  %v1093 = vpop.permute.xlu0 %1092
  %vm1094 = vcmask 777216
  %v1095 = vsel %vm1094, %v1083, %v1085
  %v1096 = vsel %vm1094, %v1085, %v1087
  %v1097 = vsel %vm1094, %v1089, %v1091
  %v1098 = vsel %vm1094, %v1091, %v1093
  %v1104 = vsel %vm142, %v1080, 0
  %v1107 = vsel %vm142, %v1081, 0
  %1109 = vmatpush.msra.mxu0 0.0
  %1110 = vmatpush.msra.mxu0 0.0
  %1111 = vmatpush.msra.mxu0 0.0
  %1112 = vmatpush.msra.mxu0 0.0
  %1113 = vmatpush.msra.mxu0 0.0
  %1114 = vmatpush.msra.mxu0 0.0
  %1115 = vmatpush.msra.mxu0 0.0
  %1116 = vmatpush.msra.mxu0 0.0
  %1117 = vmatpush.msra.mxu0 0.0
  %1118 = vmatpush.msra.mxu0 0.0
  %1119 = vmatpush.msra.mxu0 0.0
  %1120 = vmatpush.msra.mxu0 0.0
  %1121 = vmatpush.msra.mxu0 0.0
  %1122 = vmatpush.msra.mxu0 0.0
  %1123 = vmatpush.msra.mxu0 %v1097
  %1124 = vmatpush.msra.mxu0 %v1095
  %1125 = vmatmul.f32.gmra.mxu0 %v1104
  %v1126 = vpop.f32.mrf.mxu0
  %v1127 = vadd.f32 0.0, %v1126
  %1128 = vmatmul.f32.gmra.mxu0 %v1107
  %v1129 = vpop.f32.mrf.mxu0
  %v1130 = vadd.f32 0.0, %v1129
  %1131 = vdwg.mxu0
  %1132 = vmatpush.msra.mxu0 0.0
  %1133 = vmatpush.msra.mxu0 0.0
  %1134 = vmatpush.msra.mxu0 0.0
  %1135 = vmatpush.msra.mxu0 0.0
  %1136 = vmatpush.msra.mxu0 0.0
  %1137 = vmatpush.msra.mxu0 0.0
  %1138 = vmatpush.msra.mxu0 0.0
  %1139 = vmatpush.msra.mxu0 0.0
  %1140 = vmatpush.msra.mxu0 0.0
  %1141 = vmatpush.msra.mxu0 0.0
  %1142 = vmatpush.msra.mxu0 0.0
  %1143 = vmatpush.msra.mxu0 0.0
  %1144 = vmatpush.msra.mxu0 0.0
  %1145 = vmatpush.msra.mxu0 0.0
  %1146 = vmatpush.msra.mxu0 %v1098
  %1147 = vmatpush.msra.mxu0 %v1096
  %1148 = vmatmul.f32.gmra.mxu0 %v1104
  %v1149 = vpop.f32.mrf.mxu0
  %v1150 = vadd.f32 0.0, %v1149
  %1151 = vmatmul.f32.gmra.mxu0 %v1107
  %v1152 = vpop.f32.mrf.mxu0
  %v1153 = vadd.f32 0.0, %v1152
  %1154 = vdwg.mxu0
  %1155 = vrot.lane.b32.xlu0 %v98, 95
  %v1156 = vpop.permute.xlu0 %1155
  %1157 = vrot.lane.b32.xlu0 %v88, 95
  %v1158 = vpop.permute.xlu0 %1157
  %1159 = vrot.lane.b32.xlu0 %v101, 95
  %v1160 = vpop.permute.xlu0 %1159
  %v1161 = vsel %vm1094, %v1156, %v1158
  %v1162 = vsel %vm1094, %v1158, %v1160
  %1165 = vmatpush.msra.mxu0 0.0
  %1166 = vmatpush.msra.mxu0 0.0
  %1167 = vmatpush.msra.mxu0 0.0
  %1168 = vmatpush.msra.mxu0 0.0
  %1169 = vmatpush.msra.mxu0 0.0
  %1170 = vmatpush.msra.mxu0 0.0
  %1171 = vmatpush.msra.mxu0 0.0
  %1172 = vmatpush.msra.mxu0 0.0
  %1173 = vmatpush.msra.mxu0 0.0
  %1174 = vmatpush.msra.mxu0 0.0
  %1175 = vmatpush.msra.mxu0 0.0
  %1176 = vmatpush.msra.mxu0 0.0
  %1177 = vmatpush.msra.mxu0 0.0
  %1178 = vmatpush.msra.mxu0 0.0
  %1179 = vmatpush.msra.mxu0 %v1097
  %1180 = vmatpush.msra.mxu0 %v1161
  %1181 = vmatmul.f32.gmra.mxu0 %v1104
  %v1182 = vpop.f32.mrf.mxu0
  %v1183 = vadd.f32 0.0, %v1182
  %1184 = vmatmul.f32.gmra.mxu0 %v1107
  %v1185 = vpop.f32.mrf.mxu0
  %v1186 = vadd.f32 0.0, %v1185
  %1187 = vdwg.mxu0
  %1188 = vmatpush.msra.mxu0 0.0
  %1189 = vmatpush.msra.mxu0 0.0
  %1190 = vmatpush.msra.mxu0 0.0
  %1191 = vmatpush.msra.mxu0 0.0
  %1192 = vmatpush.msra.mxu0 0.0
  %1193 = vmatpush.msra.mxu0 0.0
  %1194 = vmatpush.msra.mxu0 0.0
  %1195 = vmatpush.msra.mxu0 0.0
  %1196 = vmatpush.msra.mxu0 0.0
  %1197 = vmatpush.msra.mxu0 0.0
  %1198 = vmatpush.msra.mxu0 0.0
  %1199 = vmatpush.msra.mxu0 0.0
  %1200 = vmatpush.msra.mxu0 0.0
  %1201 = vmatpush.msra.mxu0 0.0
  %1202 = vmatpush.msra.mxu0 %v1098
  %1203 = vmatpush.msra.mxu0 %v1162
  %1204 = vmatmul.f32.gmra.mxu0 %v1104
  %v1205 = vpop.f32.mrf.mxu0
  %v1206 = vadd.f32 0.0, %v1205
  %1207 = vmatmul.f32.gmra.mxu0 %v1107
  %v1208 = vpop.f32.mrf.mxu0
  %v1209 = vadd.f32 0.0, %v1208
  %1210 = vdwg.mxu0
  %v1211 = vadd.f32 %v1071, %v1127
  %v1212 = vadd.f32 %v1072, %v1150
  %v1213 = vadd.f32 %v1073, %v1130
  %v1214 = vadd.f32 %v1074, %v1153
  %v1215 = vadd.f32 %v1075, %v1183
  %v1216 = vadd.f32 %v1076, %v1206
  %v1217 = vadd.f32 %v1077, %v1186
  %v1218 = vadd.f32 %v1078, %v1209
  %1219 = vrot.lane.b32.xlu0 %v96, 94
  %v1220 = vpop.permute.xlu0 %1219
  %1221 = vrot.lane.b32.xlu0 %v87, 94
  %v1222 = vpop.permute.xlu0 %1221
  %1223 = vrot.lane.b32.xlu0 %v99, 94
  %v1224 = vpop.permute.xlu0 %1223
  %1225 = vrot.lane.b32.xlu0 %v97, 94
  %v1226 = vpop.permute.xlu0 %1225
  %1227 = vrot.lane.b32.xlu0 %v81, 94
  %v1228 = vpop.permute.xlu0 %1227
  %1229 = vrot.lane.b32.xlu0 %v100, 94
  %v1230 = vpop.permute.xlu0 %1229
  %1231 = vrot.lane.b32.xlu0 %v98, 94
  %v1232 = vpop.permute.xlu0 %1231
  %1233 = vrot.lane.b32.xlu0 %v88, 94
  %v1234 = vpop.permute.xlu0 %1233
  %1235 = vrot.lane.b32.xlu0 %v101, 94
  %v1236 = vpop.permute.xlu0 %1235
  %vm1237 = vcmask 769024
  %v1238 = vsel %vm1237, %v1220, %v1222
  %v1239 = vsel %vm1237, %v1222, %v1224
  %v1240 = vsel %vm1237, %v1226, %v1228
  %v1241 = vsel %vm1237, %v1228, %v1230
  %v1242 = vsel %vm1237, %v1232, %v1234
  %v1243 = vsel %vm1237, %v1234, %v1236
  %v1250 = vsel %vm353, %v1238, 0.0
  %v1251 = vsel %vm354, %v1239, 0.0
  %v1252 = vsel %vm353, %v1240, 0.0
  %v1253 = vsel %vm354, %v1241, 0.0
  %v1254 = vsel %vm353, %v1242, 0.0
  %v1255 = vsel %vm354, %v1243, 0.0
  %s1256 = scalar_lea.vmem %s1, 128
  %v1257 = vld [vmem:[%s1256] sm:$0xff]
  %v1258 = vld [vmem:[%s1256 + $0x8] sm:$0xff]
  %v1260 = vsel %vm142, %v1257, 0
  %v1263 = vsel %vm142, %v1258, 0
  %1265 = vmatpush.msra.mxu0 0.0
  %1266 = vmatpush.msra.mxu0 0.0
  %1267 = vmatpush.msra.mxu0 0.0
  %1268 = vmatpush.msra.mxu0 0.0
  %1269 = vmatpush.msra.mxu0 0.0
  %1270 = vmatpush.msra.mxu0 0.0
  %1271 = vmatpush.msra.mxu0 0.0
  %1272 = vmatpush.msra.mxu0 0.0
  %1273 = vmatpush.msra.mxu0 0.0
  %1274 = vmatpush.msra.mxu0 0.0
  %1275 = vmatpush.msra.mxu0 0.0
  %1276 = vmatpush.msra.mxu0 0.0
  %1277 = vmatpush.msra.mxu0 0.0
  %1278 = vmatpush.msra.mxu0 0.0
  %1279 = vmatpush.msra.mxu0 %v1252
  %1280 = vmatpush.msra.mxu0 %v1250
  %1281 = vmatmul.f32.gmra.mxu0 %v1260
  %v1282 = vpop.f32.mrf.mxu0
  %v1283 = vadd.f32 0.0, %v1282
  %1284 = vmatmul.f32.gmra.mxu0 %v1263
  %v1285 = vpop.f32.mrf.mxu0
  %v1286 = vadd.f32 0.0, %v1285
  %1287 = vdwg.mxu0
  %1288 = vmatpush.msra.mxu0 0.0
  %1289 = vmatpush.msra.mxu0 0.0
  %1290 = vmatpush.msra.mxu0 0.0
  %1291 = vmatpush.msra.mxu0 0.0
  %1292 = vmatpush.msra.mxu0 0.0
  %1293 = vmatpush.msra.mxu0 0.0
  %1294 = vmatpush.msra.mxu0 0.0
  %1295 = vmatpush.msra.mxu0 0.0
  %1296 = vmatpush.msra.mxu0 0.0
  %1297 = vmatpush.msra.mxu0 0.0
  %1298 = vmatpush.msra.mxu0 0.0
  %1299 = vmatpush.msra.mxu0 0.0
  %1300 = vmatpush.msra.mxu0 0.0
  %1301 = vmatpush.msra.mxu0 0.0
  %1302 = vmatpush.msra.mxu0 %v1253
  %1303 = vmatpush.msra.mxu0 %v1251
  %1304 = vmatmul.f32.gmra.mxu0 %v1260
  %v1305 = vpop.f32.mrf.mxu0
  %v1306 = vadd.f32 0.0, %v1305
  %1307 = vmatmul.f32.gmra.mxu0 %v1263
  %v1308 = vpop.f32.mrf.mxu0
  %v1309 = vadd.f32 0.0, %v1308
  %1310 = vdwg.mxu0
  %1311 = vmatpush.msra.mxu0 0.0
  %1312 = vmatpush.msra.mxu0 0.0
  %1313 = vmatpush.msra.mxu0 0.0
  %1314 = vmatpush.msra.mxu0 0.0
  %1315 = vmatpush.msra.mxu0 0.0
  %1316 = vmatpush.msra.mxu0 0.0
  %1317 = vmatpush.msra.mxu0 0.0
  %1318 = vmatpush.msra.mxu0 0.0
  %1319 = vmatpush.msra.mxu0 0.0
  %1320 = vmatpush.msra.mxu0 0.0
  %1321 = vmatpush.msra.mxu0 0.0
  %1322 = vmatpush.msra.mxu0 0.0
  %1323 = vmatpush.msra.mxu0 0.0
  %1324 = vmatpush.msra.mxu0 0.0
  %1325 = vmatpush.msra.mxu0 %v1252
  %1326 = vmatpush.msra.mxu0 %v1254
  %1327 = vmatmul.f32.gmra.mxu0 %v1260
  %v1328 = vpop.f32.mrf.mxu0
  %v1329 = vadd.f32 0.0, %v1328
  %1330 = vmatmul.f32.gmra.mxu0 %v1263
  %v1331 = vpop.f32.mrf.mxu0
  %v1332 = vadd.f32 0.0, %v1331
  %1333 = vdwg.mxu0
  %1334 = vmatpush.msra.mxu0 0.0
  %1335 = vmatpush.msra.mxu0 0.0
  %1336 = vmatpush.msra.mxu0 0.0
  %1337 = vmatpush.msra.mxu0 0.0
  %1338 = vmatpush.msra.mxu0 0.0
  %1339 = vmatpush.msra.mxu0 0.0
  %1340 = vmatpush.msra.mxu0 0.0
  %1341 = vmatpush.msra.mxu0 0.0
  %1342 = vmatpush.msra.mxu0 0.0
  %1343 = vmatpush.msra.mxu0 0.0
  %1344 = vmatpush.msra.mxu0 0.0
  %1345 = vmatpush.msra.mxu0 0.0
  %1346 = vmatpush.msra.mxu0 0.0
  %1347 = vmatpush.msra.mxu0 0.0
  %1348 = vmatpush.msra.mxu0 %v1253
  %1349 = vmatpush.msra.mxu0 %v1255
  %1350 = vmatmul.f32.gmra.mxu0 %v1260
  %v1351 = vpop.f32.mrf.mxu0
  %v1352 = vadd.f32 0.0, %v1351
  %1353 = vmatmul.f32.gmra.mxu0 %v1263
  %v1354 = vpop.f32.mrf.mxu0
  %v1355 = vadd.f32 0.0, %v1354
  %1356 = vdwg.mxu0
  %v1357 = vadd.f32 %v1211, %v1283
  %v1358 = vadd.f32 %v1212, %v1306
  %v1359 = vadd.f32 %v1213, %v1286
  %v1360 = vadd.f32 %v1214, %v1309
  %v1361 = vadd.f32 %v1215, %v1329
  %v1362 = vadd.f32 %v1216, %v1352
  %v1363 = vadd.f32 %v1217, %v1332
  %v1364 = vadd.f32 %v1218, %v1355
  %v1365 = vld [vmem:[%s2] sm:$0xff]
  %v1366 = vld [vmem:[%s2 + $0x8] sm:$0xff]
  %1368 = vset.pattern.permute.xlu0 0
  %1369 = vperm.xlu0 %1368, %v1365
  %v1370 = vpop.permute.xlu0 %1369
  %1373 = vset.pattern.permute.xlu0 0
  %1374 = vperm.xlu0 %1373, %v1366
  %v1375 = vpop.permute.xlu0 %1374
  %v1377 = vadd.f32 %v1357, %v1370
  %v1378 = vadd.f32 %v1358, %v1370
  %v1379 = vadd.f32 %v1359, %v1375
  %v1380 = vadd.f32 %v1360, %v1375
  %v1381 = vadd.f32 %v1361, %v1370
  %v1382 = vadd.f32 %v1362, %v1370
  %v1383 = vadd.f32 %v1363, %v1375
  %v1384 = vadd.f32 %v1364, %v1375
  %v1385 = vmax.f32 %v1377, 0.0
  %v1386 = vmax.f32 %v1378, 0.0
  %v1387 = vmax.f32 %v1379, 0.0
  %v1388 = vmax.f32 %v1380, 0.0
  %v1389 = vmax.f32 %v1381, 0.0
  %v1390 = vmax.f32 %v1382, 0.0
  %v1391 = vmax.f32 %v1383, 0.0
  %v1392 = vmax.f32 %v1384, 0.0
  %1401 = vrot.lane.b32.xlu0 %v1385, 17
  %v1402 = vpop.permute.xlu0 %1401
  %1403 = vrot.lane.b32.xlu0 %v1386, 17
  %v1404 = vpop.permute.xlu0 %1403
  %1405 = vrot.lane.b32.xlu0 %v1387, 17
  %v1406 = vpop.permute.xlu0 %1405
  %1407 = vrot.lane.b32.xlu0 %v1388, 17
  %v1408 = vpop.permute.xlu0 %1407
  %1409 = vrot.lane.b32.xlu0 %v1389, 17
  %v1410 = vpop.permute.xlu0 %1409
  %1411 = vrot.lane.b32.xlu0 %v1390, 17
  %v1412 = vpop.permute.xlu0 %1411
  %1413 = vrot.lane.b32.xlu0 %v1391, 17
  %v1414 = vpop.permute.xlu0 %1413
  %1415 = vrot.lane.b32.xlu0 %v1392, 17
  %v1416 = vpop.permute.xlu0 %1415
  %v1417 = vsel %vm86, %v1402, %v1404
  %v1418 = vsel %vm86, %v1406, %v1408
  %v1419 = vsel %vm86, %v1410, %v1412
  %v1420 = vsel %vm86, %v1414, %v1416
  %v1433 = vsel %vm86, 0.0, %v1402
  %v1434 = vsel %vm86, 0.0, %v1406
  %v1435 = vsel %vm86, 0.0, %v1410
  %v1436 = vsel %vm86, 0.0, %v1414
  %v1437 = vsel %vm86, %v1404, 0.0
  %v1438 = vsel %vm86, %v1408, 0.0
  %v1439 = vsel %vm86, %v1412, 0.0
  %v1440 = vsel %vm86, %v1416, 0.0
  %v1441 = vsel %vm104, %v1433, 0.0
  %v1442 = vsel %vm105, %v1417, 0.0
  %v1443 = vsel %vm104, %v1434, 0.0
  %v1444 = vsel %vm105, %v1418, 0.0
  %v1445 = vsel %vm104, %v1435, 0.0
  %v1446 = vsel %vm105, %v1419, 0.0
  %v1447 = vsel %vm104, %v1436, 0.0
  %v1448 = vsel %vm105, %v1420, 0.0
  %s1449 = scalar_lea.vmem %s1, 144
  %v1450 = vld [vmem:[%s1449] sm:$0xff]
  %v1451 = vld [vmem:[%s1449 + $0x8] sm:$0xff]
  %s1452 = scalar_lea.vmem %s1, 160
  %v1453 = vld [vmem:[%s1452] sm:$0xff]
  %v1454 = vld [vmem:[%s1452 + $0x8] sm:$0xff]
  %1459 = vrot.lane.b32.xlu0 %v1433, 127
  %v1460 = vpop.permute.xlu0 %1459
  %1461 = vrot.lane.b32.xlu0 %v1417, 127
  %v1462 = vpop.permute.xlu0 %1461
  %1463 = vrot.lane.b32.xlu0 %v1437, 127
  %v1464 = vpop.permute.xlu0 %1463
  %1465 = vrot.lane.b32.xlu0 %v1434, 127
  %v1466 = vpop.permute.xlu0 %1465
  %1467 = vrot.lane.b32.xlu0 %v1418, 127
  %v1468 = vpop.permute.xlu0 %1467
  %1469 = vrot.lane.b32.xlu0 %v1438, 127
  %v1470 = vpop.permute.xlu0 %1469
  %v1471 = vsel %vm133, %v1460, %v1462
  %v1472 = vsel %vm133, %v1462, %v1464
  %v1473 = vsel %vm133, %v1466, %v1468
  %v1474 = vsel %vm133, %v1468, %v1470
  %v1480 = vsel %vm142, %v1453, 0
  %v1483 = vsel %vm142, %v1454, 0
  %1485 = vmatpush.msra.mxu0 0.0
  %1486 = vmatpush.msra.mxu0 0.0
  %1487 = vmatpush.msra.mxu0 0.0
  %1488 = vmatpush.msra.mxu0 0.0
  %1489 = vmatpush.msra.mxu0 0.0
  %1490 = vmatpush.msra.mxu0 0.0
  %1491 = vmatpush.msra.mxu0 0.0
  %1492 = vmatpush.msra.mxu0 0.0
  %1493 = vmatpush.msra.mxu0 0.0
  %1494 = vmatpush.msra.mxu0 0.0
  %1495 = vmatpush.msra.mxu0 0.0
  %1496 = vmatpush.msra.mxu0 0.0
  %1497 = vmatpush.msra.mxu0 0.0
  %1498 = vmatpush.msra.mxu0 0.0
  %1499 = vmatpush.msra.mxu0 %v1473
  %1500 = vmatpush.msra.mxu0 %v1471
  %1501 = vmatmul.f32.gmra.mxu0 %v1480
  %v1502 = vpop.f32.mrf.mxu0
  %v1503 = vadd.f32 0.0, %v1502
  %1504 = vmatmul.f32.gmra.mxu0 %v1483
  %v1505 = vpop.f32.mrf.mxu0
  %v1506 = vadd.f32 0.0, %v1505
  %1507 = vdwg.mxu0
  %1508 = vmatpush.msra.mxu0 0.0
  %1509 = vmatpush.msra.mxu0 0.0
  %1510 = vmatpush.msra.mxu0 0.0
  %1511 = vmatpush.msra.mxu0 0.0
  %1512 = vmatpush.msra.mxu0 0.0
  %1513 = vmatpush.msra.mxu0 0.0
  %1514 = vmatpush.msra.mxu0 0.0
  %1515 = vmatpush.msra.mxu0 0.0
  %1516 = vmatpush.msra.mxu0 0.0
  %1517 = vmatpush.msra.mxu0 0.0
  %1518 = vmatpush.msra.mxu0 0.0
  %1519 = vmatpush.msra.mxu0 0.0
  %1520 = vmatpush.msra.mxu0 0.0
  %1521 = vmatpush.msra.mxu0 0.0
  %1522 = vmatpush.msra.mxu0 %v1474
  %1523 = vmatpush.msra.mxu0 %v1472
  %1524 = vmatmul.f32.gmra.mxu0 %v1480
  %v1525 = vpop.f32.mrf.mxu0
  %v1526 = vadd.f32 0.0, %v1525
  %1527 = vmatmul.f32.gmra.mxu0 %v1483
  %v1528 = vpop.f32.mrf.mxu0
  %v1529 = vadd.f32 0.0, %v1528
  %1530 = vdwg.mxu0
  %1535 = vrot.lane.b32.xlu0 %v1435, 127
  %v1536 = vpop.permute.xlu0 %1535
  %1537 = vrot.lane.b32.xlu0 %v1419, 127
  %v1538 = vpop.permute.xlu0 %1537
  %1539 = vrot.lane.b32.xlu0 %v1439, 127
  %v1540 = vpop.permute.xlu0 %1539
  %1541 = vrot.lane.b32.xlu0 %v1436, 127
  %v1542 = vpop.permute.xlu0 %1541
  %1543 = vrot.lane.b32.xlu0 %v1420, 127
  %v1544 = vpop.permute.xlu0 %1543
  %1545 = vrot.lane.b32.xlu0 %v1440, 127
  %v1546 = vpop.permute.xlu0 %1545
  %v1547 = vsel %vm133, %v1536, %v1538
  %v1548 = vsel %vm133, %v1538, %v1540
  %v1549 = vsel %vm133, %v1542, %v1544
  %v1550 = vsel %vm133, %v1544, %v1546
  %1555 = vmatpush.msra.mxu0 0.0
  %1556 = vmatpush.msra.mxu0 0.0
  %1557 = vmatpush.msra.mxu0 0.0
  %1558 = vmatpush.msra.mxu0 0.0
  %1559 = vmatpush.msra.mxu0 0.0
  %1560 = vmatpush.msra.mxu0 0.0
  %1561 = vmatpush.msra.mxu0 0.0
  %1562 = vmatpush.msra.mxu0 0.0
  %1563 = vmatpush.msra.mxu0 0.0
  %1564 = vmatpush.msra.mxu0 0.0
  %1565 = vmatpush.msra.mxu0 0.0
  %1566 = vmatpush.msra.mxu0 0.0
  %1567 = vmatpush.msra.mxu0 0.0
  %1568 = vmatpush.msra.mxu0 0.0
  %1569 = vmatpush.msra.mxu0 %v1549
  %1570 = vmatpush.msra.mxu0 %v1547
  %1571 = vmatmul.f32.gmra.mxu0 %v1480
  %v1572 = vpop.f32.mrf.mxu0
  %v1573 = vadd.f32 0.0, %v1572
  %1574 = vmatmul.f32.gmra.mxu0 %v1483
  %v1575 = vpop.f32.mrf.mxu0
  %v1576 = vadd.f32 0.0, %v1575
  %1577 = vdwg.mxu0
  %1578 = vmatpush.msra.mxu0 0.0
  %1579 = vmatpush.msra.mxu0 0.0
  %1580 = vmatpush.msra.mxu0 0.0
  %1581 = vmatpush.msra.mxu0 0.0
  %1582 = vmatpush.msra.mxu0 0.0
  %1583 = vmatpush.msra.mxu0 0.0
  %1584 = vmatpush.msra.mxu0 0.0
  %1585 = vmatpush.msra.mxu0 0.0
  %1586 = vmatpush.msra.mxu0 0.0
  %1587 = vmatpush.msra.mxu0 0.0
  %1588 = vmatpush.msra.mxu0 0.0
  %1589 = vmatpush.msra.mxu0 0.0
  %1590 = vmatpush.msra.mxu0 0.0
  %1591 = vmatpush.msra.mxu0 0.0
  %1592 = vmatpush.msra.mxu0 %v1550
  %1593 = vmatpush.msra.mxu0 %v1548
  %1594 = vmatmul.f32.gmra.mxu0 %v1480
  %v1595 = vpop.f32.mrf.mxu0
  %v1596 = vadd.f32 0.0, %v1595
  %1597 = vmatmul.f32.gmra.mxu0 %v1483
  %v1598 = vpop.f32.mrf.mxu0
  %v1599 = vadd.f32 0.0, %v1598
  %1600 = vdwg.mxu0
  %v1602 = vsel %vm142, %v1450, 0
  %v1605 = vsel %vm142, %v1451, 0
  %1607 = vmatpush.msra.mxu0 0.0
  %1608 = vmatpush.msra.mxu0 0.0
  %1609 = vmatpush.msra.mxu0 0.0
  %1610 = vmatpush.msra.mxu0 0.0
  %1611 = vmatpush.msra.mxu0 0.0
  %1612 = vmatpush.msra.mxu0 0.0
  %1613 = vmatpush.msra.mxu0 0.0
  %1614 = vmatpush.msra.mxu0 0.0
  %1615 = vmatpush.msra.mxu0 0.0
  %1616 = vmatpush.msra.mxu0 0.0
  %1617 = vmatpush.msra.mxu0 0.0
  %1618 = vmatpush.msra.mxu0 0.0
  %1619 = vmatpush.msra.mxu0 0.0
  %1620 = vmatpush.msra.mxu0 0.0
  %1621 = vmatpush.msra.mxu0 %v1443
  %1622 = vmatpush.msra.mxu0 %v1441
  %1623 = vmatmul.f32.gmra.mxu0 %v1602
  %v1624 = vpop.f32.mrf.mxu0
  %v1625 = vadd.f32 %v1503, %v1624
  %1626 = vmatmul.f32.gmra.mxu0 %v1605
  %v1627 = vpop.f32.mrf.mxu0
  %v1628 = vadd.f32 %v1506, %v1627
  %1629 = vdwg.mxu0
  %1630 = vmatpush.msra.mxu0 0.0
  %1631 = vmatpush.msra.mxu0 0.0
  %1632 = vmatpush.msra.mxu0 0.0
  %1633 = vmatpush.msra.mxu0 0.0
  %1634 = vmatpush.msra.mxu0 0.0
  %1635 = vmatpush.msra.mxu0 0.0
  %1636 = vmatpush.msra.mxu0 0.0
  %1637 = vmatpush.msra.mxu0 0.0
  %1638 = vmatpush.msra.mxu0 0.0
  %1639 = vmatpush.msra.mxu0 0.0
  %1640 = vmatpush.msra.mxu0 0.0
  %1641 = vmatpush.msra.mxu0 0.0
  %1642 = vmatpush.msra.mxu0 0.0
  %1643 = vmatpush.msra.mxu0 0.0
  %1644 = vmatpush.msra.mxu0 %v1444
  %1645 = vmatpush.msra.mxu0 %v1442
  %1646 = vmatmul.f32.gmra.mxu0 %v1602
  %v1647 = vpop.f32.mrf.mxu0
  %v1648 = vadd.f32 %v1526, %v1647
  %1649 = vmatmul.f32.gmra.mxu0 %v1605
  %v1650 = vpop.f32.mrf.mxu0
  %v1651 = vadd.f32 %v1529, %v1650
  %1652 = vdwg.mxu0
  %1653 = vmatpush.msra.mxu0 0.0
  %1654 = vmatpush.msra.mxu0 0.0
  %1655 = vmatpush.msra.mxu0 0.0
  %1656 = vmatpush.msra.mxu0 0.0
  %1657 = vmatpush.msra.mxu0 0.0
  %1658 = vmatpush.msra.mxu0 0.0
  %1659 = vmatpush.msra.mxu0 0.0
  %1660 = vmatpush.msra.mxu0 0.0
  %1661 = vmatpush.msra.mxu0 0.0
  %1662 = vmatpush.msra.mxu0 0.0
  %1663 = vmatpush.msra.mxu0 0.0
  %1664 = vmatpush.msra.mxu0 0.0
  %1665 = vmatpush.msra.mxu0 0.0
  %1666 = vmatpush.msra.mxu0 0.0
  %1667 = vmatpush.msra.mxu0 %v1447
  %1668 = vmatpush.msra.mxu0 %v1445
  %1669 = vmatmul.f32.gmra.mxu0 %v1602
  %v1670 = vpop.f32.mrf.mxu0
  %v1671 = vadd.f32 %v1573, %v1670
  %1672 = vmatmul.f32.gmra.mxu0 %v1605
  %v1673 = vpop.f32.mrf.mxu0
  %v1674 = vadd.f32 %v1576, %v1673
  %1675 = vdwg.mxu0
  %1676 = vmatpush.msra.mxu0 0.0
  %1677 = vmatpush.msra.mxu0 0.0
  %1678 = vmatpush.msra.mxu0 0.0
  %1679 = vmatpush.msra.mxu0 0.0
  %1680 = vmatpush.msra.mxu0 0.0
  %1681 = vmatpush.msra.mxu0 0.0
  %1682 = vmatpush.msra.mxu0 0.0
  %1683 = vmatpush.msra.mxu0 0.0
  %1684 = vmatpush.msra.mxu0 0.0
  %1685 = vmatpush.msra.mxu0 0.0
  %1686 = vmatpush.msra.mxu0 0.0
  %1687 = vmatpush.msra.mxu0 0.0
  %1688 = vmatpush.msra.mxu0 0.0
  %1689 = vmatpush.msra.mxu0 0.0
  %1690 = vmatpush.msra.mxu0 %v1448
  %1691 = vmatpush.msra.mxu0 %v1446
  %1692 = vmatmul.f32.gmra.mxu0 %v1602
  %v1693 = vpop.f32.mrf.mxu0
  %v1694 = vadd.f32 %v1596, %v1693
  %1695 = vmatmul.f32.gmra.mxu0 %v1605
  %v1696 = vpop.f32.mrf.mxu0
  %v1697 = vadd.f32 %v1599, %v1696
  %1698 = vdwg.mxu0
  %1699 = vrot.lane.b32.xlu0 %v1433, 126
  %v1700 = vpop.permute.xlu0 %1699
  %1701 = vrot.lane.b32.xlu0 %v1417, 126
  %v1702 = vpop.permute.xlu0 %1701
  %1703 = vrot.lane.b32.xlu0 %v1437, 126
  %v1704 = vpop.permute.xlu0 %1703
  %1705 = vrot.lane.b32.xlu0 %v1434, 126
  %v1706 = vpop.permute.xlu0 %1705
  %1707 = vrot.lane.b32.xlu0 %v1418, 126
  %v1708 = vpop.permute.xlu0 %1707
  %1709 = vrot.lane.b32.xlu0 %v1438, 126
  %v1710 = vpop.permute.xlu0 %1709
  %1711 = vrot.lane.b32.xlu0 %v1435, 126
  %v1712 = vpop.permute.xlu0 %1711
  %1713 = vrot.lane.b32.xlu0 %v1419, 126
  %v1714 = vpop.permute.xlu0 %1713
  %1715 = vrot.lane.b32.xlu0 %v1439, 126
  %v1716 = vpop.permute.xlu0 %1715
  %1717 = vrot.lane.b32.xlu0 %v1436, 126
  %v1718 = vpop.permute.xlu0 %1717
  %1719 = vrot.lane.b32.xlu0 %v1420, 126
  %v1720 = vpop.permute.xlu0 %1719
  %1721 = vrot.lane.b32.xlu0 %v1440, 126
  %v1722 = vpop.permute.xlu0 %1721
  %v1723 = vsel %vm373, %v1700, %v1702
  %v1724 = vsel %vm373, %v1702, %v1704
  %v1725 = vsel %vm373, %v1706, %v1708
  %v1726 = vsel %vm373, %v1708, %v1710
  %v1727 = vsel %vm373, %v1712, %v1714
  %v1728 = vsel %vm373, %v1714, %v1716
  %v1729 = vsel %vm373, %v1718, %v1720
  %v1730 = vsel %vm373, %v1720, %v1722
  %v1739 = vsel %vm353, %v1723, 0.0
  %v1740 = vsel %vm354, %v1724, 0.0
  %v1741 = vsel %vm353, %v1725, 0.0
  %v1742 = vsel %vm354, %v1726, 0.0
  %v1743 = vsel %vm353, %v1727, 0.0
  %v1744 = vsel %vm354, %v1728, 0.0
  %v1745 = vsel %vm353, %v1729, 0.0
  %v1746 = vsel %vm354, %v1730, 0.0
  %s1747 = scalar_lea.vmem %s1, 176
  %v1748 = vld [vmem:[%s1747] sm:$0xff]
  %v1749 = vld [vmem:[%s1747 + $0x8] sm:$0xff]
  %v1751 = vsel %vm142, %v1748, 0
  %v1754 = vsel %vm142, %v1749, 0
  %1756 = vmatpush.msra.mxu0 0.0
  %1757 = vmatpush.msra.mxu0 0.0
  %1758 = vmatpush.msra.mxu0 0.0
  %1759 = vmatpush.msra.mxu0 0.0
  %1760 = vmatpush.msra.mxu0 0.0
  %1761 = vmatpush.msra.mxu0 0.0
  %1762 = vmatpush.msra.mxu0 0.0
  %1763 = vmatpush.msra.mxu0 0.0
  %1764 = vmatpush.msra.mxu0 0.0
  %1765 = vmatpush.msra.mxu0 0.0
  %1766 = vmatpush.msra.mxu0 0.0
  %1767 = vmatpush.msra.mxu0 0.0
  %1768 = vmatpush.msra.mxu0 0.0
  %1769 = vmatpush.msra.mxu0 0.0
  %1770 = vmatpush.msra.mxu0 %v1741
  %1771 = vmatpush.msra.mxu0 %v1739
  %1772 = vmatmul.f32.gmra.mxu0 %v1751
  %v1773 = vpop.f32.mrf.mxu0
  %v1774 = vadd.f32 0.0, %v1773
  %1775 = vmatmul.f32.gmra.mxu0 %v1754
  %v1776 = vpop.f32.mrf.mxu0
  %v1777 = vadd.f32 0.0, %v1776
  %1778 = vdwg.mxu0
  %1779 = vmatpush.msra.mxu0 0.0
  %1780 = vmatpush.msra.mxu0 0.0
  %1781 = vmatpush.msra.mxu0 0.0
  %1782 = vmatpush.msra.mxu0 0.0
  %1783 = vmatpush.msra.mxu0 0.0
  %1784 = vmatpush.msra.mxu0 0.0
  %1785 = vmatpush.msra.mxu0 0.0
  %1786 = vmatpush.msra.mxu0 0.0
  %1787 = vmatpush.msra.mxu0 0.0
  %1788 = vmatpush.msra.mxu0 0.0
  %1789 = vmatpush.msra.mxu0 0.0
  %1790 = vmatpush.msra.mxu0 0.0
  %1791 = vmatpush.msra.mxu0 0.0
  %1792 = vmatpush.msra.mxu0 0.0
  %1793 = vmatpush.msra.mxu0 %v1742
  %1794 = vmatpush.msra.mxu0 %v1740
  %1795 = vmatmul.f32.gmra.mxu0 %v1751
  %v1796 = vpop.f32.mrf.mxu0
  %v1797 = vadd.f32 0.0, %v1796
  %1798 = vmatmul.f32.gmra.mxu0 %v1754
  %v1799 = vpop.f32.mrf.mxu0
  %v1800 = vadd.f32 0.0, %v1799
  %1801 = vdwg.mxu0
  %1802 = vmatpush.msra.mxu0 0.0
  %1803 = vmatpush.msra.mxu0 0.0
  %1804 = vmatpush.msra.mxu0 0.0
  %1805 = vmatpush.msra.mxu0 0.0
  %1806 = vmatpush.msra.mxu0 0.0
  %1807 = vmatpush.msra.mxu0 0.0
  %1808 = vmatpush.msra.mxu0 0.0
  %1809 = vmatpush.msra.mxu0 0.0
  %1810 = vmatpush.msra.mxu0 0.0
  %1811 = vmatpush.msra.mxu0 0.0
  %1812 = vmatpush.msra.mxu0 0.0
  %1813 = vmatpush.msra.mxu0 0.0
  %1814 = vmatpush.msra.mxu0 0.0
  %1815 = vmatpush.msra.mxu0 0.0
  %1816 = vmatpush.msra.mxu0 %v1745
  %1817 = vmatpush.msra.mxu0 %v1743
  %1818 = vmatmul.f32.gmra.mxu0 %v1751
  %v1819 = vpop.f32.mrf.mxu0
  %v1820 = vadd.f32 0.0, %v1819
  %1821 = vmatmul.f32.gmra.mxu0 %v1754
  %v1822 = vpop.f32.mrf.mxu0
  %v1823 = vadd.f32 0.0, %v1822
  %1824 = vdwg.mxu0
  %1825 = vmatpush.msra.mxu0 0.0
  %1826 = vmatpush.msra.mxu0 0.0
  %1827 = vmatpush.msra.mxu0 0.0
  %1828 = vmatpush.msra.mxu0 0.0
  %1829 = vmatpush.msra.mxu0 0.0
  %1830 = vmatpush.msra.mxu0 0.0
  %1831 = vmatpush.msra.mxu0 0.0
  %1832 = vmatpush.msra.mxu0 0.0
  %1833 = vmatpush.msra.mxu0 0.0
  %1834 = vmatpush.msra.mxu0 0.0
  %1835 = vmatpush.msra.mxu0 0.0
  %1836 = vmatpush.msra.mxu0 0.0
  %1837 = vmatpush.msra.mxu0 0.0
  %1838 = vmatpush.msra.mxu0 0.0
  %1839 = vmatpush.msra.mxu0 %v1746
  %1840 = vmatpush.msra.mxu0 %v1744
  %1841 = vmatmul.f32.gmra.mxu0 %v1751
  %v1842 = vpop.f32.mrf.mxu0
  %v1843 = vadd.f32 0.0, %v1842
  %1844 = vmatmul.f32.gmra.mxu0 %v1754
  %v1845 = vpop.f32.mrf.mxu0
  %v1846 = vadd.f32 0.0, %v1845
  %1847 = vdwg.mxu0
  %v1848 = vadd.f32 %v1625, %v1774
  %v1849 = vadd.f32 %v1648, %v1797
  %v1850 = vadd.f32 %v1628, %v1777
  %v1851 = vadd.f32 %v1651, %v1800
  %v1852 = vadd.f32 %v1671, %v1820
  %v1853 = vadd.f32 %v1694, %v1843
  %v1854 = vadd.f32 %v1674, %v1823
  %v1855 = vadd.f32 %v1697, %v1846
  %1856 = vrot.lane.b32.xlu0 %v1433, 112
  %v1857 = vpop.permute.xlu0 %1856
  %1858 = vrot.lane.b32.xlu0 %v1417, 112
  %v1859 = vpop.permute.xlu0 %1858
  %1860 = vrot.lane.b32.xlu0 %v1437, 112
  %v1861 = vpop.permute.xlu0 %1860
  %1862 = vrot.lane.b32.xlu0 %v1434, 112
  %v1863 = vpop.permute.xlu0 %1862
  %1864 = vrot.lane.b32.xlu0 %v1418, 112
  %v1865 = vpop.permute.xlu0 %1864
  %1866 = vrot.lane.b32.xlu0 %v1438, 112
  %v1867 = vpop.permute.xlu0 %1866
  %1868 = vrot.lane.b32.xlu0 %v1435, 112
  %v1869 = vpop.permute.xlu0 %1868
  %1870 = vrot.lane.b32.xlu0 %v1419, 112
  %v1871 = vpop.permute.xlu0 %1870
  %1872 = vrot.lane.b32.xlu0 %v1439, 112
  %v1873 = vpop.permute.xlu0 %1872
  %1874 = vrot.lane.b32.xlu0 %v1436, 112
  %v1875 = vpop.permute.xlu0 %1874
  %1876 = vrot.lane.b32.xlu0 %v1420, 112
  %v1877 = vpop.permute.xlu0 %1876
  %1878 = vrot.lane.b32.xlu0 %v1440, 112
  %v1879 = vpop.permute.xlu0 %1878
  %v1880 = vsel %vm519, %v1857, %v1859
  %v1881 = vsel %vm519, %v1859, %v1861
  %v1882 = vsel %vm519, %v1863, %v1865
  %v1883 = vsel %vm519, %v1865, %v1867
  %v1884 = vsel %vm519, %v1869, %v1871
  %v1885 = vsel %vm519, %v1871, %v1873
  %v1886 = vsel %vm519, %v1875, %v1877
  %v1887 = vsel %vm519, %v1877, %v1879
  %v1896 = vsel %vm104, %v1880, 0.0
  %v1897 = vsel %vm105, %v1881, 0.0
  %v1898 = vsel %vm104, %v1882, 0.0
  %v1899 = vsel %vm105, %v1883, 0.0
  %v1900 = vsel %vm104, %v1884, 0.0
  %v1901 = vsel %vm105, %v1885, 0.0
  %v1902 = vsel %vm104, %v1886, 0.0
  %v1903 = vsel %vm105, %v1887, 0.0
  %s1904 = scalar_lea.vmem %s1, 192
  %v1905 = vld [vmem:[%s1904] sm:$0xff]
  %v1906 = vld [vmem:[%s1904 + $0x8] sm:$0xff]
  %v1908 = vsel %vm142, %v1905, 0
  %v1911 = vsel %vm142, %v1906, 0
  %1913 = vmatpush.msra.mxu0 0.0
  %1914 = vmatpush.msra.mxu0 0.0
  %1915 = vmatpush.msra.mxu0 0.0
  %1916 = vmatpush.msra.mxu0 0.0
  %1917 = vmatpush.msra.mxu0 0.0
  %1918 = vmatpush.msra.mxu0 0.0
  %1919 = vmatpush.msra.mxu0 0.0
  %1920 = vmatpush.msra.mxu0 0.0
  %1921 = vmatpush.msra.mxu0 0.0
  %1922 = vmatpush.msra.mxu0 0.0
  %1923 = vmatpush.msra.mxu0 0.0
  %1924 = vmatpush.msra.mxu0 0.0
  %1925 = vmatpush.msra.mxu0 0.0
  %1926 = vmatpush.msra.mxu0 0.0
  %1927 = vmatpush.msra.mxu0 %v1898
  %1928 = vmatpush.msra.mxu0 %v1896
  %1929 = vmatmul.f32.gmra.mxu0 %v1908
  %v1930 = vpop.f32.mrf.mxu0
  %v1931 = vadd.f32 0.0, %v1930
  %1932 = vmatmul.f32.gmra.mxu0 %v1911
  %v1933 = vpop.f32.mrf.mxu0
  %v1934 = vadd.f32 0.0, %v1933
  %1935 = vdwg.mxu0
  %1936 = vmatpush.msra.mxu0 0.0
  %1937 = vmatpush.msra.mxu0 0.0
  %1938 = vmatpush.msra.mxu0 0.0
  %1939 = vmatpush.msra.mxu0 0.0
  %1940 = vmatpush.msra.mxu0 0.0
  %1941 = vmatpush.msra.mxu0 0.0
  %1942 = vmatpush.msra.mxu0 0.0
  %1943 = vmatpush.msra.mxu0 0.0
  %1944 = vmatpush.msra.mxu0 0.0
  %1945 = vmatpush.msra.mxu0 0.0
  %1946 = vmatpush.msra.mxu0 0.0
  %1947 = vmatpush.msra.mxu0 0.0
  %1948 = vmatpush.msra.mxu0 0.0
  %1949 = vmatpush.msra.mxu0 0.0
  %1950 = vmatpush.msra.mxu0 %v1899
  %1951 = vmatpush.msra.mxu0 %v1897
  %1952 = vmatmul.f32.gmra.mxu0 %v1908
  %v1953 = vpop.f32.mrf.mxu0
  %v1954 = vadd.f32 0.0, %v1953
  %1955 = vmatmul.f32.gmra.mxu0 %v1911
  %v1956 = vpop.f32.mrf.mxu0
  %v1957 = vadd.f32 0.0, %v1956
  %1958 = vdwg.mxu0
  %1959 = vmatpush.msra.mxu0 0.0
  %1960 = vmatpush.msra.mxu0 0.0
  %1961 = vmatpush.msra.mxu0 0.0
  %1962 = vmatpush.msra.mxu0 0.0
  %1963 = vmatpush.msra.mxu0 0.0
  %1964 = vmatpush.msra.mxu0 0.0
  %1965 = vmatpush.msra.mxu0 0.0
  %1966 = vmatpush.msra.mxu0 0.0
  %1967 = vmatpush.msra.mxu0 0.0
  %1968 = vmatpush.msra.mxu0 0.0
  %1969 = vmatpush.msra.mxu0 0.0
  %1970 = vmatpush.msra.mxu0 0.0
  %1971 = vmatpush.msra.mxu0 0.0
  %1972 = vmatpush.msra.mxu0 0.0
  %1973 = vmatpush.msra.mxu0 %v1902
  %1974 = vmatpush.msra.mxu0 %v1900
  %1975 = vmatmul.f32.gmra.mxu0 %v1908
  %v1976 = vpop.f32.mrf.mxu0
  %v1977 = vadd.f32 0.0, %v1976
  %1978 = vmatmul.f32.gmra.mxu0 %v1911
  %v1979 = vpop.f32.mrf.mxu0
  %v1980 = vadd.f32 0.0, %v1979
  %1981 = vdwg.mxu0
  %1982 = vmatpush.msra.mxu0 0.0
  %1983 = vmatpush.msra.mxu0 0.0
  %1984 = vmatpush.msra.mxu0 0.0
  %1985 = vmatpush.msra.mxu0 0.0
  %1986 = vmatpush.msra.mxu0 0.0
  %1987 = vmatpush.msra.mxu0 0.0
  %1988 = vmatpush.msra.mxu0 0.0
  %1989 = vmatpush.msra.mxu0 0.0
  %1990 = vmatpush.msra.mxu0 0.0
  %1991 = vmatpush.msra.mxu0 0.0
  %1992 = vmatpush.msra.mxu0 0.0
  %1993 = vmatpush.msra.mxu0 0.0
  %1994 = vmatpush.msra.mxu0 0.0
  %1995 = vmatpush.msra.mxu0 0.0
  %1996 = vmatpush.msra.mxu0 %v1903
  %1997 = vmatpush.msra.mxu0 %v1901
  %1998 = vmatmul.f32.gmra.mxu0 %v1908
  %v1999 = vpop.f32.mrf.mxu0
  %v2000 = vadd.f32 0.0, %v1999
  %2001 = vmatmul.f32.gmra.mxu0 %v1911
  %v2002 = vpop.f32.mrf.mxu0
  %v2003 = vadd.f32 0.0, %v2002
  %2004 = vdwg.mxu0
  %v2005 = vadd.f32 %v1848, %v1931
  %v2006 = vadd.f32 %v1849, %v1954
  %v2007 = vadd.f32 %v1850, %v1934
  %v2008 = vadd.f32 %v1851, %v1957
  %v2009 = vadd.f32 %v1852, %v1977
  %v2010 = vadd.f32 %v1853, %v2000
  %v2011 = vadd.f32 %v1854, %v1980
  %v2012 = vadd.f32 %v1855, %v2003
  %s2013 = scalar_lea.vmem %s1, 208
  %v2014 = vld [vmem:[%s2013] sm:$0xff]
  %v2015 = vld [vmem:[%s2013 + $0x8] sm:$0xff]
  %2016 = vrot.lane.b32.xlu0 %v1433, 111
  %v2017 = vpop.permute.xlu0 %2016
  %2018 = vrot.lane.b32.xlu0 %v1417, 111
  %v2019 = vpop.permute.xlu0 %2018
  %2020 = vrot.lane.b32.xlu0 %v1437, 111
  %v2021 = vpop.permute.xlu0 %2020
  %2022 = vrot.lane.b32.xlu0 %v1434, 111
  %v2023 = vpop.permute.xlu0 %2022
  %2024 = vrot.lane.b32.xlu0 %v1418, 111
  %v2025 = vpop.permute.xlu0 %2024
  %2026 = vrot.lane.b32.xlu0 %v1438, 111
  %v2027 = vpop.permute.xlu0 %2026
  %v2028 = vsel %vm662, %v2017, %v2019
  %v2029 = vsel %vm662, %v2019, %v2021
  %v2030 = vsel %vm662, %v2023, %v2025
  %v2031 = vsel %vm662, %v2025, %v2027
  %v2037 = vsel %vm142, %v2014, 0
  %v2040 = vsel %vm142, %v2015, 0
  %2042 = vmatpush.msra.mxu0 0.0
  %2043 = vmatpush.msra.mxu0 0.0
  %2044 = vmatpush.msra.mxu0 0.0
  %2045 = vmatpush.msra.mxu0 0.0
  %2046 = vmatpush.msra.mxu0 0.0
  %2047 = vmatpush.msra.mxu0 0.0
  %2048 = vmatpush.msra.mxu0 0.0
  %2049 = vmatpush.msra.mxu0 0.0
  %2050 = vmatpush.msra.mxu0 0.0
  %2051 = vmatpush.msra.mxu0 0.0
  %2052 = vmatpush.msra.mxu0 0.0
  %2053 = vmatpush.msra.mxu0 0.0
  %2054 = vmatpush.msra.mxu0 0.0
  %2055 = vmatpush.msra.mxu0 0.0
  %2056 = vmatpush.msra.mxu0 %v2030
  %2057 = vmatpush.msra.mxu0 %v2028
  %2058 = vmatmul.f32.gmra.mxu0 %v2037
  %v2059 = vpop.f32.mrf.mxu0
  %v2060 = vadd.f32 0.0, %v2059
  %2061 = vmatmul.f32.gmra.mxu0 %v2040
  %v2062 = vpop.f32.mrf.mxu0
  %v2063 = vadd.f32 0.0, %v2062
  %2064 = vdwg.mxu0
  %2065 = vmatpush.msra.mxu0 0.0
  %2066 = vmatpush.msra.mxu0 0.0
  %2067 = vmatpush.msra.mxu0 0.0
  %2068 = vmatpush.msra.mxu0 0.0
  %2069 = vmatpush.msra.mxu0 0.0
  %2070 = vmatpush.msra.mxu0 0.0
  %2071 = vmatpush.msra.mxu0 0.0
  %2072 = vmatpush.msra.mxu0 0.0
  %2073 = vmatpush.msra.mxu0 0.0
  %2074 = vmatpush.msra.mxu0 0.0
  %2075 = vmatpush.msra.mxu0 0.0
  %2076 = vmatpush.msra.mxu0 0.0
  %2077 = vmatpush.msra.mxu0 0.0
  %2078 = vmatpush.msra.mxu0 0.0
  %2079 = vmatpush.msra.mxu0 %v2031
  %2080 = vmatpush.msra.mxu0 %v2029
  %2081 = vmatmul.f32.gmra.mxu0 %v2037
  %v2082 = vpop.f32.mrf.mxu0
  %v2083 = vadd.f32 0.0, %v2082
  %2084 = vmatmul.f32.gmra.mxu0 %v2040
  %v2085 = vpop.f32.mrf.mxu0
  %v2086 = vadd.f32 0.0, %v2085
  %2087 = vdwg.mxu0
  %2088 = vrot.lane.b32.xlu0 %v1435, 111
  %v2089 = vpop.permute.xlu0 %2088
  %2090 = vrot.lane.b32.xlu0 %v1419, 111
  %v2091 = vpop.permute.xlu0 %2090
  %2092 = vrot.lane.b32.xlu0 %v1439, 111
  %v2093 = vpop.permute.xlu0 %2092
  %2094 = vrot.lane.b32.xlu0 %v1436, 111
  %v2095 = vpop.permute.xlu0 %2094
  %2096 = vrot.lane.b32.xlu0 %v1420, 111
  %v2097 = vpop.permute.xlu0 %2096
  %2098 = vrot.lane.b32.xlu0 %v1440, 111
  %v2099 = vpop.permute.xlu0 %2098
  %v2100 = vsel %vm662, %v2089, %v2091
  %v2101 = vsel %vm662, %v2091, %v2093
  %v2102 = vsel %vm662, %v2095, %v2097
  %v2103 = vsel %vm662, %v2097, %v2099
  %2108 = vmatpush.msra.mxu0 0.0
  %2109 = vmatpush.msra.mxu0 0.0
  %2110 = vmatpush.msra.mxu0 0.0
  %2111 = vmatpush.msra.mxu0 0.0
  %2112 = vmatpush.msra.mxu0 0.0
  %2113 = vmatpush.msra.mxu0 0.0
  %2114 = vmatpush.msra.mxu0 0.0
  %2115 = vmatpush.msra.mxu0 0.0
  %2116 = vmatpush.msra.mxu0 0.0
  %2117 = vmatpush.msra.mxu0 0.0
  %2118 = vmatpush.msra.mxu0 0.0
  %2119 = vmatpush.msra.mxu0 0.0
  %2120 = vmatpush.msra.mxu0 0.0
  %2121 = vmatpush.msra.mxu0 0.0
  %2122 = vmatpush.msra.mxu0 %v2102
  %2123 = vmatpush.msra.mxu0 %v2100
  %2124 = vmatmul.f32.gmra.mxu0 %v2037
  %v2125 = vpop.f32.mrf.mxu0
  %v2126 = vadd.f32 0.0, %v2125
  %2127 = vmatmul.f32.gmra.mxu0 %v2040
  %v2128 = vpop.f32.mrf.mxu0
  %v2129 = vadd.f32 0.0, %v2128
  %2130 = vdwg.mxu0
  %2131 = vmatpush.msra.mxu0 0.0
  %2132 = vmatpush.msra.mxu0 0.0
  %2133 = vmatpush.msra.mxu0 0.0
  %2134 = vmatpush.msra.mxu0 0.0
  %2135 = vmatpush.msra.mxu0 0.0
  %2136 = vmatpush.msra.mxu0 0.0
  %2137 = vmatpush.msra.mxu0 0.0
  %2138 = vmatpush.msra.mxu0 0.0
  %2139 = vmatpush.msra.mxu0 0.0
  %2140 = vmatpush.msra.mxu0 0.0
  %2141 = vmatpush.msra.mxu0 0.0
  %2142 = vmatpush.msra.mxu0 0.0
  %2143 = vmatpush.msra.mxu0 0.0
  %2144 = vmatpush.msra.mxu0 0.0
  %2145 = vmatpush.msra.mxu0 %v2103
  %2146 = vmatpush.msra.mxu0 %v2101
  %2147 = vmatmul.f32.gmra.mxu0 %v2037
  %v2148 = vpop.f32.mrf.mxu0
  %v2149 = vadd.f32 0.0, %v2148
  %2150 = vmatmul.f32.gmra.mxu0 %v2040
  %v2151 = vpop.f32.mrf.mxu0
  %v2152 = vadd.f32 0.0, %v2151
  %2153 = vdwg.mxu0
  %v2154 = vadd.f32 %v2005, %v2060
  %v2155 = vadd.f32 %v2006, %v2083
  %v2156 = vadd.f32 %v2007, %v2063
  %v2157 = vadd.f32 %v2008, %v2086
  %v2158 = vadd.f32 %v2009, %v2126
  %v2159 = vadd.f32 %v2010, %v2149
  %v2160 = vadd.f32 %v2011, %v2129
  %v2161 = vadd.f32 %v2012, %v2152
  %2162 = vrot.lane.b32.xlu0 %v1433, 110
  %v2163 = vpop.permute.xlu0 %2162
  %2164 = vrot.lane.b32.xlu0 %v1417, 110
  %v2165 = vpop.permute.xlu0 %2164
  %2166 = vrot.lane.b32.xlu0 %v1437, 110
  %v2167 = vpop.permute.xlu0 %2166
  %2168 = vrot.lane.b32.xlu0 %v1434, 110
  %v2169 = vpop.permute.xlu0 %2168
  %2170 = vrot.lane.b32.xlu0 %v1418, 110
  %v2171 = vpop.permute.xlu0 %2170
  %2172 = vrot.lane.b32.xlu0 %v1438, 110
  %v2173 = vpop.permute.xlu0 %2172
  %2174 = vrot.lane.b32.xlu0 %v1435, 110
  %v2175 = vpop.permute.xlu0 %2174
  %2176 = vrot.lane.b32.xlu0 %v1419, 110
  %v2177 = vpop.permute.xlu0 %2176
  %2178 = vrot.lane.b32.xlu0 %v1439, 110
  %v2179 = vpop.permute.xlu0 %2178
  %2180 = vrot.lane.b32.xlu0 %v1436, 110
  %v2181 = vpop.permute.xlu0 %2180
  %2182 = vrot.lane.b32.xlu0 %v1420, 110
  %v2183 = vpop.permute.xlu0 %2182
  %2184 = vrot.lane.b32.xlu0 %v1440, 110
  %v2185 = vpop.permute.xlu0 %2184
  %v2186 = vsel %vm805, %v2163, %v2165
  %v2187 = vsel %vm805, %v2165, %v2167
  %v2188 = vsel %vm805, %v2169, %v2171
  %v2189 = vsel %vm805, %v2171, %v2173
  %v2190 = vsel %vm805, %v2175, %v2177
  %v2191 = vsel %vm805, %v2177, %v2179
  %v2192 = vsel %vm805, %v2181, %v2183
  %v2193 = vsel %vm805, %v2183, %v2185
  %v2202 = vsel %vm353, %v2186, 0.0
  %v2203 = vsel %vm354, %v2187, 0.0
  %v2204 = vsel %vm353, %v2188, 0.0
  %v2205 = vsel %vm354, %v2189, 0.0
  %v2206 = vsel %vm353, %v2190, 0.0
  %v2207 = vsel %vm354, %v2191, 0.0
  %v2208 = vsel %vm353, %v2192, 0.0
  %v2209 = vsel %vm354, %v2193, 0.0
  %s2210 = scalar_lea.vmem %s1, 224
  %v2211 = vld [vmem:[%s2210] sm:$0xff]
  %v2212 = vld [vmem:[%s2210 + $0x8] sm:$0xff]
  %v2214 = vsel %vm142, %v2211, 0
  %v2217 = vsel %vm142, %v2212, 0
  %2219 = vmatpush.msra.mxu0 0.0
  %2220 = vmatpush.msra.mxu0 0.0
  %2221 = vmatpush.msra.mxu0 0.0
  %2222 = vmatpush.msra.mxu0 0.0
  %2223 = vmatpush.msra.mxu0 0.0
  %2224 = vmatpush.msra.mxu0 0.0
  %2225 = vmatpush.msra.mxu0 0.0
  %2226 = vmatpush.msra.mxu0 0.0
  %2227 = vmatpush.msra.mxu0 0.0
  %2228 = vmatpush.msra.mxu0 0.0
  %2229 = vmatpush.msra.mxu0 0.0
  %2230 = vmatpush.msra.mxu0 0.0
  %2231 = vmatpush.msra.mxu0 0.0
  %2232 = vmatpush.msra.mxu0 0.0
  %2233 = vmatpush.msra.mxu0 %v2204
  %2234 = vmatpush.msra.mxu0 %v2202
  %2235 = vmatmul.f32.gmra.mxu0 %v2214
  %v2236 = vpop.f32.mrf.mxu0
  %v2237 = vadd.f32 0.0, %v2236
  %2238 = vmatmul.f32.gmra.mxu0 %v2217
  %v2239 = vpop.f32.mrf.mxu0
  %v2240 = vadd.f32 0.0, %v2239
  %2241 = vdwg.mxu0
  %2242 = vmatpush.msra.mxu0 0.0
  %2243 = vmatpush.msra.mxu0 0.0
  %2244 = vmatpush.msra.mxu0 0.0
  %2245 = vmatpush.msra.mxu0 0.0
  %2246 = vmatpush.msra.mxu0 0.0
  %2247 = vmatpush.msra.mxu0 0.0
  %2248 = vmatpush.msra.mxu0 0.0
  %2249 = vmatpush.msra.mxu0 0.0
  %2250 = vmatpush.msra.mxu0 0.0
  %2251 = vmatpush.msra.mxu0 0.0
  %2252 = vmatpush.msra.mxu0 0.0
  %2253 = vmatpush.msra.mxu0 0.0
  %2254 = vmatpush.msra.mxu0 0.0
  %2255 = vmatpush.msra.mxu0 0.0
  %2256 = vmatpush.msra.mxu0 %v2205
  %2257 = vmatpush.msra.mxu0 %v2203
  %2258 = vmatmul.f32.gmra.mxu0 %v2214
  %v2259 = vpop.f32.mrf.mxu0
  %v2260 = vadd.f32 0.0, %v2259
  %2261 = vmatmul.f32.gmra.mxu0 %v2217
  %v2262 = vpop.f32.mrf.mxu0
  %v2263 = vadd.f32 0.0, %v2262
  %2264 = vdwg.mxu0
  %2265 = vmatpush.msra.mxu0 0.0
  %2266 = vmatpush.msra.mxu0 0.0
  %2267 = vmatpush.msra.mxu0 0.0
  %2268 = vmatpush.msra.mxu0 0.0
  %2269 = vmatpush.msra.mxu0 0.0
  %2270 = vmatpush.msra.mxu0 0.0
  %2271 = vmatpush.msra.mxu0 0.0
  %2272 = vmatpush.msra.mxu0 0.0
  %2273 = vmatpush.msra.mxu0 0.0
  %2274 = vmatpush.msra.mxu0 0.0
  %2275 = vmatpush.msra.mxu0 0.0
  %2276 = vmatpush.msra.mxu0 0.0
  %2277 = vmatpush.msra.mxu0 0.0
  %2278 = vmatpush.msra.mxu0 0.0
  %2279 = vmatpush.msra.mxu0 %v2208
  %2280 = vmatpush.msra.mxu0 %v2206
  %2281 = vmatmul.f32.gmra.mxu0 %v2214
  %v2282 = vpop.f32.mrf.mxu0
  %v2283 = vadd.f32 0.0, %v2282
  %2284 = vmatmul.f32.gmra.mxu0 %v2217
  %v2285 = vpop.f32.mrf.mxu0
  %v2286 = vadd.f32 0.0, %v2285
  %2287 = vdwg.mxu0
  %2288 = vmatpush.msra.mxu0 0.0
  %2289 = vmatpush.msra.mxu0 0.0
  %2290 = vmatpush.msra.mxu0 0.0
  %2291 = vmatpush.msra.mxu0 0.0
  %2292 = vmatpush.msra.mxu0 0.0
  %2293 = vmatpush.msra.mxu0 0.0
  %2294 = vmatpush.msra.mxu0 0.0
  %2295 = vmatpush.msra.mxu0 0.0
  %2296 = vmatpush.msra.mxu0 0.0
  %2297 = vmatpush.msra.mxu0 0.0
  %2298 = vmatpush.msra.mxu0 0.0
  %2299 = vmatpush.msra.mxu0 0.0
  %2300 = vmatpush.msra.mxu0 0.0
  %2301 = vmatpush.msra.mxu0 0.0
  %2302 = vmatpush.msra.mxu0 %v2209
  %2303 = vmatpush.msra.mxu0 %v2207
  %2304 = vmatmul.f32.gmra.mxu0 %v2214
  %v2305 = vpop.f32.mrf.mxu0
  %v2306 = vadd.f32 0.0, %v2305
  %2307 = vmatmul.f32.gmra.mxu0 %v2217
  %v2308 = vpop.f32.mrf.mxu0
  %v2309 = vadd.f32 0.0, %v2308
  %2310 = vdwg.mxu0
  %v2311 = vadd.f32 %v2154, %v2237
  %v2312 = vadd.f32 %v2155, %v2260
  %v2313 = vadd.f32 %v2156, %v2240
  %v2314 = vadd.f32 %v2157, %v2263
  %v2315 = vadd.f32 %v2158, %v2283
  %v2316 = vadd.f32 %v2159, %v2306
  %v2317 = vadd.f32 %v2160, %v2286
  %v2318 = vadd.f32 %v2161, %v2309
  %2319 = vrot.lane.b32.xlu0 %v1433, 96
  %v2320 = vpop.permute.xlu0 %2319
  %2321 = vrot.lane.b32.xlu0 %v1417, 96
  %v2322 = vpop.permute.xlu0 %2321
  %2323 = vrot.lane.b32.xlu0 %v1437, 96
  %v2324 = vpop.permute.xlu0 %2323
  %2325 = vrot.lane.b32.xlu0 %v1434, 96
  %v2326 = vpop.permute.xlu0 %2325
  %2327 = vrot.lane.b32.xlu0 %v1418, 96
  %v2328 = vpop.permute.xlu0 %2327
  %2329 = vrot.lane.b32.xlu0 %v1438, 96
  %v2330 = vpop.permute.xlu0 %2329
  %2331 = vrot.lane.b32.xlu0 %v1435, 96
  %v2332 = vpop.permute.xlu0 %2331
  %2333 = vrot.lane.b32.xlu0 %v1419, 96
  %v2334 = vpop.permute.xlu0 %2333
  %2335 = vrot.lane.b32.xlu0 %v1439, 96
  %v2336 = vpop.permute.xlu0 %2335
  %2337 = vrot.lane.b32.xlu0 %v1436, 96
  %v2338 = vpop.permute.xlu0 %2337
  %2339 = vrot.lane.b32.xlu0 %v1420, 96
  %v2340 = vpop.permute.xlu0 %2339
  %2341 = vrot.lane.b32.xlu0 %v1440, 96
  %v2342 = vpop.permute.xlu0 %2341
  %v2343 = vsel %vm951, %v2320, %v2322
  %v2344 = vsel %vm951, %v2322, %v2324
  %v2345 = vsel %vm951, %v2326, %v2328
  %v2346 = vsel %vm951, %v2328, %v2330
  %v2347 = vsel %vm951, %v2332, %v2334
  %v2348 = vsel %vm951, %v2334, %v2336
  %v2349 = vsel %vm951, %v2338, %v2340
  %v2350 = vsel %vm951, %v2340, %v2342
  %v2359 = vsel %vm104, %v2343, 0.0
  %v2360 = vsel %vm105, %v2344, 0.0
  %v2361 = vsel %vm104, %v2345, 0.0
  %v2362 = vsel %vm105, %v2346, 0.0
  %v2363 = vsel %vm104, %v2347, 0.0
  %v2364 = vsel %vm105, %v2348, 0.0
  %v2365 = vsel %vm104, %v2349, 0.0
  %v2366 = vsel %vm105, %v2350, 0.0
  %s2367 = scalar_lea.vmem %s1, 240
  %v2368 = vld [vmem:[%s2367] sm:$0xff]
  %v2369 = vld [vmem:[%s2367 + $0x8] sm:$0xff]
  %v2371 = vsel %vm142, %v2368, 0
  %v2374 = vsel %vm142, %v2369, 0
  %2376 = vmatpush.msra.mxu0 0.0
  %2377 = vmatpush.msra.mxu0 0.0
  %2378 = vmatpush.msra.mxu0 0.0
  %2379 = vmatpush.msra.mxu0 0.0
  %2380 = vmatpush.msra.mxu0 0.0
  %2381 = vmatpush.msra.mxu0 0.0
  %2382 = vmatpush.msra.mxu0 0.0
  %2383 = vmatpush.msra.mxu0 0.0
  %2384 = vmatpush.msra.mxu0 0.0
  %2385 = vmatpush.msra.mxu0 0.0
  %2386 = vmatpush.msra.mxu0 0.0
  %2387 = vmatpush.msra.mxu0 0.0
  %2388 = vmatpush.msra.mxu0 0.0
  %2389 = vmatpush.msra.mxu0 0.0
  %2390 = vmatpush.msra.mxu0 %v2361
  %2391 = vmatpush.msra.mxu0 %v2359
  %2392 = vmatmul.f32.gmra.mxu0 %v2371
  %v2393 = vpop.f32.mrf.mxu0
  %v2394 = vadd.f32 0.0, %v2393
  %2395 = vmatmul.f32.gmra.mxu0 %v2374
  %v2396 = vpop.f32.mrf.mxu0
  %v2397 = vadd.f32 0.0, %v2396
  %2398 = vdwg.mxu0
  %2399 = vmatpush.msra.mxu0 0.0
  %2400 = vmatpush.msra.mxu0 0.0
  %2401 = vmatpush.msra.mxu0 0.0
  %2402 = vmatpush.msra.mxu0 0.0
  %2403 = vmatpush.msra.mxu0 0.0
  %2404 = vmatpush.msra.mxu0 0.0
  %2405 = vmatpush.msra.mxu0 0.0
  %2406 = vmatpush.msra.mxu0 0.0
  %2407 = vmatpush.msra.mxu0 0.0
  %2408 = vmatpush.msra.mxu0 0.0
  %2409 = vmatpush.msra.mxu0 0.0
  %2410 = vmatpush.msra.mxu0 0.0
  %2411 = vmatpush.msra.mxu0 0.0
  %2412 = vmatpush.msra.mxu0 0.0
  %2413 = vmatpush.msra.mxu0 %v2362
  %2414 = vmatpush.msra.mxu0 %v2360
  %2415 = vmatmul.f32.gmra.mxu0 %v2371
  %v2416 = vpop.f32.mrf.mxu0
  %v2417 = vadd.f32 0.0, %v2416
  %2418 = vmatmul.f32.gmra.mxu0 %v2374
  %v2419 = vpop.f32.mrf.mxu0
  %v2420 = vadd.f32 0.0, %v2419
  %2421 = vdwg.mxu0
  %2422 = vmatpush.msra.mxu0 0.0
  %2423 = vmatpush.msra.mxu0 0.0
  %2424 = vmatpush.msra.mxu0 0.0
  %2425 = vmatpush.msra.mxu0 0.0
  %2426 = vmatpush.msra.mxu0 0.0
  %2427 = vmatpush.msra.mxu0 0.0
  %2428 = vmatpush.msra.mxu0 0.0
  %2429 = vmatpush.msra.mxu0 0.0
  %2430 = vmatpush.msra.mxu0 0.0
  %2431 = vmatpush.msra.mxu0 0.0
  %2432 = vmatpush.msra.mxu0 0.0
  %2433 = vmatpush.msra.mxu0 0.0
  %2434 = vmatpush.msra.mxu0 0.0
  %2435 = vmatpush.msra.mxu0 0.0
  %2436 = vmatpush.msra.mxu0 %v2365
  %2437 = vmatpush.msra.mxu0 %v2363
  %2438 = vmatmul.f32.gmra.mxu0 %v2371
  %v2439 = vpop.f32.mrf.mxu0
  %v2440 = vadd.f32 0.0, %v2439
  %2441 = vmatmul.f32.gmra.mxu0 %v2374
  %v2442 = vpop.f32.mrf.mxu0
  %v2443 = vadd.f32 0.0, %v2442
  %2444 = vdwg.mxu0
  %2445 = vmatpush.msra.mxu0 0.0
  %2446 = vmatpush.msra.mxu0 0.0
  %2447 = vmatpush.msra.mxu0 0.0
  %2448 = vmatpush.msra.mxu0 0.0
  %2449 = vmatpush.msra.mxu0 0.0
  %2450 = vmatpush.msra.mxu0 0.0
  %2451 = vmatpush.msra.mxu0 0.0
  %2452 = vmatpush.msra.mxu0 0.0
  %2453 = vmatpush.msra.mxu0 0.0
  %2454 = vmatpush.msra.mxu0 0.0
  %2455 = vmatpush.msra.mxu0 0.0
  %2456 = vmatpush.msra.mxu0 0.0
  %2457 = vmatpush.msra.mxu0 0.0
  %2458 = vmatpush.msra.mxu0 0.0
  %2459 = vmatpush.msra.mxu0 %v2366
  %2460 = vmatpush.msra.mxu0 %v2364
  %2461 = vmatmul.f32.gmra.mxu0 %v2371
  %v2462 = vpop.f32.mrf.mxu0
  %v2463 = vadd.f32 0.0, %v2462
  %2464 = vmatmul.f32.gmra.mxu0 %v2374
  %v2465 = vpop.f32.mrf.mxu0
  %v2466 = vadd.f32 0.0, %v2465
  %2467 = vdwg.mxu0
  %v2468 = vadd.f32 %v2311, %v2394
  %v2469 = vadd.f32 %v2312, %v2417
  %v2470 = vadd.f32 %v2313, %v2397
  %v2471 = vadd.f32 %v2314, %v2420
  %v2472 = vadd.f32 %v2315, %v2440
  %v2473 = vadd.f32 %v2316, %v2463
  %v2474 = vadd.f32 %v2317, %v2443
  %v2475 = vadd.f32 %v2318, %v2466
  %s2476 = scalar_lea.vmem %s1, 256
  %v2477 = vld [vmem:[%s2476] sm:$0xff]
  %v2478 = vld [vmem:[%s2476 + $0x8] sm:$0xff]
  %2479 = vrot.lane.b32.xlu0 %v1433, 95
  %v2480 = vpop.permute.xlu0 %2479
  %2481 = vrot.lane.b32.xlu0 %v1417, 95
  %v2482 = vpop.permute.xlu0 %2481
  %2483 = vrot.lane.b32.xlu0 %v1437, 95
  %v2484 = vpop.permute.xlu0 %2483
  %2485 = vrot.lane.b32.xlu0 %v1434, 95
  %v2486 = vpop.permute.xlu0 %2485
  %2487 = vrot.lane.b32.xlu0 %v1418, 95
  %v2488 = vpop.permute.xlu0 %2487
  %2489 = vrot.lane.b32.xlu0 %v1438, 95
  %v2490 = vpop.permute.xlu0 %2489
  %v2491 = vsel %vm1094, %v2480, %v2482
  %v2492 = vsel %vm1094, %v2482, %v2484
  %v2493 = vsel %vm1094, %v2486, %v2488
  %v2494 = vsel %vm1094, %v2488, %v2490
  %v2500 = vsel %vm142, %v2477, 0
  %v2503 = vsel %vm142, %v2478, 0
  %2505 = vmatpush.msra.mxu0 0.0
  %2506 = vmatpush.msra.mxu0 0.0
  %2507 = vmatpush.msra.mxu0 0.0
  %2508 = vmatpush.msra.mxu0 0.0
  %2509 = vmatpush.msra.mxu0 0.0
  %2510 = vmatpush.msra.mxu0 0.0
  %2511 = vmatpush.msra.mxu0 0.0
  %2512 = vmatpush.msra.mxu0 0.0
  %2513 = vmatpush.msra.mxu0 0.0
  %2514 = vmatpush.msra.mxu0 0.0
  %2515 = vmatpush.msra.mxu0 0.0
  %2516 = vmatpush.msra.mxu0 0.0
  %2517 = vmatpush.msra.mxu0 0.0
  %2518 = vmatpush.msra.mxu0 0.0
  %2519 = vmatpush.msra.mxu0 %v2493
  %2520 = vmatpush.msra.mxu0 %v2491
  %2521 = vmatmul.f32.gmra.mxu0 %v2500
  %v2522 = vpop.f32.mrf.mxu0
  %v2523 = vadd.f32 0.0, %v2522
  %2524 = vmatmul.f32.gmra.mxu0 %v2503
  %v2525 = vpop.f32.mrf.mxu0
  %v2526 = vadd.f32 0.0, %v2525
  %2527 = vdwg.mxu0
  %2528 = vmatpush.msra.mxu0 0.0
  %2529 = vmatpush.msra.mxu0 0.0
  %2530 = vmatpush.msra.mxu0 0.0
  %2531 = vmatpush.msra.mxu0 0.0
  %2532 = vmatpush.msra.mxu0 0.0
  %2533 = vmatpush.msra.mxu0 0.0
  %2534 = vmatpush.msra.mxu0 0.0
  %2535 = vmatpush.msra.mxu0 0.0
  %2536 = vmatpush.msra.mxu0 0.0
  %2537 = vmatpush.msra.mxu0 0.0
  %2538 = vmatpush.msra.mxu0 0.0
  %2539 = vmatpush.msra.mxu0 0.0
  %2540 = vmatpush.msra.mxu0 0.0
  %2541 = vmatpush.msra.mxu0 0.0
  %2542 = vmatpush.msra.mxu0 %v2494
  %2543 = vmatpush.msra.mxu0 %v2492
  %2544 = vmatmul.f32.gmra.mxu0 %v2500
  %v2545 = vpop.f32.mrf.mxu0
  %v2546 = vadd.f32 0.0, %v2545
  %2547 = vmatmul.f32.gmra.mxu0 %v2503
  %v2548 = vpop.f32.mrf.mxu0
  %v2549 = vadd.f32 0.0, %v2548
  %2550 = vdwg.mxu0
  %2551 = vrot.lane.b32.xlu0 %v1435, 95
  %v2552 = vpop.permute.xlu0 %2551
  %2553 = vrot.lane.b32.xlu0 %v1419, 95
  %v2554 = vpop.permute.xlu0 %2553
  %2555 = vrot.lane.b32.xlu0 %v1439, 95
  %v2556 = vpop.permute.xlu0 %2555
  %2557 = vrot.lane.b32.xlu0 %v1436, 95
  %v2558 = vpop.permute.xlu0 %2557
  %2559 = vrot.lane.b32.xlu0 %v1420, 95
  %v2560 = vpop.permute.xlu0 %2559
  %2561 = vrot.lane.b32.xlu0 %v1440, 95
  %v2562 = vpop.permute.xlu0 %2561
  %v2563 = vsel %vm1094, %v2552, %v2554
  %v2564 = vsel %vm1094, %v2554, %v2556
  %v2565 = vsel %vm1094, %v2558, %v2560
  %v2566 = vsel %vm1094, %v2560, %v2562
  %2571 = vmatpush.msra.mxu0 0.0
  %2572 = vmatpush.msra.mxu0 0.0
  %2573 = vmatpush.msra.mxu0 0.0
  %2574 = vmatpush.msra.mxu0 0.0
  %2575 = vmatpush.msra.mxu0 0.0
  %2576 = vmatpush.msra.mxu0 0.0
  %2577 = vmatpush.msra.mxu0 0.0
  %2578 = vmatpush.msra.mxu0 0.0
  %2579 = vmatpush.msra.mxu0 0.0
  %2580 = vmatpush.msra.mxu0 0.0
  %2581 = vmatpush.msra.mxu0 0.0
  %2582 = vmatpush.msra.mxu0 0.0
  %2583 = vmatpush.msra.mxu0 0.0
  %2584 = vmatpush.msra.mxu0 0.0
  %2585 = vmatpush.msra.mxu0 %v2565
  %2586 = vmatpush.msra.mxu0 %v2563
  %2587 = vmatmul.f32.gmra.mxu0 %v2500
  %v2588 = vpop.f32.mrf.mxu0
  %v2589 = vadd.f32 0.0, %v2588
  %2590 = vmatmul.f32.gmra.mxu0 %v2503
  %v2591 = vpop.f32.mrf.mxu0
  %v2592 = vadd.f32 0.0, %v2591
  %2593 = vdwg.mxu0
  %2594 = vmatpush.msra.mxu0 0.0
  %2595 = vmatpush.msra.mxu0 0.0
  %2596 = vmatpush.msra.mxu0 0.0
  %2597 = vmatpush.msra.mxu0 0.0
  %2598 = vmatpush.msra.mxu0 0.0
  %2599 = vmatpush.msra.mxu0 0.0
  %2600 = vmatpush.msra.mxu0 0.0
  %2601 = vmatpush.msra.mxu0 0.0
  %2602 = vmatpush.msra.mxu0 0.0
  %2603 = vmatpush.msra.mxu0 0.0
  %2604 = vmatpush.msra.mxu0 0.0
  %2605 = vmatpush.msra.mxu0 0.0
  %2606 = vmatpush.msra.mxu0 0.0
  %2607 = vmatpush.msra.mxu0 0.0
  %2608 = vmatpush.msra.mxu0 %v2566
  %2609 = vmatpush.msra.mxu0 %v2564
  %2610 = vmatmul.f32.gmra.mxu0 %v2500
  %v2611 = vpop.f32.mrf.mxu0
  %v2612 = vadd.f32 0.0, %v2611
  %2613 = vmatmul.f32.gmra.mxu0 %v2503
  %v2614 = vpop.f32.mrf.mxu0
  %v2615 = vadd.f32 0.0, %v2614
  %2616 = vdwg.mxu0
  %v2617 = vadd.f32 %v2468, %v2523
  %v2618 = vadd.f32 %v2469, %v2546
  %v2619 = vadd.f32 %v2470, %v2526
  %v2620 = vadd.f32 %v2471, %v2549
  %v2621 = vadd.f32 %v2472, %v2589
  %v2622 = vadd.f32 %v2473, %v2612
  %v2623 = vadd.f32 %v2474, %v2592
  %v2624 = vadd.f32 %v2475, %v2615
  %2625 = vrot.lane.b32.xlu0 %v1433, 94
  %v2626 = vpop.permute.xlu0 %2625
  %2627 = vrot.lane.b32.xlu0 %v1417, 94
  %v2628 = vpop.permute.xlu0 %2627
  %2629 = vrot.lane.b32.xlu0 %v1437, 94
  %v2630 = vpop.permute.xlu0 %2629
  %2631 = vrot.lane.b32.xlu0 %v1434, 94
  %v2632 = vpop.permute.xlu0 %2631
  %2633 = vrot.lane.b32.xlu0 %v1418, 94
  %v2634 = vpop.permute.xlu0 %2633
  %2635 = vrot.lane.b32.xlu0 %v1438, 94
  %v2636 = vpop.permute.xlu0 %2635
  %2637 = vrot.lane.b32.xlu0 %v1435, 94
  %v2638 = vpop.permute.xlu0 %2637
  %2639 = vrot.lane.b32.xlu0 %v1419, 94
  %v2640 = vpop.permute.xlu0 %2639
  %2641 = vrot.lane.b32.xlu0 %v1439, 94
  %v2642 = vpop.permute.xlu0 %2641
  %2643 = vrot.lane.b32.xlu0 %v1436, 94
  %v2644 = vpop.permute.xlu0 %2643
  %2645 = vrot.lane.b32.xlu0 %v1420, 94
  %v2646 = vpop.permute.xlu0 %2645
  %2647 = vrot.lane.b32.xlu0 %v1440, 94
  %v2648 = vpop.permute.xlu0 %2647
  %v2649 = vsel %vm1237, %v2626, %v2628
  %v2650 = vsel %vm1237, %v2628, %v2630
  %v2651 = vsel %vm1237, %v2632, %v2634
  %v2652 = vsel %vm1237, %v2634, %v2636
  %v2653 = vsel %vm1237, %v2638, %v2640
  %v2654 = vsel %vm1237, %v2640, %v2642
  %v2655 = vsel %vm1237, %v2644, %v2646
  %v2656 = vsel %vm1237, %v2646, %v2648
  %v2665 = vsel %vm353, %v2649, 0.0
  %v2666 = vsel %vm354, %v2650, 0.0
  %v2667 = vsel %vm353, %v2651, 0.0
  %v2668 = vsel %vm354, %v2652, 0.0
  %v2669 = vsel %vm353, %v2653, 0.0
  %v2670 = vsel %vm354, %v2654, 0.0
  %v2671 = vsel %vm353, %v2655, 0.0
  %v2672 = vsel %vm354, %v2656, 0.0
  %s2673 = scalar_lea.vmem %s1, 272
  %v2674 = vld [vmem:[%s2673] sm:$0xff]
  %v2675 = vld [vmem:[%s2673 + $0x8] sm:$0xff]
  %v2677 = vsel %vm142, %v2674, 0
  %v2680 = vsel %vm142, %v2675, 0
  %2682 = vmatpush.msra.mxu0 0.0
  %2683 = vmatpush.msra.mxu0 0.0
  %2684 = vmatpush.msra.mxu0 0.0
  %2685 = vmatpush.msra.mxu0 0.0
  %2686 = vmatpush.msra.mxu0 0.0
  %2687 = vmatpush.msra.mxu0 0.0
  %2688 = vmatpush.msra.mxu0 0.0
  %2689 = vmatpush.msra.mxu0 0.0
  %2690 = vmatpush.msra.mxu0 0.0
  %2691 = vmatpush.msra.mxu0 0.0
  %2692 = vmatpush.msra.mxu0 0.0
  %2693 = vmatpush.msra.mxu0 0.0
  %2694 = vmatpush.msra.mxu0 0.0
  %2695 = vmatpush.msra.mxu0 0.0
  %2696 = vmatpush.msra.mxu0 %v2667
  %2697 = vmatpush.msra.mxu0 %v2665
  %2698 = vmatmul.f32.gmra.mxu0 %v2677
  %v2699 = vpop.f32.mrf.mxu0
  %v2700 = vadd.f32 0.0, %v2699
  %2701 = vmatmul.f32.gmra.mxu0 %v2680
  %v2702 = vpop.f32.mrf.mxu0
  %v2703 = vadd.f32 0.0, %v2702
  %2704 = vdwg.mxu0
  %2705 = vmatpush.msra.mxu0 0.0
  %2706 = vmatpush.msra.mxu0 0.0
  %2707 = vmatpush.msra.mxu0 0.0
  %2708 = vmatpush.msra.mxu0 0.0
  %2709 = vmatpush.msra.mxu0 0.0
  %2710 = vmatpush.msra.mxu0 0.0
  %2711 = vmatpush.msra.mxu0 0.0
  %2712 = vmatpush.msra.mxu0 0.0
  %2713 = vmatpush.msra.mxu0 0.0
  %2714 = vmatpush.msra.mxu0 0.0
  %2715 = vmatpush.msra.mxu0 0.0
  %2716 = vmatpush.msra.mxu0 0.0
  %2717 = vmatpush.msra.mxu0 0.0
  %2718 = vmatpush.msra.mxu0 0.0
  %2719 = vmatpush.msra.mxu0 %v2668
  %2720 = vmatpush.msra.mxu0 %v2666
  %2721 = vmatmul.f32.gmra.mxu0 %v2677
  %v2722 = vpop.f32.mrf.mxu0
  %v2723 = vadd.f32 0.0, %v2722
  %2724 = vmatmul.f32.gmra.mxu0 %v2680
  %v2725 = vpop.f32.mrf.mxu0
  %v2726 = vadd.f32 0.0, %v2725
  %2727 = vdwg.mxu0
  %2728 = vmatpush.msra.mxu0 0.0
  %2729 = vmatpush.msra.mxu0 0.0
  %2730 = vmatpush.msra.mxu0 0.0
  %2731 = vmatpush.msra.mxu0 0.0
  %2732 = vmatpush.msra.mxu0 0.0
  %2733 = vmatpush.msra.mxu0 0.0
  %2734 = vmatpush.msra.mxu0 0.0
  %2735 = vmatpush.msra.mxu0 0.0
  %2736 = vmatpush.msra.mxu0 0.0
  %2737 = vmatpush.msra.mxu0 0.0
  %2738 = vmatpush.msra.mxu0 0.0
  %2739 = vmatpush.msra.mxu0 0.0
  %2740 = vmatpush.msra.mxu0 0.0
  %2741 = vmatpush.msra.mxu0 0.0
  %2742 = vmatpush.msra.mxu0 %v2671
  %2743 = vmatpush.msra.mxu0 %v2669
  %2744 = vmatmul.f32.gmra.mxu0 %v2677
  %v2745 = vpop.f32.mrf.mxu0
  %v2746 = vadd.f32 0.0, %v2745
  %2747 = vmatmul.f32.gmra.mxu0 %v2680
  %v2748 = vpop.f32.mrf.mxu0
  %v2749 = vadd.f32 0.0, %v2748
  %2750 = vdwg.mxu0
  %2751 = vmatpush.msra.mxu0 0.0
  %2752 = vmatpush.msra.mxu0 0.0
  %2753 = vmatpush.msra.mxu0 0.0
  %2754 = vmatpush.msra.mxu0 0.0
  %2755 = vmatpush.msra.mxu0 0.0
  %2756 = vmatpush.msra.mxu0 0.0
  %2757 = vmatpush.msra.mxu0 0.0
  %2758 = vmatpush.msra.mxu0 0.0
  %2759 = vmatpush.msra.mxu0 0.0
  %2760 = vmatpush.msra.mxu0 0.0
  %2761 = vmatpush.msra.mxu0 0.0
  %2762 = vmatpush.msra.mxu0 0.0
  %2763 = vmatpush.msra.mxu0 0.0
  %2764 = vmatpush.msra.mxu0 0.0
  %2765 = vmatpush.msra.mxu0 %v2672
  %2766 = vmatpush.msra.mxu0 %v2670
  %2767 = vmatmul.f32.gmra.mxu0 %v2677
  %v2768 = vpop.f32.mrf.mxu0
  %v2769 = vadd.f32 0.0, %v2768
  %2770 = vmatmul.f32.gmra.mxu0 %v2680
  %v2771 = vpop.f32.mrf.mxu0
  %v2772 = vadd.f32 0.0, %v2771
  %2773 = vdwg.mxu0
  %v2774 = vadd.f32 %v2617, %v2700
  %v2775 = vadd.f32 %v2618, %v2723
  %v2776 = vadd.f32 %v2619, %v2703
  %v2777 = vadd.f32 %v2620, %v2726
  %v2778 = vadd.f32 %v2621, %v2746
  %v2779 = vadd.f32 %v2622, %v2769
  %v2780 = vadd.f32 %v2623, %v2749
  %v2781 = vadd.f32 %v2624, %v2772
  %s2782 = scalar_lea.vmem %s2, 16
  %v2783 = vld [vmem:[%s2782] sm:$0xff]
  %v2784 = vld [vmem:[%s2782 + $0x8] sm:$0xff]
  %2786 = vset.pattern.permute.xlu0 0
  %2787 = vperm.xlu0 %2786, %v2783
  %v2788 = vpop.permute.xlu0 %2787
  %2791 = vset.pattern.permute.xlu0 0
  %2792 = vperm.xlu0 %2791, %v2784
  %v2793 = vpop.permute.xlu0 %2792
  %v2795 = vadd.f32 %v2774, %v2788
  %v2796 = vadd.f32 %v2775, %v2788
  %v2797 = vadd.f32 %v2776, %v2793
  %v2798 = vadd.f32 %v2777, %v2793
  %v2799 = vadd.f32 %v2778, %v2788
  %v2800 = vadd.f32 %v2779, %v2788
  %v2801 = vadd.f32 %v2780, %v2793
  %v2802 = vadd.f32 %v2781, %v2793
  %v2803 = vmax.f32 %v2795, 0.0
  %v2804 = vmax.f32 %v2796, 0.0
  %v2805 = vmax.f32 %v2797, 0.0
  %v2806 = vmax.f32 %v2798, 0.0
  %v2807 = vmax.f32 %v2799, 0.0
  %v2808 = vmax.f32 %v2800, 0.0
  %v2809 = vmax.f32 %v2801, 0.0
  %v2810 = vmax.f32 %v2802, 0.0
  %v2811 = vld [vmem:[%s3] sm:$0xff]
  %v2812 = vld [vmem:[%s3 + $0x8] sm:$0xff]
  %v2813 = vld [vmem:[%s3 + $0x10] sm:$0xff]
  %v2814 = vld [vmem:[%s3 + $0x18] sm:$0xff]
  %v2815 = vld [vmem:[%s3 + $0x20] sm:$0xff]
  %v2816 = vld [vmem:[%s3 + $0x28] sm:$0xff]
  %v2817 = vld [vmem:[%s3 + $0x30] sm:$0xff]
  %v2818 = vld [vmem:[%s3 + $0x38] sm:$0xff]
  %v2819 = vld [vmem:[%s3 + $0x40] sm:$0xff]
  %v2820 = vld [vmem:[%s3 + $0x48] sm:$0xff]
  %v2821 = vld [vmem:[%s3 + $0x50] sm:$0xff]
  %v2822 = vld [vmem:[%s3 + $0x58] sm:$0xff]
  %v2823 = vld [vmem:[%s3 + $0x60] sm:$0xff]
  %v2824 = vld [vmem:[%s3 + $0x68] sm:$0xff]
  %v2825 = vld [vmem:[%s3 + $0x70] sm:$0xff]
  %v2826 = vld [vmem:[%s3 + $0x78] sm:$0xff]
  %v2827 = vld [vmem:[%s3 + $0x80] sm:$0xff]
  %v2828 = vld [vmem:[%s3 + $0x88] sm:$0xff]
  %v2829 = vld [vmem:[%s3 + $0x90] sm:$0xff]
  %v2830 = vld [vmem:[%s3 + $0x98] sm:$0xff]
  %v2831 = vld [vmem:[%s3 + $0xa0] sm:$0xff]
  %v2832 = vld [vmem:[%s3 + $0xa8] sm:$0xff]
  %v2833 = vld [vmem:[%s3 + $0xb0] sm:$0xff]
  %v2834 = vld [vmem:[%s3 + $0xb8] sm:$0xff]
  %v2835 = vld [vmem:[%s3 + $0xc0] sm:$0xff]
  %v2836 = vld [vmem:[%s3 + $0xc8] sm:$0xff]
  %v2837 = vld [vmem:[%s3 + $0xd0] sm:$0xff]
  %v2838 = vld [vmem:[%s3 + $0xd8] sm:$0xff]
  %v2839 = vld [vmem:[%s3 + $0xe0] sm:$0xff]
  %v2840 = vld [vmem:[%s3 + $0xe8] sm:$0xff]
  %v2841 = vld [vmem:[%s3 + $0xf0] sm:$0xff]
  %v2842 = vld [vmem:[%s3 + $0xf8] sm:$0xff]
  %2843 = vmatpush.msra.mxu0 %v2826
  %2844 = vmatpush.msra.mxu0 %v2825
  %2845 = vmatpush.msra.mxu0 %v2824
  %2846 = vmatpush.msra.mxu0 %v2823
  %2847 = vmatpush.msra.mxu0 %v2822
  %2848 = vmatpush.msra.mxu0 %v2821
  %2849 = vmatpush.msra.mxu0 %v2820
  %2850 = vmatpush.msra.mxu0 %v2819
  %2851 = vmatpush.msra.mxu0 %v2818
  %2852 = vmatpush.msra.mxu0 %v2817
  %2853 = vmatpush.msra.mxu0 %v2816
  %2854 = vmatpush.msra.mxu0 %v2815
  %2855 = vmatpush.msra.mxu0 %v2814
  %2856 = vmatpush.msra.mxu0 %v2813
  %2857 = vmatpush.msra.mxu0 %v2812
  %2858 = vmatpush.msra.mxu0 %v2811
  %2859 = vmatmul.f32.gmra.mxu0 %v2803
  %v2860 = vpop.f32.mrf.mxu0
  %v2861 = vadd.f32 0.0, %v2860
  %2862 = vmatmul.f32.gmra.mxu0 %v2805
  %v2863 = vpop.f32.mrf.mxu0
  %v2864 = vadd.f32 0.0, %v2863
  %2865 = vmatmul.f32.gmra.mxu0 %v2807
  %v2866 = vpop.f32.mrf.mxu0
  %v2867 = vadd.f32 0.0, %v2866
  %2868 = vmatmul.f32.gmra.mxu0 %v2809
  %v2869 = vpop.f32.mrf.mxu0
  %v2870 = vadd.f32 0.0, %v2869
  %2871 = vdwg.mxu0
  %2872 = vmatpush.msra.mxu0 %v2842
  %2873 = vmatpush.msra.mxu0 %v2841
  %2874 = vmatpush.msra.mxu0 %v2840
  %2875 = vmatpush.msra.mxu0 %v2839
  %2876 = vmatpush.msra.mxu0 %v2838
  %2877 = vmatpush.msra.mxu0 %v2837
  %2878 = vmatpush.msra.mxu0 %v2836
  %2879 = vmatpush.msra.mxu0 %v2835
  %2880 = vmatpush.msra.mxu0 %v2834
  %2881 = vmatpush.msra.mxu0 %v2833
  %2882 = vmatpush.msra.mxu0 %v2832
  %2883 = vmatpush.msra.mxu0 %v2831
  %2884 = vmatpush.msra.mxu0 %v2830
  %2885 = vmatpush.msra.mxu0 %v2829
  %2886 = vmatpush.msra.mxu0 %v2828
  %2887 = vmatpush.msra.mxu0 %v2827
  %2888 = vmatmul.f32.gmra.mxu0 %v2804
  %v2889 = vpop.f32.mrf.mxu0
  %v2890 = vadd.f32 %v2861, %v2889
  %2891 = vmatmul.f32.gmra.mxu0 %v2806
  %v2892 = vpop.f32.mrf.mxu0
  %v2893 = vadd.f32 %v2864, %v2892
  %2894 = vmatmul.f32.gmra.mxu0 %v2808
  %v2895 = vpop.f32.mrf.mxu0
  %v2896 = vadd.f32 %v2867, %v2895
  %2897 = vmatmul.f32.gmra.mxu0 %v2810
  %v2898 = vpop.f32.mrf.mxu0
  %v2899 = vadd.f32 %v2870, %v2898
  %2900 = vdwg.mxu0
  %2905 = vrot.lane.b32.xlu0 %v2890, 9
  %v2906 = vpop.permute.xlu0 %2905
  %2907 = vrot.lane.b32.xlu0 %v2893, 9
  %v2908 = vpop.permute.xlu0 %2907
  %2909 = vrot.lane.b32.xlu0 %v2896, 9
  %v2910 = vpop.permute.xlu0 %2909
  %2911 = vrot.lane.b32.xlu0 %v2899, 9
  %v2912 = vpop.permute.xlu0 %2911
  %vm2917 = vcmask 72704
  %v2918 = vsel %vm2917, 0.0, %v2906
  %v2919 = vsel %vm2917, 0.0, %v2908
  %v2920 = vsel %vm2917, 0.0, %v2910
  %v2921 = vsel %vm2917, 0.0, %v2912
  %vm2922 = vcmask 596992
  %v2923 = vsel %vm2922, %v2918, 0.0
  %v2924 = vsel %vm2922, %v2919, 0.0
  %v2925 = vsel %vm2922, %v2920, 0.0
  %v2926 = vsel %vm2922, %v2921, 0.0
  %v2927 = vsel %vm36, 1, 0
  %vm2928 = vcmp.eq.s32.totalorder %v2927, 1
  %v2929 = vsel %vm2928, %v2923, 0.0
  %v2930 = vsel %vm2928, %v2924, 0.0
  %v2931 = vsel %vm2928, %v2925, 0.0
  %v2932 = vsel %vm2928, %v2926, 0.0
  %s2933 = scalar_lea.vmem %s1, 288
  %v2934 = vld [vmem:[%s2933] sm:$0xff]
  %v2935 = vld [vmem:[%s2933 + $0x8] sm:$0xff]
  %s2936 = scalar_lea.vmem %s1, 304
  %v2937 = vld [vmem:[%s2936] sm:$0xff]
  %v2938 = vld [vmem:[%s2936 + $0x8] sm:$0xff]
  %2941 = vrot.lane.b32.xlu0 %v2923, 127
  %v2942 = vpop.permute.xlu0 %2941
  %2943 = vrot.lane.b32.xlu0 %v2924, 127
  %v2944 = vpop.permute.xlu0 %2943
  %v2948 = vsel %vm142, %v2937, 0
  %v2951 = vsel %vm142, %v2938, 0
  %2953 = vmatpush.msra.mxu0 0.0
  %2954 = vmatpush.msra.mxu0 0.0
  %2955 = vmatpush.msra.mxu0 0.0
  %2956 = vmatpush.msra.mxu0 0.0
  %2957 = vmatpush.msra.mxu0 0.0
  %2958 = vmatpush.msra.mxu0 0.0
  %2959 = vmatpush.msra.mxu0 0.0
  %2960 = vmatpush.msra.mxu0 0.0
  %2961 = vmatpush.msra.mxu0 0.0
  %2962 = vmatpush.msra.mxu0 0.0
  %2963 = vmatpush.msra.mxu0 0.0
  %2964 = vmatpush.msra.mxu0 0.0
  %2965 = vmatpush.msra.mxu0 0.0
  %2966 = vmatpush.msra.mxu0 0.0
  %2967 = vmatpush.msra.mxu0 %v2944
  %2968 = vmatpush.msra.mxu0 %v2942
  %2969 = vmatmul.f32.gmra.mxu0 %v2948
  %v2970 = vpop.f32.mrf.mxu0
  %v2971 = vadd.f32 0.0, %v2970
  %2972 = vmatmul.f32.gmra.mxu0 %v2951
  %v2973 = vpop.f32.mrf.mxu0
  %v2974 = vadd.f32 0.0, %v2973
  %2975 = vdwg.mxu0
  %2978 = vrot.lane.b32.xlu0 %v2925, 127
  %v2979 = vpop.permute.xlu0 %2978
  %2980 = vrot.lane.b32.xlu0 %v2926, 127
  %v2981 = vpop.permute.xlu0 %2980
  %2984 = vmatpush.msra.mxu0 0.0
  %2985 = vmatpush.msra.mxu0 0.0
  %2986 = vmatpush.msra.mxu0 0.0
  %2987 = vmatpush.msra.mxu0 0.0
  %2988 = vmatpush.msra.mxu0 0.0
  %2989 = vmatpush.msra.mxu0 0.0
  %2990 = vmatpush.msra.mxu0 0.0
  %2991 = vmatpush.msra.mxu0 0.0
  %2992 = vmatpush.msra.mxu0 0.0
  %2993 = vmatpush.msra.mxu0 0.0
  %2994 = vmatpush.msra.mxu0 0.0
  %2995 = vmatpush.msra.mxu0 0.0
  %2996 = vmatpush.msra.mxu0 0.0
  %2997 = vmatpush.msra.mxu0 0.0
  %2998 = vmatpush.msra.mxu0 %v2981
  %2999 = vmatpush.msra.mxu0 %v2979
  %3000 = vmatmul.f32.gmra.mxu0 %v2948
  %v3001 = vpop.f32.mrf.mxu0
  %v3002 = vadd.f32 0.0, %v3001
  %3003 = vmatmul.f32.gmra.mxu0 %v2951
  %v3004 = vpop.f32.mrf.mxu0
  %v3005 = vadd.f32 0.0, %v3004
  %3006 = vdwg.mxu0
  %v3008 = vsel %vm142, %v2934, 0
  %v3011 = vsel %vm142, %v2935, 0
  %3013 = vmatpush.msra.mxu0 0.0
  %3014 = vmatpush.msra.mxu0 0.0
  %3015 = vmatpush.msra.mxu0 0.0
  %3016 = vmatpush.msra.mxu0 0.0
  %3017 = vmatpush.msra.mxu0 0.0
  %3018 = vmatpush.msra.mxu0 0.0
  %3019 = vmatpush.msra.mxu0 0.0
  %3020 = vmatpush.msra.mxu0 0.0
  %3021 = vmatpush.msra.mxu0 0.0
  %3022 = vmatpush.msra.mxu0 0.0
  %3023 = vmatpush.msra.mxu0 0.0
  %3024 = vmatpush.msra.mxu0 0.0
  %3025 = vmatpush.msra.mxu0 0.0
  %3026 = vmatpush.msra.mxu0 0.0
  %3027 = vmatpush.msra.mxu0 %v2930
  %3028 = vmatpush.msra.mxu0 %v2929
  %3029 = vmatmul.f32.gmra.mxu0 %v3008
  %v3030 = vpop.f32.mrf.mxu0
  %v3031 = vadd.f32 %v2971, %v3030
  %3032 = vmatmul.f32.gmra.mxu0 %v3011
  %v3033 = vpop.f32.mrf.mxu0
  %v3034 = vadd.f32 %v2974, %v3033
  %3035 = vdwg.mxu0
  %3036 = vmatpush.msra.mxu0 0.0
  %3037 = vmatpush.msra.mxu0 0.0
  %3038 = vmatpush.msra.mxu0 0.0
  %3039 = vmatpush.msra.mxu0 0.0
  %3040 = vmatpush.msra.mxu0 0.0
  %3041 = vmatpush.msra.mxu0 0.0
  %3042 = vmatpush.msra.mxu0 0.0
  %3043 = vmatpush.msra.mxu0 0.0
  %3044 = vmatpush.msra.mxu0 0.0
  %3045 = vmatpush.msra.mxu0 0.0
  %3046 = vmatpush.msra.mxu0 0.0
  %3047 = vmatpush.msra.mxu0 0.0
  %3048 = vmatpush.msra.mxu0 0.0
  %3049 = vmatpush.msra.mxu0 0.0
  %3050 = vmatpush.msra.mxu0 %v2932
  %3051 = vmatpush.msra.mxu0 %v2931
  %3052 = vmatmul.f32.gmra.mxu0 %v3008
  %v3053 = vpop.f32.mrf.mxu0
  %v3054 = vadd.f32 %v3002, %v3053
  %3055 = vmatmul.f32.gmra.mxu0 %v3011
  %v3056 = vpop.f32.mrf.mxu0
  %v3057 = vadd.f32 %v3005, %v3056
  %3058 = vdwg.mxu0
  %v3059 = vsel %vm37, 1, 0
  %vm3060 = vcmp.eq.s32.totalorder %v3059, 1
  %3061 = vrot.lane.b32.xlu0 %v2923, 126
  %v3062 = vpop.permute.xlu0 %3061
  %3063 = vrot.lane.b32.xlu0 %v2924, 126
  %v3064 = vpop.permute.xlu0 %3063
  %3065 = vrot.lane.b32.xlu0 %v2925, 126
  %v3066 = vpop.permute.xlu0 %3065
  %3067 = vrot.lane.b32.xlu0 %v2926, 126
  %v3068 = vpop.permute.xlu0 %3067
  %v3073 = vsel %vm3060, %v3062, 0.0
  %v3074 = vsel %vm3060, %v3064, 0.0
  %v3075 = vsel %vm3060, %v3066, 0.0
  %v3076 = vsel %vm3060, %v3068, 0.0
  %s3077 = scalar_lea.vmem %s1, 320
  %v3078 = vld [vmem:[%s3077] sm:$0xff]
  %v3079 = vld [vmem:[%s3077 + $0x8] sm:$0xff]
  %v3081 = vsel %vm142, %v3078, 0
  %v3084 = vsel %vm142, %v3079, 0
  %3086 = vmatpush.msra.mxu0 0.0
  %3087 = vmatpush.msra.mxu0 0.0
  %3088 = vmatpush.msra.mxu0 0.0
  %3089 = vmatpush.msra.mxu0 0.0
  %3090 = vmatpush.msra.mxu0 0.0
  %3091 = vmatpush.msra.mxu0 0.0
  %3092 = vmatpush.msra.mxu0 0.0
  %3093 = vmatpush.msra.mxu0 0.0
  %3094 = vmatpush.msra.mxu0 0.0
  %3095 = vmatpush.msra.mxu0 0.0
  %3096 = vmatpush.msra.mxu0 0.0
  %3097 = vmatpush.msra.mxu0 0.0
  %3098 = vmatpush.msra.mxu0 0.0
  %3099 = vmatpush.msra.mxu0 0.0
  %3100 = vmatpush.msra.mxu0 %v3074
  %3101 = vmatpush.msra.mxu0 %v3073
  %3102 = vmatmul.f32.gmra.mxu0 %v3081
  %v3103 = vpop.f32.mrf.mxu0
  %v3104 = vadd.f32 0.0, %v3103
  %3105 = vmatmul.f32.gmra.mxu0 %v3084
  %v3106 = vpop.f32.mrf.mxu0
  %v3107 = vadd.f32 0.0, %v3106
  %3108 = vdwg.mxu0
  %3109 = vmatpush.msra.mxu0 0.0
  %3110 = vmatpush.msra.mxu0 0.0
  %3111 = vmatpush.msra.mxu0 0.0
  %3112 = vmatpush.msra.mxu0 0.0
  %3113 = vmatpush.msra.mxu0 0.0
  %3114 = vmatpush.msra.mxu0 0.0
  %3115 = vmatpush.msra.mxu0 0.0
  %3116 = vmatpush.msra.mxu0 0.0
  %3117 = vmatpush.msra.mxu0 0.0
  %3118 = vmatpush.msra.mxu0 0.0
  %3119 = vmatpush.msra.mxu0 0.0
  %3120 = vmatpush.msra.mxu0 0.0
  %3121 = vmatpush.msra.mxu0 0.0
  %3122 = vmatpush.msra.mxu0 0.0
  %3123 = vmatpush.msra.mxu0 %v3076
  %3124 = vmatpush.msra.mxu0 %v3075
  %3125 = vmatmul.f32.gmra.mxu0 %v3081
  %v3126 = vpop.f32.mrf.mxu0
  %v3127 = vadd.f32 0.0, %v3126
  %3128 = vmatmul.f32.gmra.mxu0 %v3084
  %v3129 = vpop.f32.mrf.mxu0
  %v3130 = vadd.f32 0.0, %v3129
  %3131 = vdwg.mxu0
  %v3132 = vadd.f32 %v3031, %v3104
  %v3133 = vadd.f32 %v3034, %v3107
  %v3134 = vadd.f32 %v3054, %v3127
  %v3135 = vadd.f32 %v3057, %v3130
  %3136 = vrot.lane.b32.xlu0 %v2923, 120
  %v3137 = vpop.permute.xlu0 %3136
  %3138 = vrot.lane.b32.xlu0 %v2924, 120
  %v3139 = vpop.permute.xlu0 %3138
  %3140 = vrot.lane.b32.xlu0 %v2925, 120
  %v3141 = vpop.permute.xlu0 %3140
  %3142 = vrot.lane.b32.xlu0 %v2926, 120
  %v3143 = vpop.permute.xlu0 %3142
  %v3148 = vsel %vm2928, %v3137, 0.0
  %v3149 = vsel %vm2928, %v3139, 0.0
  %v3150 = vsel %vm2928, %v3141, 0.0
  %v3151 = vsel %vm2928, %v3143, 0.0
  %s3152 = scalar_lea.vmem %s1, 336
  %v3153 = vld [vmem:[%s3152] sm:$0xff]
  %v3154 = vld [vmem:[%s3152 + $0x8] sm:$0xff]
  %v3156 = vsel %vm142, %v3153, 0
  %v3159 = vsel %vm142, %v3154, 0
  %3161 = vmatpush.msra.mxu0 0.0
  %3162 = vmatpush.msra.mxu0 0.0
  %3163 = vmatpush.msra.mxu0 0.0
  %3164 = vmatpush.msra.mxu0 0.0
  %3165 = vmatpush.msra.mxu0 0.0
  %3166 = vmatpush.msra.mxu0 0.0
  %3167 = vmatpush.msra.mxu0 0.0
  %3168 = vmatpush.msra.mxu0 0.0
  %3169 = vmatpush.msra.mxu0 0.0
  %3170 = vmatpush.msra.mxu0 0.0
  %3171 = vmatpush.msra.mxu0 0.0
  %3172 = vmatpush.msra.mxu0 0.0
  %3173 = vmatpush.msra.mxu0 0.0
  %3174 = vmatpush.msra.mxu0 0.0
  %3175 = vmatpush.msra.mxu0 %v3149
  %3176 = vmatpush.msra.mxu0 %v3148
  %3177 = vmatmul.f32.gmra.mxu0 %v3156
  %v3178 = vpop.f32.mrf.mxu0
  %v3179 = vadd.f32 0.0, %v3178
  %3180 = vmatmul.f32.gmra.mxu0 %v3159
  %v3181 = vpop.f32.mrf.mxu0
  %v3182 = vadd.f32 0.0, %v3181
  %3183 = vdwg.mxu0
  %3184 = vmatpush.msra.mxu0 0.0
  %3185 = vmatpush.msra.mxu0 0.0
  %3186 = vmatpush.msra.mxu0 0.0
  %3187 = vmatpush.msra.mxu0 0.0
  %3188 = vmatpush.msra.mxu0 0.0
  %3189 = vmatpush.msra.mxu0 0.0
  %3190 = vmatpush.msra.mxu0 0.0
  %3191 = vmatpush.msra.mxu0 0.0
  %3192 = vmatpush.msra.mxu0 0.0
  %3193 = vmatpush.msra.mxu0 0.0
  %3194 = vmatpush.msra.mxu0 0.0
  %3195 = vmatpush.msra.mxu0 0.0
  %3196 = vmatpush.msra.mxu0 0.0
  %3197 = vmatpush.msra.mxu0 0.0
  %3198 = vmatpush.msra.mxu0 %v3151
  %3199 = vmatpush.msra.mxu0 %v3150
  %3200 = vmatmul.f32.gmra.mxu0 %v3156
  %v3201 = vpop.f32.mrf.mxu0
  %v3202 = vadd.f32 0.0, %v3201
  %3203 = vmatmul.f32.gmra.mxu0 %v3159
  %v3204 = vpop.f32.mrf.mxu0
  %v3205 = vadd.f32 0.0, %v3204
  %3206 = vdwg.mxu0
  %v3207 = vadd.f32 %v3132, %v3179
  %v3208 = vadd.f32 %v3133, %v3182
  %v3209 = vadd.f32 %v3134, %v3202
  %v3210 = vadd.f32 %v3135, %v3205
  %s3211 = scalar_lea.vmem %s1, 352
  %v3212 = vld [vmem:[%s3211] sm:$0xff]
  %v3213 = vld [vmem:[%s3211 + $0x8] sm:$0xff]
  %3214 = vrot.lane.b32.xlu0 %v2923, 119
  %v3215 = vpop.permute.xlu0 %3214
  %3216 = vrot.lane.b32.xlu0 %v2924, 119
  %v3217 = vpop.permute.xlu0 %3216
  %v3221 = vsel %vm142, %v3212, 0
  %v3224 = vsel %vm142, %v3213, 0
  %3226 = vmatpush.msra.mxu0 0.0
  %3227 = vmatpush.msra.mxu0 0.0
  %3228 = vmatpush.msra.mxu0 0.0
  %3229 = vmatpush.msra.mxu0 0.0
  %3230 = vmatpush.msra.mxu0 0.0
  %3231 = vmatpush.msra.mxu0 0.0
  %3232 = vmatpush.msra.mxu0 0.0
  %3233 = vmatpush.msra.mxu0 0.0
  %3234 = vmatpush.msra.mxu0 0.0
  %3235 = vmatpush.msra.mxu0 0.0
  %3236 = vmatpush.msra.mxu0 0.0
  %3237 = vmatpush.msra.mxu0 0.0
  %3238 = vmatpush.msra.mxu0 0.0
  %3239 = vmatpush.msra.mxu0 0.0
  %3240 = vmatpush.msra.mxu0 %v3217
  %3241 = vmatpush.msra.mxu0 %v3215
  %3242 = vmatmul.f32.gmra.mxu0 %v3221
  %v3243 = vpop.f32.mrf.mxu0
  %v3244 = vadd.f32 0.0, %v3243
  %3245 = vmatmul.f32.gmra.mxu0 %v3224
  %v3246 = vpop.f32.mrf.mxu0
  %v3247 = vadd.f32 0.0, %v3246
  %3248 = vdwg.mxu0
  %3249 = vrot.lane.b32.xlu0 %v2925, 119
  %v3250 = vpop.permute.xlu0 %3249
  %3251 = vrot.lane.b32.xlu0 %v2926, 119
  %v3252 = vpop.permute.xlu0 %3251
  %3255 = vmatpush.msra.mxu0 0.0
  %3256 = vmatpush.msra.mxu0 0.0
  %3257 = vmatpush.msra.mxu0 0.0
  %3258 = vmatpush.msra.mxu0 0.0
  %3259 = vmatpush.msra.mxu0 0.0
  %3260 = vmatpush.msra.mxu0 0.0
  %3261 = vmatpush.msra.mxu0 0.0
  %3262 = vmatpush.msra.mxu0 0.0
  %3263 = vmatpush.msra.mxu0 0.0
  %3264 = vmatpush.msra.mxu0 0.0
  %3265 = vmatpush.msra.mxu0 0.0
  %3266 = vmatpush.msra.mxu0 0.0
  %3267 = vmatpush.msra.mxu0 0.0
  %3268 = vmatpush.msra.mxu0 0.0
  %3269 = vmatpush.msra.mxu0 %v3252
  %3270 = vmatpush.msra.mxu0 %v3250
  %3271 = vmatmul.f32.gmra.mxu0 %v3221
  %v3272 = vpop.f32.mrf.mxu0
  %v3273 = vadd.f32 0.0, %v3272
  %3274 = vmatmul.f32.gmra.mxu0 %v3224
  %v3275 = vpop.f32.mrf.mxu0
  %v3276 = vadd.f32 0.0, %v3275
  %3277 = vdwg.mxu0
  %v3278 = vadd.f32 %v3207, %v3244
  %v3279 = vadd.f32 %v3208, %v3247
  %v3280 = vadd.f32 %v3209, %v3273
  %v3281 = vadd.f32 %v3210, %v3276
  %3282 = vrot.lane.b32.xlu0 %v2923, 118
  %v3283 = vpop.permute.xlu0 %3282
  %3284 = vrot.lane.b32.xlu0 %v2924, 118
  %v3285 = vpop.permute.xlu0 %3284
  %3286 = vrot.lane.b32.xlu0 %v2925, 118
  %v3287 = vpop.permute.xlu0 %3286
  %3288 = vrot.lane.b32.xlu0 %v2926, 118
  %v3289 = vpop.permute.xlu0 %3288
  %v3294 = vsel %vm3060, %v3283, 0.0
  %v3295 = vsel %vm3060, %v3285, 0.0
  %v3296 = vsel %vm3060, %v3287, 0.0
  %v3297 = vsel %vm3060, %v3289, 0.0
  %s3298 = scalar_lea.vmem %s1, 368
  %v3299 = vld [vmem:[%s3298] sm:$0xff]
  %v3300 = vld [vmem:[%s3298 + $0x8] sm:$0xff]
  %v3302 = vsel %vm142, %v3299, 0
  %v3305 = vsel %vm142, %v3300, 0
  %3307 = vmatpush.msra.mxu0 0.0
  %3308 = vmatpush.msra.mxu0 0.0
  %3309 = vmatpush.msra.mxu0 0.0
  %3310 = vmatpush.msra.mxu0 0.0
  %3311 = vmatpush.msra.mxu0 0.0
  %3312 = vmatpush.msra.mxu0 0.0
  %3313 = vmatpush.msra.mxu0 0.0
  %3314 = vmatpush.msra.mxu0 0.0
  %3315 = vmatpush.msra.mxu0 0.0
  %3316 = vmatpush.msra.mxu0 0.0
  %3317 = vmatpush.msra.mxu0 0.0
  %3318 = vmatpush.msra.mxu0 0.0
  %3319 = vmatpush.msra.mxu0 0.0
  %3320 = vmatpush.msra.mxu0 0.0
  %3321 = vmatpush.msra.mxu0 %v3295
  %3322 = vmatpush.msra.mxu0 %v3294
  %3323 = vmatmul.f32.gmra.mxu0 %v3302
  %v3324 = vpop.f32.mrf.mxu0
  %v3325 = vadd.f32 0.0, %v3324
  %3326 = vmatmul.f32.gmra.mxu0 %v3305
  %v3327 = vpop.f32.mrf.mxu0
  %v3328 = vadd.f32 0.0, %v3327
  %3329 = vdwg.mxu0
  %3330 = vmatpush.msra.mxu0 0.0
  %3331 = vmatpush.msra.mxu0 0.0
  %3332 = vmatpush.msra.mxu0 0.0
  %3333 = vmatpush.msra.mxu0 0.0
  %3334 = vmatpush.msra.mxu0 0.0
  %3335 = vmatpush.msra.mxu0 0.0
  %3336 = vmatpush.msra.mxu0 0.0
  %3337 = vmatpush.msra.mxu0 0.0
  %3338 = vmatpush.msra.mxu0 0.0
  %3339 = vmatpush.msra.mxu0 0.0
  %3340 = vmatpush.msra.mxu0 0.0
  %3341 = vmatpush.msra.mxu0 0.0
  %3342 = vmatpush.msra.mxu0 0.0
  %3343 = vmatpush.msra.mxu0 0.0
  %3344 = vmatpush.msra.mxu0 %v3297
  %3345 = vmatpush.msra.mxu0 %v3296
  %3346 = vmatmul.f32.gmra.mxu0 %v3302
  %v3347 = vpop.f32.mrf.mxu0
  %v3348 = vadd.f32 0.0, %v3347
  %3349 = vmatmul.f32.gmra.mxu0 %v3305
  %v3350 = vpop.f32.mrf.mxu0
  %v3351 = vadd.f32 0.0, %v3350
  %3352 = vdwg.mxu0
  %v3353 = vadd.f32 %v3278, %v3325
  %v3354 = vadd.f32 %v3279, %v3328
  %v3355 = vadd.f32 %v3280, %v3348
  %v3356 = vadd.f32 %v3281, %v3351
  %3357 = vrot.lane.b32.xlu0 %v2923, 112
  %v3358 = vpop.permute.xlu0 %3357
  %3359 = vrot.lane.b32.xlu0 %v2924, 112
  %v3360 = vpop.permute.xlu0 %3359
  %3361 = vrot.lane.b32.xlu0 %v2925, 112
  %v3362 = vpop.permute.xlu0 %3361
  %3363 = vrot.lane.b32.xlu0 %v2926, 112
  %v3364 = vpop.permute.xlu0 %3363
  %v3369 = vsel %vm2928, %v3358, 0.0
  %v3370 = vsel %vm2928, %v3360, 0.0
  %v3371 = vsel %vm2928, %v3362, 0.0
  %v3372 = vsel %vm2928, %v3364, 0.0
  %s3373 = scalar_lea.vmem %s1, 384
  %v3374 = vld [vmem:[%s3373] sm:$0xff]
  %v3375 = vld [vmem:[%s3373 + $0x8] sm:$0xff]
  %v3377 = vsel %vm142, %v3374, 0
  %v3380 = vsel %vm142, %v3375, 0
  %3382 = vmatpush.msra.mxu0 0.0
  %3383 = vmatpush.msra.mxu0 0.0
  %3384 = vmatpush.msra.mxu0 0.0
  %3385 = vmatpush.msra.mxu0 0.0
  %3386 = vmatpush.msra.mxu0 0.0
  %3387 = vmatpush.msra.mxu0 0.0
  %3388 = vmatpush.msra.mxu0 0.0
  %3389 = vmatpush.msra.mxu0 0.0
  %3390 = vmatpush.msra.mxu0 0.0
  %3391 = vmatpush.msra.mxu0 0.0
  %3392 = vmatpush.msra.mxu0 0.0
  %3393 = vmatpush.msra.mxu0 0.0
  %3394 = vmatpush.msra.mxu0 0.0
  %3395 = vmatpush.msra.mxu0 0.0
  %3396 = vmatpush.msra.mxu0 %v3370
  %3397 = vmatpush.msra.mxu0 %v3369
  %3398 = vmatmul.f32.gmra.mxu0 %v3377
  %v3399 = vpop.f32.mrf.mxu0
  %v3400 = vadd.f32 0.0, %v3399
  %3401 = vmatmul.f32.gmra.mxu0 %v3380
  %v3402 = vpop.f32.mrf.mxu0
  %v3403 = vadd.f32 0.0, %v3402
  %3404 = vdwg.mxu0
  %3405 = vmatpush.msra.mxu0 0.0
  %3406 = vmatpush.msra.mxu0 0.0
  %3407 = vmatpush.msra.mxu0 0.0
  %3408 = vmatpush.msra.mxu0 0.0
  %3409 = vmatpush.msra.mxu0 0.0
  %3410 = vmatpush.msra.mxu0 0.0
  %3411 = vmatpush.msra.mxu0 0.0
  %3412 = vmatpush.msra.mxu0 0.0
  %3413 = vmatpush.msra.mxu0 0.0
  %3414 = vmatpush.msra.mxu0 0.0
  %3415 = vmatpush.msra.mxu0 0.0
  %3416 = vmatpush.msra.mxu0 0.0
  %3417 = vmatpush.msra.mxu0 0.0
  %3418 = vmatpush.msra.mxu0 0.0
  %3419 = vmatpush.msra.mxu0 %v3372
  %3420 = vmatpush.msra.mxu0 %v3371
  %3421 = vmatmul.f32.gmra.mxu0 %v3377
  %v3422 = vpop.f32.mrf.mxu0
  %v3423 = vadd.f32 0.0, %v3422
  %3424 = vmatmul.f32.gmra.mxu0 %v3380
  %v3425 = vpop.f32.mrf.mxu0
  %v3426 = vadd.f32 0.0, %v3425
  %3427 = vdwg.mxu0
  %v3428 = vadd.f32 %v3353, %v3400
  %v3429 = vadd.f32 %v3354, %v3403
  %v3430 = vadd.f32 %v3355, %v3423
  %v3431 = vadd.f32 %v3356, %v3426
  %s3432 = scalar_lea.vmem %s1, 400
  %v3433 = vld [vmem:[%s3432] sm:$0xff]
  %v3434 = vld [vmem:[%s3432 + $0x8] sm:$0xff]
  %3435 = vrot.lane.b32.xlu0 %v2923, 111
  %v3436 = vpop.permute.xlu0 %3435
  %3437 = vrot.lane.b32.xlu0 %v2924, 111
  %v3438 = vpop.permute.xlu0 %3437
  %v3442 = vsel %vm142, %v3433, 0
  %v3445 = vsel %vm142, %v3434, 0
  %3447 = vmatpush.msra.mxu0 0.0
  %3448 = vmatpush.msra.mxu0 0.0
  %3449 = vmatpush.msra.mxu0 0.0
  %3450 = vmatpush.msra.mxu0 0.0
  %3451 = vmatpush.msra.mxu0 0.0
  %3452 = vmatpush.msra.mxu0 0.0
  %3453 = vmatpush.msra.mxu0 0.0
  %3454 = vmatpush.msra.mxu0 0.0
  %3455 = vmatpush.msra.mxu0 0.0
  %3456 = vmatpush.msra.mxu0 0.0
  %3457 = vmatpush.msra.mxu0 0.0
  %3458 = vmatpush.msra.mxu0 0.0
  %3459 = vmatpush.msra.mxu0 0.0
  %3460 = vmatpush.msra.mxu0 0.0
  %3461 = vmatpush.msra.mxu0 %v3438
  %3462 = vmatpush.msra.mxu0 %v3436
  %3463 = vmatmul.f32.gmra.mxu0 %v3442
  %v3464 = vpop.f32.mrf.mxu0
  %v3465 = vadd.f32 0.0, %v3464
  %3466 = vmatmul.f32.gmra.mxu0 %v3445
  %v3467 = vpop.f32.mrf.mxu0
  %v3468 = vadd.f32 0.0, %v3467
  %3469 = vdwg.mxu0
  %3470 = vrot.lane.b32.xlu0 %v2925, 111
  %v3471 = vpop.permute.xlu0 %3470
  %3472 = vrot.lane.b32.xlu0 %v2926, 111
  %v3473 = vpop.permute.xlu0 %3472
  %3476 = vmatpush.msra.mxu0 0.0
  %3477 = vmatpush.msra.mxu0 0.0
  %3478 = vmatpush.msra.mxu0 0.0
  %3479 = vmatpush.msra.mxu0 0.0
  %3480 = vmatpush.msra.mxu0 0.0
  %3481 = vmatpush.msra.mxu0 0.0
  %3482 = vmatpush.msra.mxu0 0.0
  %3483 = vmatpush.msra.mxu0 0.0
  %3484 = vmatpush.msra.mxu0 0.0
  %3485 = vmatpush.msra.mxu0 0.0
  %3486 = vmatpush.msra.mxu0 0.0
  %3487 = vmatpush.msra.mxu0 0.0
  %3488 = vmatpush.msra.mxu0 0.0
  %3489 = vmatpush.msra.mxu0 0.0
  %3490 = vmatpush.msra.mxu0 %v3473
  %3491 = vmatpush.msra.mxu0 %v3471
  %3492 = vmatmul.f32.gmra.mxu0 %v3442
  %v3493 = vpop.f32.mrf.mxu0
  %v3494 = vadd.f32 0.0, %v3493
  %3495 = vmatmul.f32.gmra.mxu0 %v3445
  %v3496 = vpop.f32.mrf.mxu0
  %v3497 = vadd.f32 0.0, %v3496
  %3498 = vdwg.mxu0
  %v3499 = vadd.f32 %v3428, %v3465
  %v3500 = vadd.f32 %v3429, %v3468
  %v3501 = vadd.f32 %v3430, %v3494
  %v3502 = vadd.f32 %v3431, %v3497
  %3503 = vrot.lane.b32.xlu0 %v2923, 110
  %v3504 = vpop.permute.xlu0 %3503
  %3505 = vrot.lane.b32.xlu0 %v2924, 110
  %v3506 = vpop.permute.xlu0 %3505
  %3507 = vrot.lane.b32.xlu0 %v2925, 110
  %v3508 = vpop.permute.xlu0 %3507
  %3509 = vrot.lane.b32.xlu0 %v2926, 110
  %v3510 = vpop.permute.xlu0 %3509
  %v3515 = vsel %vm3060, %v3504, 0.0
  %v3516 = vsel %vm3060, %v3506, 0.0
  %v3517 = vsel %vm3060, %v3508, 0.0
  %v3518 = vsel %vm3060, %v3510, 0.0
  %s3519 = scalar_lea.vmem %s1, 416
  %v3520 = vld [vmem:[%s3519] sm:$0xff]
  %v3521 = vld [vmem:[%s3519 + $0x8] sm:$0xff]
  %v3523 = vsel %vm142, %v3520, 0
  %v3526 = vsel %vm142, %v3521, 0
  %3528 = vmatpush.msra.mxu0 0.0
  %3529 = vmatpush.msra.mxu0 0.0
  %3530 = vmatpush.msra.mxu0 0.0
  %3531 = vmatpush.msra.mxu0 0.0
  %3532 = vmatpush.msra.mxu0 0.0
  %3533 = vmatpush.msra.mxu0 0.0
  %3534 = vmatpush.msra.mxu0 0.0
  %3535 = vmatpush.msra.mxu0 0.0
  %3536 = vmatpush.msra.mxu0 0.0
  %3537 = vmatpush.msra.mxu0 0.0
  %3538 = vmatpush.msra.mxu0 0.0
  %3539 = vmatpush.msra.mxu0 0.0
  %3540 = vmatpush.msra.mxu0 0.0
  %3541 = vmatpush.msra.mxu0 0.0
  %3542 = vmatpush.msra.mxu0 %v3516
  %3543 = vmatpush.msra.mxu0 %v3515
  %3544 = vmatmul.f32.gmra.mxu0 %v3523
  %v3545 = vpop.f32.mrf.mxu0
  %v3546 = vadd.f32 0.0, %v3545
  %3547 = vmatmul.f32.gmra.mxu0 %v3526
  %v3548 = vpop.f32.mrf.mxu0
  %v3549 = vadd.f32 0.0, %v3548
  %3550 = vdwg.mxu0
  %3551 = vmatpush.msra.mxu0 0.0
  %3552 = vmatpush.msra.mxu0 0.0
  %3553 = vmatpush.msra.mxu0 0.0
  %3554 = vmatpush.msra.mxu0 0.0
  %3555 = vmatpush.msra.mxu0 0.0
  %3556 = vmatpush.msra.mxu0 0.0
  %3557 = vmatpush.msra.mxu0 0.0
  %3558 = vmatpush.msra.mxu0 0.0
  %3559 = vmatpush.msra.mxu0 0.0
  %3560 = vmatpush.msra.mxu0 0.0
  %3561 = vmatpush.msra.mxu0 0.0
  %3562 = vmatpush.msra.mxu0 0.0
  %3563 = vmatpush.msra.mxu0 0.0
  %3564 = vmatpush.msra.mxu0 0.0
  %3565 = vmatpush.msra.mxu0 %v3518
  %3566 = vmatpush.msra.mxu0 %v3517
  %3567 = vmatmul.f32.gmra.mxu0 %v3523
  %v3568 = vpop.f32.mrf.mxu0
  %v3569 = vadd.f32 0.0, %v3568
  %3570 = vmatmul.f32.gmra.mxu0 %v3526
  %v3571 = vpop.f32.mrf.mxu0
  %v3572 = vadd.f32 0.0, %v3571
  %3573 = vdwg.mxu0
  %v3574 = vadd.f32 %v3499, %v3546
  %v3575 = vadd.f32 %v3500, %v3549
  %v3576 = vadd.f32 %v3501, %v3569
  %v3577 = vadd.f32 %v3502, %v3572
  %s3578 = scalar_lea.vmem %s2, 32
  %v3579 = vld [vmem:[%s3578] sm:$0xff]
  %v3580 = vld [vmem:[%s3578 + $0x8] sm:$0xff]
  %3582 = vset.pattern.permute.xlu0 0
  %3583 = vperm.xlu0 %3582, %v3579
  %v3584 = vpop.permute.xlu0 %3583
  %3587 = vset.pattern.permute.xlu0 0
  %3588 = vperm.xlu0 %3587, %v3580
  %v3589 = vpop.permute.xlu0 %3588
  %v3591 = vadd.f32 %v3574, %v3584
  %v3592 = vadd.f32 %v3575, %v3589
  %v3593 = vadd.f32 %v3576, %v3584
  %v3594 = vadd.f32 %v3577, %v3589
  %v3595 = vmax.f32 %v3591, 0.0
  %v3596 = vmax.f32 %v3592, 0.0
  %v3597 = vmax.f32 %v3593, 0.0
  %v3598 = vmax.f32 %v3594, 0.0
  %3603 = vrot.lane.b32.xlu0 %v3595, 9
  %v3604 = vpop.permute.xlu0 %3603
  %3605 = vrot.lane.b32.xlu0 %v3596, 9
  %v3606 = vpop.permute.xlu0 %3605
  %3607 = vrot.lane.b32.xlu0 %v3597, 9
  %v3608 = vpop.permute.xlu0 %3607
  %3609 = vrot.lane.b32.xlu0 %v3598, 9
  %v3610 = vpop.permute.xlu0 %3609
  %v3615 = vsel %vm2917, 0.0, %v3604
  %v3616 = vsel %vm2917, 0.0, %v3606
  %v3617 = vsel %vm2917, 0.0, %v3608
  %v3618 = vsel %vm2917, 0.0, %v3610
  %v3619 = vsel %vm2922, %v3615, 0.0
  %v3620 = vsel %vm2922, %v3616, 0.0
  %v3621 = vsel %vm2922, %v3617, 0.0
  %v3622 = vsel %vm2922, %v3618, 0.0
  %v3623 = vsel %vm2928, %v3619, 0.0
  %v3624 = vsel %vm2928, %v3620, 0.0
  %v3625 = vsel %vm2928, %v3621, 0.0
  %v3626 = vsel %vm2928, %v3622, 0.0
  %s3627 = scalar_lea.vmem %s1, 432
  %v3628 = vld [vmem:[%s3627] sm:$0xff]
  %v3629 = vld [vmem:[%s3627 + $0x8] sm:$0xff]
  %s3630 = scalar_lea.vmem %s1, 448
  %v3631 = vld [vmem:[%s3630] sm:$0xff]
  %v3632 = vld [vmem:[%s3630 + $0x8] sm:$0xff]
  %3635 = vrot.lane.b32.xlu0 %v3619, 127
  %v3636 = vpop.permute.xlu0 %3635
  %3637 = vrot.lane.b32.xlu0 %v3620, 127
  %v3638 = vpop.permute.xlu0 %3637
  %v3642 = vsel %vm142, %v3631, 0
  %v3645 = vsel %vm142, %v3632, 0
  %3647 = vmatpush.msra.mxu0 0.0
  %3648 = vmatpush.msra.mxu0 0.0
  %3649 = vmatpush.msra.mxu0 0.0
  %3650 = vmatpush.msra.mxu0 0.0
  %3651 = vmatpush.msra.mxu0 0.0
  %3652 = vmatpush.msra.mxu0 0.0
  %3653 = vmatpush.msra.mxu0 0.0
  %3654 = vmatpush.msra.mxu0 0.0
  %3655 = vmatpush.msra.mxu0 0.0
  %3656 = vmatpush.msra.mxu0 0.0
  %3657 = vmatpush.msra.mxu0 0.0
  %3658 = vmatpush.msra.mxu0 0.0
  %3659 = vmatpush.msra.mxu0 0.0
  %3660 = vmatpush.msra.mxu0 0.0
  %3661 = vmatpush.msra.mxu0 %v3638
  %3662 = vmatpush.msra.mxu0 %v3636
  %3663 = vmatmul.f32.gmra.mxu0 %v3642
  %v3664 = vpop.f32.mrf.mxu0
  %v3665 = vadd.f32 0.0, %v3664
  %3666 = vmatmul.f32.gmra.mxu0 %v3645
  %v3667 = vpop.f32.mrf.mxu0
  %v3668 = vadd.f32 0.0, %v3667
  %3669 = vdwg.mxu0
  %3672 = vrot.lane.b32.xlu0 %v3621, 127
  %v3673 = vpop.permute.xlu0 %3672
  %3674 = vrot.lane.b32.xlu0 %v3622, 127
  %v3675 = vpop.permute.xlu0 %3674
  %3678 = vmatpush.msra.mxu0 0.0
  %3679 = vmatpush.msra.mxu0 0.0
  %3680 = vmatpush.msra.mxu0 0.0
  %3681 = vmatpush.msra.mxu0 0.0
  %3682 = vmatpush.msra.mxu0 0.0
  %3683 = vmatpush.msra.mxu0 0.0
  %3684 = vmatpush.msra.mxu0 0.0
  %3685 = vmatpush.msra.mxu0 0.0
  %3686 = vmatpush.msra.mxu0 0.0
  %3687 = vmatpush.msra.mxu0 0.0
  %3688 = vmatpush.msra.mxu0 0.0
  %3689 = vmatpush.msra.mxu0 0.0
  %3690 = vmatpush.msra.mxu0 0.0
  %3691 = vmatpush.msra.mxu0 0.0
  %3692 = vmatpush.msra.mxu0 %v3675
  %3693 = vmatpush.msra.mxu0 %v3673
  %3694 = vmatmul.f32.gmra.mxu0 %v3642
  %v3695 = vpop.f32.mrf.mxu0
  %v3696 = vadd.f32 0.0, %v3695
  %3697 = vmatmul.f32.gmra.mxu0 %v3645
  %v3698 = vpop.f32.mrf.mxu0
  %v3699 = vadd.f32 0.0, %v3698
  %3700 = vdwg.mxu0
  %v3702 = vsel %vm142, %v3628, 0
  %v3705 = vsel %vm142, %v3629, 0
  %3707 = vmatpush.msra.mxu0 0.0
  %3708 = vmatpush.msra.mxu0 0.0
  %3709 = vmatpush.msra.mxu0 0.0
  %3710 = vmatpush.msra.mxu0 0.0
  %3711 = vmatpush.msra.mxu0 0.0
  %3712 = vmatpush.msra.mxu0 0.0
  %3713 = vmatpush.msra.mxu0 0.0
  %3714 = vmatpush.msra.mxu0 0.0
  %3715 = vmatpush.msra.mxu0 0.0
  %3716 = vmatpush.msra.mxu0 0.0
  %3717 = vmatpush.msra.mxu0 0.0
  %3718 = vmatpush.msra.mxu0 0.0
  %3719 = vmatpush.msra.mxu0 0.0
  %3720 = vmatpush.msra.mxu0 0.0
  %3721 = vmatpush.msra.mxu0 %v3624
  %3722 = vmatpush.msra.mxu0 %v3623
  %3723 = vmatmul.f32.gmra.mxu0 %v3702
  %v3724 = vpop.f32.mrf.mxu0
  %v3725 = vadd.f32 %v3665, %v3724
  %3726 = vmatmul.f32.gmra.mxu0 %v3705
  %v3727 = vpop.f32.mrf.mxu0
  %v3728 = vadd.f32 %v3668, %v3727
  %3729 = vdwg.mxu0
  %3730 = vmatpush.msra.mxu0 0.0
  %3731 = vmatpush.msra.mxu0 0.0
  %3732 = vmatpush.msra.mxu0 0.0
  %3733 = vmatpush.msra.mxu0 0.0
  %3734 = vmatpush.msra.mxu0 0.0
  %3735 = vmatpush.msra.mxu0 0.0
  %3736 = vmatpush.msra.mxu0 0.0
  %3737 = vmatpush.msra.mxu0 0.0
  %3738 = vmatpush.msra.mxu0 0.0
  %3739 = vmatpush.msra.mxu0 0.0
  %3740 = vmatpush.msra.mxu0 0.0
  %3741 = vmatpush.msra.mxu0 0.0
  %3742 = vmatpush.msra.mxu0 0.0
  %3743 = vmatpush.msra.mxu0 0.0
  %3744 = vmatpush.msra.mxu0 %v3626
  %3745 = vmatpush.msra.mxu0 %v3625
  %3746 = vmatmul.f32.gmra.mxu0 %v3702
  %v3747 = vpop.f32.mrf.mxu0
  %v3748 = vadd.f32 %v3696, %v3747
  %3749 = vmatmul.f32.gmra.mxu0 %v3705
  %v3750 = vpop.f32.mrf.mxu0
  %v3751 = vadd.f32 %v3699, %v3750
  %3752 = vdwg.mxu0
  %3753 = vrot.lane.b32.xlu0 %v3619, 126
  %v3754 = vpop.permute.xlu0 %3753
  %3755 = vrot.lane.b32.xlu0 %v3620, 126
  %v3756 = vpop.permute.xlu0 %3755
  %3757 = vrot.lane.b32.xlu0 %v3621, 126
  %v3758 = vpop.permute.xlu0 %3757
  %3759 = vrot.lane.b32.xlu0 %v3622, 126
  %v3760 = vpop.permute.xlu0 %3759
  %v3765 = vsel %vm3060, %v3754, 0.0
  %v3766 = vsel %vm3060, %v3756, 0.0
  %v3767 = vsel %vm3060, %v3758, 0.0
  %v3768 = vsel %vm3060, %v3760, 0.0
  %s3769 = scalar_lea.vmem %s1, 464
  %v3770 = vld [vmem:[%s3769] sm:$0xff]
  %v3771 = vld [vmem:[%s3769 + $0x8] sm:$0xff]
  %v3773 = vsel %vm142, %v3770, 0
  %v3776 = vsel %vm142, %v3771, 0
  %3778 = vmatpush.msra.mxu0 0.0
  %3779 = vmatpush.msra.mxu0 0.0
  %3780 = vmatpush.msra.mxu0 0.0
  %3781 = vmatpush.msra.mxu0 0.0
  %3782 = vmatpush.msra.mxu0 0.0
  %3783 = vmatpush.msra.mxu0 0.0
  %3784 = vmatpush.msra.mxu0 0.0
  %3785 = vmatpush.msra.mxu0 0.0
  %3786 = vmatpush.msra.mxu0 0.0
  %3787 = vmatpush.msra.mxu0 0.0
  %3788 = vmatpush.msra.mxu0 0.0
  %3789 = vmatpush.msra.mxu0 0.0
  %3790 = vmatpush.msra.mxu0 0.0
  %3791 = vmatpush.msra.mxu0 0.0
  %3792 = vmatpush.msra.mxu0 %v3766
  %3793 = vmatpush.msra.mxu0 %v3765
  %3794 = vmatmul.f32.gmra.mxu0 %v3773
  %v3795 = vpop.f32.mrf.mxu0
  %v3796 = vadd.f32 0.0, %v3795
  %3797 = vmatmul.f32.gmra.mxu0 %v3776
  %v3798 = vpop.f32.mrf.mxu0
  %v3799 = vadd.f32 0.0, %v3798
  %3800 = vdwg.mxu0
  %3801 = vmatpush.msra.mxu0 0.0
  %3802 = vmatpush.msra.mxu0 0.0
  %3803 = vmatpush.msra.mxu0 0.0
  %3804 = vmatpush.msra.mxu0 0.0
  %3805 = vmatpush.msra.mxu0 0.0
  %3806 = vmatpush.msra.mxu0 0.0
  %3807 = vmatpush.msra.mxu0 0.0
  %3808 = vmatpush.msra.mxu0 0.0
  %3809 = vmatpush.msra.mxu0 0.0
  %3810 = vmatpush.msra.mxu0 0.0
  %3811 = vmatpush.msra.mxu0 0.0
  %3812 = vmatpush.msra.mxu0 0.0
  %3813 = vmatpush.msra.mxu0 0.0
  %3814 = vmatpush.msra.mxu0 0.0
  %3815 = vmatpush.msra.mxu0 %v3768
  %3816 = vmatpush.msra.mxu0 %v3767
  %3817 = vmatmul.f32.gmra.mxu0 %v3773
  %v3818 = vpop.f32.mrf.mxu0
  %v3819 = vadd.f32 0.0, %v3818
  %3820 = vmatmul.f32.gmra.mxu0 %v3776
  %v3821 = vpop.f32.mrf.mxu0
  %v3822 = vadd.f32 0.0, %v3821
  %3823 = vdwg.mxu0
  %v3824 = vadd.f32 %v3725, %v3796
  %v3825 = vadd.f32 %v3728, %v3799
  %v3826 = vadd.f32 %v3748, %v3819
  %v3827 = vadd.f32 %v3751, %v3822
  %3828 = vrot.lane.b32.xlu0 %v3619, 120
  %v3829 = vpop.permute.xlu0 %3828
  %3830 = vrot.lane.b32.xlu0 %v3620, 120
  %v3831 = vpop.permute.xlu0 %3830
  %3832 = vrot.lane.b32.xlu0 %v3621, 120
  %v3833 = vpop.permute.xlu0 %3832
  %3834 = vrot.lane.b32.xlu0 %v3622, 120
  %v3835 = vpop.permute.xlu0 %3834
  %v3840 = vsel %vm2928, %v3829, 0.0
  %v3841 = vsel %vm2928, %v3831, 0.0
  %v3842 = vsel %vm2928, %v3833, 0.0
  %v3843 = vsel %vm2928, %v3835, 0.0
  %s3844 = scalar_lea.vmem %s1, 480
  %v3845 = vld [vmem:[%s3844] sm:$0xff]
  %v3846 = vld [vmem:[%s3844 + $0x8] sm:$0xff]
  %v3848 = vsel %vm142, %v3845, 0
  %v3851 = vsel %vm142, %v3846, 0
  %3853 = vmatpush.msra.mxu0 0.0
  %3854 = vmatpush.msra.mxu0 0.0
  %3855 = vmatpush.msra.mxu0 0.0
  %3856 = vmatpush.msra.mxu0 0.0
  %3857 = vmatpush.msra.mxu0 0.0
  %3858 = vmatpush.msra.mxu0 0.0
  %3859 = vmatpush.msra.mxu0 0.0
  %3860 = vmatpush.msra.mxu0 0.0
  %3861 = vmatpush.msra.mxu0 0.0
  %3862 = vmatpush.msra.mxu0 0.0
  %3863 = vmatpush.msra.mxu0 0.0
  %3864 = vmatpush.msra.mxu0 0.0
  %3865 = vmatpush.msra.mxu0 0.0
  %3866 = vmatpush.msra.mxu0 0.0
  %3867 = vmatpush.msra.mxu0 %v3841
  %3868 = vmatpush.msra.mxu0 %v3840
  %3869 = vmatmul.f32.gmra.mxu0 %v3848
  %v3870 = vpop.f32.mrf.mxu0
  %v3871 = vadd.f32 0.0, %v3870
  %3872 = vmatmul.f32.gmra.mxu0 %v3851
  %v3873 = vpop.f32.mrf.mxu0
  %v3874 = vadd.f32 0.0, %v3873
  %3875 = vdwg.mxu0
  %3876 = vmatpush.msra.mxu0 0.0
  %3877 = vmatpush.msra.mxu0 0.0
  %3878 = vmatpush.msra.mxu0 0.0
  %3879 = vmatpush.msra.mxu0 0.0
  %3880 = vmatpush.msra.mxu0 0.0
  %3881 = vmatpush.msra.mxu0 0.0
  %3882 = vmatpush.msra.mxu0 0.0
  %3883 = vmatpush.msra.mxu0 0.0
  %3884 = vmatpush.msra.mxu0 0.0
  %3885 = vmatpush.msra.mxu0 0.0
  %3886 = vmatpush.msra.mxu0 0.0
  %3887 = vmatpush.msra.mxu0 0.0
  %3888 = vmatpush.msra.mxu0 0.0
  %3889 = vmatpush.msra.mxu0 0.0
  %3890 = vmatpush.msra.mxu0 %v3843
  %3891 = vmatpush.msra.mxu0 %v3842
  %3892 = vmatmul.f32.gmra.mxu0 %v3848
  %v3893 = vpop.f32.mrf.mxu0
  %v3894 = vadd.f32 0.0, %v3893
  %3895 = vmatmul.f32.gmra.mxu0 %v3851
  %v3896 = vpop.f32.mrf.mxu0
  %v3897 = vadd.f32 0.0, %v3896
  %3898 = vdwg.mxu0
  %v3899 = vadd.f32 %v3824, %v3871
  %v3900 = vadd.f32 %v3825, %v3874
  %v3901 = vadd.f32 %v3826, %v3894
  %v3902 = vadd.f32 %v3827, %v3897
  %s3903 = scalar_lea.vmem %s1, 496
  %v3904 = vld [vmem:[%s3903] sm:$0xff]
  %v3905 = vld [vmem:[%s3903 + $0x8] sm:$0xff]
  %3906 = vrot.lane.b32.xlu0 %v3619, 119
  %v3907 = vpop.permute.xlu0 %3906
  %3908 = vrot.lane.b32.xlu0 %v3620, 119
  %v3909 = vpop.permute.xlu0 %3908
  %v3913 = vsel %vm142, %v3904, 0
  %v3916 = vsel %vm142, %v3905, 0
  %3918 = vmatpush.msra.mxu0 0.0
  %3919 = vmatpush.msra.mxu0 0.0
  %3920 = vmatpush.msra.mxu0 0.0
  %3921 = vmatpush.msra.mxu0 0.0
  %3922 = vmatpush.msra.mxu0 0.0
  %3923 = vmatpush.msra.mxu0 0.0
  %3924 = vmatpush.msra.mxu0 0.0
  %3925 = vmatpush.msra.mxu0 0.0
  %3926 = vmatpush.msra.mxu0 0.0
  %3927 = vmatpush.msra.mxu0 0.0
  %3928 = vmatpush.msra.mxu0 0.0
  %3929 = vmatpush.msra.mxu0 0.0
  %3930 = vmatpush.msra.mxu0 0.0
  %3931 = vmatpush.msra.mxu0 0.0
  %3932 = vmatpush.msra.mxu0 %v3909
  %3933 = vmatpush.msra.mxu0 %v3907
  %3934 = vmatmul.f32.gmra.mxu0 %v3913
  %v3935 = vpop.f32.mrf.mxu0
  %v3936 = vadd.f32 0.0, %v3935
  %3937 = vmatmul.f32.gmra.mxu0 %v3916
  %v3938 = vpop.f32.mrf.mxu0
  %v3939 = vadd.f32 0.0, %v3938
  %3940 = vdwg.mxu0
  %3941 = vrot.lane.b32.xlu0 %v3621, 119
  %v3942 = vpop.permute.xlu0 %3941
  %3943 = vrot.lane.b32.xlu0 %v3622, 119
  %v3944 = vpop.permute.xlu0 %3943
  %3947 = vmatpush.msra.mxu0 0.0
  %3948 = vmatpush.msra.mxu0 0.0
  %3949 = vmatpush.msra.mxu0 0.0
  %3950 = vmatpush.msra.mxu0 0.0
  %3951 = vmatpush.msra.mxu0 0.0
  %3952 = vmatpush.msra.mxu0 0.0
  %3953 = vmatpush.msra.mxu0 0.0
  %3954 = vmatpush.msra.mxu0 0.0
  %3955 = vmatpush.msra.mxu0 0.0
  %3956 = vmatpush.msra.mxu0 0.0
  %3957 = vmatpush.msra.mxu0 0.0
  %3958 = vmatpush.msra.mxu0 0.0
  %3959 = vmatpush.msra.mxu0 0.0
  %3960 = vmatpush.msra.mxu0 0.0
  %3961 = vmatpush.msra.mxu0 %v3944
  %3962 = vmatpush.msra.mxu0 %v3942
  %3963 = vmatmul.f32.gmra.mxu0 %v3913
  %v3964 = vpop.f32.mrf.mxu0
  %v3965 = vadd.f32 0.0, %v3964
  %3966 = vmatmul.f32.gmra.mxu0 %v3916
  %v3967 = vpop.f32.mrf.mxu0
  %v3968 = vadd.f32 0.0, %v3967
  %3969 = vdwg.mxu0
  %v3970 = vadd.f32 %v3899, %v3936
  %v3971 = vadd.f32 %v3900, %v3939
  %v3972 = vadd.f32 %v3901, %v3965
  %v3973 = vadd.f32 %v3902, %v3968
  %3974 = vrot.lane.b32.xlu0 %v3619, 118
  %v3975 = vpop.permute.xlu0 %3974
  %3976 = vrot.lane.b32.xlu0 %v3620, 118
  %v3977 = vpop.permute.xlu0 %3976
  %3978 = vrot.lane.b32.xlu0 %v3621, 118
  %v3979 = vpop.permute.xlu0 %3978
  %3980 = vrot.lane.b32.xlu0 %v3622, 118
  %v3981 = vpop.permute.xlu0 %3980
  %v3986 = vsel %vm3060, %v3975, 0.0
  %v3987 = vsel %vm3060, %v3977, 0.0
  %v3988 = vsel %vm3060, %v3979, 0.0
  %v3989 = vsel %vm3060, %v3981, 0.0
  %s3990 = scalar_lea.vmem %s1, 512
  %v3991 = vld [vmem:[%s3990] sm:$0xff]
  %v3992 = vld [vmem:[%s3990 + $0x8] sm:$0xff]
  %v3994 = vsel %vm142, %v3991, 0
  %v3997 = vsel %vm142, %v3992, 0
  %3999 = vmatpush.msra.mxu0 0.0
  %4000 = vmatpush.msra.mxu0 0.0
  %4001 = vmatpush.msra.mxu0 0.0
  %4002 = vmatpush.msra.mxu0 0.0
  %4003 = vmatpush.msra.mxu0 0.0
  %4004 = vmatpush.msra.mxu0 0.0
  %4005 = vmatpush.msra.mxu0 0.0
  %4006 = vmatpush.msra.mxu0 0.0
  %4007 = vmatpush.msra.mxu0 0.0
  %4008 = vmatpush.msra.mxu0 0.0
  %4009 = vmatpush.msra.mxu0 0.0
  %4010 = vmatpush.msra.mxu0 0.0
  %4011 = vmatpush.msra.mxu0 0.0
  %4012 = vmatpush.msra.mxu0 0.0
  %4013 = vmatpush.msra.mxu0 %v3987
  %4014 = vmatpush.msra.mxu0 %v3986
  %4015 = vmatmul.f32.gmra.mxu0 %v3994
  %v4016 = vpop.f32.mrf.mxu0
  %v4017 = vadd.f32 0.0, %v4016
  %4018 = vmatmul.f32.gmra.mxu0 %v3997
  %v4019 = vpop.f32.mrf.mxu0
  %v4020 = vadd.f32 0.0, %v4019
  %4021 = vdwg.mxu0
  %4022 = vmatpush.msra.mxu0 0.0
  %4023 = vmatpush.msra.mxu0 0.0
  %4024 = vmatpush.msra.mxu0 0.0
  %4025 = vmatpush.msra.mxu0 0.0
  %4026 = vmatpush.msra.mxu0 0.0
  %4027 = vmatpush.msra.mxu0 0.0
  %4028 = vmatpush.msra.mxu0 0.0
  %4029 = vmatpush.msra.mxu0 0.0
  %4030 = vmatpush.msra.mxu0 0.0
  %4031 = vmatpush.msra.mxu0 0.0
  %4032 = vmatpush.msra.mxu0 0.0
  %4033 = vmatpush.msra.mxu0 0.0
  %4034 = vmatpush.msra.mxu0 0.0
  %4035 = vmatpush.msra.mxu0 0.0
  %4036 = vmatpush.msra.mxu0 %v3989
  %4037 = vmatpush.msra.mxu0 %v3988
  %4038 = vmatmul.f32.gmra.mxu0 %v3994
  %v4039 = vpop.f32.mrf.mxu0
  %v4040 = vadd.f32 0.0, %v4039
  %4041 = vmatmul.f32.gmra.mxu0 %v3997
  %v4042 = vpop.f32.mrf.mxu0
  %v4043 = vadd.f32 0.0, %v4042
  %4044 = vdwg.mxu0
  %v4045 = vadd.f32 %v3970, %v4017
  %v4046 = vadd.f32 %v3971, %v4020
  %v4047 = vadd.f32 %v3972, %v4040
  %v4048 = vadd.f32 %v3973, %v4043
  %4049 = vrot.lane.b32.xlu0 %v3619, 112
  %v4050 = vpop.permute.xlu0 %4049
  %4051 = vrot.lane.b32.xlu0 %v3620, 112
  %v4052 = vpop.permute.xlu0 %4051
  %4053 = vrot.lane.b32.xlu0 %v3621, 112
  %v4054 = vpop.permute.xlu0 %4053
  %4055 = vrot.lane.b32.xlu0 %v3622, 112
  %v4056 = vpop.permute.xlu0 %4055
  %v4061 = vsel %vm2928, %v4050, 0.0
  %v4062 = vsel %vm2928, %v4052, 0.0
  %v4063 = vsel %vm2928, %v4054, 0.0
  %v4064 = vsel %vm2928, %v4056, 0.0
  %s4065 = scalar_lea.vmem %s1, 528
  %v4066 = vld [vmem:[%s4065] sm:$0xff]
  %v4067 = vld [vmem:[%s4065 + $0x8] sm:$0xff]
  %v4069 = vsel %vm142, %v4066, 0
  %v4072 = vsel %vm142, %v4067, 0
  %4074 = vmatpush.msra.mxu0 0.0
  %4075 = vmatpush.msra.mxu0 0.0
  %4076 = vmatpush.msra.mxu0 0.0
  %4077 = vmatpush.msra.mxu0 0.0
  %4078 = vmatpush.msra.mxu0 0.0
  %4079 = vmatpush.msra.mxu0 0.0
  %4080 = vmatpush.msra.mxu0 0.0
  %4081 = vmatpush.msra.mxu0 0.0
  %4082 = vmatpush.msra.mxu0 0.0
  %4083 = vmatpush.msra.mxu0 0.0
  %4084 = vmatpush.msra.mxu0 0.0
  %4085 = vmatpush.msra.mxu0 0.0
  %4086 = vmatpush.msra.mxu0 0.0
  %4087 = vmatpush.msra.mxu0 0.0
  %4088 = vmatpush.msra.mxu0 %v4062
  %4089 = vmatpush.msra.mxu0 %v4061
  %4090 = vmatmul.f32.gmra.mxu0 %v4069
  %v4091 = vpop.f32.mrf.mxu0
  %v4092 = vadd.f32 0.0, %v4091
  %4093 = vmatmul.f32.gmra.mxu0 %v4072
  %v4094 = vpop.f32.mrf.mxu0
  %v4095 = vadd.f32 0.0, %v4094
  %4096 = vdwg.mxu0
  %4097 = vmatpush.msra.mxu0 0.0
  %4098 = vmatpush.msra.mxu0 0.0
  %4099 = vmatpush.msra.mxu0 0.0
  %4100 = vmatpush.msra.mxu0 0.0
  %4101 = vmatpush.msra.mxu0 0.0
  %4102 = vmatpush.msra.mxu0 0.0
  %4103 = vmatpush.msra.mxu0 0.0
  %4104 = vmatpush.msra.mxu0 0.0
  %4105 = vmatpush.msra.mxu0 0.0
  %4106 = vmatpush.msra.mxu0 0.0
  %4107 = vmatpush.msra.mxu0 0.0
  %4108 = vmatpush.msra.mxu0 0.0
  %4109 = vmatpush.msra.mxu0 0.0
  %4110 = vmatpush.msra.mxu0 0.0
  %4111 = vmatpush.msra.mxu0 %v4064
  %4112 = vmatpush.msra.mxu0 %v4063
  %4113 = vmatmul.f32.gmra.mxu0 %v4069
  %v4114 = vpop.f32.mrf.mxu0
  %v4115 = vadd.f32 0.0, %v4114
  %4116 = vmatmul.f32.gmra.mxu0 %v4072
  %v4117 = vpop.f32.mrf.mxu0
  %v4118 = vadd.f32 0.0, %v4117
  %4119 = vdwg.mxu0
  %v4120 = vadd.f32 %v4045, %v4092
  %v4121 = vadd.f32 %v4046, %v4095
  %v4122 = vadd.f32 %v4047, %v4115
  %v4123 = vadd.f32 %v4048, %v4118
  %s4124 = scalar_lea.vmem %s1, 544
  %v4125 = vld [vmem:[%s4124] sm:$0xff]
  %v4126 = vld [vmem:[%s4124 + $0x8] sm:$0xff]
  %4127 = vrot.lane.b32.xlu0 %v3619, 111
  %v4128 = vpop.permute.xlu0 %4127
  %4129 = vrot.lane.b32.xlu0 %v3620, 111
  %v4130 = vpop.permute.xlu0 %4129
  %v4134 = vsel %vm142, %v4125, 0
  %v4137 = vsel %vm142, %v4126, 0
  %4139 = vmatpush.msra.mxu0 0.0
  %4140 = vmatpush.msra.mxu0 0.0
  %4141 = vmatpush.msra.mxu0 0.0
  %4142 = vmatpush.msra.mxu0 0.0
  %4143 = vmatpush.msra.mxu0 0.0
  %4144 = vmatpush.msra.mxu0 0.0
  %4145 = vmatpush.msra.mxu0 0.0
  %4146 = vmatpush.msra.mxu0 0.0
  %4147 = vmatpush.msra.mxu0 0.0
  %4148 = vmatpush.msra.mxu0 0.0
  %4149 = vmatpush.msra.mxu0 0.0
  %4150 = vmatpush.msra.mxu0 0.0
  %4151 = vmatpush.msra.mxu0 0.0
  %4152 = vmatpush.msra.mxu0 0.0
  %4153 = vmatpush.msra.mxu0 %v4130
  %4154 = vmatpush.msra.mxu0 %v4128
  %4155 = vmatmul.f32.gmra.mxu0 %v4134
  %v4156 = vpop.f32.mrf.mxu0
  %v4157 = vadd.f32 0.0, %v4156
  %4158 = vmatmul.f32.gmra.mxu0 %v4137
  %v4159 = vpop.f32.mrf.mxu0
  %v4160 = vadd.f32 0.0, %v4159
  %4161 = vdwg.mxu0
  %4162 = vrot.lane.b32.xlu0 %v3621, 111
  %v4163 = vpop.permute.xlu0 %4162
  %4164 = vrot.lane.b32.xlu0 %v3622, 111
  %v4165 = vpop.permute.xlu0 %4164
  %4168 = vmatpush.msra.mxu0 0.0
  %4169 = vmatpush.msra.mxu0 0.0
  %4170 = vmatpush.msra.mxu0 0.0
  %4171 = vmatpush.msra.mxu0 0.0
  %4172 = vmatpush.msra.mxu0 0.0
  %4173 = vmatpush.msra.mxu0 0.0
  %4174 = vmatpush.msra.mxu0 0.0
  %4175 = vmatpush.msra.mxu0 0.0
  %4176 = vmatpush.msra.mxu0 0.0
  %4177 = vmatpush.msra.mxu0 0.0
  %4178 = vmatpush.msra.mxu0 0.0
  %4179 = vmatpush.msra.mxu0 0.0
  %4180 = vmatpush.msra.mxu0 0.0
  %4181 = vmatpush.msra.mxu0 0.0
  %4182 = vmatpush.msra.mxu0 %v4165
  %4183 = vmatpush.msra.mxu0 %v4163
  %4184 = vmatmul.f32.gmra.mxu0 %v4134
  %v4185 = vpop.f32.mrf.mxu0
  %v4186 = vadd.f32 0.0, %v4185
  %4187 = vmatmul.f32.gmra.mxu0 %v4137
  %v4188 = vpop.f32.mrf.mxu0
  %v4189 = vadd.f32 0.0, %v4188
  %4190 = vdwg.mxu0
  %v4191 = vadd.f32 %v4120, %v4157
  %v4192 = vadd.f32 %v4121, %v4160
  %v4193 = vadd.f32 %v4122, %v4186
  %v4194 = vadd.f32 %v4123, %v4189
  %4195 = vrot.lane.b32.xlu0 %v3619, 110
  %v4196 = vpop.permute.xlu0 %4195
  %4197 = vrot.lane.b32.xlu0 %v3620, 110
  %v4198 = vpop.permute.xlu0 %4197
  %4199 = vrot.lane.b32.xlu0 %v3621, 110
  %v4200 = vpop.permute.xlu0 %4199
  %4201 = vrot.lane.b32.xlu0 %v3622, 110
  %v4202 = vpop.permute.xlu0 %4201
  %v4207 = vsel %vm3060, %v4196, 0.0
  %v4208 = vsel %vm3060, %v4198, 0.0
  %v4209 = vsel %vm3060, %v4200, 0.0
  %v4210 = vsel %vm3060, %v4202, 0.0
  %s4211 = scalar_lea.vmem %s1, 560
  %v4212 = vld [vmem:[%s4211] sm:$0xff]
  %v4213 = vld [vmem:[%s4211 + $0x8] sm:$0xff]
  %v4215 = vsel %vm142, %v4212, 0
  %v4218 = vsel %vm142, %v4213, 0
  %4220 = vmatpush.msra.mxu0 0.0
  %4221 = vmatpush.msra.mxu0 0.0
  %4222 = vmatpush.msra.mxu0 0.0
  %4223 = vmatpush.msra.mxu0 0.0
  %4224 = vmatpush.msra.mxu0 0.0
  %4225 = vmatpush.msra.mxu0 0.0
  %4226 = vmatpush.msra.mxu0 0.0
  %4227 = vmatpush.msra.mxu0 0.0
  %4228 = vmatpush.msra.mxu0 0.0
  %4229 = vmatpush.msra.mxu0 0.0
  %4230 = vmatpush.msra.mxu0 0.0
  %4231 = vmatpush.msra.mxu0 0.0
  %4232 = vmatpush.msra.mxu0 0.0
  %4233 = vmatpush.msra.mxu0 0.0
  %4234 = vmatpush.msra.mxu0 %v4208
  %4235 = vmatpush.msra.mxu0 %v4207
  %4236 = vmatmul.f32.gmra.mxu0 %v4215
  %v4237 = vpop.f32.mrf.mxu0
  %v4238 = vadd.f32 0.0, %v4237
  %4239 = vmatmul.f32.gmra.mxu0 %v4218
  %v4240 = vpop.f32.mrf.mxu0
  %v4241 = vadd.f32 0.0, %v4240
  %4242 = vdwg.mxu0
  %4243 = vmatpush.msra.mxu0 0.0
  %4244 = vmatpush.msra.mxu0 0.0
  %4245 = vmatpush.msra.mxu0 0.0
  %4246 = vmatpush.msra.mxu0 0.0
  %4247 = vmatpush.msra.mxu0 0.0
  %4248 = vmatpush.msra.mxu0 0.0
  %4249 = vmatpush.msra.mxu0 0.0
  %4250 = vmatpush.msra.mxu0 0.0
  %4251 = vmatpush.msra.mxu0 0.0
  %4252 = vmatpush.msra.mxu0 0.0
  %4253 = vmatpush.msra.mxu0 0.0
  %4254 = vmatpush.msra.mxu0 0.0
  %4255 = vmatpush.msra.mxu0 0.0
  %4256 = vmatpush.msra.mxu0 0.0
  %4257 = vmatpush.msra.mxu0 %v4210
  %4258 = vmatpush.msra.mxu0 %v4209
  %4259 = vmatmul.f32.gmra.mxu0 %v4215
  %v4260 = vpop.f32.mrf.mxu0
  %v4261 = vadd.f32 0.0, %v4260
  %4262 = vmatmul.f32.gmra.mxu0 %v4218
  %v4263 = vpop.f32.mrf.mxu0
  %v4264 = vadd.f32 0.0, %v4263
  %4265 = vdwg.mxu0
  %v4266 = vadd.f32 %v4191, %v4238
  %v4267 = vadd.f32 %v4192, %v4241
  %v4268 = vadd.f32 %v4193, %v4261
  %v4269 = vadd.f32 %v4194, %v4264
  %s4270 = scalar_lea.vmem %s2, 48
  %v4271 = vld [vmem:[%s4270] sm:$0xff]
  %v4272 = vld [vmem:[%s4270 + $0x8] sm:$0xff]
  %4274 = vset.pattern.permute.xlu0 0
  %4275 = vperm.xlu0 %4274, %v4271
  %v4276 = vpop.permute.xlu0 %4275
  %4279 = vset.pattern.permute.xlu0 0
  %4280 = vperm.xlu0 %4279, %v4272
  %v4281 = vpop.permute.xlu0 %4280
  %v4283 = vadd.f32 %v4266, %v4276
  %v4284 = vadd.f32 %v4267, %v4281
  %v4285 = vadd.f32 %v4268, %v4276
  %v4286 = vadd.f32 %v4269, %v4281
  %v4287 = vmax.f32 %v4283, 0.0
  %v4288 = vmax.f32 %v4284, 0.0
  %v4289 = vmax.f32 %v4285, 0.0
  %v4290 = vmax.f32 %v4286, 0.0
  %v4291 = vld [vmem:[%s4] sm:$0xff]
  %v4292 = vld [vmem:[%s4 + $0x8] sm:$0xff]
  %v4293 = vld [vmem:[%s4 + $0x10] sm:$0xff]
  %v4294 = vld [vmem:[%s4 + $0x18] sm:$0xff]
  %v4295 = vld [vmem:[%s4 + $0x20] sm:$0xff]
  %v4296 = vld [vmem:[%s4 + $0x28] sm:$0xff]
  %v4297 = vld [vmem:[%s4 + $0x30] sm:$0xff]
  %v4298 = vld [vmem:[%s4 + $0x38] sm:$0xff]
  %vm4299 = vcmask 523264
  %v4301 = vsel %vm4299, %v4287, 0
  %v4304 = vsel %vm4299, %v4288, 0
  %v4307 = vsel %vm4299, %v4289, 0
  %v4310 = vsel %vm4299, %v4290, 0
  %4312 = vmatpush.msra.mxu0 0.0
  %4313 = vmatpush.msra.mxu0 0.0
  %4314 = vmatpush.msra.mxu0 0.0
  %4315 = vmatpush.msra.mxu0 0.0
  %4316 = vmatpush.msra.mxu0 0.0
  %4317 = vmatpush.msra.mxu0 0.0
  %4318 = vmatpush.msra.mxu0 0.0
  %4319 = vmatpush.msra.mxu0 0.0
  %4320 = vmatpush.msra.mxu0 %v4298
  %4321 = vmatpush.msra.mxu0 %v4297
  %4322 = vmatpush.msra.mxu0 %v4296
  %4323 = vmatpush.msra.mxu0 %v4295
  %4324 = vmatpush.msra.mxu0 %v4294
  %4325 = vmatpush.msra.mxu0 %v4293
  %4326 = vmatpush.msra.mxu0 %v4292
  %4327 = vmatpush.msra.mxu0 %v4291
  %4328 = vmatmul.f32.gmra.mxu0 %v4301
  %v4329 = vpop.f32.mrf.mxu0
  %v4330 = vadd.f32 0.0, %v4329
  %4331 = vmatmul.f32.gmra.mxu0 %v4304
  %v4332 = vpop.f32.mrf.mxu0
  %v4333 = vadd.f32 0.0, %v4332
  %4334 = vmatmul.f32.gmra.mxu0 %v4307
  %v4335 = vpop.f32.mrf.mxu0
  %v4336 = vadd.f32 0.0, %v4335
  %4337 = vmatmul.f32.gmra.mxu0 %v4310
  %v4338 = vpop.f32.mrf.mxu0
  %v4339 = vadd.f32 0.0, %v4338
  %4340 = vdwg.mxu0
  %4345 = vrot.lane.b32.xlu0 %v4330, 5
  %v4346 = vpop.permute.xlu0 %4345
  %4347 = vrot.lane.b32.xlu0 %v4333, 5
  %v4348 = vpop.permute.xlu0 %4347
  %4349 = vrot.lane.b32.xlu0 %v4336, 5
  %v4350 = vpop.permute.xlu0 %4349
  %4351 = vrot.lane.b32.xlu0 %v4339, 5
  %v4352 = vpop.permute.xlu0 %4351
  %vm4357 = vcmask 39936
  %v4358 = vsel %vm4357, 0.0, %v4346
  %v4359 = vsel %vm4357, 0.0, %v4348
  %v4360 = vsel %vm4357, 0.0, %v4350
  %v4361 = vsel %vm4357, 0.0, %v4352
  %vm4362 = vcmask 171008
  %v4363 = vsel %vm4362, %v4358, 0.0
  %v4364 = vsel %vm4362, %v4359, 0.0
  %v4365 = vsel %vm4362, %v4360, 0.0
  %v4366 = vsel %vm4362, %v4361, 0.0
  %v4367 = vsel %vm39, 1, 0
  %vm4368 = vcmp.eq.s32.totalorder %v4367, 1
  %v4369 = vsel %vm4368, %v4363, 0.0
  %v4370 = vsel %vm4368, %v4364, 0.0
  %v4371 = vsel %vm4368, %v4365, 0.0
  %v4372 = vsel %vm4368, %v4366, 0.0
  %s4373 = scalar_lea.vmem %s1, 576
  %v4374 = vld [vmem:[%s4373] sm:$0xff]
  %v4375 = vld [vmem:[%s4373 + $0x8] sm:$0xff]
  %s4376 = scalar_lea.vmem %s1, 592
  %v4377 = vld [vmem:[%s4376] sm:$0xff]
  %v4378 = vld [vmem:[%s4376 + $0x8] sm:$0xff]
  %4381 = vrot.lane.b32.xlu0 %v4363, 127
  %v4382 = vpop.permute.xlu0 %4381
  %4383 = vrot.lane.b32.xlu0 %v4364, 127
  %v4384 = vpop.permute.xlu0 %4383
  %v4388 = vsel %vm142, %v4377, 0
  %v4391 = vsel %vm142, %v4378, 0
  %4393 = vmatpush.msra.mxu0 0.0
  %4394 = vmatpush.msra.mxu0 0.0
  %4395 = vmatpush.msra.mxu0 0.0
  %4396 = vmatpush.msra.mxu0 0.0
  %4397 = vmatpush.msra.mxu0 0.0
  %4398 = vmatpush.msra.mxu0 0.0
  %4399 = vmatpush.msra.mxu0 0.0
  %4400 = vmatpush.msra.mxu0 0.0
  %4401 = vmatpush.msra.mxu0 0.0
  %4402 = vmatpush.msra.mxu0 0.0
  %4403 = vmatpush.msra.mxu0 0.0
  %4404 = vmatpush.msra.mxu0 0.0
  %4405 = vmatpush.msra.mxu0 0.0
  %4406 = vmatpush.msra.mxu0 0.0
  %4407 = vmatpush.msra.mxu0 %v4384
  %4408 = vmatpush.msra.mxu0 %v4382
  %4409 = vmatmul.f32.gmra.mxu0 %v4388
  %v4410 = vpop.f32.mrf.mxu0
  %v4411 = vadd.f32 0.0, %v4410
  %4412 = vmatmul.f32.gmra.mxu0 %v4391
  %v4413 = vpop.f32.mrf.mxu0
  %v4414 = vadd.f32 0.0, %v4413
  %4415 = vdwg.mxu0
  %4418 = vrot.lane.b32.xlu0 %v4365, 127
  %v4419 = vpop.permute.xlu0 %4418
  %4420 = vrot.lane.b32.xlu0 %v4366, 127
  %v4421 = vpop.permute.xlu0 %4420
  %4424 = vmatpush.msra.mxu0 0.0
  %4425 = vmatpush.msra.mxu0 0.0
  %4426 = vmatpush.msra.mxu0 0.0
  %4427 = vmatpush.msra.mxu0 0.0
  %4428 = vmatpush.msra.mxu0 0.0
  %4429 = vmatpush.msra.mxu0 0.0
  %4430 = vmatpush.msra.mxu0 0.0
  %4431 = vmatpush.msra.mxu0 0.0
  %4432 = vmatpush.msra.mxu0 0.0
  %4433 = vmatpush.msra.mxu0 0.0
  %4434 = vmatpush.msra.mxu0 0.0
  %4435 = vmatpush.msra.mxu0 0.0
  %4436 = vmatpush.msra.mxu0 0.0
  %4437 = vmatpush.msra.mxu0 0.0
  %4438 = vmatpush.msra.mxu0 %v4421
  %4439 = vmatpush.msra.mxu0 %v4419
  %4440 = vmatmul.f32.gmra.mxu0 %v4388
  %v4441 = vpop.f32.mrf.mxu0
  %v4442 = vadd.f32 0.0, %v4441
  %4443 = vmatmul.f32.gmra.mxu0 %v4391
  %v4444 = vpop.f32.mrf.mxu0
  %v4445 = vadd.f32 0.0, %v4444
  %4446 = vdwg.mxu0
  %v4448 = vsel %vm142, %v4374, 0
  %v4451 = vsel %vm142, %v4375, 0
  %4453 = vmatpush.msra.mxu0 0.0
  %4454 = vmatpush.msra.mxu0 0.0
  %4455 = vmatpush.msra.mxu0 0.0
  %4456 = vmatpush.msra.mxu0 0.0
  %4457 = vmatpush.msra.mxu0 0.0
  %4458 = vmatpush.msra.mxu0 0.0
  %4459 = vmatpush.msra.mxu0 0.0
  %4460 = vmatpush.msra.mxu0 0.0
  %4461 = vmatpush.msra.mxu0 0.0
  %4462 = vmatpush.msra.mxu0 0.0
  %4463 = vmatpush.msra.mxu0 0.0
  %4464 = vmatpush.msra.mxu0 0.0
  %4465 = vmatpush.msra.mxu0 0.0
  %4466 = vmatpush.msra.mxu0 0.0
  %4467 = vmatpush.msra.mxu0 %v4370
  %4468 = vmatpush.msra.mxu0 %v4369
  %4469 = vmatmul.f32.gmra.mxu0 %v4448
  %v4470 = vpop.f32.mrf.mxu0
  %v4471 = vadd.f32 %v4411, %v4470
  %4472 = vmatmul.f32.gmra.mxu0 %v4451
  %v4473 = vpop.f32.mrf.mxu0
  %v4474 = vadd.f32 %v4414, %v4473
  %4475 = vdwg.mxu0
  %4476 = vmatpush.msra.mxu0 0.0
  %4477 = vmatpush.msra.mxu0 0.0
  %4478 = vmatpush.msra.mxu0 0.0
  %4479 = vmatpush.msra.mxu0 0.0
  %4480 = vmatpush.msra.mxu0 0.0
  %4481 = vmatpush.msra.mxu0 0.0
  %4482 = vmatpush.msra.mxu0 0.0
  %4483 = vmatpush.msra.mxu0 0.0
  %4484 = vmatpush.msra.mxu0 0.0
  %4485 = vmatpush.msra.mxu0 0.0
  %4486 = vmatpush.msra.mxu0 0.0
  %4487 = vmatpush.msra.mxu0 0.0
  %4488 = vmatpush.msra.mxu0 0.0
  %4489 = vmatpush.msra.mxu0 0.0
  %4490 = vmatpush.msra.mxu0 %v4372
  %4491 = vmatpush.msra.mxu0 %v4371
  %4492 = vmatmul.f32.gmra.mxu0 %v4448
  %v4493 = vpop.f32.mrf.mxu0
  %v4494 = vadd.f32 %v4442, %v4493
  %4495 = vmatmul.f32.gmra.mxu0 %v4451
  %v4496 = vpop.f32.mrf.mxu0
  %v4497 = vadd.f32 %v4445, %v4496
  %4498 = vdwg.mxu0
  %v4499 = vsel %vm40, 1, 0
  %vm4500 = vcmp.eq.s32.totalorder %v4499, 1
  %4501 = vrot.lane.b32.xlu0 %v4363, 126
  %v4502 = vpop.permute.xlu0 %4501
  %4503 = vrot.lane.b32.xlu0 %v4364, 126
  %v4504 = vpop.permute.xlu0 %4503
  %4505 = vrot.lane.b32.xlu0 %v4365, 126
  %v4506 = vpop.permute.xlu0 %4505
  %4507 = vrot.lane.b32.xlu0 %v4366, 126
  %v4508 = vpop.permute.xlu0 %4507
  %v4513 = vsel %vm4500, %v4502, 0.0
  %v4514 = vsel %vm4500, %v4504, 0.0
  %v4515 = vsel %vm4500, %v4506, 0.0
  %v4516 = vsel %vm4500, %v4508, 0.0
  %s4517 = scalar_lea.vmem %s1, 608
  %v4518 = vld [vmem:[%s4517] sm:$0xff]
  %v4519 = vld [vmem:[%s4517 + $0x8] sm:$0xff]
  %v4521 = vsel %vm142, %v4518, 0
  %v4524 = vsel %vm142, %v4519, 0
  %4526 = vmatpush.msra.mxu0 0.0
  %4527 = vmatpush.msra.mxu0 0.0
  %4528 = vmatpush.msra.mxu0 0.0
  %4529 = vmatpush.msra.mxu0 0.0
  %4530 = vmatpush.msra.mxu0 0.0
  %4531 = vmatpush.msra.mxu0 0.0
  %4532 = vmatpush.msra.mxu0 0.0
  %4533 = vmatpush.msra.mxu0 0.0
  %4534 = vmatpush.msra.mxu0 0.0
  %4535 = vmatpush.msra.mxu0 0.0
  %4536 = vmatpush.msra.mxu0 0.0
  %4537 = vmatpush.msra.mxu0 0.0
  %4538 = vmatpush.msra.mxu0 0.0
  %4539 = vmatpush.msra.mxu0 0.0
  %4540 = vmatpush.msra.mxu0 %v4514
  %4541 = vmatpush.msra.mxu0 %v4513
  %4542 = vmatmul.f32.gmra.mxu0 %v4521
  %v4543 = vpop.f32.mrf.mxu0
  %v4544 = vadd.f32 0.0, %v4543
  %4545 = vmatmul.f32.gmra.mxu0 %v4524
  %v4546 = vpop.f32.mrf.mxu0
  %v4547 = vadd.f32 0.0, %v4546
  %4548 = vdwg.mxu0
  %4549 = vmatpush.msra.mxu0 0.0
  %4550 = vmatpush.msra.mxu0 0.0
  %4551 = vmatpush.msra.mxu0 0.0
  %4552 = vmatpush.msra.mxu0 0.0
  %4553 = vmatpush.msra.mxu0 0.0
  %4554 = vmatpush.msra.mxu0 0.0
  %4555 = vmatpush.msra.mxu0 0.0
  %4556 = vmatpush.msra.mxu0 0.0
  %4557 = vmatpush.msra.mxu0 0.0
  %4558 = vmatpush.msra.mxu0 0.0
  %4559 = vmatpush.msra.mxu0 0.0
  %4560 = vmatpush.msra.mxu0 0.0
  %4561 = vmatpush.msra.mxu0 0.0
  %4562 = vmatpush.msra.mxu0 0.0
  %4563 = vmatpush.msra.mxu0 %v4516
  %4564 = vmatpush.msra.mxu0 %v4515
  %4565 = vmatmul.f32.gmra.mxu0 %v4521
  %v4566 = vpop.f32.mrf.mxu0
  %v4567 = vadd.f32 0.0, %v4566
  %4568 = vmatmul.f32.gmra.mxu0 %v4524
  %v4569 = vpop.f32.mrf.mxu0
  %v4570 = vadd.f32 0.0, %v4569
  %4571 = vdwg.mxu0
  %v4572 = vadd.f32 %v4471, %v4544
  %v4573 = vadd.f32 %v4474, %v4547
  %v4574 = vadd.f32 %v4494, %v4567
  %v4575 = vadd.f32 %v4497, %v4570
  %4576 = vrot.lane.b32.xlu0 %v4363, 124
  %v4577 = vpop.permute.xlu0 %4576
  %4578 = vrot.lane.b32.xlu0 %v4364, 124
  %v4579 = vpop.permute.xlu0 %4578
  %4580 = vrot.lane.b32.xlu0 %v4365, 124
  %v4581 = vpop.permute.xlu0 %4580
  %4582 = vrot.lane.b32.xlu0 %v4366, 124
  %v4583 = vpop.permute.xlu0 %4582
  %v4588 = vsel %vm4368, %v4577, 0.0
  %v4589 = vsel %vm4368, %v4579, 0.0
  %v4590 = vsel %vm4368, %v4581, 0.0
  %v4591 = vsel %vm4368, %v4583, 0.0
  %s4592 = scalar_lea.vmem %s1, 624
  %v4593 = vld [vmem:[%s4592] sm:$0xff]
  %v4594 = vld [vmem:[%s4592 + $0x8] sm:$0xff]
  %v4596 = vsel %vm142, %v4593, 0
  %v4599 = vsel %vm142, %v4594, 0
  %4601 = vmatpush.msra.mxu0 0.0
  %4602 = vmatpush.msra.mxu0 0.0
  %4603 = vmatpush.msra.mxu0 0.0
  %4604 = vmatpush.msra.mxu0 0.0
  %4605 = vmatpush.msra.mxu0 0.0
  %4606 = vmatpush.msra.mxu0 0.0
  %4607 = vmatpush.msra.mxu0 0.0
  %4608 = vmatpush.msra.mxu0 0.0
  %4609 = vmatpush.msra.mxu0 0.0
  %4610 = vmatpush.msra.mxu0 0.0
  %4611 = vmatpush.msra.mxu0 0.0
  %4612 = vmatpush.msra.mxu0 0.0
  %4613 = vmatpush.msra.mxu0 0.0
  %4614 = vmatpush.msra.mxu0 0.0
  %4615 = vmatpush.msra.mxu0 %v4589
  %4616 = vmatpush.msra.mxu0 %v4588
  %4617 = vmatmul.f32.gmra.mxu0 %v4596
  %v4618 = vpop.f32.mrf.mxu0
  %v4619 = vadd.f32 0.0, %v4618
  %4620 = vmatmul.f32.gmra.mxu0 %v4599
  %v4621 = vpop.f32.mrf.mxu0
  %v4622 = vadd.f32 0.0, %v4621
  %4623 = vdwg.mxu0
  %4624 = vmatpush.msra.mxu0 0.0
  %4625 = vmatpush.msra.mxu0 0.0
  %4626 = vmatpush.msra.mxu0 0.0
  %4627 = vmatpush.msra.mxu0 0.0
  %4628 = vmatpush.msra.mxu0 0.0
  %4629 = vmatpush.msra.mxu0 0.0
  %4630 = vmatpush.msra.mxu0 0.0
  %4631 = vmatpush.msra.mxu0 0.0
  %4632 = vmatpush.msra.mxu0 0.0
  %4633 = vmatpush.msra.mxu0 0.0
  %4634 = vmatpush.msra.mxu0 0.0
  %4635 = vmatpush.msra.mxu0 0.0
  %4636 = vmatpush.msra.mxu0 0.0
  %4637 = vmatpush.msra.mxu0 0.0
  %4638 = vmatpush.msra.mxu0 %v4591
  %4639 = vmatpush.msra.mxu0 %v4590
  %4640 = vmatmul.f32.gmra.mxu0 %v4596
  %v4641 = vpop.f32.mrf.mxu0
  %v4642 = vadd.f32 0.0, %v4641
  %4643 = vmatmul.f32.gmra.mxu0 %v4599
  %v4644 = vpop.f32.mrf.mxu0
  %v4645 = vadd.f32 0.0, %v4644
  %4646 = vdwg.mxu0
  %v4647 = vadd.f32 %v4572, %v4619
  %v4648 = vadd.f32 %v4573, %v4622
  %v4649 = vadd.f32 %v4574, %v4642
  %v4650 = vadd.f32 %v4575, %v4645
  %s4651 = scalar_lea.vmem %s1, 640
  %v4652 = vld [vmem:[%s4651] sm:$0xff]
  %v4653 = vld [vmem:[%s4651 + $0x8] sm:$0xff]
  %4654 = vrot.lane.b32.xlu0 %v4363, 123
  %v4655 = vpop.permute.xlu0 %4654
  %4656 = vrot.lane.b32.xlu0 %v4364, 123
  %v4657 = vpop.permute.xlu0 %4656
  %v4661 = vsel %vm142, %v4652, 0
  %v4664 = vsel %vm142, %v4653, 0
  %4666 = vmatpush.msra.mxu0 0.0
  %4667 = vmatpush.msra.mxu0 0.0
  %4668 = vmatpush.msra.mxu0 0.0
  %4669 = vmatpush.msra.mxu0 0.0
  %4670 = vmatpush.msra.mxu0 0.0
  %4671 = vmatpush.msra.mxu0 0.0
  %4672 = vmatpush.msra.mxu0 0.0
  %4673 = vmatpush.msra.mxu0 0.0
  %4674 = vmatpush.msra.mxu0 0.0
  %4675 = vmatpush.msra.mxu0 0.0
  %4676 = vmatpush.msra.mxu0 0.0
  %4677 = vmatpush.msra.mxu0 0.0
  %4678 = vmatpush.msra.mxu0 0.0
  %4679 = vmatpush.msra.mxu0 0.0
  %4680 = vmatpush.msra.mxu0 %v4657
  %4681 = vmatpush.msra.mxu0 %v4655
  %4682 = vmatmul.f32.gmra.mxu0 %v4661
  %v4683 = vpop.f32.mrf.mxu0
  %v4684 = vadd.f32 0.0, %v4683
  %4685 = vmatmul.f32.gmra.mxu0 %v4664
  %v4686 = vpop.f32.mrf.mxu0
  %v4687 = vadd.f32 0.0, %v4686
  %4688 = vdwg.mxu0
  %4689 = vrot.lane.b32.xlu0 %v4365, 123
  %v4690 = vpop.permute.xlu0 %4689
  %4691 = vrot.lane.b32.xlu0 %v4366, 123
  %v4692 = vpop.permute.xlu0 %4691
  %4695 = vmatpush.msra.mxu0 0.0
  %4696 = vmatpush.msra.mxu0 0.0
  %4697 = vmatpush.msra.mxu0 0.0
  %4698 = vmatpush.msra.mxu0 0.0
  %4699 = vmatpush.msra.mxu0 0.0
  %4700 = vmatpush.msra.mxu0 0.0
  %4701 = vmatpush.msra.mxu0 0.0
  %4702 = vmatpush.msra.mxu0 0.0
  %4703 = vmatpush.msra.mxu0 0.0
  %4704 = vmatpush.msra.mxu0 0.0
  %4705 = vmatpush.msra.mxu0 0.0
  %4706 = vmatpush.msra.mxu0 0.0
  %4707 = vmatpush.msra.mxu0 0.0
  %4708 = vmatpush.msra.mxu0 0.0
  %4709 = vmatpush.msra.mxu0 %v4692
  %4710 = vmatpush.msra.mxu0 %v4690
  %4711 = vmatmul.f32.gmra.mxu0 %v4661
  %v4712 = vpop.f32.mrf.mxu0
  %v4713 = vadd.f32 0.0, %v4712
  %4714 = vmatmul.f32.gmra.mxu0 %v4664
  %v4715 = vpop.f32.mrf.mxu0
  %v4716 = vadd.f32 0.0, %v4715
  %4717 = vdwg.mxu0
  %v4718 = vadd.f32 %v4647, %v4684
  %v4719 = vadd.f32 %v4648, %v4687
  %v4720 = vadd.f32 %v4649, %v4713
  %v4721 = vadd.f32 %v4650, %v4716
  %4722 = vrot.lane.b32.xlu0 %v4363, 122
  %v4723 = vpop.permute.xlu0 %4722
  %4724 = vrot.lane.b32.xlu0 %v4364, 122
  %v4725 = vpop.permute.xlu0 %4724
  %4726 = vrot.lane.b32.xlu0 %v4365, 122
  %v4727 = vpop.permute.xlu0 %4726
  %4728 = vrot.lane.b32.xlu0 %v4366, 122
  %v4729 = vpop.permute.xlu0 %4728
  %v4734 = vsel %vm4500, %v4723, 0.0
  %v4735 = vsel %vm4500, %v4725, 0.0
  %v4736 = vsel %vm4500, %v4727, 0.0
  %v4737 = vsel %vm4500, %v4729, 0.0
  %s4738 = scalar_lea.vmem %s1, 656
  %v4739 = vld [vmem:[%s4738] sm:$0xff]
  %v4740 = vld [vmem:[%s4738 + $0x8] sm:$0xff]
  %v4742 = vsel %vm142, %v4739, 0
  %v4745 = vsel %vm142, %v4740, 0
  %4747 = vmatpush.msra.mxu0 0.0
  %4748 = vmatpush.msra.mxu0 0.0
  %4749 = vmatpush.msra.mxu0 0.0
  %4750 = vmatpush.msra.mxu0 0.0
  %4751 = vmatpush.msra.mxu0 0.0
  %4752 = vmatpush.msra.mxu0 0.0
  %4753 = vmatpush.msra.mxu0 0.0
  %4754 = vmatpush.msra.mxu0 0.0
  %4755 = vmatpush.msra.mxu0 0.0
  %4756 = vmatpush.msra.mxu0 0.0
  %4757 = vmatpush.msra.mxu0 0.0
  %4758 = vmatpush.msra.mxu0 0.0
  %4759 = vmatpush.msra.mxu0 0.0
  %4760 = vmatpush.msra.mxu0 0.0
  %4761 = vmatpush.msra.mxu0 %v4735
  %4762 = vmatpush.msra.mxu0 %v4734
  %4763 = vmatmul.f32.gmra.mxu0 %v4742
  %v4764 = vpop.f32.mrf.mxu0
  %v4765 = vadd.f32 0.0, %v4764
  %4766 = vmatmul.f32.gmra.mxu0 %v4745
  %v4767 = vpop.f32.mrf.mxu0
  %v4768 = vadd.f32 0.0, %v4767
  %4769 = vdwg.mxu0
  %4770 = vmatpush.msra.mxu0 0.0
  %4771 = vmatpush.msra.mxu0 0.0
  %4772 = vmatpush.msra.mxu0 0.0
  %4773 = vmatpush.msra.mxu0 0.0
  %4774 = vmatpush.msra.mxu0 0.0
  %4775 = vmatpush.msra.mxu0 0.0
  %4776 = vmatpush.msra.mxu0 0.0
  %4777 = vmatpush.msra.mxu0 0.0
  %4778 = vmatpush.msra.mxu0 0.0
  %4779 = vmatpush.msra.mxu0 0.0
  %4780 = vmatpush.msra.mxu0 0.0
  %4781 = vmatpush.msra.mxu0 0.0
  %4782 = vmatpush.msra.mxu0 0.0
  %4783 = vmatpush.msra.mxu0 0.0
  %4784 = vmatpush.msra.mxu0 %v4737
  %4785 = vmatpush.msra.mxu0 %v4736
  %4786 = vmatmul.f32.gmra.mxu0 %v4742
  %v4787 = vpop.f32.mrf.mxu0
  %v4788 = vadd.f32 0.0, %v4787
  %4789 = vmatmul.f32.gmra.mxu0 %v4745
  %v4790 = vpop.f32.mrf.mxu0
  %v4791 = vadd.f32 0.0, %v4790
  %4792 = vdwg.mxu0
  %v4793 = vadd.f32 %v4718, %v4765
  %v4794 = vadd.f32 %v4719, %v4768
  %v4795 = vadd.f32 %v4720, %v4788
  %v4796 = vadd.f32 %v4721, %v4791
  %4797 = vrot.lane.b32.xlu0 %v4363, 120
  %v4798 = vpop.permute.xlu0 %4797
  %4799 = vrot.lane.b32.xlu0 %v4364, 120
  %v4800 = vpop.permute.xlu0 %4799
  %4801 = vrot.lane.b32.xlu0 %v4365, 120
  %v4802 = vpop.permute.xlu0 %4801
  %4803 = vrot.lane.b32.xlu0 %v4366, 120
  %v4804 = vpop.permute.xlu0 %4803
  %v4809 = vsel %vm4368, %v4798, 0.0
  %v4810 = vsel %vm4368, %v4800, 0.0
  %v4811 = vsel %vm4368, %v4802, 0.0
  %v4812 = vsel %vm4368, %v4804, 0.0
  %s4813 = scalar_lea.vmem %s1, 672
  %v4814 = vld [vmem:[%s4813] sm:$0xff]
  %v4815 = vld [vmem:[%s4813 + $0x8] sm:$0xff]
  %v4817 = vsel %vm142, %v4814, 0
  %v4820 = vsel %vm142, %v4815, 0
  %4822 = vmatpush.msra.mxu0 0.0
  %4823 = vmatpush.msra.mxu0 0.0
  %4824 = vmatpush.msra.mxu0 0.0
  %4825 = vmatpush.msra.mxu0 0.0
  %4826 = vmatpush.msra.mxu0 0.0
  %4827 = vmatpush.msra.mxu0 0.0
  %4828 = vmatpush.msra.mxu0 0.0
  %4829 = vmatpush.msra.mxu0 0.0
  %4830 = vmatpush.msra.mxu0 0.0
  %4831 = vmatpush.msra.mxu0 0.0
  %4832 = vmatpush.msra.mxu0 0.0
  %4833 = vmatpush.msra.mxu0 0.0
  %4834 = vmatpush.msra.mxu0 0.0
  %4835 = vmatpush.msra.mxu0 0.0
  %4836 = vmatpush.msra.mxu0 %v4810
  %4837 = vmatpush.msra.mxu0 %v4809
  %4838 = vmatmul.f32.gmra.mxu0 %v4817
  %v4839 = vpop.f32.mrf.mxu0
  %v4840 = vadd.f32 0.0, %v4839
  %4841 = vmatmul.f32.gmra.mxu0 %v4820
  %v4842 = vpop.f32.mrf.mxu0
  %v4843 = vadd.f32 0.0, %v4842
  %4844 = vdwg.mxu0
  %4845 = vmatpush.msra.mxu0 0.0
  %4846 = vmatpush.msra.mxu0 0.0
  %4847 = vmatpush.msra.mxu0 0.0
  %4848 = vmatpush.msra.mxu0 0.0
  %4849 = vmatpush.msra.mxu0 0.0
  %4850 = vmatpush.msra.mxu0 0.0
  %4851 = vmatpush.msra.mxu0 0.0
  %4852 = vmatpush.msra.mxu0 0.0
  %4853 = vmatpush.msra.mxu0 0.0
  %4854 = vmatpush.msra.mxu0 0.0
  %4855 = vmatpush.msra.mxu0 0.0
  %4856 = vmatpush.msra.mxu0 0.0
  %4857 = vmatpush.msra.mxu0 0.0
  %4858 = vmatpush.msra.mxu0 0.0
  %4859 = vmatpush.msra.mxu0 %v4812
  %4860 = vmatpush.msra.mxu0 %v4811
  %4861 = vmatmul.f32.gmra.mxu0 %v4817
  %v4862 = vpop.f32.mrf.mxu0
  %v4863 = vadd.f32 0.0, %v4862
  %4864 = vmatmul.f32.gmra.mxu0 %v4820
  %v4865 = vpop.f32.mrf.mxu0
  %v4866 = vadd.f32 0.0, %v4865
  %4867 = vdwg.mxu0
  %v4868 = vadd.f32 %v4793, %v4840
  %v4869 = vadd.f32 %v4794, %v4843
  %v4870 = vadd.f32 %v4795, %v4863
  %v4871 = vadd.f32 %v4796, %v4866
  %s4872 = scalar_lea.vmem %s1, 688
  %v4873 = vld [vmem:[%s4872] sm:$0xff]
  %v4874 = vld [vmem:[%s4872 + $0x8] sm:$0xff]
  %4875 = vrot.lane.b32.xlu0 %v4363, 119
  %v4876 = vpop.permute.xlu0 %4875
  %4877 = vrot.lane.b32.xlu0 %v4364, 119
  %v4878 = vpop.permute.xlu0 %4877
  %v4882 = vsel %vm142, %v4873, 0
  %v4885 = vsel %vm142, %v4874, 0
  %4887 = vmatpush.msra.mxu0 0.0
  %4888 = vmatpush.msra.mxu0 0.0
  %4889 = vmatpush.msra.mxu0 0.0
  %4890 = vmatpush.msra.mxu0 0.0
  %4891 = vmatpush.msra.mxu0 0.0
  %4892 = vmatpush.msra.mxu0 0.0
  %4893 = vmatpush.msra.mxu0 0.0
  %4894 = vmatpush.msra.mxu0 0.0
  %4895 = vmatpush.msra.mxu0 0.0
  %4896 = vmatpush.msra.mxu0 0.0
  %4897 = vmatpush.msra.mxu0 0.0
  %4898 = vmatpush.msra.mxu0 0.0
  %4899 = vmatpush.msra.mxu0 0.0
  %4900 = vmatpush.msra.mxu0 0.0
  %4901 = vmatpush.msra.mxu0 %v4878
  %4902 = vmatpush.msra.mxu0 %v4876
  %4903 = vmatmul.f32.gmra.mxu0 %v4882
  %v4904 = vpop.f32.mrf.mxu0
  %v4905 = vadd.f32 0.0, %v4904
  %4906 = vmatmul.f32.gmra.mxu0 %v4885
  %v4907 = vpop.f32.mrf.mxu0
  %v4908 = vadd.f32 0.0, %v4907
  %4909 = vdwg.mxu0
  %4910 = vrot.lane.b32.xlu0 %v4365, 119
  %v4911 = vpop.permute.xlu0 %4910
  %4912 = vrot.lane.b32.xlu0 %v4366, 119
  %v4913 = vpop.permute.xlu0 %4912
  %4916 = vmatpush.msra.mxu0 0.0
  %4917 = vmatpush.msra.mxu0 0.0
  %4918 = vmatpush.msra.mxu0 0.0
  %4919 = vmatpush.msra.mxu0 0.0
  %4920 = vmatpush.msra.mxu0 0.0
  %4921 = vmatpush.msra.mxu0 0.0
  %4922 = vmatpush.msra.mxu0 0.0
  %4923 = vmatpush.msra.mxu0 0.0
  %4924 = vmatpush.msra.mxu0 0.0
  %4925 = vmatpush.msra.mxu0 0.0
  %4926 = vmatpush.msra.mxu0 0.0
  %4927 = vmatpush.msra.mxu0 0.0
  %4928 = vmatpush.msra.mxu0 0.0
  %4929 = vmatpush.msra.mxu0 0.0
  %4930 = vmatpush.msra.mxu0 %v4913
  %4931 = vmatpush.msra.mxu0 %v4911
  %4932 = vmatmul.f32.gmra.mxu0 %v4882
  %v4933 = vpop.f32.mrf.mxu0
  %v4934 = vadd.f32 0.0, %v4933
  %4935 = vmatmul.f32.gmra.mxu0 %v4885
  %v4936 = vpop.f32.mrf.mxu0
  %v4937 = vadd.f32 0.0, %v4936
  %4938 = vdwg.mxu0
  %v4939 = vadd.f32 %v4868, %v4905
  %v4940 = vadd.f32 %v4869, %v4908
  %v4941 = vadd.f32 %v4870, %v4934
  %v4942 = vadd.f32 %v4871, %v4937
  %4943 = vrot.lane.b32.xlu0 %v4363, 118
  %v4944 = vpop.permute.xlu0 %4943
  %4945 = vrot.lane.b32.xlu0 %v4364, 118
  %v4946 = vpop.permute.xlu0 %4945
  %4947 = vrot.lane.b32.xlu0 %v4365, 118
  %v4948 = vpop.permute.xlu0 %4947
  %4949 = vrot.lane.b32.xlu0 %v4366, 118
  %v4950 = vpop.permute.xlu0 %4949
  %v4955 = vsel %vm4500, %v4944, 0.0
  %v4956 = vsel %vm4500, %v4946, 0.0
  %v4957 = vsel %vm4500, %v4948, 0.0
  %v4958 = vsel %vm4500, %v4950, 0.0
  %s4959 = scalar_lea.vmem %s1, 704
  %v4960 = vld [vmem:[%s4959] sm:$0xff]
  %v4961 = vld [vmem:[%s4959 + $0x8] sm:$0xff]
  %v4963 = vsel %vm142, %v4960, 0
  %v4966 = vsel %vm142, %v4961, 0
  %4968 = vmatpush.msra.mxu0 0.0
  %4969 = vmatpush.msra.mxu0 0.0
  %4970 = vmatpush.msra.mxu0 0.0
  %4971 = vmatpush.msra.mxu0 0.0
  %4972 = vmatpush.msra.mxu0 0.0
  %4973 = vmatpush.msra.mxu0 0.0
  %4974 = vmatpush.msra.mxu0 0.0
  %4975 = vmatpush.msra.mxu0 0.0
  %4976 = vmatpush.msra.mxu0 0.0
  %4977 = vmatpush.msra.mxu0 0.0
  %4978 = vmatpush.msra.mxu0 0.0
  %4979 = vmatpush.msra.mxu0 0.0
  %4980 = vmatpush.msra.mxu0 0.0
  %4981 = vmatpush.msra.mxu0 0.0
  %4982 = vmatpush.msra.mxu0 %v4956
  %4983 = vmatpush.msra.mxu0 %v4955
  %4984 = vmatmul.f32.gmra.mxu0 %v4963
  %v4985 = vpop.f32.mrf.mxu0
  %v4986 = vadd.f32 0.0, %v4985
  %4987 = vmatmul.f32.gmra.mxu0 %v4966
  %v4988 = vpop.f32.mrf.mxu0
  %v4989 = vadd.f32 0.0, %v4988
  %4990 = vdwg.mxu0
  %4991 = vmatpush.msra.mxu0 0.0
  %4992 = vmatpush.msra.mxu0 0.0
  %4993 = vmatpush.msra.mxu0 0.0
  %4994 = vmatpush.msra.mxu0 0.0
  %4995 = vmatpush.msra.mxu0 0.0
  %4996 = vmatpush.msra.mxu0 0.0
  %4997 = vmatpush.msra.mxu0 0.0
  %4998 = vmatpush.msra.mxu0 0.0
  %4999 = vmatpush.msra.mxu0 0.0
  %5000 = vmatpush.msra.mxu0 0.0
  %5001 = vmatpush.msra.mxu0 0.0
  %5002 = vmatpush.msra.mxu0 0.0
  %5003 = vmatpush.msra.mxu0 0.0
  %5004 = vmatpush.msra.mxu0 0.0
  %5005 = vmatpush.msra.mxu0 %v4958
  %5006 = vmatpush.msra.mxu0 %v4957
  %5007 = vmatmul.f32.gmra.mxu0 %v4963
  %v5008 = vpop.f32.mrf.mxu0
  %v5009 = vadd.f32 0.0, %v5008
  %5010 = vmatmul.f32.gmra.mxu0 %v4966
  %v5011 = vpop.f32.mrf.mxu0
  %v5012 = vadd.f32 0.0, %v5011
  %5013 = vdwg.mxu0
  %v5014 = vadd.f32 %v4939, %v4986
  %v5015 = vadd.f32 %v4940, %v4989
  %v5016 = vadd.f32 %v4941, %v5009
  %v5017 = vadd.f32 %v4942, %v5012
  %s5018 = scalar_lea.vmem %s2, 64
  %v5019 = vld [vmem:[%s5018] sm:$0xff]
  %v5020 = vld [vmem:[%s5018 + $0x8] sm:$0xff]
  %5022 = vset.pattern.permute.xlu0 0
  %5023 = vperm.xlu0 %5022, %v5019
  %v5024 = vpop.permute.xlu0 %5023
  %5027 = vset.pattern.permute.xlu0 0
  %5028 = vperm.xlu0 %5027, %v5020
  %v5029 = vpop.permute.xlu0 %5028
  %v5031 = vadd.f32 %v5014, %v5024
  %v5032 = vadd.f32 %v5015, %v5029
  %v5033 = vadd.f32 %v5016, %v5024
  %v5034 = vadd.f32 %v5017, %v5029
  %v5035 = vmax.f32 %v5031, 0.0
  %v5036 = vmax.f32 %v5032, 0.0
  %v5037 = vmax.f32 %v5033, 0.0
  %v5038 = vmax.f32 %v5034, 0.0
  %5043 = vrot.lane.b32.xlu0 %v5035, 5
  %v5044 = vpop.permute.xlu0 %5043
  %5045 = vrot.lane.b32.xlu0 %v5036, 5
  %v5046 = vpop.permute.xlu0 %5045
  %5047 = vrot.lane.b32.xlu0 %v5037, 5
  %v5048 = vpop.permute.xlu0 %5047
  %5049 = vrot.lane.b32.xlu0 %v5038, 5
  %v5050 = vpop.permute.xlu0 %5049
  %v5055 = vsel %vm4357, 0.0, %v5044
  %v5056 = vsel %vm4357, 0.0, %v5046
  %v5057 = vsel %vm4357, 0.0, %v5048
  %v5058 = vsel %vm4357, 0.0, %v5050
  %v5059 = vsel %vm4362, %v5055, 0.0
  %v5060 = vsel %vm4362, %v5056, 0.0
  %v5061 = vsel %vm4362, %v5057, 0.0
  %v5062 = vsel %vm4362, %v5058, 0.0
  %v5063 = vsel %vm4368, %v5059, 0.0
  %v5064 = vsel %vm4368, %v5060, 0.0
  %v5065 = vsel %vm4368, %v5061, 0.0
  %v5066 = vsel %vm4368, %v5062, 0.0
  %s5067 = scalar_lea.vmem %s1, 720
  %v5068 = vld [vmem:[%s5067] sm:$0xff]
  %v5069 = vld [vmem:[%s5067 + $0x8] sm:$0xff]
  %s5070 = scalar_lea.vmem %s1, 736
  %v5071 = vld [vmem:[%s5070] sm:$0xff]
  %v5072 = vld [vmem:[%s5070 + $0x8] sm:$0xff]
  %5075 = vrot.lane.b32.xlu0 %v5059, 127
  %v5076 = vpop.permute.xlu0 %5075
  %5077 = vrot.lane.b32.xlu0 %v5060, 127
  %v5078 = vpop.permute.xlu0 %5077
  %v5082 = vsel %vm142, %v5071, 0
  %v5085 = vsel %vm142, %v5072, 0
  %5087 = vmatpush.msra.mxu0 0.0
  %5088 = vmatpush.msra.mxu0 0.0
  %5089 = vmatpush.msra.mxu0 0.0
  %5090 = vmatpush.msra.mxu0 0.0
  %5091 = vmatpush.msra.mxu0 0.0
  %5092 = vmatpush.msra.mxu0 0.0
  %5093 = vmatpush.msra.mxu0 0.0
  %5094 = vmatpush.msra.mxu0 0.0
  %5095 = vmatpush.msra.mxu0 0.0
  %5096 = vmatpush.msra.mxu0 0.0
  %5097 = vmatpush.msra.mxu0 0.0
  %5098 = vmatpush.msra.mxu0 0.0
  %5099 = vmatpush.msra.mxu0 0.0
  %5100 = vmatpush.msra.mxu0 0.0
  %5101 = vmatpush.msra.mxu0 %v5078
  %5102 = vmatpush.msra.mxu0 %v5076
  %5103 = vmatmul.f32.gmra.mxu0 %v5082
  %v5104 = vpop.f32.mrf.mxu0
  %v5105 = vadd.f32 0.0, %v5104
  %5106 = vmatmul.f32.gmra.mxu0 %v5085
  %v5107 = vpop.f32.mrf.mxu0
  %v5108 = vadd.f32 0.0, %v5107
  %5109 = vdwg.mxu0
  %5112 = vrot.lane.b32.xlu0 %v5061, 127
  %v5113 = vpop.permute.xlu0 %5112
  %5114 = vrot.lane.b32.xlu0 %v5062, 127
  %v5115 = vpop.permute.xlu0 %5114
  %5118 = vmatpush.msra.mxu0 0.0
  %5119 = vmatpush.msra.mxu0 0.0
  %5120 = vmatpush.msra.mxu0 0.0
  %5121 = vmatpush.msra.mxu0 0.0
  %5122 = vmatpush.msra.mxu0 0.0
  %5123 = vmatpush.msra.mxu0 0.0
  %5124 = vmatpush.msra.mxu0 0.0
  %5125 = vmatpush.msra.mxu0 0.0
  %5126 = vmatpush.msra.mxu0 0.0
  %5127 = vmatpush.msra.mxu0 0.0
  %5128 = vmatpush.msra.mxu0 0.0
  %5129 = vmatpush.msra.mxu0 0.0
  %5130 = vmatpush.msra.mxu0 0.0
  %5131 = vmatpush.msra.mxu0 0.0
  %5132 = vmatpush.msra.mxu0 %v5115
  %5133 = vmatpush.msra.mxu0 %v5113
  %5134 = vmatmul.f32.gmra.mxu0 %v5082
  %v5135 = vpop.f32.mrf.mxu0
  %v5136 = vadd.f32 0.0, %v5135
  %5137 = vmatmul.f32.gmra.mxu0 %v5085
  %v5138 = vpop.f32.mrf.mxu0
  %v5139 = vadd.f32 0.0, %v5138
  %5140 = vdwg.mxu0
  %v5142 = vsel %vm142, %v5068, 0
  %v5145 = vsel %vm142, %v5069, 0
  %5147 = vmatpush.msra.mxu0 0.0
  %5148 = vmatpush.msra.mxu0 0.0
  %5149 = vmatpush.msra.mxu0 0.0
  %5150 = vmatpush.msra.mxu0 0.0
  %5151 = vmatpush.msra.mxu0 0.0
  %5152 = vmatpush.msra.mxu0 0.0
  %5153 = vmatpush.msra.mxu0 0.0
  %5154 = vmatpush.msra.mxu0 0.0
  %5155 = vmatpush.msra.mxu0 0.0
  %5156 = vmatpush.msra.mxu0 0.0
  %5157 = vmatpush.msra.mxu0 0.0
  %5158 = vmatpush.msra.mxu0 0.0
  %5159 = vmatpush.msra.mxu0 0.0
  %5160 = vmatpush.msra.mxu0 0.0
  %5161 = vmatpush.msra.mxu0 %v5064
  %5162 = vmatpush.msra.mxu0 %v5063
  %5163 = vmatmul.f32.gmra.mxu0 %v5142
  %v5164 = vpop.f32.mrf.mxu0
  %v5165 = vadd.f32 %v5105, %v5164
  %5166 = vmatmul.f32.gmra.mxu0 %v5145
  %v5167 = vpop.f32.mrf.mxu0
  %v5168 = vadd.f32 %v5108, %v5167
  %5169 = vdwg.mxu0
  %5170 = vmatpush.msra.mxu0 0.0
  %5171 = vmatpush.msra.mxu0 0.0
  %5172 = vmatpush.msra.mxu0 0.0
  %5173 = vmatpush.msra.mxu0 0.0
  %5174 = vmatpush.msra.mxu0 0.0
  %5175 = vmatpush.msra.mxu0 0.0
  %5176 = vmatpush.msra.mxu0 0.0
  %5177 = vmatpush.msra.mxu0 0.0
  %5178 = vmatpush.msra.mxu0 0.0
  %5179 = vmatpush.msra.mxu0 0.0
  %5180 = vmatpush.msra.mxu0 0.0
  %5181 = vmatpush.msra.mxu0 0.0
  %5182 = vmatpush.msra.mxu0 0.0
  %5183 = vmatpush.msra.mxu0 0.0
  %5184 = vmatpush.msra.mxu0 %v5066
  %5185 = vmatpush.msra.mxu0 %v5065
  %5186 = vmatmul.f32.gmra.mxu0 %v5142
  %v5187 = vpop.f32.mrf.mxu0
  %v5188 = vadd.f32 %v5136, %v5187
  %5189 = vmatmul.f32.gmra.mxu0 %v5145
  %v5190 = vpop.f32.mrf.mxu0
  %v5191 = vadd.f32 %v5139, %v5190
  %5192 = vdwg.mxu0
  %5193 = vrot.lane.b32.xlu0 %v5059, 126
  %v5194 = vpop.permute.xlu0 %5193
  %5195 = vrot.lane.b32.xlu0 %v5060, 126
  %v5196 = vpop.permute.xlu0 %5195
  %5197 = vrot.lane.b32.xlu0 %v5061, 126
  %v5198 = vpop.permute.xlu0 %5197
  %5199 = vrot.lane.b32.xlu0 %v5062, 126
  %v5200 = vpop.permute.xlu0 %5199
  %v5205 = vsel %vm4500, %v5194, 0.0
  %v5206 = vsel %vm4500, %v5196, 0.0
  %v5207 = vsel %vm4500, %v5198, 0.0
  %v5208 = vsel %vm4500, %v5200, 0.0
  %s5209 = scalar_lea.vmem %s1, 752
  %v5210 = vld [vmem:[%s5209] sm:$0xff]
  %v5211 = vld [vmem:[%s5209 + $0x8] sm:$0xff]
  %v5213 = vsel %vm142, %v5210, 0
  %v5216 = vsel %vm142, %v5211, 0
  %5218 = vmatpush.msra.mxu0 0.0
  %5219 = vmatpush.msra.mxu0 0.0
  %5220 = vmatpush.msra.mxu0 0.0
  %5221 = vmatpush.msra.mxu0 0.0
  %5222 = vmatpush.msra.mxu0 0.0
  %5223 = vmatpush.msra.mxu0 0.0
  %5224 = vmatpush.msra.mxu0 0.0
  %5225 = vmatpush.msra.mxu0 0.0
  %5226 = vmatpush.msra.mxu0 0.0
  %5227 = vmatpush.msra.mxu0 0.0
  %5228 = vmatpush.msra.mxu0 0.0
  %5229 = vmatpush.msra.mxu0 0.0
  %5230 = vmatpush.msra.mxu0 0.0
  %5231 = vmatpush.msra.mxu0 0.0
  %5232 = vmatpush.msra.mxu0 %v5206
  %5233 = vmatpush.msra.mxu0 %v5205
  %5234 = vmatmul.f32.gmra.mxu0 %v5213
  %v5235 = vpop.f32.mrf.mxu0
  %v5236 = vadd.f32 0.0, %v5235
  %5237 = vmatmul.f32.gmra.mxu0 %v5216
  %v5238 = vpop.f32.mrf.mxu0
  %v5239 = vadd.f32 0.0, %v5238
  %5240 = vdwg.mxu0
  %5241 = vmatpush.msra.mxu0 0.0
  %5242 = vmatpush.msra.mxu0 0.0
  %5243 = vmatpush.msra.mxu0 0.0
  %5244 = vmatpush.msra.mxu0 0.0
  %5245 = vmatpush.msra.mxu0 0.0
  %5246 = vmatpush.msra.mxu0 0.0
  %5247 = vmatpush.msra.mxu0 0.0
  %5248 = vmatpush.msra.mxu0 0.0
  %5249 = vmatpush.msra.mxu0 0.0
  %5250 = vmatpush.msra.mxu0 0.0
  %5251 = vmatpush.msra.mxu0 0.0
  %5252 = vmatpush.msra.mxu0 0.0
  %5253 = vmatpush.msra.mxu0 0.0
  %5254 = vmatpush.msra.mxu0 0.0
  %5255 = vmatpush.msra.mxu0 %v5208
  %5256 = vmatpush.msra.mxu0 %v5207
  %5257 = vmatmul.f32.gmra.mxu0 %v5213
  %v5258 = vpop.f32.mrf.mxu0
  %v5259 = vadd.f32 0.0, %v5258
  %5260 = vmatmul.f32.gmra.mxu0 %v5216
  %v5261 = vpop.f32.mrf.mxu0
  %v5262 = vadd.f32 0.0, %v5261
  %5263 = vdwg.mxu0
  %v5264 = vadd.f32 %v5165, %v5236
  %v5265 = vadd.f32 %v5168, %v5239
  %v5266 = vadd.f32 %v5188, %v5259
  %v5267 = vadd.f32 %v5191, %v5262
  %5268 = vrot.lane.b32.xlu0 %v5059, 124
  %v5269 = vpop.permute.xlu0 %5268
  %5270 = vrot.lane.b32.xlu0 %v5060, 124
  %v5271 = vpop.permute.xlu0 %5270
  %5272 = vrot.lane.b32.xlu0 %v5061, 124
  %v5273 = vpop.permute.xlu0 %5272
  %5274 = vrot.lane.b32.xlu0 %v5062, 124
  %v5275 = vpop.permute.xlu0 %5274
  %v5280 = vsel %vm4368, %v5269, 0.0
  %v5281 = vsel %vm4368, %v5271, 0.0
  %v5282 = vsel %vm4368, %v5273, 0.0
  %v5283 = vsel %vm4368, %v5275, 0.0
  %s5284 = scalar_lea.vmem %s1, 768
  %v5285 = vld [vmem:[%s5284] sm:$0xff]
  %v5286 = vld [vmem:[%s5284 + $0x8] sm:$0xff]
  %v5288 = vsel %vm142, %v5285, 0
  %v5291 = vsel %vm142, %v5286, 0
  %5293 = vmatpush.msra.mxu0 0.0
  %5294 = vmatpush.msra.mxu0 0.0
  %5295 = vmatpush.msra.mxu0 0.0
  %5296 = vmatpush.msra.mxu0 0.0
  %5297 = vmatpush.msra.mxu0 0.0
  %5298 = vmatpush.msra.mxu0 0.0
  %5299 = vmatpush.msra.mxu0 0.0
  %5300 = vmatpush.msra.mxu0 0.0
  %5301 = vmatpush.msra.mxu0 0.0
  %5302 = vmatpush.msra.mxu0 0.0
  %5303 = vmatpush.msra.mxu0 0.0
  %5304 = vmatpush.msra.mxu0 0.0
  %5305 = vmatpush.msra.mxu0 0.0
  %5306 = vmatpush.msra.mxu0 0.0
  %5307 = vmatpush.msra.mxu0 %v5281
  %5308 = vmatpush.msra.mxu0 %v5280
  %5309 = vmatmul.f32.gmra.mxu0 %v5288
  %v5310 = vpop.f32.mrf.mxu0
  %v5311 = vadd.f32 0.0, %v5310
  %5312 = vmatmul.f32.gmra.mxu0 %v5291
  %v5313 = vpop.f32.mrf.mxu0
  %v5314 = vadd.f32 0.0, %v5313
  %5315 = vdwg.mxu0
  %5316 = vmatpush.msra.mxu0 0.0
  %5317 = vmatpush.msra.mxu0 0.0
  %5318 = vmatpush.msra.mxu0 0.0
  %5319 = vmatpush.msra.mxu0 0.0
  %5320 = vmatpush.msra.mxu0 0.0
  %5321 = vmatpush.msra.mxu0 0.0
  %5322 = vmatpush.msra.mxu0 0.0
  %5323 = vmatpush.msra.mxu0 0.0
  %5324 = vmatpush.msra.mxu0 0.0
  %5325 = vmatpush.msra.mxu0 0.0
  %5326 = vmatpush.msra.mxu0 0.0
  %5327 = vmatpush.msra.mxu0 0.0
  %5328 = vmatpush.msra.mxu0 0.0
  %5329 = vmatpush.msra.mxu0 0.0
  %5330 = vmatpush.msra.mxu0 %v5283
  %5331 = vmatpush.msra.mxu0 %v5282
  %5332 = vmatmul.f32.gmra.mxu0 %v5288
  %v5333 = vpop.f32.mrf.mxu0
  %v5334 = vadd.f32 0.0, %v5333
  %5335 = vmatmul.f32.gmra.mxu0 %v5291
  %v5336 = vpop.f32.mrf.mxu0
  %v5337 = vadd.f32 0.0, %v5336
  %5338 = vdwg.mxu0
  %v5339 = vadd.f32 %v5264, %v5311
  %v5340 = vadd.f32 %v5265, %v5314
  %v5341 = vadd.f32 %v5266, %v5334
  %v5342 = vadd.f32 %v5267, %v5337
  %s5343 = scalar_lea.vmem %s1, 784
  %v5344 = vld [vmem:[%s5343] sm:$0xff]
  %v5345 = vld [vmem:[%s5343 + $0x8] sm:$0xff]
  %5346 = vrot.lane.b32.xlu0 %v5059, 123
  %v5347 = vpop.permute.xlu0 %5346
  %5348 = vrot.lane.b32.xlu0 %v5060, 123
  %v5349 = vpop.permute.xlu0 %5348
  %v5353 = vsel %vm142, %v5344, 0
  %v5356 = vsel %vm142, %v5345, 0
  %5358 = vmatpush.msra.mxu0 0.0
  %5359 = vmatpush.msra.mxu0 0.0
  %5360 = vmatpush.msra.mxu0 0.0
  %5361 = vmatpush.msra.mxu0 0.0
  %5362 = vmatpush.msra.mxu0 0.0
  %5363 = vmatpush.msra.mxu0 0.0
  %5364 = vmatpush.msra.mxu0 0.0
  %5365 = vmatpush.msra.mxu0 0.0
  %5366 = vmatpush.msra.mxu0 0.0
  %5367 = vmatpush.msra.mxu0 0.0
  %5368 = vmatpush.msra.mxu0 0.0
  %5369 = vmatpush.msra.mxu0 0.0
  %5370 = vmatpush.msra.mxu0 0.0
  %5371 = vmatpush.msra.mxu0 0.0
  %5372 = vmatpush.msra.mxu0 %v5349
  %5373 = vmatpush.msra.mxu0 %v5347
  %5374 = vmatmul.f32.gmra.mxu0 %v5353
  %v5375 = vpop.f32.mrf.mxu0
  %v5376 = vadd.f32 0.0, %v5375
  %5377 = vmatmul.f32.gmra.mxu0 %v5356
  %v5378 = vpop.f32.mrf.mxu0
  %v5379 = vadd.f32 0.0, %v5378
  %5380 = vdwg.mxu0
  %5381 = vrot.lane.b32.xlu0 %v5061, 123
  %v5382 = vpop.permute.xlu0 %5381
  %5383 = vrot.lane.b32.xlu0 %v5062, 123
  %v5384 = vpop.permute.xlu0 %5383
  %5387 = vmatpush.msra.mxu0 0.0
  %5388 = vmatpush.msra.mxu0 0.0
  %5389 = vmatpush.msra.mxu0 0.0
  %5390 = vmatpush.msra.mxu0 0.0
  %5391 = vmatpush.msra.mxu0 0.0
  %5392 = vmatpush.msra.mxu0 0.0
  %5393 = vmatpush.msra.mxu0 0.0
  %5394 = vmatpush.msra.mxu0 0.0
  %5395 = vmatpush.msra.mxu0 0.0
  %5396 = vmatpush.msra.mxu0 0.0
  %5397 = vmatpush.msra.mxu0 0.0
  %5398 = vmatpush.msra.mxu0 0.0
  %5399 = vmatpush.msra.mxu0 0.0
  %5400 = vmatpush.msra.mxu0 0.0
  %5401 = vmatpush.msra.mxu0 %v5384
  %5402 = vmatpush.msra.mxu0 %v5382
  %5403 = vmatmul.f32.gmra.mxu0 %v5353
  %v5404 = vpop.f32.mrf.mxu0
  %v5405 = vadd.f32 0.0, %v5404
  %5406 = vmatmul.f32.gmra.mxu0 %v5356
  %v5407 = vpop.f32.mrf.mxu0
  %v5408 = vadd.f32 0.0, %v5407
  %5409 = vdwg.mxu0
  %v5410 = vadd.f32 %v5339, %v5376
  %v5411 = vadd.f32 %v5340, %v5379
  %v5412 = vadd.f32 %v5341, %v5405
  %v5413 = vadd.f32 %v5342, %v5408
  %5414 = vrot.lane.b32.xlu0 %v5059, 122
  %v5415 = vpop.permute.xlu0 %5414
  %5416 = vrot.lane.b32.xlu0 %v5060, 122
  %v5417 = vpop.permute.xlu0 %5416
  %5418 = vrot.lane.b32.xlu0 %v5061, 122
  %v5419 = vpop.permute.xlu0 %5418
  %5420 = vrot.lane.b32.xlu0 %v5062, 122
  %v5421 = vpop.permute.xlu0 %5420
  %v5426 = vsel %vm4500, %v5415, 0.0
  %v5427 = vsel %vm4500, %v5417, 0.0
  %v5428 = vsel %vm4500, %v5419, 0.0
  %v5429 = vsel %vm4500, %v5421, 0.0
  %s5430 = scalar_lea.vmem %s1, 800
  %v5431 = vld [vmem:[%s5430] sm:$0xff]
  %v5432 = vld [vmem:[%s5430 + $0x8] sm:$0xff]
  %v5434 = vsel %vm142, %v5431, 0
  %v5437 = vsel %vm142, %v5432, 0
  %5439 = vmatpush.msra.mxu0 0.0
  %5440 = vmatpush.msra.mxu0 0.0
  %5441 = vmatpush.msra.mxu0 0.0
  %5442 = vmatpush.msra.mxu0 0.0
  %5443 = vmatpush.msra.mxu0 0.0
  %5444 = vmatpush.msra.mxu0 0.0
  %5445 = vmatpush.msra.mxu0 0.0
  %5446 = vmatpush.msra.mxu0 0.0
  %5447 = vmatpush.msra.mxu0 0.0
  %5448 = vmatpush.msra.mxu0 0.0
  %5449 = vmatpush.msra.mxu0 0.0
  %5450 = vmatpush.msra.mxu0 0.0
  %5451 = vmatpush.msra.mxu0 0.0
  %5452 = vmatpush.msra.mxu0 0.0
  %5453 = vmatpush.msra.mxu0 %v5427
  %5454 = vmatpush.msra.mxu0 %v5426
  %5455 = vmatmul.f32.gmra.mxu0 %v5434
  %v5456 = vpop.f32.mrf.mxu0
  %v5457 = vadd.f32 0.0, %v5456
  %5458 = vmatmul.f32.gmra.mxu0 %v5437
  %v5459 = vpop.f32.mrf.mxu0
  %v5460 = vadd.f32 0.0, %v5459
  %5461 = vdwg.mxu0
  %5462 = vmatpush.msra.mxu0 0.0
  %5463 = vmatpush.msra.mxu0 0.0
  %5464 = vmatpush.msra.mxu0 0.0
  %5465 = vmatpush.msra.mxu0 0.0
  %5466 = vmatpush.msra.mxu0 0.0
  %5467 = vmatpush.msra.mxu0 0.0
  %5468 = vmatpush.msra.mxu0 0.0
  %5469 = vmatpush.msra.mxu0 0.0
  %5470 = vmatpush.msra.mxu0 0.0
  %5471 = vmatpush.msra.mxu0 0.0
  %5472 = vmatpush.msra.mxu0 0.0
  %5473 = vmatpush.msra.mxu0 0.0
  %5474 = vmatpush.msra.mxu0 0.0
  %5475 = vmatpush.msra.mxu0 0.0
  %5476 = vmatpush.msra.mxu0 %v5429
  %5477 = vmatpush.msra.mxu0 %v5428
  %5478 = vmatmul.f32.gmra.mxu0 %v5434
  %v5479 = vpop.f32.mrf.mxu0
  %v5480 = vadd.f32 0.0, %v5479
  %5481 = vmatmul.f32.gmra.mxu0 %v5437
  %v5482 = vpop.f32.mrf.mxu0
  %v5483 = vadd.f32 0.0, %v5482
  %5484 = vdwg.mxu0
  %v5485 = vadd.f32 %v5410, %v5457
  %v5486 = vadd.f32 %v5411, %v5460
  %v5487 = vadd.f32 %v5412, %v5480
  %v5488 = vadd.f32 %v5413, %v5483
  %5489 = vrot.lane.b32.xlu0 %v5059, 120
  %v5490 = vpop.permute.xlu0 %5489
  %5491 = vrot.lane.b32.xlu0 %v5060, 120
  %v5492 = vpop.permute.xlu0 %5491
  %5493 = vrot.lane.b32.xlu0 %v5061, 120
  %v5494 = vpop.permute.xlu0 %5493
  %5495 = vrot.lane.b32.xlu0 %v5062, 120
  %v5496 = vpop.permute.xlu0 %5495
  %v5501 = vsel %vm4368, %v5490, 0.0
  %v5502 = vsel %vm4368, %v5492, 0.0
  %v5503 = vsel %vm4368, %v5494, 0.0
  %v5504 = vsel %vm4368, %v5496, 0.0
  %s5505 = scalar_lea.vmem %s1, 816
  %v5506 = vld [vmem:[%s5505] sm:$0xff]
  %v5507 = vld [vmem:[%s5505 + $0x8] sm:$0xff]
  %v5509 = vsel %vm142, %v5506, 0
  %v5512 = vsel %vm142, %v5507, 0
  %5514 = vmatpush.msra.mxu0 0.0
  %5515 = vmatpush.msra.mxu0 0.0
  %5516 = vmatpush.msra.mxu0 0.0
  %5517 = vmatpush.msra.mxu0 0.0
  %5518 = vmatpush.msra.mxu0 0.0
  %5519 = vmatpush.msra.mxu0 0.0
  %5520 = vmatpush.msra.mxu0 0.0
  %5521 = vmatpush.msra.mxu0 0.0
  %5522 = vmatpush.msra.mxu0 0.0
  %5523 = vmatpush.msra.mxu0 0.0
  %5524 = vmatpush.msra.mxu0 0.0
  %5525 = vmatpush.msra.mxu0 0.0
  %5526 = vmatpush.msra.mxu0 0.0
  %5527 = vmatpush.msra.mxu0 0.0
  %5528 = vmatpush.msra.mxu0 %v5502
  %5529 = vmatpush.msra.mxu0 %v5501
  %5530 = vmatmul.f32.gmra.mxu0 %v5509
  %v5531 = vpop.f32.mrf.mxu0
  %v5532 = vadd.f32 0.0, %v5531
  %5533 = vmatmul.f32.gmra.mxu0 %v5512
  %v5534 = vpop.f32.mrf.mxu0
  %v5535 = vadd.f32 0.0, %v5534
  %5536 = vdwg.mxu0
  %5537 = vmatpush.msra.mxu0 0.0
  %5538 = vmatpush.msra.mxu0 0.0
  %5539 = vmatpush.msra.mxu0 0.0
  %5540 = vmatpush.msra.mxu0 0.0
  %5541 = vmatpush.msra.mxu0 0.0
  %5542 = vmatpush.msra.mxu0 0.0
  %5543 = vmatpush.msra.mxu0 0.0
  %5544 = vmatpush.msra.mxu0 0.0
  %5545 = vmatpush.msra.mxu0 0.0
  %5546 = vmatpush.msra.mxu0 0.0
  %5547 = vmatpush.msra.mxu0 0.0
  %5548 = vmatpush.msra.mxu0 0.0
  %5549 = vmatpush.msra.mxu0 0.0
  %5550 = vmatpush.msra.mxu0 0.0
  %5551 = vmatpush.msra.mxu0 %v5504
  %5552 = vmatpush.msra.mxu0 %v5503
  %5553 = vmatmul.f32.gmra.mxu0 %v5509
  %v5554 = vpop.f32.mrf.mxu0
  %v5555 = vadd.f32 0.0, %v5554
  %5556 = vmatmul.f32.gmra.mxu0 %v5512
  %v5557 = vpop.f32.mrf.mxu0
  %v5558 = vadd.f32 0.0, %v5557
  %5559 = vdwg.mxu0
  %v5560 = vadd.f32 %v5485, %v5532
  %v5561 = vadd.f32 %v5486, %v5535
  %v5562 = vadd.f32 %v5487, %v5555
  %v5563 = vadd.f32 %v5488, %v5558
  %s5564 = scalar_lea.vmem %s1, 832
  %v5565 = vld [vmem:[%s5564] sm:$0xff]
  %v5566 = vld [vmem:[%s5564 + $0x8] sm:$0xff]
  %5567 = vrot.lane.b32.xlu0 %v5059, 119
  %v5568 = vpop.permute.xlu0 %5567
  %5569 = vrot.lane.b32.xlu0 %v5060, 119
  %v5570 = vpop.permute.xlu0 %5569
  %v5574 = vsel %vm142, %v5565, 0
  %v5577 = vsel %vm142, %v5566, 0
  %5579 = vmatpush.msra.mxu0 0.0
  %5580 = vmatpush.msra.mxu0 0.0
  %5581 = vmatpush.msra.mxu0 0.0
  %5582 = vmatpush.msra.mxu0 0.0
  %5583 = vmatpush.msra.mxu0 0.0
  %5584 = vmatpush.msra.mxu0 0.0
  %5585 = vmatpush.msra.mxu0 0.0
  %5586 = vmatpush.msra.mxu0 0.0
  %5587 = vmatpush.msra.mxu0 0.0
  %5588 = vmatpush.msra.mxu0 0.0
  %5589 = vmatpush.msra.mxu0 0.0
  %5590 = vmatpush.msra.mxu0 0.0
  %5591 = vmatpush.msra.mxu0 0.0
  %5592 = vmatpush.msra.mxu0 0.0
  %5593 = vmatpush.msra.mxu0 %v5570
  %5594 = vmatpush.msra.mxu0 %v5568
  %5595 = vmatmul.f32.gmra.mxu0 %v5574
  %v5596 = vpop.f32.mrf.mxu0
  %v5597 = vadd.f32 0.0, %v5596
  %5598 = vmatmul.f32.gmra.mxu0 %v5577
  %v5599 = vpop.f32.mrf.mxu0
  %v5600 = vadd.f32 0.0, %v5599
  %5601 = vdwg.mxu0
  %5602 = vrot.lane.b32.xlu0 %v5061, 119
  %v5603 = vpop.permute.xlu0 %5602
  %5604 = vrot.lane.b32.xlu0 %v5062, 119
  %v5605 = vpop.permute.xlu0 %5604
  %5608 = vmatpush.msra.mxu0 0.0
  %5609 = vmatpush.msra.mxu0 0.0
  %5610 = vmatpush.msra.mxu0 0.0
  %5611 = vmatpush.msra.mxu0 0.0
  %5612 = vmatpush.msra.mxu0 0.0
  %5613 = vmatpush.msra.mxu0 0.0
  %5614 = vmatpush.msra.mxu0 0.0
  %5615 = vmatpush.msra.mxu0 0.0
  %5616 = vmatpush.msra.mxu0 0.0
  %5617 = vmatpush.msra.mxu0 0.0
  %5618 = vmatpush.msra.mxu0 0.0
  %5619 = vmatpush.msra.mxu0 0.0
  %5620 = vmatpush.msra.mxu0 0.0
  %5621 = vmatpush.msra.mxu0 0.0
  %5622 = vmatpush.msra.mxu0 %v5605
  %5623 = vmatpush.msra.mxu0 %v5603
  %5624 = vmatmul.f32.gmra.mxu0 %v5574
  %v5625 = vpop.f32.mrf.mxu0
  %v5626 = vadd.f32 0.0, %v5625
  %5627 = vmatmul.f32.gmra.mxu0 %v5577
  %v5628 = vpop.f32.mrf.mxu0
  %v5629 = vadd.f32 0.0, %v5628
  %5630 = vdwg.mxu0
  %v5631 = vadd.f32 %v5560, %v5597
  %v5632 = vadd.f32 %v5561, %v5600
  %v5633 = vadd.f32 %v5562, %v5626
  %v5634 = vadd.f32 %v5563, %v5629
  %5635 = vrot.lane.b32.xlu0 %v5059, 118
  %v5636 = vpop.permute.xlu0 %5635
  %5637 = vrot.lane.b32.xlu0 %v5060, 118
  %v5638 = vpop.permute.xlu0 %5637
  %5639 = vrot.lane.b32.xlu0 %v5061, 118
  %v5640 = vpop.permute.xlu0 %5639
  %5641 = vrot.lane.b32.xlu0 %v5062, 118
  %v5642 = vpop.permute.xlu0 %5641
  %v5647 = vsel %vm4500, %v5636, 0.0
  %v5648 = vsel %vm4500, %v5638, 0.0
  %v5649 = vsel %vm4500, %v5640, 0.0
  %v5650 = vsel %vm4500, %v5642, 0.0
  %s5651 = scalar_lea.vmem %s1, 848
  %v5652 = vld [vmem:[%s5651] sm:$0xff]
  %v5653 = vld [vmem:[%s5651 + $0x8] sm:$0xff]
  %v5655 = vsel %vm142, %v5652, 0
  %v5658 = vsel %vm142, %v5653, 0
  %5660 = vmatpush.msra.mxu0 0.0
  %5661 = vmatpush.msra.mxu0 0.0
  %5662 = vmatpush.msra.mxu0 0.0
  %5663 = vmatpush.msra.mxu0 0.0
  %5664 = vmatpush.msra.mxu0 0.0
  %5665 = vmatpush.msra.mxu0 0.0
  %5666 = vmatpush.msra.mxu0 0.0
  %5667 = vmatpush.msra.mxu0 0.0
  %5668 = vmatpush.msra.mxu0 0.0
  %5669 = vmatpush.msra.mxu0 0.0
  %5670 = vmatpush.msra.mxu0 0.0
  %5671 = vmatpush.msra.mxu0 0.0
  %5672 = vmatpush.msra.mxu0 0.0
  %5673 = vmatpush.msra.mxu0 0.0
  %5674 = vmatpush.msra.mxu0 %v5648
  %5675 = vmatpush.msra.mxu0 %v5647
  %5676 = vmatmul.f32.gmra.mxu0 %v5655
  %v5677 = vpop.f32.mrf.mxu0
  %v5678 = vadd.f32 0.0, %v5677
  %5679 = vmatmul.f32.gmra.mxu0 %v5658
  %v5680 = vpop.f32.mrf.mxu0
  %v5681 = vadd.f32 0.0, %v5680
  %5682 = vdwg.mxu0
  %5683 = vmatpush.msra.mxu0 0.0
  %5684 = vmatpush.msra.mxu0 0.0
  %5685 = vmatpush.msra.mxu0 0.0
  %5686 = vmatpush.msra.mxu0 0.0
  %5687 = vmatpush.msra.mxu0 0.0
  %5688 = vmatpush.msra.mxu0 0.0
  %5689 = vmatpush.msra.mxu0 0.0
  %5690 = vmatpush.msra.mxu0 0.0
  %5691 = vmatpush.msra.mxu0 0.0
  %5692 = vmatpush.msra.mxu0 0.0
  %5693 = vmatpush.msra.mxu0 0.0
  %5694 = vmatpush.msra.mxu0 0.0
  %5695 = vmatpush.msra.mxu0 0.0
  %5696 = vmatpush.msra.mxu0 0.0
  %5697 = vmatpush.msra.mxu0 %v5650
  %5698 = vmatpush.msra.mxu0 %v5649
  %5699 = vmatmul.f32.gmra.mxu0 %v5655
  %v5700 = vpop.f32.mrf.mxu0
  %v5701 = vadd.f32 0.0, %v5700
  %5702 = vmatmul.f32.gmra.mxu0 %v5658
  %v5703 = vpop.f32.mrf.mxu0
  %v5704 = vadd.f32 0.0, %v5703
  %5705 = vdwg.mxu0
  %v5706 = vadd.f32 %v5631, %v5678
  %v5707 = vadd.f32 %v5632, %v5681
  %v5708 = vadd.f32 %v5633, %v5701
  %v5709 = vadd.f32 %v5634, %v5704
  %s5710 = scalar_lea.vmem %s2, 80
  %v5711 = vld [vmem:[%s5710] sm:$0xff]
  %v5712 = vld [vmem:[%s5710 + $0x8] sm:$0xff]
  %5714 = vset.pattern.permute.xlu0 0
  %5715 = vperm.xlu0 %5714, %v5711
  %v5716 = vpop.permute.xlu0 %5715
  %5719 = vset.pattern.permute.xlu0 0
  %5720 = vperm.xlu0 %5719, %v5712
  %v5721 = vpop.permute.xlu0 %5720
  %v5723 = vadd.f32 %v5706, %v5716
  %v5724 = vadd.f32 %v5707, %v5721
  %v5725 = vadd.f32 %v5708, %v5716
  %v5726 = vadd.f32 %v5709, %v5721
  %v5727 = vmax.f32 %v5723, 0.0
  %v5728 = vmax.f32 %v5724, 0.0
  %v5729 = vmax.f32 %v5725, 0.0
  %v5730 = vmax.f32 %v5726, 0.0
  %s5731 = scalar_lea.vmem %s1, 1296
  %v5732 = vld [vmem:[%s5731] sm:$0xff]
  %v5733 = vld [vmem:[%s5731 + $0x8] sm:$0xff]
  %v5735 = vsel %vm142, %v5732, 0
  %v5738 = vsel %vm142, %v5733, 0
  %5740 = vmatpush.msra.mxu0 0.0
  %5741 = vmatpush.msra.mxu0 0.0
  %5742 = vmatpush.msra.mxu0 0.0
  %5743 = vmatpush.msra.mxu0 0.0
  %5744 = vmatpush.msra.mxu0 0.0
  %5745 = vmatpush.msra.mxu0 0.0
  %5746 = vmatpush.msra.mxu0 0.0
  %5747 = vmatpush.msra.mxu0 0.0
  %5748 = vmatpush.msra.mxu0 0.0
  %5749 = vmatpush.msra.mxu0 0.0
  %5750 = vmatpush.msra.mxu0 0.0
  %5751 = vmatpush.msra.mxu0 0.0
  %5752 = vmatpush.msra.mxu0 0.0
  %5753 = vmatpush.msra.mxu0 0.0
  %5754 = vmatpush.msra.mxu0 %v5728
  %5755 = vmatpush.msra.mxu0 %v5727
  %5756 = vmatmul.f32.gmra.mxu0 %v5735
  %v5757 = vpop.f32.mrf.mxu0
  %v5758 = vadd.f32 0.0, %v5757
  %5759 = vmatmul.f32.gmra.mxu0 %v5738
  %v5760 = vpop.f32.mrf.mxu0
  %v5761 = vadd.f32 0.0, %v5760
  %5762 = vdwg.mxu0
  %5763 = vmatpush.msra.mxu0 0.0
  %5764 = vmatpush.msra.mxu0 0.0
  %5765 = vmatpush.msra.mxu0 0.0
  %5766 = vmatpush.msra.mxu0 0.0
  %5767 = vmatpush.msra.mxu0 0.0
  %5768 = vmatpush.msra.mxu0 0.0
  %5769 = vmatpush.msra.mxu0 0.0
  %5770 = vmatpush.msra.mxu0 0.0
  %5771 = vmatpush.msra.mxu0 0.0
  %5772 = vmatpush.msra.mxu0 0.0
  %5773 = vmatpush.msra.mxu0 0.0
  %5774 = vmatpush.msra.mxu0 0.0
  %5775 = vmatpush.msra.mxu0 0.0
  %5776 = vmatpush.msra.mxu0 0.0
  %5777 = vmatpush.msra.mxu0 %v5730
  %5778 = vmatpush.msra.mxu0 %v5729
  %5779 = vmatmul.f32.gmra.mxu0 %v5735
  %v5780 = vpop.f32.mrf.mxu0
  %v5781 = vadd.f32 0.0, %v5780
  %5782 = vmatmul.f32.gmra.mxu0 %v5738
  %v5783 = vpop.f32.mrf.mxu0
  %v5784 = vadd.f32 0.0, %v5783
  %5785 = vdwg.mxu0
  %v5786 = vld [vmem:[%s5] sm:$0xff]
  %v5787 = vld [vmem:[%s5 + $0x8] sm:$0xff]
  %v5789 = vsel %vm142, %v5758, 0
  %v5792 = vsel %vm142, %v5761, 0
  %v5795 = vsel %vm142, %v5781, 0
  %v5798 = vsel %vm142, %v5784, 0
  %5800 = vmatpush.msra.mxu0 0.0
  %5801 = vmatpush.msra.mxu0 0.0
  %5802 = vmatpush.msra.mxu0 0.0
  %5803 = vmatpush.msra.mxu0 0.0
  %5804 = vmatpush.msra.mxu0 0.0
  %5805 = vmatpush.msra.mxu0 0.0
  %5806 = vmatpush.msra.mxu0 0.0
  %5807 = vmatpush.msra.mxu0 0.0
  %5808 = vmatpush.msra.mxu0 0.0
  %5809 = vmatpush.msra.mxu0 0.0
  %5810 = vmatpush.msra.mxu0 0.0
  %5811 = vmatpush.msra.mxu0 0.0
  %5812 = vmatpush.msra.mxu0 0.0
  %5813 = vmatpush.msra.mxu0 0.0
  %5814 = vmatpush.msra.mxu0 %v5787
  %5815 = vmatpush.msra.mxu0 %v5786
  %5816 = vmatmul.f32.gmra.mxu0 %v5789
  %v5817 = vpop.f32.mrf.mxu0
  %v5818 = vadd.f32 0.0, %v5817
  %5819 = vmatmul.f32.gmra.mxu0 %v5792
  %v5820 = vpop.f32.mrf.mxu0
  %v5821 = vadd.f32 0.0, %v5820
  %5822 = vmatmul.f32.gmra.mxu0 %v5795
  %v5823 = vpop.f32.mrf.mxu0
  %v5824 = vadd.f32 0.0, %v5823
  %5825 = vmatmul.f32.gmra.mxu0 %v5798
  %v5826 = vpop.f32.mrf.mxu0
  %v5827 = vadd.f32 0.0, %v5826
  %5828 = vdwg.mxu0
  %v5829 = vadd.f32 %v5818, 0.0
  %v5830 = vadd.f32 %v5821, 0.0
  %v5831 = vadd.f32 %v5824, 0.0
  %v5832 = vadd.f32 %v5827, 0.0
  %s5833 = scalar_lea.vmem %s1, 1312
  %v5834 = vld [vmem:[%s5833] sm:$0xff]
  %v5835 = vld [vmem:[%s5833 + $0x8] sm:$0xff]
  %v5837 = vsel %vm142, %v5834, 0
  %v5840 = vsel %vm142, %v5835, 0
  %5842 = vmatpush.msra.mxu0 0.0
  %5843 = vmatpush.msra.mxu0 0.0
  %5844 = vmatpush.msra.mxu0 0.0
  %5845 = vmatpush.msra.mxu0 0.0
  %5846 = vmatpush.msra.mxu0 0.0
  %5847 = vmatpush.msra.mxu0 0.0
  %5848 = vmatpush.msra.mxu0 0.0
  %5849 = vmatpush.msra.mxu0 0.0
  %5850 = vmatpush.msra.mxu0 0.0
  %5851 = vmatpush.msra.mxu0 0.0
  %5852 = vmatpush.msra.mxu0 0.0
  %5853 = vmatpush.msra.mxu0 0.0
  %5854 = vmatpush.msra.mxu0 0.0
  %5855 = vmatpush.msra.mxu0 0.0
  %5856 = vmatpush.msra.mxu0 %v5728
  %5857 = vmatpush.msra.mxu0 %v5727
  %5858 = vmatmul.f32.gmra.mxu0 %v5837
  %v5859 = vpop.f32.mrf.mxu0
  %v5860 = vadd.f32 0.0, %v5859
  %5861 = vmatmul.f32.gmra.mxu0 %v5840
  %v5862 = vpop.f32.mrf.mxu0
  %v5863 = vadd.f32 0.0, %v5862
  %5864 = vdwg.mxu0
  %5865 = vmatpush.msra.mxu0 0.0
  %5866 = vmatpush.msra.mxu0 0.0
  %5867 = vmatpush.msra.mxu0 0.0
  %5868 = vmatpush.msra.mxu0 0.0
  %5869 = vmatpush.msra.mxu0 0.0
  %5870 = vmatpush.msra.mxu0 0.0
  %5871 = vmatpush.msra.mxu0 0.0
  %5872 = vmatpush.msra.mxu0 0.0
  %5873 = vmatpush.msra.mxu0 0.0
  %5874 = vmatpush.msra.mxu0 0.0
  %5875 = vmatpush.msra.mxu0 0.0
  %5876 = vmatpush.msra.mxu0 0.0
  %5877 = vmatpush.msra.mxu0 0.0
  %5878 = vmatpush.msra.mxu0 0.0
  %5879 = vmatpush.msra.mxu0 %v5730
  %5880 = vmatpush.msra.mxu0 %v5729
  %5881 = vmatmul.f32.gmra.mxu0 %v5837
  %v5882 = vpop.f32.mrf.mxu0
  %v5883 = vadd.f32 0.0, %v5882
  %5884 = vmatmul.f32.gmra.mxu0 %v5840
  %v5885 = vpop.f32.mrf.mxu0
  %v5886 = vadd.f32 0.0, %v5885
  %5887 = vdwg.mxu0
  %s5888 = scalar_lea.vmem %s5, 16
  %v5889 = vld [vmem:[%s5888] sm:$0xff]
  %v5890 = vld [vmem:[%s5888 + $0x8] sm:$0xff]
  %v5892 = vsel %vm142, %v5860, 0
  %v5895 = vsel %vm142, %v5863, 0
  %v5898 = vsel %vm142, %v5883, 0
  %v5901 = vsel %vm142, %v5886, 0
  %5903 = vmatpush.msra.mxu0 0.0
  %5904 = vmatpush.msra.mxu0 0.0
  %5905 = vmatpush.msra.mxu0 0.0
  %5906 = vmatpush.msra.mxu0 0.0
  %5907 = vmatpush.msra.mxu0 0.0
  %5908 = vmatpush.msra.mxu0 0.0
  %5909 = vmatpush.msra.mxu0 0.0
  %5910 = vmatpush.msra.mxu0 0.0
  %5911 = vmatpush.msra.mxu0 0.0
  %5912 = vmatpush.msra.mxu0 0.0
  %5913 = vmatpush.msra.mxu0 0.0
  %5914 = vmatpush.msra.mxu0 0.0
  %5915 = vmatpush.msra.mxu0 0.0
  %5916 = vmatpush.msra.mxu0 0.0
  %5917 = vmatpush.msra.mxu0 %v5890
  %5918 = vmatpush.msra.mxu0 %v5889
  %5919 = vmatmul.f32.gmra.mxu0 %v5892
  %v5920 = vpop.f32.mrf.mxu0
  %v5921 = vadd.f32 0.0, %v5920
  %5922 = vmatmul.f32.gmra.mxu0 %v5895
  %v5923 = vpop.f32.mrf.mxu0
  %v5924 = vadd.f32 0.0, %v5923
  %5925 = vmatmul.f32.gmra.mxu0 %v5898
  %v5926 = vpop.f32.mrf.mxu0
  %v5927 = vadd.f32 0.0, %v5926
  %5928 = vmatmul.f32.gmra.mxu0 %v5901
  %v5929 = vpop.f32.mrf.mxu0
  %v5930 = vadd.f32 0.0, %v5929
  %5931 = vdwg.mxu0
  %v5932 = vadd.f32 %v5829, %v5921
  %v5933 = vadd.f32 %v5830, %v5924
  %v5934 = vadd.f32 %v5831, %v5927
  %v5935 = vadd.f32 %v5832, %v5930
  %s5936 = scalar_lea.vmem %s1, 1328
  %v5937 = vld [vmem:[%s5936] sm:$0xff]
  %v5938 = vld [vmem:[%s5936 + $0x8] sm:$0xff]
  %v5940 = vsel %vm142, %v5937, 0
  %v5943 = vsel %vm142, %v5938, 0
  %5945 = vmatpush.msra.mxu0 0.0
  %5946 = vmatpush.msra.mxu0 0.0
  %5947 = vmatpush.msra.mxu0 0.0
  %5948 = vmatpush.msra.mxu0 0.0
  %5949 = vmatpush.msra.mxu0 0.0
  %5950 = vmatpush.msra.mxu0 0.0
  %5951 = vmatpush.msra.mxu0 0.0
  %5952 = vmatpush.msra.mxu0 0.0
  %5953 = vmatpush.msra.mxu0 0.0
  %5954 = vmatpush.msra.mxu0 0.0
  %5955 = vmatpush.msra.mxu0 0.0
  %5956 = vmatpush.msra.mxu0 0.0
  %5957 = vmatpush.msra.mxu0 0.0
  %5958 = vmatpush.msra.mxu0 0.0
  %5959 = vmatpush.msra.mxu0 %v5728
  %5960 = vmatpush.msra.mxu0 %v5727
  %5961 = vmatmul.f32.gmra.mxu0 %v5940
  %v5962 = vpop.f32.mrf.mxu0
  %v5963 = vadd.f32 0.0, %v5962
  %5964 = vmatmul.f32.gmra.mxu0 %v5943
  %v5965 = vpop.f32.mrf.mxu0
  %v5966 = vadd.f32 0.0, %v5965
  %5967 = vdwg.mxu0
  %5968 = vmatpush.msra.mxu0 0.0
  %5969 = vmatpush.msra.mxu0 0.0
  %5970 = vmatpush.msra.mxu0 0.0
  %5971 = vmatpush.msra.mxu0 0.0
  %5972 = vmatpush.msra.mxu0 0.0
  %5973 = vmatpush.msra.mxu0 0.0
  %5974 = vmatpush.msra.mxu0 0.0
  %5975 = vmatpush.msra.mxu0 0.0
  %5976 = vmatpush.msra.mxu0 0.0
  %5977 = vmatpush.msra.mxu0 0.0
  %5978 = vmatpush.msra.mxu0 0.0
  %5979 = vmatpush.msra.mxu0 0.0
  %5980 = vmatpush.msra.mxu0 0.0
  %5981 = vmatpush.msra.mxu0 0.0
  %5982 = vmatpush.msra.mxu0 %v5730
  %5983 = vmatpush.msra.mxu0 %v5729
  %5984 = vmatmul.f32.gmra.mxu0 %v5940
  %v5985 = vpop.f32.mrf.mxu0
  %v5986 = vadd.f32 0.0, %v5985
  %5987 = vmatmul.f32.gmra.mxu0 %v5943
  %v5988 = vpop.f32.mrf.mxu0
  %v5989 = vadd.f32 0.0, %v5988
  %5990 = vdwg.mxu0
  %s5991 = scalar_lea.vmem %s5, 32
  %v5992 = vld [vmem:[%s5991] sm:$0xff]
  %v5993 = vld [vmem:[%s5991 + $0x8] sm:$0xff]
  %v5995 = vsel %vm142, %v5963, 0
  %v5998 = vsel %vm142, %v5966, 0
  %v6001 = vsel %vm142, %v5986, 0
  %v6004 = vsel %vm142, %v5989, 0
  %6006 = vmatpush.msra.mxu0 0.0
  %6007 = vmatpush.msra.mxu0 0.0
  %6008 = vmatpush.msra.mxu0 0.0
  %6009 = vmatpush.msra.mxu0 0.0
  %6010 = vmatpush.msra.mxu0 0.0
  %6011 = vmatpush.msra.mxu0 0.0
  %6012 = vmatpush.msra.mxu0 0.0
  %6013 = vmatpush.msra.mxu0 0.0
  %6014 = vmatpush.msra.mxu0 0.0
  %6015 = vmatpush.msra.mxu0 0.0
  %6016 = vmatpush.msra.mxu0 0.0
  %6017 = vmatpush.msra.mxu0 0.0
  %6018 = vmatpush.msra.mxu0 0.0
  %6019 = vmatpush.msra.mxu0 0.0
  %6020 = vmatpush.msra.mxu0 %v5993
  %6021 = vmatpush.msra.mxu0 %v5992
  %6022 = vmatmul.f32.gmra.mxu0 %v5995
  %v6023 = vpop.f32.mrf.mxu0
  %v6024 = vadd.f32 0.0, %v6023
  %6025 = vmatmul.f32.gmra.mxu0 %v5998
  %v6026 = vpop.f32.mrf.mxu0
  %v6027 = vadd.f32 0.0, %v6026
  %6028 = vmatmul.f32.gmra.mxu0 %v6001
  %v6029 = vpop.f32.mrf.mxu0
  %v6030 = vadd.f32 0.0, %v6029
  %6031 = vmatmul.f32.gmra.mxu0 %v6004
  %v6032 = vpop.f32.mrf.mxu0
  %v6033 = vadd.f32 0.0, %v6032
  %6034 = vdwg.mxu0
  %v6035 = vadd.f32 %v5932, %v6024
  %v6036 = vadd.f32 %v5933, %v6027
  %v6037 = vadd.f32 %v5934, %v6030
  %v6038 = vadd.f32 %v5935, %v6033
  %s6039 = scalar_lea.vmem %s1, 1344
  %v6040 = vld [vmem:[%s6039] sm:$0xff]
  %v6041 = vld [vmem:[%s6039 + $0x8] sm:$0xff]
  %v6043 = vsel %vm142, %v6040, 0
  %v6046 = vsel %vm142, %v6041, 0
  %6048 = vmatpush.msra.mxu0 0.0
  %6049 = vmatpush.msra.mxu0 0.0
  %6050 = vmatpush.msra.mxu0 0.0
  %6051 = vmatpush.msra.mxu0 0.0
  %6052 = vmatpush.msra.mxu0 0.0
  %6053 = vmatpush.msra.mxu0 0.0
  %6054 = vmatpush.msra.mxu0 0.0
  %6055 = vmatpush.msra.mxu0 0.0
  %6056 = vmatpush.msra.mxu0 0.0
  %6057 = vmatpush.msra.mxu0 0.0
  %6058 = vmatpush.msra.mxu0 0.0
  %6059 = vmatpush.msra.mxu0 0.0
  %6060 = vmatpush.msra.mxu0 0.0
  %6061 = vmatpush.msra.mxu0 0.0
  %6062 = vmatpush.msra.mxu0 %v5728
  %6063 = vmatpush.msra.mxu0 %v5727
  %6064 = vmatmul.f32.gmra.mxu0 %v6043
  %v6065 = vpop.f32.mrf.mxu0
  %v6066 = vadd.f32 0.0, %v6065
  %6067 = vmatmul.f32.gmra.mxu0 %v6046
  %v6068 = vpop.f32.mrf.mxu0
  %v6069 = vadd.f32 0.0, %v6068
  %6070 = vdwg.mxu0
  %6071 = vmatpush.msra.mxu0 0.0
  %6072 = vmatpush.msra.mxu0 0.0
  %6073 = vmatpush.msra.mxu0 0.0
  %6074 = vmatpush.msra.mxu0 0.0
  %6075 = vmatpush.msra.mxu0 0.0
  %6076 = vmatpush.msra.mxu0 0.0
  %6077 = vmatpush.msra.mxu0 0.0
  %6078 = vmatpush.msra.mxu0 0.0
  %6079 = vmatpush.msra.mxu0 0.0
  %6080 = vmatpush.msra.mxu0 0.0
  %6081 = vmatpush.msra.mxu0 0.0
  %6082 = vmatpush.msra.mxu0 0.0
  %6083 = vmatpush.msra.mxu0 0.0
  %6084 = vmatpush.msra.mxu0 0.0
  %6085 = vmatpush.msra.mxu0 %v5730
  %6086 = vmatpush.msra.mxu0 %v5729
  %6087 = vmatmul.f32.gmra.mxu0 %v6043
  %v6088 = vpop.f32.mrf.mxu0
  %v6089 = vadd.f32 0.0, %v6088
  %6090 = vmatmul.f32.gmra.mxu0 %v6046
  %v6091 = vpop.f32.mrf.mxu0
  %v6092 = vadd.f32 0.0, %v6091
  %6093 = vdwg.mxu0
  %s6094 = scalar_lea.vmem %s5, 48
  %v6095 = vld [vmem:[%s6094] sm:$0xff]
  %v6096 = vld [vmem:[%s6094 + $0x8] sm:$0xff]
  %v6098 = vsel %vm142, %v6066, 0
  %v6101 = vsel %vm142, %v6069, 0
  %v6104 = vsel %vm142, %v6089, 0
  %v6107 = vsel %vm142, %v6092, 0
  %6109 = vmatpush.msra.mxu0 0.0
  %6110 = vmatpush.msra.mxu0 0.0
  %6111 = vmatpush.msra.mxu0 0.0
  %6112 = vmatpush.msra.mxu0 0.0
  %6113 = vmatpush.msra.mxu0 0.0
  %6114 = vmatpush.msra.mxu0 0.0
  %6115 = vmatpush.msra.mxu0 0.0
  %6116 = vmatpush.msra.mxu0 0.0
  %6117 = vmatpush.msra.mxu0 0.0
  %6118 = vmatpush.msra.mxu0 0.0
  %6119 = vmatpush.msra.mxu0 0.0
  %6120 = vmatpush.msra.mxu0 0.0
  %6121 = vmatpush.msra.mxu0 0.0
  %6122 = vmatpush.msra.mxu0 0.0
  %6123 = vmatpush.msra.mxu0 %v6096
  %6124 = vmatpush.msra.mxu0 %v6095
  %6125 = vmatmul.f32.gmra.mxu0 %v6098
  %v6126 = vpop.f32.mrf.mxu0
  %v6127 = vadd.f32 0.0, %v6126
  %6128 = vmatmul.f32.gmra.mxu0 %v6101
  %v6129 = vpop.f32.mrf.mxu0
  %v6130 = vadd.f32 0.0, %v6129
  %6131 = vmatmul.f32.gmra.mxu0 %v6104
  %v6132 = vpop.f32.mrf.mxu0
  %v6133 = vadd.f32 0.0, %v6132
  %6134 = vmatmul.f32.gmra.mxu0 %v6107
  %v6135 = vpop.f32.mrf.mxu0
  %v6136 = vadd.f32 0.0, %v6135
  %6137 = vdwg.mxu0
  %v6138 = vadd.f32 %v6035, %v6127
  %v6139 = vadd.f32 %v6036, %v6130
  %v6140 = vadd.f32 %v6037, %v6133
  %v6141 = vadd.f32 %v6038, %v6136
  %s6142 = scalar_lea.vmem %s2, 96
  %v6143 = vld [vmem:[%s6142] sm:$0xff]
  %v6144 = vld [vmem:[%s6142 + $0x8] sm:$0xff]
  %6146 = vset.pattern.permute.xlu0 0
  %6147 = vperm.xlu0 %6146, %v6143
  %v6148 = vpop.permute.xlu0 %6147
  %6151 = vset.pattern.permute.xlu0 0
  %6152 = vperm.xlu0 %6151, %v6144
  %v6153 = vpop.permute.xlu0 %6152
  %v6155 = vadd.f32 %v6138, %v6148
  %v6156 = vadd.f32 %v6139, %v6153
  %v6157 = vadd.f32 %v6140, %v6148
  %v6158 = vadd.f32 %v6141, %v6153
  %6163 = vrot.lane.b32.xlu0 %v6155, 9
  %v6164 = vpop.permute.xlu0 %6163
  %6165 = vrot.lane.b32.xlu0 %v6156, 9
  %v6166 = vpop.permute.xlu0 %6165
  %6167 = vrot.lane.b32.xlu0 %v6157, 9
  %v6168 = vpop.permute.xlu0 %6167
  %6169 = vrot.lane.b32.xlu0 %v6158, 9
  %v6170 = vpop.permute.xlu0 %6169
  %v6175 = vsel %vm2917, 0.0, %v6164
  %v6176 = vsel %vm2917, 0.0, %v6166
  %v6177 = vsel %vm2917, 0.0, %v6168
  %v6178 = vsel %vm2917, 0.0, %v6170
  %v6179 = vsel %vm2922, %v6175, 0.0
  %v6180 = vsel %vm2922, %v6176, 0.0
  %v6181 = vsel %vm2922, %v6177, 0.0
  %v6182 = vsel %vm2922, %v6178, 0.0
  %v6183 = vsel %vm2928, %v6179, 0.0
  %v6184 = vsel %vm2928, %v6180, 0.0
  %v6185 = vsel %vm2928, %v6181, 0.0
  %v6186 = vsel %vm2928, %v6182, 0.0
  %s6187 = scalar_lea.vmem %s1, 864
  %v6188 = vld [vmem:[%s6187] sm:$0xff]
  %v6189 = vld [vmem:[%s6187 + $0x8] sm:$0xff]
  %s6190 = scalar_lea.vmem %s1, 880
  %v6191 = vld [vmem:[%s6190] sm:$0xff]
  %v6192 = vld [vmem:[%s6190 + $0x8] sm:$0xff]
  %6195 = vrot.lane.b32.xlu0 %v6179, 127
  %v6196 = vpop.permute.xlu0 %6195
  %6197 = vrot.lane.b32.xlu0 %v6180, 127
  %v6198 = vpop.permute.xlu0 %6197
  %v6202 = vsel %vm142, %v6191, 0
  %v6205 = vsel %vm142, %v6192, 0
  %6207 = vmatpush.msra.mxu0 0.0
  %6208 = vmatpush.msra.mxu0 0.0
  %6209 = vmatpush.msra.mxu0 0.0
  %6210 = vmatpush.msra.mxu0 0.0
  %6211 = vmatpush.msra.mxu0 0.0
  %6212 = vmatpush.msra.mxu0 0.0
  %6213 = vmatpush.msra.mxu0 0.0
  %6214 = vmatpush.msra.mxu0 0.0
  %6215 = vmatpush.msra.mxu0 0.0
  %6216 = vmatpush.msra.mxu0 0.0
  %6217 = vmatpush.msra.mxu0 0.0
  %6218 = vmatpush.msra.mxu0 0.0
  %6219 = vmatpush.msra.mxu0 0.0
  %6220 = vmatpush.msra.mxu0 0.0
  %6221 = vmatpush.msra.mxu0 %v6198
  %6222 = vmatpush.msra.mxu0 %v6196
  %6223 = vmatmul.f32.gmra.mxu0 %v6202
  %v6224 = vpop.f32.mrf.mxu0
  %v6225 = vadd.f32 0.0, %v6224
  %6226 = vmatmul.f32.gmra.mxu0 %v6205
  %v6227 = vpop.f32.mrf.mxu0
  %v6228 = vadd.f32 0.0, %v6227
  %6229 = vdwg.mxu0
  %6232 = vrot.lane.b32.xlu0 %v6181, 127
  %v6233 = vpop.permute.xlu0 %6232
  %6234 = vrot.lane.b32.xlu0 %v6182, 127
  %v6235 = vpop.permute.xlu0 %6234
  %6238 = vmatpush.msra.mxu0 0.0
  %6239 = vmatpush.msra.mxu0 0.0
  %6240 = vmatpush.msra.mxu0 0.0
  %6241 = vmatpush.msra.mxu0 0.0
  %6242 = vmatpush.msra.mxu0 0.0
  %6243 = vmatpush.msra.mxu0 0.0
  %6244 = vmatpush.msra.mxu0 0.0
  %6245 = vmatpush.msra.mxu0 0.0
  %6246 = vmatpush.msra.mxu0 0.0
  %6247 = vmatpush.msra.mxu0 0.0
  %6248 = vmatpush.msra.mxu0 0.0
  %6249 = vmatpush.msra.mxu0 0.0
  %6250 = vmatpush.msra.mxu0 0.0
  %6251 = vmatpush.msra.mxu0 0.0
  %6252 = vmatpush.msra.mxu0 %v6235
  %6253 = vmatpush.msra.mxu0 %v6233
  %6254 = vmatmul.f32.gmra.mxu0 %v6202
  %v6255 = vpop.f32.mrf.mxu0
  %v6256 = vadd.f32 0.0, %v6255
  %6257 = vmatmul.f32.gmra.mxu0 %v6205
  %v6258 = vpop.f32.mrf.mxu0
  %v6259 = vadd.f32 0.0, %v6258
  %6260 = vdwg.mxu0
  %v6262 = vsel %vm142, %v6188, 0
  %v6265 = vsel %vm142, %v6189, 0
  %6267 = vmatpush.msra.mxu0 0.0
  %6268 = vmatpush.msra.mxu0 0.0
  %6269 = vmatpush.msra.mxu0 0.0
  %6270 = vmatpush.msra.mxu0 0.0
  %6271 = vmatpush.msra.mxu0 0.0
  %6272 = vmatpush.msra.mxu0 0.0
  %6273 = vmatpush.msra.mxu0 0.0
  %6274 = vmatpush.msra.mxu0 0.0
  %6275 = vmatpush.msra.mxu0 0.0
  %6276 = vmatpush.msra.mxu0 0.0
  %6277 = vmatpush.msra.mxu0 0.0
  %6278 = vmatpush.msra.mxu0 0.0
  %6279 = vmatpush.msra.mxu0 0.0
  %6280 = vmatpush.msra.mxu0 0.0
  %6281 = vmatpush.msra.mxu0 %v6184
  %6282 = vmatpush.msra.mxu0 %v6183
  %6283 = vmatmul.f32.gmra.mxu0 %v6262
  %v6284 = vpop.f32.mrf.mxu0
  %v6285 = vadd.f32 %v6225, %v6284
  %6286 = vmatmul.f32.gmra.mxu0 %v6265
  %v6287 = vpop.f32.mrf.mxu0
  %v6288 = vadd.f32 %v6228, %v6287
  %6289 = vdwg.mxu0
  %6290 = vmatpush.msra.mxu0 0.0
  %6291 = vmatpush.msra.mxu0 0.0
  %6292 = vmatpush.msra.mxu0 0.0
  %6293 = vmatpush.msra.mxu0 0.0
  %6294 = vmatpush.msra.mxu0 0.0
  %6295 = vmatpush.msra.mxu0 0.0
  %6296 = vmatpush.msra.mxu0 0.0
  %6297 = vmatpush.msra.mxu0 0.0
  %6298 = vmatpush.msra.mxu0 0.0
  %6299 = vmatpush.msra.mxu0 0.0
  %6300 = vmatpush.msra.mxu0 0.0
  %6301 = vmatpush.msra.mxu0 0.0
  %6302 = vmatpush.msra.mxu0 0.0
  %6303 = vmatpush.msra.mxu0 0.0
  %6304 = vmatpush.msra.mxu0 %v6186
  %6305 = vmatpush.msra.mxu0 %v6185
  %6306 = vmatmul.f32.gmra.mxu0 %v6262
  %v6307 = vpop.f32.mrf.mxu0
  %v6308 = vadd.f32 %v6256, %v6307
  %6309 = vmatmul.f32.gmra.mxu0 %v6265
  %v6310 = vpop.f32.mrf.mxu0
  %v6311 = vadd.f32 %v6259, %v6310
  %6312 = vdwg.mxu0
  %6313 = vrot.lane.b32.xlu0 %v6179, 126
  %v6314 = vpop.permute.xlu0 %6313
  %6315 = vrot.lane.b32.xlu0 %v6180, 126
  %v6316 = vpop.permute.xlu0 %6315
  %6317 = vrot.lane.b32.xlu0 %v6181, 126
  %v6318 = vpop.permute.xlu0 %6317
  %6319 = vrot.lane.b32.xlu0 %v6182, 126
  %v6320 = vpop.permute.xlu0 %6319
  %v6325 = vsel %vm3060, %v6314, 0.0
  %v6326 = vsel %vm3060, %v6316, 0.0
  %v6327 = vsel %vm3060, %v6318, 0.0
  %v6328 = vsel %vm3060, %v6320, 0.0
  %s6329 = scalar_lea.vmem %s1, 896
  %v6330 = vld [vmem:[%s6329] sm:$0xff]
  %v6331 = vld [vmem:[%s6329 + $0x8] sm:$0xff]
  %v6333 = vsel %vm142, %v6330, 0
  %v6336 = vsel %vm142, %v6331, 0
  %6338 = vmatpush.msra.mxu0 0.0
  %6339 = vmatpush.msra.mxu0 0.0
  %6340 = vmatpush.msra.mxu0 0.0
  %6341 = vmatpush.msra.mxu0 0.0
  %6342 = vmatpush.msra.mxu0 0.0
  %6343 = vmatpush.msra.mxu0 0.0
  %6344 = vmatpush.msra.mxu0 0.0
  %6345 = vmatpush.msra.mxu0 0.0
  %6346 = vmatpush.msra.mxu0 0.0
  %6347 = vmatpush.msra.mxu0 0.0
  %6348 = vmatpush.msra.mxu0 0.0
  %6349 = vmatpush.msra.mxu0 0.0
  %6350 = vmatpush.msra.mxu0 0.0
  %6351 = vmatpush.msra.mxu0 0.0
  %6352 = vmatpush.msra.mxu0 %v6326
  %6353 = vmatpush.msra.mxu0 %v6325
  %6354 = vmatmul.f32.gmra.mxu0 %v6333
  %v6355 = vpop.f32.mrf.mxu0
  %v6356 = vadd.f32 0.0, %v6355
  %6357 = vmatmul.f32.gmra.mxu0 %v6336
  %v6358 = vpop.f32.mrf.mxu0
  %v6359 = vadd.f32 0.0, %v6358
  %6360 = vdwg.mxu0
  %6361 = vmatpush.msra.mxu0 0.0
  %6362 = vmatpush.msra.mxu0 0.0
  %6363 = vmatpush.msra.mxu0 0.0
  %6364 = vmatpush.msra.mxu0 0.0
  %6365 = vmatpush.msra.mxu0 0.0
  %6366 = vmatpush.msra.mxu0 0.0
  %6367 = vmatpush.msra.mxu0 0.0
  %6368 = vmatpush.msra.mxu0 0.0
  %6369 = vmatpush.msra.mxu0 0.0
  %6370 = vmatpush.msra.mxu0 0.0
  %6371 = vmatpush.msra.mxu0 0.0
  %6372 = vmatpush.msra.mxu0 0.0
  %6373 = vmatpush.msra.mxu0 0.0
  %6374 = vmatpush.msra.mxu0 0.0
  %6375 = vmatpush.msra.mxu0 %v6328
  %6376 = vmatpush.msra.mxu0 %v6327
  %6377 = vmatmul.f32.gmra.mxu0 %v6333
  %v6378 = vpop.f32.mrf.mxu0
  %v6379 = vadd.f32 0.0, %v6378
  %6380 = vmatmul.f32.gmra.mxu0 %v6336
  %v6381 = vpop.f32.mrf.mxu0
  %v6382 = vadd.f32 0.0, %v6381
  %6383 = vdwg.mxu0
  %v6384 = vadd.f32 %v6285, %v6356
  %v6385 = vadd.f32 %v6288, %v6359
  %v6386 = vadd.f32 %v6308, %v6379
  %v6387 = vadd.f32 %v6311, %v6382
  %6388 = vrot.lane.b32.xlu0 %v6179, 120
  %v6389 = vpop.permute.xlu0 %6388
  %6390 = vrot.lane.b32.xlu0 %v6180, 120
  %v6391 = vpop.permute.xlu0 %6390
  %6392 = vrot.lane.b32.xlu0 %v6181, 120
  %v6393 = vpop.permute.xlu0 %6392
  %6394 = vrot.lane.b32.xlu0 %v6182, 120
  %v6395 = vpop.permute.xlu0 %6394
  %v6400 = vsel %vm2928, %v6389, 0.0
  %v6401 = vsel %vm2928, %v6391, 0.0
  %v6402 = vsel %vm2928, %v6393, 0.0
  %v6403 = vsel %vm2928, %v6395, 0.0
  %s6404 = scalar_lea.vmem %s1, 912
  %v6405 = vld [vmem:[%s6404] sm:$0xff]
  %v6406 = vld [vmem:[%s6404 + $0x8] sm:$0xff]
  %v6408 = vsel %vm142, %v6405, 0
  %v6411 = vsel %vm142, %v6406, 0
  %6413 = vmatpush.msra.mxu0 0.0
  %6414 = vmatpush.msra.mxu0 0.0
  %6415 = vmatpush.msra.mxu0 0.0
  %6416 = vmatpush.msra.mxu0 0.0
  %6417 = vmatpush.msra.mxu0 0.0
  %6418 = vmatpush.msra.mxu0 0.0
  %6419 = vmatpush.msra.mxu0 0.0
  %6420 = vmatpush.msra.mxu0 0.0
  %6421 = vmatpush.msra.mxu0 0.0
  %6422 = vmatpush.msra.mxu0 0.0
  %6423 = vmatpush.msra.mxu0 0.0
  %6424 = vmatpush.msra.mxu0 0.0
  %6425 = vmatpush.msra.mxu0 0.0
  %6426 = vmatpush.msra.mxu0 0.0
  %6427 = vmatpush.msra.mxu0 %v6401
  %6428 = vmatpush.msra.mxu0 %v6400
  %6429 = vmatmul.f32.gmra.mxu0 %v6408
  %v6430 = vpop.f32.mrf.mxu0
  %v6431 = vadd.f32 0.0, %v6430
  %6432 = vmatmul.f32.gmra.mxu0 %v6411
  %v6433 = vpop.f32.mrf.mxu0
  %v6434 = vadd.f32 0.0, %v6433
  %6435 = vdwg.mxu0
  %6436 = vmatpush.msra.mxu0 0.0
  %6437 = vmatpush.msra.mxu0 0.0
  %6438 = vmatpush.msra.mxu0 0.0
  %6439 = vmatpush.msra.mxu0 0.0
  %6440 = vmatpush.msra.mxu0 0.0
  %6441 = vmatpush.msra.mxu0 0.0
  %6442 = vmatpush.msra.mxu0 0.0
  %6443 = vmatpush.msra.mxu0 0.0
  %6444 = vmatpush.msra.mxu0 0.0
  %6445 = vmatpush.msra.mxu0 0.0
  %6446 = vmatpush.msra.mxu0 0.0
  %6447 = vmatpush.msra.mxu0 0.0
  %6448 = vmatpush.msra.mxu0 0.0
  %6449 = vmatpush.msra.mxu0 0.0
  %6450 = vmatpush.msra.mxu0 %v6403
  %6451 = vmatpush.msra.mxu0 %v6402
  %6452 = vmatmul.f32.gmra.mxu0 %v6408
  %v6453 = vpop.f32.mrf.mxu0
  %v6454 = vadd.f32 0.0, %v6453
  %6455 = vmatmul.f32.gmra.mxu0 %v6411
  %v6456 = vpop.f32.mrf.mxu0
  %v6457 = vadd.f32 0.0, %v6456
  %6458 = vdwg.mxu0
  %v6459 = vadd.f32 %v6384, %v6431
  %v6460 = vadd.f32 %v6385, %v6434
  %v6461 = vadd.f32 %v6386, %v6454
  %v6462 = vadd.f32 %v6387, %v6457
  %s6463 = scalar_lea.vmem %s1, 928
  %v6464 = vld [vmem:[%s6463] sm:$0xff]
  %v6465 = vld [vmem:[%s6463 + $0x8] sm:$0xff]
  %6466 = vrot.lane.b32.xlu0 %v6179, 119
  %v6467 = vpop.permute.xlu0 %6466
  %6468 = vrot.lane.b32.xlu0 %v6180, 119
  %v6469 = vpop.permute.xlu0 %6468
  %v6473 = vsel %vm142, %v6464, 0
  %v6476 = vsel %vm142, %v6465, 0
  %6478 = vmatpush.msra.mxu0 0.0
  %6479 = vmatpush.msra.mxu0 0.0
  %6480 = vmatpush.msra.mxu0 0.0
  %6481 = vmatpush.msra.mxu0 0.0
  %6482 = vmatpush.msra.mxu0 0.0
  %6483 = vmatpush.msra.mxu0 0.0
  %6484 = vmatpush.msra.mxu0 0.0
  %6485 = vmatpush.msra.mxu0 0.0
  %6486 = vmatpush.msra.mxu0 0.0
  %6487 = vmatpush.msra.mxu0 0.0
  %6488 = vmatpush.msra.mxu0 0.0
  %6489 = vmatpush.msra.mxu0 0.0
  %6490 = vmatpush.msra.mxu0 0.0
  %6491 = vmatpush.msra.mxu0 0.0
  %6492 = vmatpush.msra.mxu0 %v6469
  %6493 = vmatpush.msra.mxu0 %v6467
  %6494 = vmatmul.f32.gmra.mxu0 %v6473
  %v6495 = vpop.f32.mrf.mxu0
  %v6496 = vadd.f32 0.0, %v6495
  %6497 = vmatmul.f32.gmra.mxu0 %v6476
  %v6498 = vpop.f32.mrf.mxu0
  %v6499 = vadd.f32 0.0, %v6498
  %6500 = vdwg.mxu0
  %6501 = vrot.lane.b32.xlu0 %v6181, 119
  %v6502 = vpop.permute.xlu0 %6501
  %6503 = vrot.lane.b32.xlu0 %v6182, 119
  %v6504 = vpop.permute.xlu0 %6503
  %6507 = vmatpush.msra.mxu0 0.0
  %6508 = vmatpush.msra.mxu0 0.0
  %6509 = vmatpush.msra.mxu0 0.0
  %6510 = vmatpush.msra.mxu0 0.0
  %6511 = vmatpush.msra.mxu0 0.0
  %6512 = vmatpush.msra.mxu0 0.0
  %6513 = vmatpush.msra.mxu0 0.0
  %6514 = vmatpush.msra.mxu0 0.0
  %6515 = vmatpush.msra.mxu0 0.0
  %6516 = vmatpush.msra.mxu0 0.0
  %6517 = vmatpush.msra.mxu0 0.0
  %6518 = vmatpush.msra.mxu0 0.0
  %6519 = vmatpush.msra.mxu0 0.0
  %6520 = vmatpush.msra.mxu0 0.0
  %6521 = vmatpush.msra.mxu0 %v6504
  %6522 = vmatpush.msra.mxu0 %v6502
  %6523 = vmatmul.f32.gmra.mxu0 %v6473
  %v6524 = vpop.f32.mrf.mxu0
  %v6525 = vadd.f32 0.0, %v6524
  %6526 = vmatmul.f32.gmra.mxu0 %v6476
  %v6527 = vpop.f32.mrf.mxu0
  %v6528 = vadd.f32 0.0, %v6527
  %6529 = vdwg.mxu0
  %v6530 = vadd.f32 %v6459, %v6496
  %v6531 = vadd.f32 %v6460, %v6499
  %v6532 = vadd.f32 %v6461, %v6525
  %v6533 = vadd.f32 %v6462, %v6528
  %6534 = vrot.lane.b32.xlu0 %v6179, 118
  %v6535 = vpop.permute.xlu0 %6534
  %6536 = vrot.lane.b32.xlu0 %v6180, 118
  %v6537 = vpop.permute.xlu0 %6536
  %6538 = vrot.lane.b32.xlu0 %v6181, 118
  %v6539 = vpop.permute.xlu0 %6538
  %6540 = vrot.lane.b32.xlu0 %v6182, 118
  %v6541 = vpop.permute.xlu0 %6540
  %v6546 = vsel %vm3060, %v6535, 0.0
  %v6547 = vsel %vm3060, %v6537, 0.0
  %v6548 = vsel %vm3060, %v6539, 0.0
  %v6549 = vsel %vm3060, %v6541, 0.0
  %s6550 = scalar_lea.vmem %s1, 944
  %v6551 = vld [vmem:[%s6550] sm:$0xff]
  %v6552 = vld [vmem:[%s6550 + $0x8] sm:$0xff]
  %v6554 = vsel %vm142, %v6551, 0
  %v6557 = vsel %vm142, %v6552, 0
  %6559 = vmatpush.msra.mxu0 0.0
  %6560 = vmatpush.msra.mxu0 0.0
  %6561 = vmatpush.msra.mxu0 0.0
  %6562 = vmatpush.msra.mxu0 0.0
  %6563 = vmatpush.msra.mxu0 0.0
  %6564 = vmatpush.msra.mxu0 0.0
  %6565 = vmatpush.msra.mxu0 0.0
  %6566 = vmatpush.msra.mxu0 0.0
  %6567 = vmatpush.msra.mxu0 0.0
  %6568 = vmatpush.msra.mxu0 0.0
  %6569 = vmatpush.msra.mxu0 0.0
  %6570 = vmatpush.msra.mxu0 0.0
  %6571 = vmatpush.msra.mxu0 0.0
  %6572 = vmatpush.msra.mxu0 0.0
  %6573 = vmatpush.msra.mxu0 %v6547
  %6574 = vmatpush.msra.mxu0 %v6546
  %6575 = vmatmul.f32.gmra.mxu0 %v6554
  %v6576 = vpop.f32.mrf.mxu0
  %v6577 = vadd.f32 0.0, %v6576
  %6578 = vmatmul.f32.gmra.mxu0 %v6557
  %v6579 = vpop.f32.mrf.mxu0
  %v6580 = vadd.f32 0.0, %v6579
  %6581 = vdwg.mxu0
  %6582 = vmatpush.msra.mxu0 0.0
  %6583 = vmatpush.msra.mxu0 0.0
  %6584 = vmatpush.msra.mxu0 0.0
  %6585 = vmatpush.msra.mxu0 0.0
  %6586 = vmatpush.msra.mxu0 0.0
  %6587 = vmatpush.msra.mxu0 0.0
  %6588 = vmatpush.msra.mxu0 0.0
  %6589 = vmatpush.msra.mxu0 0.0
  %6590 = vmatpush.msra.mxu0 0.0
  %6591 = vmatpush.msra.mxu0 0.0
  %6592 = vmatpush.msra.mxu0 0.0
  %6593 = vmatpush.msra.mxu0 0.0
  %6594 = vmatpush.msra.mxu0 0.0
  %6595 = vmatpush.msra.mxu0 0.0
  %6596 = vmatpush.msra.mxu0 %v6549
  %6597 = vmatpush.msra.mxu0 %v6548
  %6598 = vmatmul.f32.gmra.mxu0 %v6554
  %v6599 = vpop.f32.mrf.mxu0
  %v6600 = vadd.f32 0.0, %v6599
  %6601 = vmatmul.f32.gmra.mxu0 %v6557
  %v6602 = vpop.f32.mrf.mxu0
  %v6603 = vadd.f32 0.0, %v6602
  %6604 = vdwg.mxu0
  %v6605 = vadd.f32 %v6530, %v6577
  %v6606 = vadd.f32 %v6531, %v6580
  %v6607 = vadd.f32 %v6532, %v6600
  %v6608 = vadd.f32 %v6533, %v6603
  %6609 = vrot.lane.b32.xlu0 %v6179, 112
  %v6610 = vpop.permute.xlu0 %6609
  %6611 = vrot.lane.b32.xlu0 %v6180, 112
  %v6612 = vpop.permute.xlu0 %6611
  %6613 = vrot.lane.b32.xlu0 %v6181, 112
  %v6614 = vpop.permute.xlu0 %6613
  %6615 = vrot.lane.b32.xlu0 %v6182, 112
  %v6616 = vpop.permute.xlu0 %6615
  %v6621 = vsel %vm2928, %v6610, 0.0
  %v6622 = vsel %vm2928, %v6612, 0.0
  %v6623 = vsel %vm2928, %v6614, 0.0
  %v6624 = vsel %vm2928, %v6616, 0.0
  %s6625 = scalar_lea.vmem %s1, 960
  %v6626 = vld [vmem:[%s6625] sm:$0xff]
  %v6627 = vld [vmem:[%s6625 + $0x8] sm:$0xff]
  %v6629 = vsel %vm142, %v6626, 0
  %v6632 = vsel %vm142, %v6627, 0
  %6634 = vmatpush.msra.mxu0 0.0
  %6635 = vmatpush.msra.mxu0 0.0
  %6636 = vmatpush.msra.mxu0 0.0
  %6637 = vmatpush.msra.mxu0 0.0
  %6638 = vmatpush.msra.mxu0 0.0
  %6639 = vmatpush.msra.mxu0 0.0
  %6640 = vmatpush.msra.mxu0 0.0
  %6641 = vmatpush.msra.mxu0 0.0
  %6642 = vmatpush.msra.mxu0 0.0
  %6643 = vmatpush.msra.mxu0 0.0
  %6644 = vmatpush.msra.mxu0 0.0
  %6645 = vmatpush.msra.mxu0 0.0
  %6646 = vmatpush.msra.mxu0 0.0
  %6647 = vmatpush.msra.mxu0 0.0
  %6648 = vmatpush.msra.mxu0 %v6622
  %6649 = vmatpush.msra.mxu0 %v6621
  %6650 = vmatmul.f32.gmra.mxu0 %v6629
  %v6651 = vpop.f32.mrf.mxu0
  %v6652 = vadd.f32 0.0, %v6651
  %6653 = vmatmul.f32.gmra.mxu0 %v6632
  %v6654 = vpop.f32.mrf.mxu0
  %v6655 = vadd.f32 0.0, %v6654
  %6656 = vdwg.mxu0
  %6657 = vmatpush.msra.mxu0 0.0
  %6658 = vmatpush.msra.mxu0 0.0
  %6659 = vmatpush.msra.mxu0 0.0
  %6660 = vmatpush.msra.mxu0 0.0
  %6661 = vmatpush.msra.mxu0 0.0
  %6662 = vmatpush.msra.mxu0 0.0
  %6663 = vmatpush.msra.mxu0 0.0
  %6664 = vmatpush.msra.mxu0 0.0
  %6665 = vmatpush.msra.mxu0 0.0
  %6666 = vmatpush.msra.mxu0 0.0
  %6667 = vmatpush.msra.mxu0 0.0
  %6668 = vmatpush.msra.mxu0 0.0
  %6669 = vmatpush.msra.mxu0 0.0
  %6670 = vmatpush.msra.mxu0 0.0
  %6671 = vmatpush.msra.mxu0 %v6624
  %6672 = vmatpush.msra.mxu0 %v6623
  %6673 = vmatmul.f32.gmra.mxu0 %v6629
  %v6674 = vpop.f32.mrf.mxu0
  %v6675 = vadd.f32 0.0, %v6674
  %6676 = vmatmul.f32.gmra.mxu0 %v6632
  %v6677 = vpop.f32.mrf.mxu0
  %v6678 = vadd.f32 0.0, %v6677
  %6679 = vdwg.mxu0
  %v6680 = vadd.f32 %v6605, %v6652
  %v6681 = vadd.f32 %v6606, %v6655
  %v6682 = vadd.f32 %v6607, %v6675
  %v6683 = vadd.f32 %v6608, %v6678
  %s6684 = scalar_lea.vmem %s1, 976
  %v6685 = vld [vmem:[%s6684] sm:$0xff]
  %v6686 = vld [vmem:[%s6684 + $0x8] sm:$0xff]
  %6687 = vrot.lane.b32.xlu0 %v6179, 111
  %v6688 = vpop.permute.xlu0 %6687
  %6689 = vrot.lane.b32.xlu0 %v6180, 111
  %v6690 = vpop.permute.xlu0 %6689
  %v6694 = vsel %vm142, %v6685, 0
  %v6697 = vsel %vm142, %v6686, 0
  %6699 = vmatpush.msra.mxu0 0.0
  %6700 = vmatpush.msra.mxu0 0.0
  %6701 = vmatpush.msra.mxu0 0.0
  %6702 = vmatpush.msra.mxu0 0.0
  %6703 = vmatpush.msra.mxu0 0.0
  %6704 = vmatpush.msra.mxu0 0.0
  %6705 = vmatpush.msra.mxu0 0.0
  %6706 = vmatpush.msra.mxu0 0.0
  %6707 = vmatpush.msra.mxu0 0.0
  %6708 = vmatpush.msra.mxu0 0.0
  %6709 = vmatpush.msra.mxu0 0.0
  %6710 = vmatpush.msra.mxu0 0.0
  %6711 = vmatpush.msra.mxu0 0.0
  %6712 = vmatpush.msra.mxu0 0.0
  %6713 = vmatpush.msra.mxu0 %v6690
  %6714 = vmatpush.msra.mxu0 %v6688
  %6715 = vmatmul.f32.gmra.mxu0 %v6694
  %v6716 = vpop.f32.mrf.mxu0
  %v6717 = vadd.f32 0.0, %v6716
  %6718 = vmatmul.f32.gmra.mxu0 %v6697
  %v6719 = vpop.f32.mrf.mxu0
  %v6720 = vadd.f32 0.0, %v6719
  %6721 = vdwg.mxu0
  %6722 = vrot.lane.b32.xlu0 %v6181, 111
  %v6723 = vpop.permute.xlu0 %6722
  %6724 = vrot.lane.b32.xlu0 %v6182, 111
  %v6725 = vpop.permute.xlu0 %6724
  %6728 = vmatpush.msra.mxu0 0.0
  %6729 = vmatpush.msra.mxu0 0.0
  %6730 = vmatpush.msra.mxu0 0.0
  %6731 = vmatpush.msra.mxu0 0.0
  %6732 = vmatpush.msra.mxu0 0.0
  %6733 = vmatpush.msra.mxu0 0.0
  %6734 = vmatpush.msra.mxu0 0.0
  %6735 = vmatpush.msra.mxu0 0.0
  %6736 = vmatpush.msra.mxu0 0.0
  %6737 = vmatpush.msra.mxu0 0.0
  %6738 = vmatpush.msra.mxu0 0.0
  %6739 = vmatpush.msra.mxu0 0.0
  %6740 = vmatpush.msra.mxu0 0.0
  %6741 = vmatpush.msra.mxu0 0.0
  %6742 = vmatpush.msra.mxu0 %v6725
  %6743 = vmatpush.msra.mxu0 %v6723
  %6744 = vmatmul.f32.gmra.mxu0 %v6694
  %v6745 = vpop.f32.mrf.mxu0
  %v6746 = vadd.f32 0.0, %v6745
  %6747 = vmatmul.f32.gmra.mxu0 %v6697
  %v6748 = vpop.f32.mrf.mxu0
  %v6749 = vadd.f32 0.0, %v6748
  %6750 = vdwg.mxu0
  %v6751 = vadd.f32 %v6680, %v6717
  %v6752 = vadd.f32 %v6681, %v6720
  %v6753 = vadd.f32 %v6682, %v6746
  %v6754 = vadd.f32 %v6683, %v6749
  %6755 = vrot.lane.b32.xlu0 %v6179, 110
  %v6756 = vpop.permute.xlu0 %6755
  %6757 = vrot.lane.b32.xlu0 %v6180, 110
  %v6758 = vpop.permute.xlu0 %6757
  %6759 = vrot.lane.b32.xlu0 %v6181, 110
  %v6760 = vpop.permute.xlu0 %6759
  %6761 = vrot.lane.b32.xlu0 %v6182, 110
  %v6762 = vpop.permute.xlu0 %6761
  %v6767 = vsel %vm3060, %v6756, 0.0
  %v6768 = vsel %vm3060, %v6758, 0.0
  %v6769 = vsel %vm3060, %v6760, 0.0
  %v6770 = vsel %vm3060, %v6762, 0.0
  %s6771 = scalar_lea.vmem %s1, 992
  %v6772 = vld [vmem:[%s6771] sm:$0xff]
  %v6773 = vld [vmem:[%s6771 + $0x8] sm:$0xff]
  %v6775 = vsel %vm142, %v6772, 0
  %v6778 = vsel %vm142, %v6773, 0
  %6780 = vmatpush.msra.mxu0 0.0
  %6781 = vmatpush.msra.mxu0 0.0
  %6782 = vmatpush.msra.mxu0 0.0
  %6783 = vmatpush.msra.mxu0 0.0
  %6784 = vmatpush.msra.mxu0 0.0
  %6785 = vmatpush.msra.mxu0 0.0
  %6786 = vmatpush.msra.mxu0 0.0
  %6787 = vmatpush.msra.mxu0 0.0
  %6788 = vmatpush.msra.mxu0 0.0
  %6789 = vmatpush.msra.mxu0 0.0
  %6790 = vmatpush.msra.mxu0 0.0
  %6791 = vmatpush.msra.mxu0 0.0
  %6792 = vmatpush.msra.mxu0 0.0
  %6793 = vmatpush.msra.mxu0 0.0
  %6794 = vmatpush.msra.mxu0 %v6768
  %6795 = vmatpush.msra.mxu0 %v6767
  %6796 = vmatmul.f32.gmra.mxu0 %v6775
  %v6797 = vpop.f32.mrf.mxu0
  %v6798 = vadd.f32 0.0, %v6797
  %6799 = vmatmul.f32.gmra.mxu0 %v6778
  %v6800 = vpop.f32.mrf.mxu0
  %v6801 = vadd.f32 0.0, %v6800
  %6802 = vdwg.mxu0
  %6803 = vmatpush.msra.mxu0 0.0
  %6804 = vmatpush.msra.mxu0 0.0
  %6805 = vmatpush.msra.mxu0 0.0
  %6806 = vmatpush.msra.mxu0 0.0
  %6807 = vmatpush.msra.mxu0 0.0
  %6808 = vmatpush.msra.mxu0 0.0
  %6809 = vmatpush.msra.mxu0 0.0
  %6810 = vmatpush.msra.mxu0 0.0
  %6811 = vmatpush.msra.mxu0 0.0
  %6812 = vmatpush.msra.mxu0 0.0
  %6813 = vmatpush.msra.mxu0 0.0
  %6814 = vmatpush.msra.mxu0 0.0
  %6815 = vmatpush.msra.mxu0 0.0
  %6816 = vmatpush.msra.mxu0 0.0
  %6817 = vmatpush.msra.mxu0 %v6770
  %6818 = vmatpush.msra.mxu0 %v6769
  %6819 = vmatmul.f32.gmra.mxu0 %v6775
  %v6820 = vpop.f32.mrf.mxu0
  %v6821 = vadd.f32 0.0, %v6820
  %6822 = vmatmul.f32.gmra.mxu0 %v6778
  %v6823 = vpop.f32.mrf.mxu0
  %v6824 = vadd.f32 0.0, %v6823
  %6825 = vdwg.mxu0
  %v6826 = vadd.f32 %v6751, %v6798
  %v6827 = vadd.f32 %v6752, %v6801
  %v6828 = vadd.f32 %v6753, %v6821
  %v6829 = vadd.f32 %v6754, %v6824
  %s6830 = scalar_lea.vmem %s2, 112
  %v6831 = vld [vmem:[%s6830] sm:$0xff]
  %v6832 = vld [vmem:[%s6830 + $0x8] sm:$0xff]
  %6834 = vset.pattern.permute.xlu0 0
  %6835 = vperm.xlu0 %6834, %v6831
  %v6836 = vpop.permute.xlu0 %6835
  %6839 = vset.pattern.permute.xlu0 0
  %6840 = vperm.xlu0 %6839, %v6832
  %v6841 = vpop.permute.xlu0 %6840
  %v6843 = vadd.f32 %v6826, %v6836
  %v6844 = vadd.f32 %v6827, %v6841
  %v6845 = vadd.f32 %v6828, %v6836
  %v6846 = vadd.f32 %v6829, %v6841
  %v6847 = vmax.f32 %v6843, 0.0
  %v6848 = vmax.f32 %v6844, 0.0
  %v6849 = vmax.f32 %v6845, 0.0
  %v6850 = vmax.f32 %v6846, 0.0
  %6855 = vrot.lane.b32.xlu0 %v6847, 9
  %v6856 = vpop.permute.xlu0 %6855
  %6857 = vrot.lane.b32.xlu0 %v6848, 9
  %v6858 = vpop.permute.xlu0 %6857
  %6859 = vrot.lane.b32.xlu0 %v6849, 9
  %v6860 = vpop.permute.xlu0 %6859
  %6861 = vrot.lane.b32.xlu0 %v6850, 9
  %v6862 = vpop.permute.xlu0 %6861
  %v6867 = vsel %vm2917, 0.0, %v6856
  %v6868 = vsel %vm2917, 0.0, %v6858
  %v6869 = vsel %vm2917, 0.0, %v6860
  %v6870 = vsel %vm2917, 0.0, %v6862
  %v6871 = vsel %vm2922, %v6867, 0.0
  %v6872 = vsel %vm2922, %v6868, 0.0
  %v6873 = vsel %vm2922, %v6869, 0.0
  %v6874 = vsel %vm2922, %v6870, 0.0
  %v6875 = vsel %vm2928, %v6871, 0.0
  %v6876 = vsel %vm2928, %v6872, 0.0
  %v6877 = vsel %vm2928, %v6873, 0.0
  %v6878 = vsel %vm2928, %v6874, 0.0
  %s6879 = scalar_lea.vmem %s1, 1008
  %v6880 = vld [vmem:[%s6879] sm:$0xff]
  %v6881 = vld [vmem:[%s6879 + $0x8] sm:$0xff]
  %s6882 = scalar_lea.vmem %s1, 1024
  %v6883 = vld [vmem:[%s6882] sm:$0xff]
  %v6884 = vld [vmem:[%s6882 + $0x8] sm:$0xff]
  %6887 = vrot.lane.b32.xlu0 %v6871, 127
  %v6888 = vpop.permute.xlu0 %6887
  %6889 = vrot.lane.b32.xlu0 %v6872, 127
  %v6890 = vpop.permute.xlu0 %6889
  %v6894 = vsel %vm142, %v6883, 0
  %v6897 = vsel %vm142, %v6884, 0
  %6899 = vmatpush.msra.mxu0 0.0
  %6900 = vmatpush.msra.mxu0 0.0
  %6901 = vmatpush.msra.mxu0 0.0
  %6902 = vmatpush.msra.mxu0 0.0
  %6903 = vmatpush.msra.mxu0 0.0
  %6904 = vmatpush.msra.mxu0 0.0
  %6905 = vmatpush.msra.mxu0 0.0
  %6906 = vmatpush.msra.mxu0 0.0
  %6907 = vmatpush.msra.mxu0 0.0
  %6908 = vmatpush.msra.mxu0 0.0
  %6909 = vmatpush.msra.mxu0 0.0
  %6910 = vmatpush.msra.mxu0 0.0
  %6911 = vmatpush.msra.mxu0 0.0
  %6912 = vmatpush.msra.mxu0 0.0
  %6913 = vmatpush.msra.mxu0 %v6890
  %6914 = vmatpush.msra.mxu0 %v6888
  %6915 = vmatmul.f32.gmra.mxu0 %v6894
  %v6916 = vpop.f32.mrf.mxu0
  %v6917 = vadd.f32 0.0, %v6916
  %6918 = vmatmul.f32.gmra.mxu0 %v6897
  %v6919 = vpop.f32.mrf.mxu0
  %v6920 = vadd.f32 0.0, %v6919
  %6921 = vdwg.mxu0
  %6924 = vrot.lane.b32.xlu0 %v6873, 127
  %v6925 = vpop.permute.xlu0 %6924
  %6926 = vrot.lane.b32.xlu0 %v6874, 127
  %v6927 = vpop.permute.xlu0 %6926
  %6930 = vmatpush.msra.mxu0 0.0
  %6931 = vmatpush.msra.mxu0 0.0
  %6932 = vmatpush.msra.mxu0 0.0
  %6933 = vmatpush.msra.mxu0 0.0
  %6934 = vmatpush.msra.mxu0 0.0
  %6935 = vmatpush.msra.mxu0 0.0
  %6936 = vmatpush.msra.mxu0 0.0
  %6937 = vmatpush.msra.mxu0 0.0
  %6938 = vmatpush.msra.mxu0 0.0
  %6939 = vmatpush.msra.mxu0 0.0
  %6940 = vmatpush.msra.mxu0 0.0
  %6941 = vmatpush.msra.mxu0 0.0
  %6942 = vmatpush.msra.mxu0 0.0
  %6943 = vmatpush.msra.mxu0 0.0
  %6944 = vmatpush.msra.mxu0 %v6927
  %6945 = vmatpush.msra.mxu0 %v6925
  %6946 = vmatmul.f32.gmra.mxu0 %v6894
  %v6947 = vpop.f32.mrf.mxu0
  %v6948 = vadd.f32 0.0, %v6947
  %6949 = vmatmul.f32.gmra.mxu0 %v6897
  %v6950 = vpop.f32.mrf.mxu0
  %v6951 = vadd.f32 0.0, %v6950
  %6952 = vdwg.mxu0
  %v6954 = vsel %vm142, %v6880, 0
  %v6957 = vsel %vm142, %v6881, 0
  %6959 = vmatpush.msra.mxu0 0.0
  %6960 = vmatpush.msra.mxu0 0.0
  %6961 = vmatpush.msra.mxu0 0.0
  %6962 = vmatpush.msra.mxu0 0.0
  %6963 = vmatpush.msra.mxu0 0.0
  %6964 = vmatpush.msra.mxu0 0.0
  %6965 = vmatpush.msra.mxu0 0.0
  %6966 = vmatpush.msra.mxu0 0.0
  %6967 = vmatpush.msra.mxu0 0.0
  %6968 = vmatpush.msra.mxu0 0.0
  %6969 = vmatpush.msra.mxu0 0.0
  %6970 = vmatpush.msra.mxu0 0.0
  %6971 = vmatpush.msra.mxu0 0.0
  %6972 = vmatpush.msra.mxu0 0.0
  %6973 = vmatpush.msra.mxu0 %v6876
  %6974 = vmatpush.msra.mxu0 %v6875
  %6975 = vmatmul.f32.gmra.mxu0 %v6954
  %v6976 = vpop.f32.mrf.mxu0
  %v6977 = vadd.f32 %v6917, %v6976
  %6978 = vmatmul.f32.gmra.mxu0 %v6957
  %v6979 = vpop.f32.mrf.mxu0
  %v6980 = vadd.f32 %v6920, %v6979
  %6981 = vdwg.mxu0
  %6982 = vmatpush.msra.mxu0 0.0
  %6983 = vmatpush.msra.mxu0 0.0
  %6984 = vmatpush.msra.mxu0 0.0
  %6985 = vmatpush.msra.mxu0 0.0
  %6986 = vmatpush.msra.mxu0 0.0
  %6987 = vmatpush.msra.mxu0 0.0
  %6988 = vmatpush.msra.mxu0 0.0
  %6989 = vmatpush.msra.mxu0 0.0
  %6990 = vmatpush.msra.mxu0 0.0
  %6991 = vmatpush.msra.mxu0 0.0
  %6992 = vmatpush.msra.mxu0 0.0
  %6993 = vmatpush.msra.mxu0 0.0
  %6994 = vmatpush.msra.mxu0 0.0
  %6995 = vmatpush.msra.mxu0 0.0
  %6996 = vmatpush.msra.mxu0 %v6878
  %6997 = vmatpush.msra.mxu0 %v6877
  %6998 = vmatmul.f32.gmra.mxu0 %v6954
  %v6999 = vpop.f32.mrf.mxu0
  %v7000 = vadd.f32 %v6948, %v6999
  %7001 = vmatmul.f32.gmra.mxu0 %v6957
  %v7002 = vpop.f32.mrf.mxu0
  %v7003 = vadd.f32 %v6951, %v7002
  %7004 = vdwg.mxu0
  %7005 = vrot.lane.b32.xlu0 %v6871, 126
  %v7006 = vpop.permute.xlu0 %7005
  %7007 = vrot.lane.b32.xlu0 %v6872, 126
  %v7008 = vpop.permute.xlu0 %7007
  %7009 = vrot.lane.b32.xlu0 %v6873, 126
  %v7010 = vpop.permute.xlu0 %7009
  %7011 = vrot.lane.b32.xlu0 %v6874, 126
  %v7012 = vpop.permute.xlu0 %7011
  %v7017 = vsel %vm3060, %v7006, 0.0
  %v7018 = vsel %vm3060, %v7008, 0.0
  %v7019 = vsel %vm3060, %v7010, 0.0
  %v7020 = vsel %vm3060, %v7012, 0.0
  %s7021 = scalar_lea.vmem %s1, 1040
  %v7022 = vld [vmem:[%s7021] sm:$0xff]
  %v7023 = vld [vmem:[%s7021 + $0x8] sm:$0xff]
  %v7025 = vsel %vm142, %v7022, 0
  %v7028 = vsel %vm142, %v7023, 0
  %7030 = vmatpush.msra.mxu0 0.0
  %7031 = vmatpush.msra.mxu0 0.0
  %7032 = vmatpush.msra.mxu0 0.0
  %7033 = vmatpush.msra.mxu0 0.0
  %7034 = vmatpush.msra.mxu0 0.0
  %7035 = vmatpush.msra.mxu0 0.0
  %7036 = vmatpush.msra.mxu0 0.0
  %7037 = vmatpush.msra.mxu0 0.0
  %7038 = vmatpush.msra.mxu0 0.0
  %7039 = vmatpush.msra.mxu0 0.0
  %7040 = vmatpush.msra.mxu0 0.0
  %7041 = vmatpush.msra.mxu0 0.0
  %7042 = vmatpush.msra.mxu0 0.0
  %7043 = vmatpush.msra.mxu0 0.0
  %7044 = vmatpush.msra.mxu0 %v7018
  %7045 = vmatpush.msra.mxu0 %v7017
  %7046 = vmatmul.f32.gmra.mxu0 %v7025
  %v7047 = vpop.f32.mrf.mxu0
  %v7048 = vadd.f32 0.0, %v7047
  %7049 = vmatmul.f32.gmra.mxu0 %v7028
  %v7050 = vpop.f32.mrf.mxu0
  %v7051 = vadd.f32 0.0, %v7050
  %7052 = vdwg.mxu0
  %7053 = vmatpush.msra.mxu0 0.0
  %7054 = vmatpush.msra.mxu0 0.0
  %7055 = vmatpush.msra.mxu0 0.0
  %7056 = vmatpush.msra.mxu0 0.0
  %7057 = vmatpush.msra.mxu0 0.0
  %7058 = vmatpush.msra.mxu0 0.0
  %7059 = vmatpush.msra.mxu0 0.0
  %7060 = vmatpush.msra.mxu0 0.0
  %7061 = vmatpush.msra.mxu0 0.0
  %7062 = vmatpush.msra.mxu0 0.0
  %7063 = vmatpush.msra.mxu0 0.0
  %7064 = vmatpush.msra.mxu0 0.0
  %7065 = vmatpush.msra.mxu0 0.0
  %7066 = vmatpush.msra.mxu0 0.0
  %7067 = vmatpush.msra.mxu0 %v7020
  %7068 = vmatpush.msra.mxu0 %v7019
  %7069 = vmatmul.f32.gmra.mxu0 %v7025
  %v7070 = vpop.f32.mrf.mxu0
  %v7071 = vadd.f32 0.0, %v7070
  %7072 = vmatmul.f32.gmra.mxu0 %v7028
  %v7073 = vpop.f32.mrf.mxu0
  %v7074 = vadd.f32 0.0, %v7073
  %7075 = vdwg.mxu0
  %v7076 = vadd.f32 %v6977, %v7048
  %v7077 = vadd.f32 %v6980, %v7051
  %v7078 = vadd.f32 %v7000, %v7071
  %v7079 = vadd.f32 %v7003, %v7074
  %7080 = vrot.lane.b32.xlu0 %v6871, 120
  %v7081 = vpop.permute.xlu0 %7080
  %7082 = vrot.lane.b32.xlu0 %v6872, 120
  %v7083 = vpop.permute.xlu0 %7082
  %7084 = vrot.lane.b32.xlu0 %v6873, 120
  %v7085 = vpop.permute.xlu0 %7084
  %7086 = vrot.lane.b32.xlu0 %v6874, 120
  %v7087 = vpop.permute.xlu0 %7086
  %v7092 = vsel %vm2928, %v7081, 0.0
  %v7093 = vsel %vm2928, %v7083, 0.0
  %v7094 = vsel %vm2928, %v7085, 0.0
  %v7095 = vsel %vm2928, %v7087, 0.0
  %s7096 = scalar_lea.vmem %s1, 1056
  %v7097 = vld [vmem:[%s7096] sm:$0xff]
  %v7098 = vld [vmem:[%s7096 + $0x8] sm:$0xff]
  %v7100 = vsel %vm142, %v7097, 0
  %v7103 = vsel %vm142, %v7098, 0
  %7105 = vmatpush.msra.mxu0 0.0
  %7106 = vmatpush.msra.mxu0 0.0
  %7107 = vmatpush.msra.mxu0 0.0
  %7108 = vmatpush.msra.mxu0 0.0
  %7109 = vmatpush.msra.mxu0 0.0
  %7110 = vmatpush.msra.mxu0 0.0
  %7111 = vmatpush.msra.mxu0 0.0
  %7112 = vmatpush.msra.mxu0 0.0
  %7113 = vmatpush.msra.mxu0 0.0
  %7114 = vmatpush.msra.mxu0 0.0
  %7115 = vmatpush.msra.mxu0 0.0
  %7116 = vmatpush.msra.mxu0 0.0
  %7117 = vmatpush.msra.mxu0 0.0
  %7118 = vmatpush.msra.mxu0 0.0
  %7119 = vmatpush.msra.mxu0 %v7093
  %7120 = vmatpush.msra.mxu0 %v7092
  %7121 = vmatmul.f32.gmra.mxu0 %v7100
  %v7122 = vpop.f32.mrf.mxu0
  %v7123 = vadd.f32 0.0, %v7122
  %7124 = vmatmul.f32.gmra.mxu0 %v7103
  %v7125 = vpop.f32.mrf.mxu0
  %v7126 = vadd.f32 0.0, %v7125
  %7127 = vdwg.mxu0
  %7128 = vmatpush.msra.mxu0 0.0
  %7129 = vmatpush.msra.mxu0 0.0
  %7130 = vmatpush.msra.mxu0 0.0
  %7131 = vmatpush.msra.mxu0 0.0
  %7132 = vmatpush.msra.mxu0 0.0
  %7133 = vmatpush.msra.mxu0 0.0
  %7134 = vmatpush.msra.mxu0 0.0
  %7135 = vmatpush.msra.mxu0 0.0
  %7136 = vmatpush.msra.mxu0 0.0
  %7137 = vmatpush.msra.mxu0 0.0
  %7138 = vmatpush.msra.mxu0 0.0
  %7139 = vmatpush.msra.mxu0 0.0
  %7140 = vmatpush.msra.mxu0 0.0
  %7141 = vmatpush.msra.mxu0 0.0
  %7142 = vmatpush.msra.mxu0 %v7095
  %7143 = vmatpush.msra.mxu0 %v7094
  %7144 = vmatmul.f32.gmra.mxu0 %v7100
  %v7145 = vpop.f32.mrf.mxu0
  %v7146 = vadd.f32 0.0, %v7145
  %7147 = vmatmul.f32.gmra.mxu0 %v7103
  %v7148 = vpop.f32.mrf.mxu0
  %v7149 = vadd.f32 0.0, %v7148
  %7150 = vdwg.mxu0
  %v7151 = vadd.f32 %v7076, %v7123
  %v7152 = vadd.f32 %v7077, %v7126
  %v7153 = vadd.f32 %v7078, %v7146
  %v7154 = vadd.f32 %v7079, %v7149
  %s7155 = scalar_lea.vmem %s1, 1072
  %v7156 = vld [vmem:[%s7155] sm:$0xff]
  %v7157 = vld [vmem:[%s7155 + $0x8] sm:$0xff]
  %7158 = vrot.lane.b32.xlu0 %v6871, 119
  %v7159 = vpop.permute.xlu0 %7158
  %7160 = vrot.lane.b32.xlu0 %v6872, 119
  %v7161 = vpop.permute.xlu0 %7160
  %v7165 = vsel %vm142, %v7156, 0
  %v7168 = vsel %vm142, %v7157, 0
  %7170 = vmatpush.msra.mxu0 0.0
  %7171 = vmatpush.msra.mxu0 0.0
  %7172 = vmatpush.msra.mxu0 0.0
  %7173 = vmatpush.msra.mxu0 0.0
  %7174 = vmatpush.msra.mxu0 0.0
  %7175 = vmatpush.msra.mxu0 0.0
  %7176 = vmatpush.msra.mxu0 0.0
  %7177 = vmatpush.msra.mxu0 0.0
  %7178 = vmatpush.msra.mxu0 0.0
  %7179 = vmatpush.msra.mxu0 0.0
  %7180 = vmatpush.msra.mxu0 0.0
  %7181 = vmatpush.msra.mxu0 0.0
  %7182 = vmatpush.msra.mxu0 0.0
  %7183 = vmatpush.msra.mxu0 0.0
  %7184 = vmatpush.msra.mxu0 %v7161
  %7185 = vmatpush.msra.mxu0 %v7159
  %7186 = vmatmul.f32.gmra.mxu0 %v7165
  %v7187 = vpop.f32.mrf.mxu0
  %v7188 = vadd.f32 0.0, %v7187
  %7189 = vmatmul.f32.gmra.mxu0 %v7168
  %v7190 = vpop.f32.mrf.mxu0
  %v7191 = vadd.f32 0.0, %v7190
  %7192 = vdwg.mxu0
  %7193 = vrot.lane.b32.xlu0 %v6873, 119
  %v7194 = vpop.permute.xlu0 %7193
  %7195 = vrot.lane.b32.xlu0 %v6874, 119
  %v7196 = vpop.permute.xlu0 %7195
  %7199 = vmatpush.msra.mxu0 0.0
  %7200 = vmatpush.msra.mxu0 0.0
  %7201 = vmatpush.msra.mxu0 0.0
  %7202 = vmatpush.msra.mxu0 0.0
  %7203 = vmatpush.msra.mxu0 0.0
  %7204 = vmatpush.msra.mxu0 0.0
  %7205 = vmatpush.msra.mxu0 0.0
  %7206 = vmatpush.msra.mxu0 0.0
  %7207 = vmatpush.msra.mxu0 0.0
  %7208 = vmatpush.msra.mxu0 0.0
  %7209 = vmatpush.msra.mxu0 0.0
  %7210 = vmatpush.msra.mxu0 0.0
  %7211 = vmatpush.msra.mxu0 0.0
  %7212 = vmatpush.msra.mxu0 0.0
  %7213 = vmatpush.msra.mxu0 %v7196
  %7214 = vmatpush.msra.mxu0 %v7194
  %7215 = vmatmul.f32.gmra.mxu0 %v7165
  %v7216 = vpop.f32.mrf.mxu0
  %v7217 = vadd.f32 0.0, %v7216
  %7218 = vmatmul.f32.gmra.mxu0 %v7168
  %v7219 = vpop.f32.mrf.mxu0
  %v7220 = vadd.f32 0.0, %v7219
  %7221 = vdwg.mxu0
  %v7222 = vadd.f32 %v7151, %v7188
  %v7223 = vadd.f32 %v7152, %v7191
  %v7224 = vadd.f32 %v7153, %v7217
  %v7225 = vadd.f32 %v7154, %v7220
  %7226 = vrot.lane.b32.xlu0 %v6871, 118
  %v7227 = vpop.permute.xlu0 %7226
  %7228 = vrot.lane.b32.xlu0 %v6872, 118
  %v7229 = vpop.permute.xlu0 %7228
  %7230 = vrot.lane.b32.xlu0 %v6873, 118
  %v7231 = vpop.permute.xlu0 %7230
  %7232 = vrot.lane.b32.xlu0 %v6874, 118
  %v7233 = vpop.permute.xlu0 %7232
  %v7238 = vsel %vm3060, %v7227, 0.0
  %v7239 = vsel %vm3060, %v7229, 0.0
  %v7240 = vsel %vm3060, %v7231, 0.0
  %v7241 = vsel %vm3060, %v7233, 0.0
  %s7242 = scalar_lea.vmem %s1, 1088
  %v7243 = vld [vmem:[%s7242] sm:$0xff]
  %v7244 = vld [vmem:[%s7242 + $0x8] sm:$0xff]
  %v7246 = vsel %vm142, %v7243, 0
  %v7249 = vsel %vm142, %v7244, 0
  %7251 = vmatpush.msra.mxu0 0.0
  %7252 = vmatpush.msra.mxu0 0.0
  %7253 = vmatpush.msra.mxu0 0.0
  %7254 = vmatpush.msra.mxu0 0.0
  %7255 = vmatpush.msra.mxu0 0.0
  %7256 = vmatpush.msra.mxu0 0.0
  %7257 = vmatpush.msra.mxu0 0.0
  %7258 = vmatpush.msra.mxu0 0.0
  %7259 = vmatpush.msra.mxu0 0.0
  %7260 = vmatpush.msra.mxu0 0.0
  %7261 = vmatpush.msra.mxu0 0.0
  %7262 = vmatpush.msra.mxu0 0.0
  %7263 = vmatpush.msra.mxu0 0.0
  %7264 = vmatpush.msra.mxu0 0.0
  %7265 = vmatpush.msra.mxu0 %v7239
  %7266 = vmatpush.msra.mxu0 %v7238
  %7267 = vmatmul.f32.gmra.mxu0 %v7246
  %v7268 = vpop.f32.mrf.mxu0
  %v7269 = vadd.f32 0.0, %v7268
  %7270 = vmatmul.f32.gmra.mxu0 %v7249
  %v7271 = vpop.f32.mrf.mxu0
  %v7272 = vadd.f32 0.0, %v7271
  %7273 = vdwg.mxu0
  %7274 = vmatpush.msra.mxu0 0.0
  %7275 = vmatpush.msra.mxu0 0.0
  %7276 = vmatpush.msra.mxu0 0.0
  %7277 = vmatpush.msra.mxu0 0.0
  %7278 = vmatpush.msra.mxu0 0.0
  %7279 = vmatpush.msra.mxu0 0.0
  %7280 = vmatpush.msra.mxu0 0.0
  %7281 = vmatpush.msra.mxu0 0.0
  %7282 = vmatpush.msra.mxu0 0.0
  %7283 = vmatpush.msra.mxu0 0.0
  %7284 = vmatpush.msra.mxu0 0.0
  %7285 = vmatpush.msra.mxu0 0.0
  %7286 = vmatpush.msra.mxu0 0.0
  %7287 = vmatpush.msra.mxu0 0.0
  %7288 = vmatpush.msra.mxu0 %v7241
  %7289 = vmatpush.msra.mxu0 %v7240
  %7290 = vmatmul.f32.gmra.mxu0 %v7246
  %v7291 = vpop.f32.mrf.mxu0
  %v7292 = vadd.f32 0.0, %v7291
  %7293 = vmatmul.f32.gmra.mxu0 %v7249
  %v7294 = vpop.f32.mrf.mxu0
  %v7295 = vadd.f32 0.0, %v7294
  %7296 = vdwg.mxu0
  %v7297 = vadd.f32 %v7222, %v7269
  %v7298 = vadd.f32 %v7223, %v7272
  %v7299 = vadd.f32 %v7224, %v7292
  %v7300 = vadd.f32 %v7225, %v7295
  %7301 = vrot.lane.b32.xlu0 %v6871, 112
  %v7302 = vpop.permute.xlu0 %7301
  %7303 = vrot.lane.b32.xlu0 %v6872, 112
  %v7304 = vpop.permute.xlu0 %7303
  %7305 = vrot.lane.b32.xlu0 %v6873, 112
  %v7306 = vpop.permute.xlu0 %7305
  %7307 = vrot.lane.b32.xlu0 %v6874, 112
  %v7308 = vpop.permute.xlu0 %7307
  %v7313 = vsel %vm2928, %v7302, 0.0
  %v7314 = vsel %vm2928, %v7304, 0.0
  %v7315 = vsel %vm2928, %v7306, 0.0
  %v7316 = vsel %vm2928, %v7308, 0.0
  %s7317 = scalar_lea.vmem %s1, 1104
  %v7318 = vld [vmem:[%s7317] sm:$0xff]
  %v7319 = vld [vmem:[%s7317 + $0x8] sm:$0xff]
  %v7321 = vsel %vm142, %v7318, 0
  %v7324 = vsel %vm142, %v7319, 0
  %7326 = vmatpush.msra.mxu0 0.0
  %7327 = vmatpush.msra.mxu0 0.0
  %7328 = vmatpush.msra.mxu0 0.0
  %7329 = vmatpush.msra.mxu0 0.0
  %7330 = vmatpush.msra.mxu0 0.0
  %7331 = vmatpush.msra.mxu0 0.0
  %7332 = vmatpush.msra.mxu0 0.0
  %7333 = vmatpush.msra.mxu0 0.0
  %7334 = vmatpush.msra.mxu0 0.0
  %7335 = vmatpush.msra.mxu0 0.0
  %7336 = vmatpush.msra.mxu0 0.0
  %7337 = vmatpush.msra.mxu0 0.0
  %7338 = vmatpush.msra.mxu0 0.0
  %7339 = vmatpush.msra.mxu0 0.0
  %7340 = vmatpush.msra.mxu0 %v7314
  %7341 = vmatpush.msra.mxu0 %v7313
  %7342 = vmatmul.f32.gmra.mxu0 %v7321
  %v7343 = vpop.f32.mrf.mxu0
  %v7344 = vadd.f32 0.0, %v7343
  %7345 = vmatmul.f32.gmra.mxu0 %v7324
  %v7346 = vpop.f32.mrf.mxu0
  %v7347 = vadd.f32 0.0, %v7346
  %7348 = vdwg.mxu0
  %7349 = vmatpush.msra.mxu0 0.0
  %7350 = vmatpush.msra.mxu0 0.0
  %7351 = vmatpush.msra.mxu0 0.0
  %7352 = vmatpush.msra.mxu0 0.0
  %7353 = vmatpush.msra.mxu0 0.0
  %7354 = vmatpush.msra.mxu0 0.0
  %7355 = vmatpush.msra.mxu0 0.0
  %7356 = vmatpush.msra.mxu0 0.0
  %7357 = vmatpush.msra.mxu0 0.0
  %7358 = vmatpush.msra.mxu0 0.0
  %7359 = vmatpush.msra.mxu0 0.0
  %7360 = vmatpush.msra.mxu0 0.0
  %7361 = vmatpush.msra.mxu0 0.0
  %7362 = vmatpush.msra.mxu0 0.0
  %7363 = vmatpush.msra.mxu0 %v7316
  %7364 = vmatpush.msra.mxu0 %v7315
  %7365 = vmatmul.f32.gmra.mxu0 %v7321
  %v7366 = vpop.f32.mrf.mxu0
  %v7367 = vadd.f32 0.0, %v7366
  %7368 = vmatmul.f32.gmra.mxu0 %v7324
  %v7369 = vpop.f32.mrf.mxu0
  %v7370 = vadd.f32 0.0, %v7369
  %7371 = vdwg.mxu0
  %v7372 = vadd.f32 %v7297, %v7344
  %v7373 = vadd.f32 %v7298, %v7347
  %v7374 = vadd.f32 %v7299, %v7367
  %v7375 = vadd.f32 %v7300, %v7370
  %s7376 = scalar_lea.vmem %s1, 1120
  %v7377 = vld [vmem:[%s7376] sm:$0xff]
  %v7378 = vld [vmem:[%s7376 + $0x8] sm:$0xff]
  %7379 = vrot.lane.b32.xlu0 %v6871, 111
  %v7380 = vpop.permute.xlu0 %7379
  %7381 = vrot.lane.b32.xlu0 %v6872, 111
  %v7382 = vpop.permute.xlu0 %7381
  %v7386 = vsel %vm142, %v7377, 0
  %v7389 = vsel %vm142, %v7378, 0
  %7391 = vmatpush.msra.mxu0 0.0
  %7392 = vmatpush.msra.mxu0 0.0
  %7393 = vmatpush.msra.mxu0 0.0
  %7394 = vmatpush.msra.mxu0 0.0
  %7395 = vmatpush.msra.mxu0 0.0
  %7396 = vmatpush.msra.mxu0 0.0
  %7397 = vmatpush.msra.mxu0 0.0
  %7398 = vmatpush.msra.mxu0 0.0
  %7399 = vmatpush.msra.mxu0 0.0
  %7400 = vmatpush.msra.mxu0 0.0
  %7401 = vmatpush.msra.mxu0 0.0
  %7402 = vmatpush.msra.mxu0 0.0
  %7403 = vmatpush.msra.mxu0 0.0
  %7404 = vmatpush.msra.mxu0 0.0
  %7405 = vmatpush.msra.mxu0 %v7382
  %7406 = vmatpush.msra.mxu0 %v7380
  %7407 = vmatmul.f32.gmra.mxu0 %v7386
  %v7408 = vpop.f32.mrf.mxu0
  %v7409 = vadd.f32 0.0, %v7408
  %7410 = vmatmul.f32.gmra.mxu0 %v7389
  %v7411 = vpop.f32.mrf.mxu0
  %v7412 = vadd.f32 0.0, %v7411
  %7413 = vdwg.mxu0
  %7414 = vrot.lane.b32.xlu0 %v6873, 111
  %v7415 = vpop.permute.xlu0 %7414
  %7416 = vrot.lane.b32.xlu0 %v6874, 111
  %v7417 = vpop.permute.xlu0 %7416
  %7420 = vmatpush.msra.mxu0 0.0
  %7421 = vmatpush.msra.mxu0 0.0
  %7422 = vmatpush.msra.mxu0 0.0
  %7423 = vmatpush.msra.mxu0 0.0
  %7424 = vmatpush.msra.mxu0 0.0
  %7425 = vmatpush.msra.mxu0 0.0
  %7426 = vmatpush.msra.mxu0 0.0
  %7427 = vmatpush.msra.mxu0 0.0
  %7428 = vmatpush.msra.mxu0 0.0
  %7429 = vmatpush.msra.mxu0 0.0
  %7430 = vmatpush.msra.mxu0 0.0
  %7431 = vmatpush.msra.mxu0 0.0
  %7432 = vmatpush.msra.mxu0 0.0
  %7433 = vmatpush.msra.mxu0 0.0
  %7434 = vmatpush.msra.mxu0 %v7417
  %7435 = vmatpush.msra.mxu0 %v7415
  %7436 = vmatmul.f32.gmra.mxu0 %v7386
  %v7437 = vpop.f32.mrf.mxu0
  %v7438 = vadd.f32 0.0, %v7437
  %7439 = vmatmul.f32.gmra.mxu0 %v7389
  %v7440 = vpop.f32.mrf.mxu0
  %v7441 = vadd.f32 0.0, %v7440
  %7442 = vdwg.mxu0
  %v7443 = vadd.f32 %v7372, %v7409
  %v7444 = vadd.f32 %v7373, %v7412
  %v7445 = vadd.f32 %v7374, %v7438
  %v7446 = vadd.f32 %v7375, %v7441
  %7447 = vrot.lane.b32.xlu0 %v6871, 110
  %v7448 = vpop.permute.xlu0 %7447
  %7449 = vrot.lane.b32.xlu0 %v6872, 110
  %v7450 = vpop.permute.xlu0 %7449
  %7451 = vrot.lane.b32.xlu0 %v6873, 110
  %v7452 = vpop.permute.xlu0 %7451
  %7453 = vrot.lane.b32.xlu0 %v6874, 110
  %v7454 = vpop.permute.xlu0 %7453
  %v7459 = vsel %vm3060, %v7448, 0.0
  %v7460 = vsel %vm3060, %v7450, 0.0
  %v7461 = vsel %vm3060, %v7452, 0.0
  %v7462 = vsel %vm3060, %v7454, 0.0
  %s7463 = scalar_lea.vmem %s1, 1136
  %v7464 = vld [vmem:[%s7463] sm:$0xff]
  %v7465 = vld [vmem:[%s7463 + $0x8] sm:$0xff]
  %v7467 = vsel %vm142, %v7464, 0
  %v7470 = vsel %vm142, %v7465, 0
  %7472 = vmatpush.msra.mxu0 0.0
  %7473 = vmatpush.msra.mxu0 0.0
  %7474 = vmatpush.msra.mxu0 0.0
  %7475 = vmatpush.msra.mxu0 0.0
  %7476 = vmatpush.msra.mxu0 0.0
  %7477 = vmatpush.msra.mxu0 0.0
  %7478 = vmatpush.msra.mxu0 0.0
  %7479 = vmatpush.msra.mxu0 0.0
  %7480 = vmatpush.msra.mxu0 0.0
  %7481 = vmatpush.msra.mxu0 0.0
  %7482 = vmatpush.msra.mxu0 0.0
  %7483 = vmatpush.msra.mxu0 0.0
  %7484 = vmatpush.msra.mxu0 0.0
  %7485 = vmatpush.msra.mxu0 0.0
  %7486 = vmatpush.msra.mxu0 %v7460
  %7487 = vmatpush.msra.mxu0 %v7459
  %7488 = vmatmul.f32.gmra.mxu0 %v7467
  %v7489 = vpop.f32.mrf.mxu0
  %v7490 = vadd.f32 0.0, %v7489
  %7491 = vmatmul.f32.gmra.mxu0 %v7470
  %v7492 = vpop.f32.mrf.mxu0
  %v7493 = vadd.f32 0.0, %v7492
  %7494 = vdwg.mxu0
  %7495 = vmatpush.msra.mxu0 0.0
  %7496 = vmatpush.msra.mxu0 0.0
  %7497 = vmatpush.msra.mxu0 0.0
  %7498 = vmatpush.msra.mxu0 0.0
  %7499 = vmatpush.msra.mxu0 0.0
  %7500 = vmatpush.msra.mxu0 0.0
  %7501 = vmatpush.msra.mxu0 0.0
  %7502 = vmatpush.msra.mxu0 0.0
  %7503 = vmatpush.msra.mxu0 0.0
  %7504 = vmatpush.msra.mxu0 0.0
  %7505 = vmatpush.msra.mxu0 0.0
  %7506 = vmatpush.msra.mxu0 0.0
  %7507 = vmatpush.msra.mxu0 0.0
  %7508 = vmatpush.msra.mxu0 0.0
  %7509 = vmatpush.msra.mxu0 %v7462
  %7510 = vmatpush.msra.mxu0 %v7461
  %7511 = vmatmul.f32.gmra.mxu0 %v7467
  %v7512 = vpop.f32.mrf.mxu0
  %v7513 = vadd.f32 0.0, %v7512
  %7514 = vmatmul.f32.gmra.mxu0 %v7470
  %v7515 = vpop.f32.mrf.mxu0
  %v7516 = vadd.f32 0.0, %v7515
  %7517 = vdwg.mxu0
  %v7518 = vadd.f32 %v7443, %v7490
  %v7519 = vadd.f32 %v7444, %v7493
  %v7520 = vadd.f32 %v7445, %v7513
  %v7521 = vadd.f32 %v7446, %v7516
  %s7522 = scalar_lea.vmem %s2, 128
  %v7523 = vld [vmem:[%s7522] sm:$0xff]
  %v7524 = vld [vmem:[%s7522 + $0x8] sm:$0xff]
  %7526 = vset.pattern.permute.xlu0 0
  %7527 = vperm.xlu0 %7526, %v7523
  %v7528 = vpop.permute.xlu0 %7527
  %7531 = vset.pattern.permute.xlu0 0
  %7532 = vperm.xlu0 %7531, %v7524
  %v7533 = vpop.permute.xlu0 %7532
  %v7535 = vadd.f32 %v7518, %v7528
  %v7536 = vadd.f32 %v7519, %v7533
  %v7537 = vadd.f32 %v7520, %v7528
  %v7538 = vadd.f32 %v7521, %v7533
  %v7539 = vmax.f32 %v7535, 0.0
  %v7540 = vmax.f32 %v7536, 0.0
  %v7541 = vmax.f32 %v7537, 0.0
  %v7542 = vmax.f32 %v7538, 0.0
  %s7543 = scalar_lea.vmem %s1, 1360
  %v7544 = vld [vmem:[%s7543] sm:$0xff]
  %v7545 = vld [vmem:[%s7543 + $0x8] sm:$0xff]
  %v7547 = vsel %vm142, %v7544, 0
  %v7550 = vsel %vm142, %v7545, 0
  %7552 = vmatpush.msra.mxu0 0.0
  %7553 = vmatpush.msra.mxu0 0.0
  %7554 = vmatpush.msra.mxu0 0.0
  %7555 = vmatpush.msra.mxu0 0.0
  %7556 = vmatpush.msra.mxu0 0.0
  %7557 = vmatpush.msra.mxu0 0.0
  %7558 = vmatpush.msra.mxu0 0.0
  %7559 = vmatpush.msra.mxu0 0.0
  %7560 = vmatpush.msra.mxu0 0.0
  %7561 = vmatpush.msra.mxu0 0.0
  %7562 = vmatpush.msra.mxu0 0.0
  %7563 = vmatpush.msra.mxu0 0.0
  %7564 = vmatpush.msra.mxu0 0.0
  %7565 = vmatpush.msra.mxu0 0.0
  %7566 = vmatpush.msra.mxu0 %v7540
  %7567 = vmatpush.msra.mxu0 %v7539
  %7568 = vmatmul.f32.gmra.mxu0 %v7547
  %v7569 = vpop.f32.mrf.mxu0
  %v7570 = vadd.f32 0.0, %v7569
  %7571 = vmatmul.f32.gmra.mxu0 %v7550
  %v7572 = vpop.f32.mrf.mxu0
  %v7573 = vadd.f32 0.0, %v7572
  %7574 = vdwg.mxu0
  %7575 = vmatpush.msra.mxu0 0.0
  %7576 = vmatpush.msra.mxu0 0.0
  %7577 = vmatpush.msra.mxu0 0.0
  %7578 = vmatpush.msra.mxu0 0.0
  %7579 = vmatpush.msra.mxu0 0.0
  %7580 = vmatpush.msra.mxu0 0.0
  %7581 = vmatpush.msra.mxu0 0.0
  %7582 = vmatpush.msra.mxu0 0.0
  %7583 = vmatpush.msra.mxu0 0.0
  %7584 = vmatpush.msra.mxu0 0.0
  %7585 = vmatpush.msra.mxu0 0.0
  %7586 = vmatpush.msra.mxu0 0.0
  %7587 = vmatpush.msra.mxu0 0.0
  %7588 = vmatpush.msra.mxu0 0.0
  %7589 = vmatpush.msra.mxu0 %v7542
  %7590 = vmatpush.msra.mxu0 %v7541
  %7591 = vmatmul.f32.gmra.mxu0 %v7547
  %v7592 = vpop.f32.mrf.mxu0
  %v7593 = vadd.f32 0.0, %v7592
  %7594 = vmatmul.f32.gmra.mxu0 %v7550
  %v7595 = vpop.f32.mrf.mxu0
  %v7596 = vadd.f32 0.0, %v7595
  %7597 = vdwg.mxu0
  %v7598 = vld [vmem:[%s6] sm:$0xff]
  %v7599 = vld [vmem:[%s6 + $0x8] sm:$0xff]
  %v7600 = vld [vmem:[%s6 + $0x10] sm:$0xff]
  %v7601 = vld [vmem:[%s6 + $0x18] sm:$0xff]
  %v7602 = vld [vmem:[%s6 + $0x20] sm:$0xff]
  %v7603 = vld [vmem:[%s6 + $0x28] sm:$0xff]
  %v7604 = vld [vmem:[%s6 + $0x30] sm:$0xff]
  %v7605 = vld [vmem:[%s6 + $0x38] sm:$0xff]
  %v7606 = vld [vmem:[%s6 + $0x40] sm:$0xff]
  %v7607 = vld [vmem:[%s6 + $0x48] sm:$0xff]
  %v7608 = vld [vmem:[%s6 + $0x50] sm:$0xff]
  %v7609 = vld [vmem:[%s6 + $0x58] sm:$0xff]
  %v7610 = vld [vmem:[%s6 + $0x60] sm:$0xff]
  %v7611 = vld [vmem:[%s6 + $0x68] sm:$0xff]
  %v7612 = vld [vmem:[%s6 + $0x70] sm:$0xff]
  %v7613 = vld [vmem:[%s6 + $0x78] sm:$0xff]
  %v7615 = vsel %vm4299, %v7570, 0
  %v7618 = vsel %vm4299, %v7573, 0
  %v7621 = vsel %vm4299, %v7593, 0
  %v7624 = vsel %vm4299, %v7596, 0
  %7626 = vmatpush.msra.mxu0 0.0
  %7627 = vmatpush.msra.mxu0 0.0
  %7628 = vmatpush.msra.mxu0 0.0
  %7629 = vmatpush.msra.mxu0 0.0
  %7630 = vmatpush.msra.mxu0 0.0
  %7631 = vmatpush.msra.mxu0 0.0
  %7632 = vmatpush.msra.mxu0 0.0
  %7633 = vmatpush.msra.mxu0 0.0
  %7634 = vmatpush.msra.mxu0 %v7612
  %7635 = vmatpush.msra.mxu0 %v7610
  %7636 = vmatpush.msra.mxu0 %v7608
  %7637 = vmatpush.msra.mxu0 %v7606
  %7638 = vmatpush.msra.mxu0 %v7604
  %7639 = vmatpush.msra.mxu0 %v7602
  %7640 = vmatpush.msra.mxu0 %v7600
  %7641 = vmatpush.msra.mxu0 %v7598
  %7642 = vmatmul.f32.gmra.mxu0 %v7615
  %v7643 = vpop.f32.mrf.mxu0
  %v7644 = vadd.f32 0.0, %v7643
  %7645 = vmatmul.f32.gmra.mxu0 %v7618
  %v7646 = vpop.f32.mrf.mxu0
  %v7647 = vadd.f32 0.0, %v7646
  %7648 = vmatmul.f32.gmra.mxu0 %v7621
  %v7649 = vpop.f32.mrf.mxu0
  %v7650 = vadd.f32 0.0, %v7649
  %7651 = vmatmul.f32.gmra.mxu0 %v7624
  %v7652 = vpop.f32.mrf.mxu0
  %v7653 = vadd.f32 0.0, %v7652
  %7654 = vdwg.mxu0
  %7655 = vmatpush.msra.mxu0 0.0
  %7656 = vmatpush.msra.mxu0 0.0
  %7657 = vmatpush.msra.mxu0 0.0
  %7658 = vmatpush.msra.mxu0 0.0
  %7659 = vmatpush.msra.mxu0 0.0
  %7660 = vmatpush.msra.mxu0 0.0
  %7661 = vmatpush.msra.mxu0 0.0
  %7662 = vmatpush.msra.mxu0 0.0
  %7663 = vmatpush.msra.mxu0 %v7613
  %7664 = vmatpush.msra.mxu0 %v7611
  %7665 = vmatpush.msra.mxu0 %v7609
  %7666 = vmatpush.msra.mxu0 %v7607
  %7667 = vmatpush.msra.mxu0 %v7605
  %7668 = vmatpush.msra.mxu0 %v7603
  %7669 = vmatpush.msra.mxu0 %v7601
  %7670 = vmatpush.msra.mxu0 %v7599
  %7671 = vmatmul.f32.gmra.mxu0 %v7615
  %v7672 = vpop.f32.mrf.mxu0
  %v7673 = vadd.f32 0.0, %v7672
  %7674 = vmatmul.f32.gmra.mxu0 %v7618
  %v7675 = vpop.f32.mrf.mxu0
  %v7676 = vadd.f32 0.0, %v7675
  %7677 = vmatmul.f32.gmra.mxu0 %v7621
  %v7678 = vpop.f32.mrf.mxu0
  %v7679 = vadd.f32 0.0, %v7678
  %7680 = vmatmul.f32.gmra.mxu0 %v7624
  %v7681 = vpop.f32.mrf.mxu0
  %v7682 = vadd.f32 0.0, %v7681
  %7683 = vdwg.mxu0
  %v7684 = vadd.f32 %v7644, 0.0
  %v7685 = vadd.f32 %v7673, 0.0
  %v7686 = vadd.f32 %v7647, 0.0
  %v7687 = vadd.f32 %v7676, 0.0
  %v7688 = vadd.f32 %v7650, 0.0
  %v7689 = vadd.f32 %v7679, 0.0
  %v7690 = vadd.f32 %v7653, 0.0
  %v7691 = vadd.f32 %v7682, 0.0
  %s7692 = scalar_lea.vmem %s1, 1376
  %v7693 = vld [vmem:[%s7692] sm:$0xff]
  %v7694 = vld [vmem:[%s7692 + $0x8] sm:$0xff]
  %v7696 = vsel %vm142, %v7693, 0
  %v7699 = vsel %vm142, %v7694, 0
  %7701 = vmatpush.msra.mxu0 0.0
  %7702 = vmatpush.msra.mxu0 0.0
  %7703 = vmatpush.msra.mxu0 0.0
  %7704 = vmatpush.msra.mxu0 0.0
  %7705 = vmatpush.msra.mxu0 0.0
  %7706 = vmatpush.msra.mxu0 0.0
  %7707 = vmatpush.msra.mxu0 0.0
  %7708 = vmatpush.msra.mxu0 0.0
  %7709 = vmatpush.msra.mxu0 0.0
  %7710 = vmatpush.msra.mxu0 0.0
  %7711 = vmatpush.msra.mxu0 0.0
  %7712 = vmatpush.msra.mxu0 0.0
  %7713 = vmatpush.msra.mxu0 0.0
  %7714 = vmatpush.msra.mxu0 0.0
  %7715 = vmatpush.msra.mxu0 %v7540
  %7716 = vmatpush.msra.mxu0 %v7539
  %7717 = vmatmul.f32.gmra.mxu0 %v7696
  %v7718 = vpop.f32.mrf.mxu0
  %v7719 = vadd.f32 0.0, %v7718
  %7720 = vmatmul.f32.gmra.mxu0 %v7699
  %v7721 = vpop.f32.mrf.mxu0
  %v7722 = vadd.f32 0.0, %v7721
  %7723 = vdwg.mxu0
  %7724 = vmatpush.msra.mxu0 0.0
  %7725 = vmatpush.msra.mxu0 0.0
  %7726 = vmatpush.msra.mxu0 0.0
  %7727 = vmatpush.msra.mxu0 0.0
  %7728 = vmatpush.msra.mxu0 0.0
  %7729 = vmatpush.msra.mxu0 0.0
  %7730 = vmatpush.msra.mxu0 0.0
  %7731 = vmatpush.msra.mxu0 0.0
  %7732 = vmatpush.msra.mxu0 0.0
  %7733 = vmatpush.msra.mxu0 0.0
  %7734 = vmatpush.msra.mxu0 0.0
  %7735 = vmatpush.msra.mxu0 0.0
  %7736 = vmatpush.msra.mxu0 0.0
  %7737 = vmatpush.msra.mxu0 0.0
  %7738 = vmatpush.msra.mxu0 %v7542
  %7739 = vmatpush.msra.mxu0 %v7541
  %7740 = vmatmul.f32.gmra.mxu0 %v7696
  %v7741 = vpop.f32.mrf.mxu0
  %v7742 = vadd.f32 0.0, %v7741
  %7743 = vmatmul.f32.gmra.mxu0 %v7699
  %v7744 = vpop.f32.mrf.mxu0
  %v7745 = vadd.f32 0.0, %v7744
  %7746 = vdwg.mxu0
  %s7747 = scalar_lea.vmem %s6, 128
  %v7748 = vld [vmem:[%s7747] sm:$0xff]
  %v7749 = vld [vmem:[%s7747 + $0x8] sm:$0xff]
  %v7750 = vld [vmem:[%s7747 + $0x10] sm:$0xff]
  %v7751 = vld [vmem:[%s7747 + $0x18] sm:$0xff]
  %v7752 = vld [vmem:[%s7747 + $0x20] sm:$0xff]
  %v7753 = vld [vmem:[%s7747 + $0x28] sm:$0xff]
  %v7754 = vld [vmem:[%s7747 + $0x30] sm:$0xff]
  %v7755 = vld [vmem:[%s7747 + $0x38] sm:$0xff]
  %v7756 = vld [vmem:[%s7747 + $0x40] sm:$0xff]
  %v7757 = vld [vmem:[%s7747 + $0x48] sm:$0xff]
  %v7758 = vld [vmem:[%s7747 + $0x50] sm:$0xff]
  %v7759 = vld [vmem:[%s7747 + $0x58] sm:$0xff]
  %v7760 = vld [vmem:[%s7747 + $0x60] sm:$0xff]
  %v7761 = vld [vmem:[%s7747 + $0x68] sm:$0xff]
  %v7762 = vld [vmem:[%s7747 + $0x70] sm:$0xff]
  %v7763 = vld [vmem:[%s7747 + $0x78] sm:$0xff]
  %v7765 = vsel %vm4299, %v7719, 0
  %v7768 = vsel %vm4299, %v7722, 0
  %v7771 = vsel %vm4299, %v7742, 0
  %v7774 = vsel %vm4299, %v7745, 0
  %7776 = vmatpush.msra.mxu0 0.0
  %7777 = vmatpush.msra.mxu0 0.0
  %7778 = vmatpush.msra.mxu0 0.0
  %7779 = vmatpush.msra.mxu0 0.0
  %7780 = vmatpush.msra.mxu0 0.0
  %7781 = vmatpush.msra.mxu0 0.0
  %7782 = vmatpush.msra.mxu0 0.0
  %7783 = vmatpush.msra.mxu0 0.0
  %7784 = vmatpush.msra.mxu0 %v7762
  %7785 = vmatpush.msra.mxu0 %v7760
  %7786 = vmatpush.msra.mxu0 %v7758
  %7787 = vmatpush.msra.mxu0 %v7756
  %7788 = vmatpush.msra.mxu0 %v7754
  %7789 = vmatpush.msra.mxu0 %v7752
  %7790 = vmatpush.msra.mxu0 %v7750
  %7791 = vmatpush.msra.mxu0 %v7748
  %7792 = vmatmul.f32.gmra.mxu0 %v7765
  %v7793 = vpop.f32.mrf.mxu0
  %v7794 = vadd.f32 0.0, %v7793
  %7795 = vmatmul.f32.gmra.mxu0 %v7768
  %v7796 = vpop.f32.mrf.mxu0
  %v7797 = vadd.f32 0.0, %v7796
  %7798 = vmatmul.f32.gmra.mxu0 %v7771
  %v7799 = vpop.f32.mrf.mxu0
  %v7800 = vadd.f32 0.0, %v7799
  %7801 = vmatmul.f32.gmra.mxu0 %v7774
  %v7802 = vpop.f32.mrf.mxu0
  %v7803 = vadd.f32 0.0, %v7802
  %7804 = vdwg.mxu0
  %7805 = vmatpush.msra.mxu0 0.0
  %7806 = vmatpush.msra.mxu0 0.0
  %7807 = vmatpush.msra.mxu0 0.0
  %7808 = vmatpush.msra.mxu0 0.0
  %7809 = vmatpush.msra.mxu0 0.0
  %7810 = vmatpush.msra.mxu0 0.0
  %7811 = vmatpush.msra.mxu0 0.0
  %7812 = vmatpush.msra.mxu0 0.0
  %7813 = vmatpush.msra.mxu0 %v7763
  %7814 = vmatpush.msra.mxu0 %v7761
  %7815 = vmatpush.msra.mxu0 %v7759
  %7816 = vmatpush.msra.mxu0 %v7757
  %7817 = vmatpush.msra.mxu0 %v7755
  %7818 = vmatpush.msra.mxu0 %v7753
  %7819 = vmatpush.msra.mxu0 %v7751
  %7820 = vmatpush.msra.mxu0 %v7749
  %7821 = vmatmul.f32.gmra.mxu0 %v7765
  %v7822 = vpop.f32.mrf.mxu0
  %v7823 = vadd.f32 0.0, %v7822
  %7824 = vmatmul.f32.gmra.mxu0 %v7768
  %v7825 = vpop.f32.mrf.mxu0
  %v7826 = vadd.f32 0.0, %v7825
  %7827 = vmatmul.f32.gmra.mxu0 %v7771
  %v7828 = vpop.f32.mrf.mxu0
  %v7829 = vadd.f32 0.0, %v7828
  %7830 = vmatmul.f32.gmra.mxu0 %v7774
  %v7831 = vpop.f32.mrf.mxu0
  %v7832 = vadd.f32 0.0, %v7831
  %7833 = vdwg.mxu0
  %v7834 = vadd.f32 %v7684, %v7794
  %v7835 = vadd.f32 %v7685, %v7823
  %v7836 = vadd.f32 %v7686, %v7797
  %v7837 = vadd.f32 %v7687, %v7826
  %v7838 = vadd.f32 %v7688, %v7800
  %v7839 = vadd.f32 %v7689, %v7829
  %v7840 = vadd.f32 %v7690, %v7803
  %v7841 = vadd.f32 %v7691, %v7832
  %s7842 = scalar_lea.vmem %s1, 1392
  %v7843 = vld [vmem:[%s7842] sm:$0xff]
  %v7844 = vld [vmem:[%s7842 + $0x8] sm:$0xff]
  %v7846 = vsel %vm142, %v7843, 0
  %v7849 = vsel %vm142, %v7844, 0
  %7851 = vmatpush.msra.mxu0 0.0
  %7852 = vmatpush.msra.mxu0 0.0
  %7853 = vmatpush.msra.mxu0 0.0
  %7854 = vmatpush.msra.mxu0 0.0
  %7855 = vmatpush.msra.mxu0 0.0
  %7856 = vmatpush.msra.mxu0 0.0
  %7857 = vmatpush.msra.mxu0 0.0
  %7858 = vmatpush.msra.mxu0 0.0
  %7859 = vmatpush.msra.mxu0 0.0
  %7860 = vmatpush.msra.mxu0 0.0
  %7861 = vmatpush.msra.mxu0 0.0
  %7862 = vmatpush.msra.mxu0 0.0
  %7863 = vmatpush.msra.mxu0 0.0
  %7864 = vmatpush.msra.mxu0 0.0
  %7865 = vmatpush.msra.mxu0 %v7540
  %7866 = vmatpush.msra.mxu0 %v7539
  %7867 = vmatmul.f32.gmra.mxu0 %v7846
  %v7868 = vpop.f32.mrf.mxu0
  %v7869 = vadd.f32 0.0, %v7868
  %7870 = vmatmul.f32.gmra.mxu0 %v7849
  %v7871 = vpop.f32.mrf.mxu0
  %v7872 = vadd.f32 0.0, %v7871
  %7873 = vdwg.mxu0
  %7874 = vmatpush.msra.mxu0 0.0
  %7875 = vmatpush.msra.mxu0 0.0
  %7876 = vmatpush.msra.mxu0 0.0
  %7877 = vmatpush.msra.mxu0 0.0
  %7878 = vmatpush.msra.mxu0 0.0
  %7879 = vmatpush.msra.mxu0 0.0
  %7880 = vmatpush.msra.mxu0 0.0
  %7881 = vmatpush.msra.mxu0 0.0
  %7882 = vmatpush.msra.mxu0 0.0
  %7883 = vmatpush.msra.mxu0 0.0
  %7884 = vmatpush.msra.mxu0 0.0
  %7885 = vmatpush.msra.mxu0 0.0
  %7886 = vmatpush.msra.mxu0 0.0
  %7887 = vmatpush.msra.mxu0 0.0
  %7888 = vmatpush.msra.mxu0 %v7542
  %7889 = vmatpush.msra.mxu0 %v7541
  %7890 = vmatmul.f32.gmra.mxu0 %v7846
  %v7891 = vpop.f32.mrf.mxu0
  %v7892 = vadd.f32 0.0, %v7891
  %7893 = vmatmul.f32.gmra.mxu0 %v7849
  %v7894 = vpop.f32.mrf.mxu0
  %v7895 = vadd.f32 0.0, %v7894
  %7896 = vdwg.mxu0
  %s7897 = scalar_lea.vmem %s6, 256
  %v7898 = vld [vmem:[%s7897] sm:$0xff]
  %v7899 = vld [vmem:[%s7897 + $0x8] sm:$0xff]
  %v7900 = vld [vmem:[%s7897 + $0x10] sm:$0xff]
  %v7901 = vld [vmem:[%s7897 + $0x18] sm:$0xff]
  %v7902 = vld [vmem:[%s7897 + $0x20] sm:$0xff]
  %v7903 = vld [vmem:[%s7897 + $0x28] sm:$0xff]
  %v7904 = vld [vmem:[%s7897 + $0x30] sm:$0xff]
  %v7905 = vld [vmem:[%s7897 + $0x38] sm:$0xff]
  %v7906 = vld [vmem:[%s7897 + $0x40] sm:$0xff]
  %v7907 = vld [vmem:[%s7897 + $0x48] sm:$0xff]
  %v7908 = vld [vmem:[%s7897 + $0x50] sm:$0xff]
  %v7909 = vld [vmem:[%s7897 + $0x58] sm:$0xff]
  %v7910 = vld [vmem:[%s7897 + $0x60] sm:$0xff]
  %v7911 = vld [vmem:[%s7897 + $0x68] sm:$0xff]
  %v7912 = vld [vmem:[%s7897 + $0x70] sm:$0xff]
  %v7913 = vld [vmem:[%s7897 + $0x78] sm:$0xff]
  %v7915 = vsel %vm4299, %v7869, 0
  %v7918 = vsel %vm4299, %v7872, 0
  %v7921 = vsel %vm4299, %v7892, 0
  %v7924 = vsel %vm4299, %v7895, 0
  %7926 = vmatpush.msra.mxu0 0.0
  %7927 = vmatpush.msra.mxu0 0.0
  %7928 = vmatpush.msra.mxu0 0.0
  %7929 = vmatpush.msra.mxu0 0.0
  %7930 = vmatpush.msra.mxu0 0.0
  %7931 = vmatpush.msra.mxu0 0.0
  %7932 = vmatpush.msra.mxu0 0.0
  %7933 = vmatpush.msra.mxu0 0.0
  %7934 = vmatpush.msra.mxu0 %v7912
  %7935 = vmatpush.msra.mxu0 %v7910
  %7936 = vmatpush.msra.mxu0 %v7908
  %7937 = vmatpush.msra.mxu0 %v7906
  %7938 = vmatpush.msra.mxu0 %v7904
  %7939 = vmatpush.msra.mxu0 %v7902
  %7940 = vmatpush.msra.mxu0 %v7900
  %7941 = vmatpush.msra.mxu0 %v7898
  %7942 = vmatmul.f32.gmra.mxu0 %v7915
  %v7943 = vpop.f32.mrf.mxu0
  %v7944 = vadd.f32 0.0, %v7943
  %7945 = vmatmul.f32.gmra.mxu0 %v7918
  %v7946 = vpop.f32.mrf.mxu0
  %v7947 = vadd.f32 0.0, %v7946
  %7948 = vmatmul.f32.gmra.mxu0 %v7921
  %v7949 = vpop.f32.mrf.mxu0
  %v7950 = vadd.f32 0.0, %v7949
  %7951 = vmatmul.f32.gmra.mxu0 %v7924
  %v7952 = vpop.f32.mrf.mxu0
  %v7953 = vadd.f32 0.0, %v7952
  %7954 = vdwg.mxu0
  %7955 = vmatpush.msra.mxu0 0.0
  %7956 = vmatpush.msra.mxu0 0.0
  %7957 = vmatpush.msra.mxu0 0.0
  %7958 = vmatpush.msra.mxu0 0.0
  %7959 = vmatpush.msra.mxu0 0.0
  %7960 = vmatpush.msra.mxu0 0.0
  %7961 = vmatpush.msra.mxu0 0.0
  %7962 = vmatpush.msra.mxu0 0.0
  %7963 = vmatpush.msra.mxu0 %v7913
  %7964 = vmatpush.msra.mxu0 %v7911
  %7965 = vmatpush.msra.mxu0 %v7909
  %7966 = vmatpush.msra.mxu0 %v7907
  %7967 = vmatpush.msra.mxu0 %v7905
  %7968 = vmatpush.msra.mxu0 %v7903
  %7969 = vmatpush.msra.mxu0 %v7901
  %7970 = vmatpush.msra.mxu0 %v7899
  %7971 = vmatmul.f32.gmra.mxu0 %v7915
  %v7972 = vpop.f32.mrf.mxu0
  %v7973 = vadd.f32 0.0, %v7972
  %7974 = vmatmul.f32.gmra.mxu0 %v7918
  %v7975 = vpop.f32.mrf.mxu0
  %v7976 = vadd.f32 0.0, %v7975
  %7977 = vmatmul.f32.gmra.mxu0 %v7921
  %v7978 = vpop.f32.mrf.mxu0
  %v7979 = vadd.f32 0.0, %v7978
  %7980 = vmatmul.f32.gmra.mxu0 %v7924
  %v7981 = vpop.f32.mrf.mxu0
  %v7982 = vadd.f32 0.0, %v7981
  %7983 = vdwg.mxu0
  %v7984 = vadd.f32 %v7834, %v7944
  %v7985 = vadd.f32 %v7835, %v7973
  %v7986 = vadd.f32 %v7836, %v7947
  %v7987 = vadd.f32 %v7837, %v7976
  %v7988 = vadd.f32 %v7838, %v7950
  %v7989 = vadd.f32 %v7839, %v7979
  %v7990 = vadd.f32 %v7840, %v7953
  %v7991 = vadd.f32 %v7841, %v7982
  %s7992 = scalar_lea.vmem %s1, 1408
  %v7993 = vld [vmem:[%s7992] sm:$0xff]
  %v7994 = vld [vmem:[%s7992 + $0x8] sm:$0xff]
  %v7996 = vsel %vm142, %v7993, 0
  %v7999 = vsel %vm142, %v7994, 0
  %8001 = vmatpush.msra.mxu0 0.0
  %8002 = vmatpush.msra.mxu0 0.0
  %8003 = vmatpush.msra.mxu0 0.0
  %8004 = vmatpush.msra.mxu0 0.0
  %8005 = vmatpush.msra.mxu0 0.0
  %8006 = vmatpush.msra.mxu0 0.0
  %8007 = vmatpush.msra.mxu0 0.0
  %8008 = vmatpush.msra.mxu0 0.0
  %8009 = vmatpush.msra.mxu0 0.0
  %8010 = vmatpush.msra.mxu0 0.0
  %8011 = vmatpush.msra.mxu0 0.0
  %8012 = vmatpush.msra.mxu0 0.0
  %8013 = vmatpush.msra.mxu0 0.0
  %8014 = vmatpush.msra.mxu0 0.0
  %8015 = vmatpush.msra.mxu0 %v7540
  %8016 = vmatpush.msra.mxu0 %v7539
  %8017 = vmatmul.f32.gmra.mxu0 %v7996
  %v8018 = vpop.f32.mrf.mxu0
  %v8019 = vadd.f32 0.0, %v8018
  %8020 = vmatmul.f32.gmra.mxu0 %v7999
  %v8021 = vpop.f32.mrf.mxu0
  %v8022 = vadd.f32 0.0, %v8021
  %8023 = vdwg.mxu0
  %8024 = vmatpush.msra.mxu0 0.0
  %8025 = vmatpush.msra.mxu0 0.0
  %8026 = vmatpush.msra.mxu0 0.0
  %8027 = vmatpush.msra.mxu0 0.0
  %8028 = vmatpush.msra.mxu0 0.0
  %8029 = vmatpush.msra.mxu0 0.0
  %8030 = vmatpush.msra.mxu0 0.0
  %8031 = vmatpush.msra.mxu0 0.0
  %8032 = vmatpush.msra.mxu0 0.0
  %8033 = vmatpush.msra.mxu0 0.0
  %8034 = vmatpush.msra.mxu0 0.0
  %8035 = vmatpush.msra.mxu0 0.0
  %8036 = vmatpush.msra.mxu0 0.0
  %8037 = vmatpush.msra.mxu0 0.0
  %8038 = vmatpush.msra.mxu0 %v7542
  %8039 = vmatpush.msra.mxu0 %v7541
  %8040 = vmatmul.f32.gmra.mxu0 %v7996
  %v8041 = vpop.f32.mrf.mxu0
  %v8042 = vadd.f32 0.0, %v8041
  %8043 = vmatmul.f32.gmra.mxu0 %v7999
  %v8044 = vpop.f32.mrf.mxu0
  %v8045 = vadd.f32 0.0, %v8044
  %8046 = vdwg.mxu0
  %s8047 = scalar_lea.vmem %s6, 384
  %v8048 = vld [vmem:[%s8047] sm:$0xff]
  %v8049 = vld [vmem:[%s8047 + $0x8] sm:$0xff]
  %v8050 = vld [vmem:[%s8047 + $0x10] sm:$0xff]
  %v8051 = vld [vmem:[%s8047 + $0x18] sm:$0xff]
  %v8052 = vld [vmem:[%s8047 + $0x20] sm:$0xff]
  %v8053 = vld [vmem:[%s8047 + $0x28] sm:$0xff]
  %v8054 = vld [vmem:[%s8047 + $0x30] sm:$0xff]
  %v8055 = vld [vmem:[%s8047 + $0x38] sm:$0xff]
  %v8056 = vld [vmem:[%s8047 + $0x40] sm:$0xff]
  %v8057 = vld [vmem:[%s8047 + $0x48] sm:$0xff]
  %v8058 = vld [vmem:[%s8047 + $0x50] sm:$0xff]
  %v8059 = vld [vmem:[%s8047 + $0x58] sm:$0xff]
  %v8060 = vld [vmem:[%s8047 + $0x60] sm:$0xff]
  %v8061 = vld [vmem:[%s8047 + $0x68] sm:$0xff]
  %v8062 = vld [vmem:[%s8047 + $0x70] sm:$0xff]
  %v8063 = vld [vmem:[%s8047 + $0x78] sm:$0xff]
  %v8065 = vsel %vm4299, %v8019, 0
  %v8068 = vsel %vm4299, %v8022, 0
  %v8071 = vsel %vm4299, %v8042, 0
  %v8074 = vsel %vm4299, %v8045, 0
  %8076 = vmatpush.msra.mxu0 0.0
  %8077 = vmatpush.msra.mxu0 0.0
  %8078 = vmatpush.msra.mxu0 0.0
  %8079 = vmatpush.msra.mxu0 0.0
  %8080 = vmatpush.msra.mxu0 0.0
  %8081 = vmatpush.msra.mxu0 0.0
  %8082 = vmatpush.msra.mxu0 0.0
  %8083 = vmatpush.msra.mxu0 0.0
  %8084 = vmatpush.msra.mxu0 %v8062
  %8085 = vmatpush.msra.mxu0 %v8060
  %8086 = vmatpush.msra.mxu0 %v8058
  %8087 = vmatpush.msra.mxu0 %v8056
  %8088 = vmatpush.msra.mxu0 %v8054
  %8089 = vmatpush.msra.mxu0 %v8052
  %8090 = vmatpush.msra.mxu0 %v8050
  %8091 = vmatpush.msra.mxu0 %v8048
  %8092 = vmatmul.f32.gmra.mxu0 %v8065
  %v8093 = vpop.f32.mrf.mxu0
  %v8094 = vadd.f32 0.0, %v8093
  %8095 = vmatmul.f32.gmra.mxu0 %v8068
  %v8096 = vpop.f32.mrf.mxu0
  %v8097 = vadd.f32 0.0, %v8096
  %8098 = vmatmul.f32.gmra.mxu0 %v8071
  %v8099 = vpop.f32.mrf.mxu0
  %v8100 = vadd.f32 0.0, %v8099
  %8101 = vmatmul.f32.gmra.mxu0 %v8074
  %v8102 = vpop.f32.mrf.mxu0
  %v8103 = vadd.f32 0.0, %v8102
  %8104 = vdwg.mxu0
  %8105 = vmatpush.msra.mxu0 0.0
  %8106 = vmatpush.msra.mxu0 0.0
  %8107 = vmatpush.msra.mxu0 0.0
  %8108 = vmatpush.msra.mxu0 0.0
  %8109 = vmatpush.msra.mxu0 0.0
  %8110 = vmatpush.msra.mxu0 0.0
  %8111 = vmatpush.msra.mxu0 0.0
  %8112 = vmatpush.msra.mxu0 0.0
  %8113 = vmatpush.msra.mxu0 %v8063
  %8114 = vmatpush.msra.mxu0 %v8061
  %8115 = vmatpush.msra.mxu0 %v8059
  %8116 = vmatpush.msra.mxu0 %v8057
  %8117 = vmatpush.msra.mxu0 %v8055
  %8118 = vmatpush.msra.mxu0 %v8053
  %8119 = vmatpush.msra.mxu0 %v8051
  %8120 = vmatpush.msra.mxu0 %v8049
  %8121 = vmatmul.f32.gmra.mxu0 %v8065
  %v8122 = vpop.f32.mrf.mxu0
  %v8123 = vadd.f32 0.0, %v8122
  %8124 = vmatmul.f32.gmra.mxu0 %v8068
  %v8125 = vpop.f32.mrf.mxu0
  %v8126 = vadd.f32 0.0, %v8125
  %8127 = vmatmul.f32.gmra.mxu0 %v8071
  %v8128 = vpop.f32.mrf.mxu0
  %v8129 = vadd.f32 0.0, %v8128
  %8130 = vmatmul.f32.gmra.mxu0 %v8074
  %v8131 = vpop.f32.mrf.mxu0
  %v8132 = vadd.f32 0.0, %v8131
  %8133 = vdwg.mxu0
  %v8134 = vadd.f32 %v7984, %v8094
  %v8135 = vadd.f32 %v7985, %v8123
  %v8136 = vadd.f32 %v7986, %v8097
  %v8137 = vadd.f32 %v7987, %v8126
  %v8138 = vadd.f32 %v7988, %v8100
  %v8139 = vadd.f32 %v7989, %v8129
  %v8140 = vadd.f32 %v7990, %v8103
  %v8141 = vadd.f32 %v7991, %v8132
  %s8142 = scalar_lea.vmem %s2, 144
  %v8143 = vld [vmem:[%s8142] sm:$0xff]
  %v8144 = vld [vmem:[%s8142 + $0x8] sm:$0xff]
  %8146 = vset.pattern.permute.xlu0 0
  %8147 = vperm.xlu0 %8146, %v8143
  %v8148 = vpop.permute.xlu0 %8147
  %8151 = vset.pattern.permute.xlu0 0
  %8152 = vperm.xlu0 %8151, %v8144
  %v8153 = vpop.permute.xlu0 %8152
  %v8155 = vadd.f32 %v8134, %v8148
  %v8156 = vadd.f32 %v8135, %v8148
  %v8157 = vadd.f32 %v8136, %v8153
  %v8158 = vadd.f32 %v8137, %v8153
  %v8159 = vadd.f32 %v8138, %v8148
  %v8160 = vadd.f32 %v8139, %v8148
  %v8161 = vadd.f32 %v8140, %v8153
  %v8162 = vadd.f32 %v8141, %v8153
  %8171 = vrot.lane.b32.xlu0 %v8155, 17
  %v8172 = vpop.permute.xlu0 %8171
  %8173 = vrot.lane.b32.xlu0 %v8156, 17
  %v8174 = vpop.permute.xlu0 %8173
  %8175 = vrot.lane.b32.xlu0 %v8157, 17
  %v8176 = vpop.permute.xlu0 %8175
  %8177 = vrot.lane.b32.xlu0 %v8158, 17
  %v8178 = vpop.permute.xlu0 %8177
  %8179 = vrot.lane.b32.xlu0 %v8159, 17
  %v8180 = vpop.permute.xlu0 %8179
  %8181 = vrot.lane.b32.xlu0 %v8160, 17
  %v8182 = vpop.permute.xlu0 %8181
  %8183 = vrot.lane.b32.xlu0 %v8161, 17
  %v8184 = vpop.permute.xlu0 %8183
  %8185 = vrot.lane.b32.xlu0 %v8162, 17
  %v8186 = vpop.permute.xlu0 %8185
  %v8187 = vsel %vm86, %v8172, %v8174
  %v8188 = vsel %vm86, %v8176, %v8178
  %v8189 = vsel %vm86, %v8180, %v8182
  %v8190 = vsel %vm86, %v8184, %v8186
  %v8203 = vsel %vm86, 0.0, %v8172
  %v8204 = vsel %vm86, 0.0, %v8176
  %v8205 = vsel %vm86, 0.0, %v8180
  %v8206 = vsel %vm86, 0.0, %v8184
  %v8207 = vsel %vm86, %v8174, 0.0
  %v8208 = vsel %vm86, %v8178, 0.0
  %v8209 = vsel %vm86, %v8182, 0.0
  %v8210 = vsel %vm86, %v8186, 0.0
  %v8211 = vsel %vm104, %v8203, 0.0
  %v8212 = vsel %vm105, %v8187, 0.0
  %v8213 = vsel %vm104, %v8204, 0.0
  %v8214 = vsel %vm105, %v8188, 0.0
  %v8215 = vsel %vm104, %v8205, 0.0
  %v8216 = vsel %vm105, %v8189, 0.0
  %v8217 = vsel %vm104, %v8206, 0.0
  %v8218 = vsel %vm105, %v8190, 0.0
  %s8219 = scalar_lea.vmem %s1, 1152
  %v8220 = vld [vmem:[%s8219] sm:$0xff]
  %v8221 = vld [vmem:[%s8219 + $0x8] sm:$0xff]
  %s8222 = scalar_lea.vmem %s1, 1168
  %v8223 = vld [vmem:[%s8222] sm:$0xff]
  %v8224 = vld [vmem:[%s8222 + $0x8] sm:$0xff]
  %8229 = vrot.lane.b32.xlu0 %v8203, 127
  %v8230 = vpop.permute.xlu0 %8229
  %8231 = vrot.lane.b32.xlu0 %v8187, 127
  %v8232 = vpop.permute.xlu0 %8231
  %8233 = vrot.lane.b32.xlu0 %v8207, 127
  %v8234 = vpop.permute.xlu0 %8233
  %8235 = vrot.lane.b32.xlu0 %v8204, 127
  %v8236 = vpop.permute.xlu0 %8235
  %8237 = vrot.lane.b32.xlu0 %v8188, 127
  %v8238 = vpop.permute.xlu0 %8237
  %8239 = vrot.lane.b32.xlu0 %v8208, 127
  %v8240 = vpop.permute.xlu0 %8239
  %v8241 = vsel %vm133, %v8230, %v8232
  %v8242 = vsel %vm133, %v8232, %v8234
  %v8243 = vsel %vm133, %v8236, %v8238
  %v8244 = vsel %vm133, %v8238, %v8240
  %v8250 = vsel %vm142, %v8223, 0
  %v8253 = vsel %vm142, %v8224, 0
  %8255 = vmatpush.msra.mxu0 0.0
  %8256 = vmatpush.msra.mxu0 0.0
  %8257 = vmatpush.msra.mxu0 0.0
  %8258 = vmatpush.msra.mxu0 0.0
  %8259 = vmatpush.msra.mxu0 0.0
  %8260 = vmatpush.msra.mxu0 0.0
  %8261 = vmatpush.msra.mxu0 0.0
  %8262 = vmatpush.msra.mxu0 0.0
  %8263 = vmatpush.msra.mxu0 0.0
  %8264 = vmatpush.msra.mxu0 0.0
  %8265 = vmatpush.msra.mxu0 0.0
  %8266 = vmatpush.msra.mxu0 0.0
  %8267 = vmatpush.msra.mxu0 0.0
  %8268 = vmatpush.msra.mxu0 0.0
  %8269 = vmatpush.msra.mxu0 %v8243
  %8270 = vmatpush.msra.mxu0 %v8241
  %8271 = vmatmul.f32.gmra.mxu0 %v8250
  %v8272 = vpop.f32.mrf.mxu0
  %v8273 = vadd.f32 0.0, %v8272
  %8274 = vmatmul.f32.gmra.mxu0 %v8253
  %v8275 = vpop.f32.mrf.mxu0
  %8276 = vdwg.mxu0
  %8277 = vmatpush.msra.mxu0 0.0
  %8278 = vmatpush.msra.mxu0 0.0
  %8279 = vmatpush.msra.mxu0 0.0
  %8280 = vmatpush.msra.mxu0 0.0
  %8281 = vmatpush.msra.mxu0 0.0
  %8282 = vmatpush.msra.mxu0 0.0
  %8283 = vmatpush.msra.mxu0 0.0
  %8284 = vmatpush.msra.mxu0 0.0
  %8285 = vmatpush.msra.mxu0 0.0
  %8286 = vmatpush.msra.mxu0 0.0
  %8287 = vmatpush.msra.mxu0 0.0
  %8288 = vmatpush.msra.mxu0 0.0
  %8289 = vmatpush.msra.mxu0 0.0
  %8290 = vmatpush.msra.mxu0 0.0
  %8291 = vmatpush.msra.mxu0 %v8244
  %8292 = vmatpush.msra.mxu0 %v8242
  %8293 = vmatmul.f32.gmra.mxu0 %v8250
  %v8294 = vpop.f32.mrf.mxu0
  %v8295 = vadd.f32 0.0, %v8294
  %8296 = vmatmul.f32.gmra.mxu0 %v8253
  %v8297 = vpop.f32.mrf.mxu0
  %8298 = vdwg.mxu0
  %8303 = vrot.lane.b32.xlu0 %v8205, 127
  %v8304 = vpop.permute.xlu0 %8303
  %8305 = vrot.lane.b32.xlu0 %v8189, 127
  %v8306 = vpop.permute.xlu0 %8305
  %8307 = vrot.lane.b32.xlu0 %v8209, 127
  %v8308 = vpop.permute.xlu0 %8307
  %8309 = vrot.lane.b32.xlu0 %v8206, 127
  %v8310 = vpop.permute.xlu0 %8309
  %8311 = vrot.lane.b32.xlu0 %v8190, 127
  %v8312 = vpop.permute.xlu0 %8311
  %8313 = vrot.lane.b32.xlu0 %v8210, 127
  %v8314 = vpop.permute.xlu0 %8313
  %v8315 = vsel %vm133, %v8304, %v8306
  %v8316 = vsel %vm133, %v8306, %v8308
  %v8317 = vsel %vm133, %v8310, %v8312
  %v8318 = vsel %vm133, %v8312, %v8314
  %8323 = vmatpush.msra.mxu0 0.0
  %8324 = vmatpush.msra.mxu0 0.0
  %8325 = vmatpush.msra.mxu0 0.0
  %8326 = vmatpush.msra.mxu0 0.0
  %8327 = vmatpush.msra.mxu0 0.0
  %8328 = vmatpush.msra.mxu0 0.0
  %8329 = vmatpush.msra.mxu0 0.0
  %8330 = vmatpush.msra.mxu0 0.0
  %8331 = vmatpush.msra.mxu0 0.0
  %8332 = vmatpush.msra.mxu0 0.0
  %8333 = vmatpush.msra.mxu0 0.0
  %8334 = vmatpush.msra.mxu0 0.0
  %8335 = vmatpush.msra.mxu0 0.0
  %8336 = vmatpush.msra.mxu0 0.0
  %8337 = vmatpush.msra.mxu0 %v8317
  %8338 = vmatpush.msra.mxu0 %v8315
  %8339 = vmatmul.f32.gmra.mxu0 %v8250
  %v8340 = vpop.f32.mrf.mxu0
  %v8341 = vadd.f32 0.0, %v8340
  %8342 = vmatmul.f32.gmra.mxu0 %v8253
  %v8343 = vpop.f32.mrf.mxu0
  %8344 = vdwg.mxu0
  %8345 = vmatpush.msra.mxu0 0.0
  %8346 = vmatpush.msra.mxu0 0.0
  %8347 = vmatpush.msra.mxu0 0.0
  %8348 = vmatpush.msra.mxu0 0.0
  %8349 = vmatpush.msra.mxu0 0.0
  %8350 = vmatpush.msra.mxu0 0.0
  %8351 = vmatpush.msra.mxu0 0.0
  %8352 = vmatpush.msra.mxu0 0.0
  %8353 = vmatpush.msra.mxu0 0.0
  %8354 = vmatpush.msra.mxu0 0.0
  %8355 = vmatpush.msra.mxu0 0.0
  %8356 = vmatpush.msra.mxu0 0.0
  %8357 = vmatpush.msra.mxu0 0.0
  %8358 = vmatpush.msra.mxu0 0.0
  %8359 = vmatpush.msra.mxu0 %v8318
  %8360 = vmatpush.msra.mxu0 %v8316
  %8361 = vmatmul.f32.gmra.mxu0 %v8250
  %v8362 = vpop.f32.mrf.mxu0
  %v8363 = vadd.f32 0.0, %v8362
  %8364 = vmatmul.f32.gmra.mxu0 %v8253
  %v8365 = vpop.f32.mrf.mxu0
  %8366 = vdwg.mxu0
  %v8368 = vsel %vm142, %v8220, 0
  %v8371 = vsel %vm142, %v8221, 0
  %8373 = vmatpush.msra.mxu0 0.0
  %8374 = vmatpush.msra.mxu0 0.0
  %8375 = vmatpush.msra.mxu0 0.0
  %8376 = vmatpush.msra.mxu0 0.0
  %8377 = vmatpush.msra.mxu0 0.0
  %8378 = vmatpush.msra.mxu0 0.0
  %8379 = vmatpush.msra.mxu0 0.0
  %8380 = vmatpush.msra.mxu0 0.0
  %8381 = vmatpush.msra.mxu0 0.0
  %8382 = vmatpush.msra.mxu0 0.0
  %8383 = vmatpush.msra.mxu0 0.0
  %8384 = vmatpush.msra.mxu0 0.0
  %8385 = vmatpush.msra.mxu0 0.0
  %8386 = vmatpush.msra.mxu0 0.0
  %8387 = vmatpush.msra.mxu0 %v8213
  %8388 = vmatpush.msra.mxu0 %v8211
  %8389 = vmatmul.f32.gmra.mxu0 %v8368
  %v8390 = vpop.f32.mrf.mxu0
  %v8391 = vadd.f32 %v8273, %v8390
  %8392 = vmatmul.f32.gmra.mxu0 %v8371
  %v8393 = vpop.f32.mrf.mxu0
  %8394 = vdwg.mxu0
  %8395 = vmatpush.msra.mxu0 0.0
  %8396 = vmatpush.msra.mxu0 0.0
  %8397 = vmatpush.msra.mxu0 0.0
  %8398 = vmatpush.msra.mxu0 0.0
  %8399 = vmatpush.msra.mxu0 0.0
  %8400 = vmatpush.msra.mxu0 0.0
  %8401 = vmatpush.msra.mxu0 0.0
  %8402 = vmatpush.msra.mxu0 0.0
  %8403 = vmatpush.msra.mxu0 0.0
  %8404 = vmatpush.msra.mxu0 0.0
  %8405 = vmatpush.msra.mxu0 0.0
  %8406 = vmatpush.msra.mxu0 0.0
  %8407 = vmatpush.msra.mxu0 0.0
  %8408 = vmatpush.msra.mxu0 0.0
  %8409 = vmatpush.msra.mxu0 %v8214
  %8410 = vmatpush.msra.mxu0 %v8212
  %8411 = vmatmul.f32.gmra.mxu0 %v8368
  %v8412 = vpop.f32.mrf.mxu0
  %v8413 = vadd.f32 %v8295, %v8412
  %8414 = vmatmul.f32.gmra.mxu0 %v8371
  %v8415 = vpop.f32.mrf.mxu0
  %8416 = vdwg.mxu0
  %8417 = vmatpush.msra.mxu0 0.0
  %8418 = vmatpush.msra.mxu0 0.0
  %8419 = vmatpush.msra.mxu0 0.0
  %8420 = vmatpush.msra.mxu0 0.0
  %8421 = vmatpush.msra.mxu0 0.0
  %8422 = vmatpush.msra.mxu0 0.0
  %8423 = vmatpush.msra.mxu0 0.0
  %8424 = vmatpush.msra.mxu0 0.0
  %8425 = vmatpush.msra.mxu0 0.0
  %8426 = vmatpush.msra.mxu0 0.0
  %8427 = vmatpush.msra.mxu0 0.0
  %8428 = vmatpush.msra.mxu0 0.0
  %8429 = vmatpush.msra.mxu0 0.0
  %8430 = vmatpush.msra.mxu0 0.0
  %8431 = vmatpush.msra.mxu0 %v8217
  %8432 = vmatpush.msra.mxu0 %v8215
  %8433 = vmatmul.f32.gmra.mxu0 %v8368
  %v8434 = vpop.f32.mrf.mxu0
  %v8435 = vadd.f32 %v8341, %v8434
  %8436 = vmatmul.f32.gmra.mxu0 %v8371
  %v8437 = vpop.f32.mrf.mxu0
  %8438 = vdwg.mxu0
  %8439 = vmatpush.msra.mxu0 0.0
  %8440 = vmatpush.msra.mxu0 0.0
  %8441 = vmatpush.msra.mxu0 0.0
  %8442 = vmatpush.msra.mxu0 0.0
  %8443 = vmatpush.msra.mxu0 0.0
  %8444 = vmatpush.msra.mxu0 0.0
  %8445 = vmatpush.msra.mxu0 0.0
  %8446 = vmatpush.msra.mxu0 0.0
  %8447 = vmatpush.msra.mxu0 0.0
  %8448 = vmatpush.msra.mxu0 0.0
  %8449 = vmatpush.msra.mxu0 0.0
  %8450 = vmatpush.msra.mxu0 0.0
  %8451 = vmatpush.msra.mxu0 0.0
  %8452 = vmatpush.msra.mxu0 0.0
  %8453 = vmatpush.msra.mxu0 %v8218
  %8454 = vmatpush.msra.mxu0 %v8216
  %8455 = vmatmul.f32.gmra.mxu0 %v8368
  %v8456 = vpop.f32.mrf.mxu0
  %v8457 = vadd.f32 %v8363, %v8456
  %8458 = vmatmul.f32.gmra.mxu0 %v8371
  %v8459 = vpop.f32.mrf.mxu0
  %8460 = vdwg.mxu0
  %8461 = vrot.lane.b32.xlu0 %v8203, 126
  %v8462 = vpop.permute.xlu0 %8461
  %8463 = vrot.lane.b32.xlu0 %v8187, 126
  %v8464 = vpop.permute.xlu0 %8463
  %8465 = vrot.lane.b32.xlu0 %v8207, 126
  %v8466 = vpop.permute.xlu0 %8465
  %8467 = vrot.lane.b32.xlu0 %v8204, 126
  %v8468 = vpop.permute.xlu0 %8467
  %8469 = vrot.lane.b32.xlu0 %v8188, 126
  %v8470 = vpop.permute.xlu0 %8469
  %8471 = vrot.lane.b32.xlu0 %v8208, 126
  %v8472 = vpop.permute.xlu0 %8471
  %8473 = vrot.lane.b32.xlu0 %v8205, 126
  %v8474 = vpop.permute.xlu0 %8473
  %8475 = vrot.lane.b32.xlu0 %v8189, 126
  %v8476 = vpop.permute.xlu0 %8475
  %8477 = vrot.lane.b32.xlu0 %v8209, 126
  %v8478 = vpop.permute.xlu0 %8477
  %8479 = vrot.lane.b32.xlu0 %v8206, 126
  %v8480 = vpop.permute.xlu0 %8479
  %8481 = vrot.lane.b32.xlu0 %v8190, 126
  %v8482 = vpop.permute.xlu0 %8481
  %8483 = vrot.lane.b32.xlu0 %v8210, 126
  %v8484 = vpop.permute.xlu0 %8483
  %v8485 = vsel %vm373, %v8462, %v8464
  %v8486 = vsel %vm373, %v8464, %v8466
  %v8487 = vsel %vm373, %v8468, %v8470
  %v8488 = vsel %vm373, %v8470, %v8472
  %v8489 = vsel %vm373, %v8474, %v8476
  %v8490 = vsel %vm373, %v8476, %v8478
  %v8491 = vsel %vm373, %v8480, %v8482
  %v8492 = vsel %vm373, %v8482, %v8484
  %v8501 = vsel %vm353, %v8485, 0.0
  %v8502 = vsel %vm354, %v8486, 0.0
  %v8503 = vsel %vm353, %v8487, 0.0
  %v8504 = vsel %vm354, %v8488, 0.0
  %v8505 = vsel %vm353, %v8489, 0.0
  %v8506 = vsel %vm354, %v8490, 0.0
  %v8507 = vsel %vm353, %v8491, 0.0
  %v8508 = vsel %vm354, %v8492, 0.0
  %s8509 = scalar_lea.vmem %s1, 1184
  %v8510 = vld [vmem:[%s8509] sm:$0xff]
  %v8511 = vld [vmem:[%s8509 + $0x8] sm:$0xff]
  %v8513 = vsel %vm142, %v8510, 0
  %v8516 = vsel %vm142, %v8511, 0
  %8518 = vmatpush.msra.mxu0 0.0
  %8519 = vmatpush.msra.mxu0 0.0
  %8520 = vmatpush.msra.mxu0 0.0
  %8521 = vmatpush.msra.mxu0 0.0
  %8522 = vmatpush.msra.mxu0 0.0
  %8523 = vmatpush.msra.mxu0 0.0
  %8524 = vmatpush.msra.mxu0 0.0
  %8525 = vmatpush.msra.mxu0 0.0
  %8526 = vmatpush.msra.mxu0 0.0
  %8527 = vmatpush.msra.mxu0 0.0
  %8528 = vmatpush.msra.mxu0 0.0
  %8529 = vmatpush.msra.mxu0 0.0
  %8530 = vmatpush.msra.mxu0 0.0
  %8531 = vmatpush.msra.mxu0 0.0
  %8532 = vmatpush.msra.mxu0 %v8503
  %8533 = vmatpush.msra.mxu0 %v8501
  %8534 = vmatmul.f32.gmra.mxu0 %v8513
  %v8535 = vpop.f32.mrf.mxu0
  %v8536 = vadd.f32 0.0, %v8535
  %8537 = vmatmul.f32.gmra.mxu0 %v8516
  %v8538 = vpop.f32.mrf.mxu0
  %8539 = vdwg.mxu0
  %8540 = vmatpush.msra.mxu0 0.0
  %8541 = vmatpush.msra.mxu0 0.0
  %8542 = vmatpush.msra.mxu0 0.0
  %8543 = vmatpush.msra.mxu0 0.0
  %8544 = vmatpush.msra.mxu0 0.0
  %8545 = vmatpush.msra.mxu0 0.0
  %8546 = vmatpush.msra.mxu0 0.0
  %8547 = vmatpush.msra.mxu0 0.0
  %8548 = vmatpush.msra.mxu0 0.0
  %8549 = vmatpush.msra.mxu0 0.0
  %8550 = vmatpush.msra.mxu0 0.0
  %8551 = vmatpush.msra.mxu0 0.0
  %8552 = vmatpush.msra.mxu0 0.0
  %8553 = vmatpush.msra.mxu0 0.0
  %8554 = vmatpush.msra.mxu0 %v8504
  %8555 = vmatpush.msra.mxu0 %v8502
  %8556 = vmatmul.f32.gmra.mxu0 %v8513
  %v8557 = vpop.f32.mrf.mxu0
  %v8558 = vadd.f32 0.0, %v8557
  %8559 = vmatmul.f32.gmra.mxu0 %v8516
  %v8560 = vpop.f32.mrf.mxu0
  %8561 = vdwg.mxu0
  %8562 = vmatpush.msra.mxu0 0.0
  %8563 = vmatpush.msra.mxu0 0.0
  %8564 = vmatpush.msra.mxu0 0.0
  %8565 = vmatpush.msra.mxu0 0.0
  %8566 = vmatpush.msra.mxu0 0.0
  %8567 = vmatpush.msra.mxu0 0.0
  %8568 = vmatpush.msra.mxu0 0.0
  %8569 = vmatpush.msra.mxu0 0.0
  %8570 = vmatpush.msra.mxu0 0.0
  %8571 = vmatpush.msra.mxu0 0.0
  %8572 = vmatpush.msra.mxu0 0.0
  %8573 = vmatpush.msra.mxu0 0.0
  %8574 = vmatpush.msra.mxu0 0.0
  %8575 = vmatpush.msra.mxu0 0.0
  %8576 = vmatpush.msra.mxu0 %v8507
  %8577 = vmatpush.msra.mxu0 %v8505
  %8578 = vmatmul.f32.gmra.mxu0 %v8513
  %v8579 = vpop.f32.mrf.mxu0
  %v8580 = vadd.f32 0.0, %v8579
  %8581 = vmatmul.f32.gmra.mxu0 %v8516
  %v8582 = vpop.f32.mrf.mxu0
  %8583 = vdwg.mxu0
  %8584 = vmatpush.msra.mxu0 0.0
  %8585 = vmatpush.msra.mxu0 0.0
  %8586 = vmatpush.msra.mxu0 0.0
  %8587 = vmatpush.msra.mxu0 0.0
  %8588 = vmatpush.msra.mxu0 0.0
  %8589 = vmatpush.msra.mxu0 0.0
  %8590 = vmatpush.msra.mxu0 0.0
  %8591 = vmatpush.msra.mxu0 0.0
  %8592 = vmatpush.msra.mxu0 0.0
  %8593 = vmatpush.msra.mxu0 0.0
  %8594 = vmatpush.msra.mxu0 0.0
  %8595 = vmatpush.msra.mxu0 0.0
  %8596 = vmatpush.msra.mxu0 0.0
  %8597 = vmatpush.msra.mxu0 0.0
  %8598 = vmatpush.msra.mxu0 %v8508
  %8599 = vmatpush.msra.mxu0 %v8506
  %8600 = vmatmul.f32.gmra.mxu0 %v8513
  %v8601 = vpop.f32.mrf.mxu0
  %v8602 = vadd.f32 0.0, %v8601
  %8603 = vmatmul.f32.gmra.mxu0 %v8516
  %v8604 = vpop.f32.mrf.mxu0
  %8605 = vdwg.mxu0
  %v8606 = vadd.f32 %v8391, %v8536
  %v8607 = vadd.f32 %v8413, %v8558
  %v8608 = vadd.f32 %v8435, %v8580
  %v8609 = vadd.f32 %v8457, %v8602
  %8610 = vrot.lane.b32.xlu0 %v8203, 112
  %v8611 = vpop.permute.xlu0 %8610
  %8612 = vrot.lane.b32.xlu0 %v8187, 112
  %v8613 = vpop.permute.xlu0 %8612
  %8614 = vrot.lane.b32.xlu0 %v8207, 112
  %v8615 = vpop.permute.xlu0 %8614
  %8616 = vrot.lane.b32.xlu0 %v8204, 112
  %v8617 = vpop.permute.xlu0 %8616
  %8618 = vrot.lane.b32.xlu0 %v8188, 112
  %v8619 = vpop.permute.xlu0 %8618
  %8620 = vrot.lane.b32.xlu0 %v8208, 112
  %v8621 = vpop.permute.xlu0 %8620
  %8622 = vrot.lane.b32.xlu0 %v8205, 112
  %v8623 = vpop.permute.xlu0 %8622
  %8624 = vrot.lane.b32.xlu0 %v8189, 112
  %v8625 = vpop.permute.xlu0 %8624
  %8626 = vrot.lane.b32.xlu0 %v8209, 112
  %v8627 = vpop.permute.xlu0 %8626
  %8628 = vrot.lane.b32.xlu0 %v8206, 112
  %v8629 = vpop.permute.xlu0 %8628
  %8630 = vrot.lane.b32.xlu0 %v8190, 112
  %v8631 = vpop.permute.xlu0 %8630
  %8632 = vrot.lane.b32.xlu0 %v8210, 112
  %v8633 = vpop.permute.xlu0 %8632
  %v8634 = vsel %vm519, %v8611, %v8613
  %v8635 = vsel %vm519, %v8613, %v8615
  %v8636 = vsel %vm519, %v8617, %v8619
  %v8637 = vsel %vm519, %v8619, %v8621
  %v8638 = vsel %vm519, %v8623, %v8625
  %v8639 = vsel %vm519, %v8625, %v8627
  %v8640 = vsel %vm519, %v8629, %v8631
  %v8641 = vsel %vm519, %v8631, %v8633
  %v8650 = vsel %vm104, %v8634, 0.0
  %v8651 = vsel %vm105, %v8635, 0.0
  %v8652 = vsel %vm104, %v8636, 0.0
  %v8653 = vsel %vm105, %v8637, 0.0
  %v8654 = vsel %vm104, %v8638, 0.0
  %v8655 = vsel %vm105, %v8639, 0.0
  %v8656 = vsel %vm104, %v8640, 0.0
  %v8657 = vsel %vm105, %v8641, 0.0
  %s8658 = scalar_lea.vmem %s1, 1200
  %v8659 = vld [vmem:[%s8658] sm:$0xff]
  %v8660 = vld [vmem:[%s8658 + $0x8] sm:$0xff]
  %v8662 = vsel %vm142, %v8659, 0
  %v8665 = vsel %vm142, %v8660, 0
  %8667 = vmatpush.msra.mxu0 0.0
  %8668 = vmatpush.msra.mxu0 0.0
  %8669 = vmatpush.msra.mxu0 0.0
  %8670 = vmatpush.msra.mxu0 0.0
  %8671 = vmatpush.msra.mxu0 0.0
  %8672 = vmatpush.msra.mxu0 0.0
  %8673 = vmatpush.msra.mxu0 0.0
  %8674 = vmatpush.msra.mxu0 0.0
  %8675 = vmatpush.msra.mxu0 0.0
  %8676 = vmatpush.msra.mxu0 0.0
  %8677 = vmatpush.msra.mxu0 0.0
  %8678 = vmatpush.msra.mxu0 0.0
  %8679 = vmatpush.msra.mxu0 0.0
  %8680 = vmatpush.msra.mxu0 0.0
  %8681 = vmatpush.msra.mxu0 %v8652
  %8682 = vmatpush.msra.mxu0 %v8650
  %8683 = vmatmul.f32.gmra.mxu0 %v8662
  %v8684 = vpop.f32.mrf.mxu0
  %v8685 = vadd.f32 0.0, %v8684
  %8686 = vmatmul.f32.gmra.mxu0 %v8665
  %v8687 = vpop.f32.mrf.mxu0
  %8688 = vdwg.mxu0
  %8689 = vmatpush.msra.mxu0 0.0
  %8690 = vmatpush.msra.mxu0 0.0
  %8691 = vmatpush.msra.mxu0 0.0
  %8692 = vmatpush.msra.mxu0 0.0
  %8693 = vmatpush.msra.mxu0 0.0
  %8694 = vmatpush.msra.mxu0 0.0
  %8695 = vmatpush.msra.mxu0 0.0
  %8696 = vmatpush.msra.mxu0 0.0
  %8697 = vmatpush.msra.mxu0 0.0
  %8698 = vmatpush.msra.mxu0 0.0
  %8699 = vmatpush.msra.mxu0 0.0
  %8700 = vmatpush.msra.mxu0 0.0
  %8701 = vmatpush.msra.mxu0 0.0
  %8702 = vmatpush.msra.mxu0 0.0
  %8703 = vmatpush.msra.mxu0 %v8653
  %8704 = vmatpush.msra.mxu0 %v8651
  %8705 = vmatmul.f32.gmra.mxu0 %v8662
  %v8706 = vpop.f32.mrf.mxu0
  %v8707 = vadd.f32 0.0, %v8706
  %8708 = vmatmul.f32.gmra.mxu0 %v8665
  %v8709 = vpop.f32.mrf.mxu0
  %8710 = vdwg.mxu0
  %8711 = vmatpush.msra.mxu0 0.0
  %8712 = vmatpush.msra.mxu0 0.0
  %8713 = vmatpush.msra.mxu0 0.0
  %8714 = vmatpush.msra.mxu0 0.0
  %8715 = vmatpush.msra.mxu0 0.0
  %8716 = vmatpush.msra.mxu0 0.0
  %8717 = vmatpush.msra.mxu0 0.0
  %8718 = vmatpush.msra.mxu0 0.0
  %8719 = vmatpush.msra.mxu0 0.0
  %8720 = vmatpush.msra.mxu0 0.0
  %8721 = vmatpush.msra.mxu0 0.0
  %8722 = vmatpush.msra.mxu0 0.0
  %8723 = vmatpush.msra.mxu0 0.0
  %8724 = vmatpush.msra.mxu0 0.0
  %8725 = vmatpush.msra.mxu0 %v8656
  %8726 = vmatpush.msra.mxu0 %v8654
  %8727 = vmatmul.f32.gmra.mxu0 %v8662
  %v8728 = vpop.f32.mrf.mxu0
  %v8729 = vadd.f32 0.0, %v8728
  %8730 = vmatmul.f32.gmra.mxu0 %v8665
  %v8731 = vpop.f32.mrf.mxu0
  %8732 = vdwg.mxu0
  %8733 = vmatpush.msra.mxu0 0.0
  %8734 = vmatpush.msra.mxu0 0.0
  %8735 = vmatpush.msra.mxu0 0.0
  %8736 = vmatpush.msra.mxu0 0.0
  %8737 = vmatpush.msra.mxu0 0.0
  %8738 = vmatpush.msra.mxu0 0.0
  %8739 = vmatpush.msra.mxu0 0.0
  %8740 = vmatpush.msra.mxu0 0.0
  %8741 = vmatpush.msra.mxu0 0.0
  %8742 = vmatpush.msra.mxu0 0.0
  %8743 = vmatpush.msra.mxu0 0.0
  %8744 = vmatpush.msra.mxu0 0.0
  %8745 = vmatpush.msra.mxu0 0.0
  %8746 = vmatpush.msra.mxu0 0.0
  %8747 = vmatpush.msra.mxu0 %v8657
  %8748 = vmatpush.msra.mxu0 %v8655
  %8749 = vmatmul.f32.gmra.mxu0 %v8662
  %v8750 = vpop.f32.mrf.mxu0
  %v8751 = vadd.f32 0.0, %v8750
  %8752 = vmatmul.f32.gmra.mxu0 %v8665
  %v8753 = vpop.f32.mrf.mxu0
  %8754 = vdwg.mxu0
  %v8755 = vadd.f32 %v8606, %v8685
  %v8756 = vadd.f32 %v8607, %v8707
  %v8757 = vadd.f32 %v8608, %v8729
  %v8758 = vadd.f32 %v8609, %v8751
  %s8759 = scalar_lea.vmem %s1, 1216
  %v8760 = vld [vmem:[%s8759] sm:$0xff]
  %v8761 = vld [vmem:[%s8759 + $0x8] sm:$0xff]
  %8762 = vrot.lane.b32.xlu0 %v8203, 111
  %v8763 = vpop.permute.xlu0 %8762
  %8764 = vrot.lane.b32.xlu0 %v8187, 111
  %v8765 = vpop.permute.xlu0 %8764
  %8766 = vrot.lane.b32.xlu0 %v8207, 111
  %v8767 = vpop.permute.xlu0 %8766
  %8768 = vrot.lane.b32.xlu0 %v8204, 111
  %v8769 = vpop.permute.xlu0 %8768
  %8770 = vrot.lane.b32.xlu0 %v8188, 111
  %v8771 = vpop.permute.xlu0 %8770
  %8772 = vrot.lane.b32.xlu0 %v8208, 111
  %v8773 = vpop.permute.xlu0 %8772
  %v8774 = vsel %vm662, %v8763, %v8765
  %v8775 = vsel %vm662, %v8765, %v8767
  %v8776 = vsel %vm662, %v8769, %v8771
  %v8777 = vsel %vm662, %v8771, %v8773
  %v8783 = vsel %vm142, %v8760, 0
  %v8786 = vsel %vm142, %v8761, 0
  %8788 = vmatpush.msra.mxu0 0.0
  %8789 = vmatpush.msra.mxu0 0.0
  %8790 = vmatpush.msra.mxu0 0.0
  %8791 = vmatpush.msra.mxu0 0.0
  %8792 = vmatpush.msra.mxu0 0.0
  %8793 = vmatpush.msra.mxu0 0.0
  %8794 = vmatpush.msra.mxu0 0.0
  %8795 = vmatpush.msra.mxu0 0.0
  %8796 = vmatpush.msra.mxu0 0.0
  %8797 = vmatpush.msra.mxu0 0.0
  %8798 = vmatpush.msra.mxu0 0.0
  %8799 = vmatpush.msra.mxu0 0.0
  %8800 = vmatpush.msra.mxu0 0.0
  %8801 = vmatpush.msra.mxu0 0.0
  %8802 = vmatpush.msra.mxu0 %v8776
  %8803 = vmatpush.msra.mxu0 %v8774
  %8804 = vmatmul.f32.gmra.mxu0 %v8783
  %v8805 = vpop.f32.mrf.mxu0
  %v8806 = vadd.f32 0.0, %v8805
  %8807 = vmatmul.f32.gmra.mxu0 %v8786
  %v8808 = vpop.f32.mrf.mxu0
  %8809 = vdwg.mxu0
  %8810 = vmatpush.msra.mxu0 0.0
  %8811 = vmatpush.msra.mxu0 0.0
  %8812 = vmatpush.msra.mxu0 0.0
  %8813 = vmatpush.msra.mxu0 0.0
  %8814 = vmatpush.msra.mxu0 0.0
  %8815 = vmatpush.msra.mxu0 0.0
  %8816 = vmatpush.msra.mxu0 0.0
  %8817 = vmatpush.msra.mxu0 0.0
  %8818 = vmatpush.msra.mxu0 0.0
  %8819 = vmatpush.msra.mxu0 0.0
  %8820 = vmatpush.msra.mxu0 0.0
  %8821 = vmatpush.msra.mxu0 0.0
  %8822 = vmatpush.msra.mxu0 0.0
  %8823 = vmatpush.msra.mxu0 0.0
  %8824 = vmatpush.msra.mxu0 %v8777
  %8825 = vmatpush.msra.mxu0 %v8775
  %8826 = vmatmul.f32.gmra.mxu0 %v8783
  %v8827 = vpop.f32.mrf.mxu0
  %v8828 = vadd.f32 0.0, %v8827
  %8829 = vmatmul.f32.gmra.mxu0 %v8786
  %v8830 = vpop.f32.mrf.mxu0
  %8831 = vdwg.mxu0
  %8832 = vrot.lane.b32.xlu0 %v8205, 111
  %v8833 = vpop.permute.xlu0 %8832
  %8834 = vrot.lane.b32.xlu0 %v8189, 111
  %v8835 = vpop.permute.xlu0 %8834
  %8836 = vrot.lane.b32.xlu0 %v8209, 111
  %v8837 = vpop.permute.xlu0 %8836
  %8838 = vrot.lane.b32.xlu0 %v8206, 111
  %v8839 = vpop.permute.xlu0 %8838
  %8840 = vrot.lane.b32.xlu0 %v8190, 111
  %v8841 = vpop.permute.xlu0 %8840
  %8842 = vrot.lane.b32.xlu0 %v8210, 111
  %v8843 = vpop.permute.xlu0 %8842
  %v8844 = vsel %vm662, %v8833, %v8835
  %v8845 = vsel %vm662, %v8835, %v8837
  %v8846 = vsel %vm662, %v8839, %v8841
  %v8847 = vsel %vm662, %v8841, %v8843
  %8852 = vmatpush.msra.mxu0 0.0
  %8853 = vmatpush.msra.mxu0 0.0
  %8854 = vmatpush.msra.mxu0 0.0
  %8855 = vmatpush.msra.mxu0 0.0
  %8856 = vmatpush.msra.mxu0 0.0
  %8857 = vmatpush.msra.mxu0 0.0
  %8858 = vmatpush.msra.mxu0 0.0
  %8859 = vmatpush.msra.mxu0 0.0
  %8860 = vmatpush.msra.mxu0 0.0
  %8861 = vmatpush.msra.mxu0 0.0
  %8862 = vmatpush.msra.mxu0 0.0
  %8863 = vmatpush.msra.mxu0 0.0
  %8864 = vmatpush.msra.mxu0 0.0
  %8865 = vmatpush.msra.mxu0 0.0
  %8866 = vmatpush.msra.mxu0 %v8846
  %8867 = vmatpush.msra.mxu0 %v8844
  %8868 = vmatmul.f32.gmra.mxu0 %v8783
  %v8869 = vpop.f32.mrf.mxu0
  %v8870 = vadd.f32 0.0, %v8869
  %8871 = vmatmul.f32.gmra.mxu0 %v8786
  %v8872 = vpop.f32.mrf.mxu0
  %8873 = vdwg.mxu0
  %8874 = vmatpush.msra.mxu0 0.0
  %8875 = vmatpush.msra.mxu0 0.0
  %8876 = vmatpush.msra.mxu0 0.0
  %8877 = vmatpush.msra.mxu0 0.0
  %8878 = vmatpush.msra.mxu0 0.0
  %8879 = vmatpush.msra.mxu0 0.0
  %8880 = vmatpush.msra.mxu0 0.0
  %8881 = vmatpush.msra.mxu0 0.0
  %8882 = vmatpush.msra.mxu0 0.0
  %8883 = vmatpush.msra.mxu0 0.0
  %8884 = vmatpush.msra.mxu0 0.0
  %8885 = vmatpush.msra.mxu0 0.0
  %8886 = vmatpush.msra.mxu0 0.0
  %8887 = vmatpush.msra.mxu0 0.0
  %8888 = vmatpush.msra.mxu0 %v8847
  %8889 = vmatpush.msra.mxu0 %v8845
  %8890 = vmatmul.f32.gmra.mxu0 %v8783
  %v8891 = vpop.f32.mrf.mxu0
  %v8892 = vadd.f32 0.0, %v8891
  %8893 = vmatmul.f32.gmra.mxu0 %v8786
  %v8894 = vpop.f32.mrf.mxu0
  %8895 = vdwg.mxu0
  %v8896 = vadd.f32 %v8755, %v8806
  %v8897 = vadd.f32 %v8756, %v8828
  %v8898 = vadd.f32 %v8757, %v8870
  %v8899 = vadd.f32 %v8758, %v8892
  %8900 = vrot.lane.b32.xlu0 %v8203, 110
  %v8901 = vpop.permute.xlu0 %8900
  %8902 = vrot.lane.b32.xlu0 %v8187, 110
  %v8903 = vpop.permute.xlu0 %8902
  %8904 = vrot.lane.b32.xlu0 %v8207, 110
  %v8905 = vpop.permute.xlu0 %8904
  %8906 = vrot.lane.b32.xlu0 %v8204, 110
  %v8907 = vpop.permute.xlu0 %8906
  %8908 = vrot.lane.b32.xlu0 %v8188, 110
  %v8909 = vpop.permute.xlu0 %8908
  %8910 = vrot.lane.b32.xlu0 %v8208, 110
  %v8911 = vpop.permute.xlu0 %8910
  %8912 = vrot.lane.b32.xlu0 %v8205, 110
  %v8913 = vpop.permute.xlu0 %8912
  %8914 = vrot.lane.b32.xlu0 %v8189, 110
  %v8915 = vpop.permute.xlu0 %8914
  %8916 = vrot.lane.b32.xlu0 %v8209, 110
  %v8917 = vpop.permute.xlu0 %8916
  %8918 = vrot.lane.b32.xlu0 %v8206, 110
  %v8919 = vpop.permute.xlu0 %8918
  %8920 = vrot.lane.b32.xlu0 %v8190, 110
  %v8921 = vpop.permute.xlu0 %8920
  %8922 = vrot.lane.b32.xlu0 %v8210, 110
  %v8923 = vpop.permute.xlu0 %8922
  %v8924 = vsel %vm805, %v8901, %v8903
  %v8925 = vsel %vm805, %v8903, %v8905
  %v8926 = vsel %vm805, %v8907, %v8909
  %v8927 = vsel %vm805, %v8909, %v8911
  %v8928 = vsel %vm805, %v8913, %v8915
  %v8929 = vsel %vm805, %v8915, %v8917
  %v8930 = vsel %vm805, %v8919, %v8921
  %v8931 = vsel %vm805, %v8921, %v8923
  %v8940 = vsel %vm353, %v8924, 0.0
  %v8941 = vsel %vm354, %v8925, 0.0
  %v8942 = vsel %vm353, %v8926, 0.0
  %v8943 = vsel %vm354, %v8927, 0.0
  %v8944 = vsel %vm353, %v8928, 0.0
  %v8945 = vsel %vm354, %v8929, 0.0
  %v8946 = vsel %vm353, %v8930, 0.0
  %v8947 = vsel %vm354, %v8931, 0.0
  %s8948 = scalar_lea.vmem %s1, 1232
  %v8949 = vld [vmem:[%s8948] sm:$0xff]
  %v8950 = vld [vmem:[%s8948 + $0x8] sm:$0xff]
  %v8952 = vsel %vm142, %v8949, 0
  %v8955 = vsel %vm142, %v8950, 0
  %8957 = vmatpush.msra.mxu0 0.0
  %8958 = vmatpush.msra.mxu0 0.0
  %8959 = vmatpush.msra.mxu0 0.0
  %8960 = vmatpush.msra.mxu0 0.0
  %8961 = vmatpush.msra.mxu0 0.0
  %8962 = vmatpush.msra.mxu0 0.0
  %8963 = vmatpush.msra.mxu0 0.0
  %8964 = vmatpush.msra.mxu0 0.0
  %8965 = vmatpush.msra.mxu0 0.0
  %8966 = vmatpush.msra.mxu0 0.0
  %8967 = vmatpush.msra.mxu0 0.0
  %8968 = vmatpush.msra.mxu0 0.0
  %8969 = vmatpush.msra.mxu0 0.0
  %8970 = vmatpush.msra.mxu0 0.0
  %8971 = vmatpush.msra.mxu0 %v8942
  %8972 = vmatpush.msra.mxu0 %v8940
  %8973 = vmatmul.f32.gmra.mxu0 %v8952
  %v8974 = vpop.f32.mrf.mxu0
  %v8975 = vadd.f32 0.0, %v8974
  %8976 = vmatmul.f32.gmra.mxu0 %v8955
  %v8977 = vpop.f32.mrf.mxu0
  %8978 = vdwg.mxu0
  %8979 = vmatpush.msra.mxu0 0.0
  %8980 = vmatpush.msra.mxu0 0.0
  %8981 = vmatpush.msra.mxu0 0.0
  %8982 = vmatpush.msra.mxu0 0.0
  %8983 = vmatpush.msra.mxu0 0.0
  %8984 = vmatpush.msra.mxu0 0.0
  %8985 = vmatpush.msra.mxu0 0.0
  %8986 = vmatpush.msra.mxu0 0.0
  %8987 = vmatpush.msra.mxu0 0.0
  %8988 = vmatpush.msra.mxu0 0.0
  %8989 = vmatpush.msra.mxu0 0.0
  %8990 = vmatpush.msra.mxu0 0.0
  %8991 = vmatpush.msra.mxu0 0.0
  %8992 = vmatpush.msra.mxu0 0.0
  %8993 = vmatpush.msra.mxu0 %v8943
  %8994 = vmatpush.msra.mxu0 %v8941
  %8995 = vmatmul.f32.gmra.mxu0 %v8952
  %v8996 = vpop.f32.mrf.mxu0
  %v8997 = vadd.f32 0.0, %v8996
  %8998 = vmatmul.f32.gmra.mxu0 %v8955
  %v8999 = vpop.f32.mrf.mxu0
  %9000 = vdwg.mxu0
  %9001 = vmatpush.msra.mxu0 0.0
  %9002 = vmatpush.msra.mxu0 0.0
  %9003 = vmatpush.msra.mxu0 0.0
  %9004 = vmatpush.msra.mxu0 0.0
  %9005 = vmatpush.msra.mxu0 0.0
  %9006 = vmatpush.msra.mxu0 0.0
  %9007 = vmatpush.msra.mxu0 0.0
  %9008 = vmatpush.msra.mxu0 0.0
  %9009 = vmatpush.msra.mxu0 0.0
  %9010 = vmatpush.msra.mxu0 0.0
  %9011 = vmatpush.msra.mxu0 0.0
  %9012 = vmatpush.msra.mxu0 0.0
  %9013 = vmatpush.msra.mxu0 0.0
  %9014 = vmatpush.msra.mxu0 0.0
  %9015 = vmatpush.msra.mxu0 %v8946
  %9016 = vmatpush.msra.mxu0 %v8944
  %9017 = vmatmul.f32.gmra.mxu0 %v8952
  %v9018 = vpop.f32.mrf.mxu0
  %v9019 = vadd.f32 0.0, %v9018
  %9020 = vmatmul.f32.gmra.mxu0 %v8955
  %v9021 = vpop.f32.mrf.mxu0
  %9022 = vdwg.mxu0
  %9023 = vmatpush.msra.mxu0 0.0
  %9024 = vmatpush.msra.mxu0 0.0
  %9025 = vmatpush.msra.mxu0 0.0
  %9026 = vmatpush.msra.mxu0 0.0
  %9027 = vmatpush.msra.mxu0 0.0
  %9028 = vmatpush.msra.mxu0 0.0
  %9029 = vmatpush.msra.mxu0 0.0
  %9030 = vmatpush.msra.mxu0 0.0
  %9031 = vmatpush.msra.mxu0 0.0
  %9032 = vmatpush.msra.mxu0 0.0
  %9033 = vmatpush.msra.mxu0 0.0
  %9034 = vmatpush.msra.mxu0 0.0
  %9035 = vmatpush.msra.mxu0 0.0
  %9036 = vmatpush.msra.mxu0 0.0
  %9037 = vmatpush.msra.mxu0 %v8947
  %9038 = vmatpush.msra.mxu0 %v8945
  %9039 = vmatmul.f32.gmra.mxu0 %v8952
  %v9040 = vpop.f32.mrf.mxu0
  %v9041 = vadd.f32 0.0, %v9040
  %9042 = vmatmul.f32.gmra.mxu0 %v8955
  %v9043 = vpop.f32.mrf.mxu0
  %9044 = vdwg.mxu0
  %v9045 = vadd.f32 %v8896, %v8975
  %v9046 = vadd.f32 %v8897, %v8997
  %v9047 = vadd.f32 %v8898, %v9019
  %v9048 = vadd.f32 %v8899, %v9041
  %9049 = vrot.lane.b32.xlu0 %v8203, 96
  %v9050 = vpop.permute.xlu0 %9049
  %9051 = vrot.lane.b32.xlu0 %v8187, 96
  %v9052 = vpop.permute.xlu0 %9051
  %9053 = vrot.lane.b32.xlu0 %v8207, 96
  %v9054 = vpop.permute.xlu0 %9053
  %9055 = vrot.lane.b32.xlu0 %v8204, 96
  %v9056 = vpop.permute.xlu0 %9055
  %9057 = vrot.lane.b32.xlu0 %v8188, 96
  %v9058 = vpop.permute.xlu0 %9057
  %9059 = vrot.lane.b32.xlu0 %v8208, 96
  %v9060 = vpop.permute.xlu0 %9059
  %9061 = vrot.lane.b32.xlu0 %v8205, 96
  %v9062 = vpop.permute.xlu0 %9061
  %9063 = vrot.lane.b32.xlu0 %v8189, 96
  %v9064 = vpop.permute.xlu0 %9063
  %9065 = vrot.lane.b32.xlu0 %v8209, 96
  %v9066 = vpop.permute.xlu0 %9065
  %9067 = vrot.lane.b32.xlu0 %v8206, 96
  %v9068 = vpop.permute.xlu0 %9067
  %9069 = vrot.lane.b32.xlu0 %v8190, 96
  %v9070 = vpop.permute.xlu0 %9069
  %9071 = vrot.lane.b32.xlu0 %v8210, 96
  %v9072 = vpop.permute.xlu0 %9071
  %v9073 = vsel %vm951, %v9050, %v9052
  %v9074 = vsel %vm951, %v9052, %v9054
  %v9075 = vsel %vm951, %v9056, %v9058
  %v9076 = vsel %vm951, %v9058, %v9060
  %v9077 = vsel %vm951, %v9062, %v9064
  %v9078 = vsel %vm951, %v9064, %v9066
  %v9079 = vsel %vm951, %v9068, %v9070
  %v9080 = vsel %vm951, %v9070, %v9072
  %v9089 = vsel %vm104, %v9073, 0.0
  %v9090 = vsel %vm105, %v9074, 0.0
  %v9091 = vsel %vm104, %v9075, 0.0
  %v9092 = vsel %vm105, %v9076, 0.0
  %v9093 = vsel %vm104, %v9077, 0.0
  %v9094 = vsel %vm105, %v9078, 0.0
  %v9095 = vsel %vm104, %v9079, 0.0
  %v9096 = vsel %vm105, %v9080, 0.0
  %s9097 = scalar_lea.vmem %s1, 1248
  %v9098 = vld [vmem:[%s9097] sm:$0xff]
  %v9099 = vld [vmem:[%s9097 + $0x8] sm:$0xff]
  %v9101 = vsel %vm142, %v9098, 0
  %v9104 = vsel %vm142, %v9099, 0
  %9106 = vmatpush.msra.mxu0 0.0
  %9107 = vmatpush.msra.mxu0 0.0
  %9108 = vmatpush.msra.mxu0 0.0
  %9109 = vmatpush.msra.mxu0 0.0
  %9110 = vmatpush.msra.mxu0 0.0
  %9111 = vmatpush.msra.mxu0 0.0
  %9112 = vmatpush.msra.mxu0 0.0
  %9113 = vmatpush.msra.mxu0 0.0
  %9114 = vmatpush.msra.mxu0 0.0
  %9115 = vmatpush.msra.mxu0 0.0
  %9116 = vmatpush.msra.mxu0 0.0
  %9117 = vmatpush.msra.mxu0 0.0
  %9118 = vmatpush.msra.mxu0 0.0
  %9119 = vmatpush.msra.mxu0 0.0
  %9120 = vmatpush.msra.mxu0 %v9091
  %9121 = vmatpush.msra.mxu0 %v9089
  %9122 = vmatmul.f32.gmra.mxu0 %v9101
  %v9123 = vpop.f32.mrf.mxu0
  %v9124 = vadd.f32 0.0, %v9123
  %9125 = vmatmul.f32.gmra.mxu0 %v9104
  %v9126 = vpop.f32.mrf.mxu0
  %9127 = vdwg.mxu0
  %9128 = vmatpush.msra.mxu0 0.0
  %9129 = vmatpush.msra.mxu0 0.0
  %9130 = vmatpush.msra.mxu0 0.0
  %9131 = vmatpush.msra.mxu0 0.0
  %9132 = vmatpush.msra.mxu0 0.0
  %9133 = vmatpush.msra.mxu0 0.0
  %9134 = vmatpush.msra.mxu0 0.0
  %9135 = vmatpush.msra.mxu0 0.0
  %9136 = vmatpush.msra.mxu0 0.0
  %9137 = vmatpush.msra.mxu0 0.0
  %9138 = vmatpush.msra.mxu0 0.0
  %9139 = vmatpush.msra.mxu0 0.0
  %9140 = vmatpush.msra.mxu0 0.0
  %9141 = vmatpush.msra.mxu0 0.0
  %9142 = vmatpush.msra.mxu0 %v9092
  %9143 = vmatpush.msra.mxu0 %v9090
  %9144 = vmatmul.f32.gmra.mxu0 %v9101
  %v9145 = vpop.f32.mrf.mxu0
  %v9146 = vadd.f32 0.0, %v9145
  %9147 = vmatmul.f32.gmra.mxu0 %v9104
  %v9148 = vpop.f32.mrf.mxu0
  %9149 = vdwg.mxu0
  %9150 = vmatpush.msra.mxu0 0.0
  %9151 = vmatpush.msra.mxu0 0.0
  %9152 = vmatpush.msra.mxu0 0.0
  %9153 = vmatpush.msra.mxu0 0.0
  %9154 = vmatpush.msra.mxu0 0.0
  %9155 = vmatpush.msra.mxu0 0.0
  %9156 = vmatpush.msra.mxu0 0.0
  %9157 = vmatpush.msra.mxu0 0.0
  %9158 = vmatpush.msra.mxu0 0.0
  %9159 = vmatpush.msra.mxu0 0.0
  %9160 = vmatpush.msra.mxu0 0.0
  %9161 = vmatpush.msra.mxu0 0.0
  %9162 = vmatpush.msra.mxu0 0.0
  %9163 = vmatpush.msra.mxu0 0.0
  %9164 = vmatpush.msra.mxu0 %v9095
  %9165 = vmatpush.msra.mxu0 %v9093
  %9166 = vmatmul.f32.gmra.mxu0 %v9101
  %v9167 = vpop.f32.mrf.mxu0
  %v9168 = vadd.f32 0.0, %v9167
  %9169 = vmatmul.f32.gmra.mxu0 %v9104
  %v9170 = vpop.f32.mrf.mxu0
  %9171 = vdwg.mxu0
  %9172 = vmatpush.msra.mxu0 0.0
  %9173 = vmatpush.msra.mxu0 0.0
  %9174 = vmatpush.msra.mxu0 0.0
  %9175 = vmatpush.msra.mxu0 0.0
  %9176 = vmatpush.msra.mxu0 0.0
  %9177 = vmatpush.msra.mxu0 0.0
  %9178 = vmatpush.msra.mxu0 0.0
  %9179 = vmatpush.msra.mxu0 0.0
  %9180 = vmatpush.msra.mxu0 0.0
  %9181 = vmatpush.msra.mxu0 0.0
  %9182 = vmatpush.msra.mxu0 0.0
  %9183 = vmatpush.msra.mxu0 0.0
  %9184 = vmatpush.msra.mxu0 0.0
  %9185 = vmatpush.msra.mxu0 0.0
  %9186 = vmatpush.msra.mxu0 %v9096
  %9187 = vmatpush.msra.mxu0 %v9094
  %9188 = vmatmul.f32.gmra.mxu0 %v9101
  %v9189 = vpop.f32.mrf.mxu0
  %v9190 = vadd.f32 0.0, %v9189
  %9191 = vmatmul.f32.gmra.mxu0 %v9104
  %v9192 = vpop.f32.mrf.mxu0
  %9193 = vdwg.mxu0
  %v9194 = vadd.f32 %v9045, %v9124
  %v9195 = vadd.f32 %v9046, %v9146
  %v9196 = vadd.f32 %v9047, %v9168
  %v9197 = vadd.f32 %v9048, %v9190
  %s9198 = scalar_lea.vmem %s1, 1264
  %v9199 = vld [vmem:[%s9198] sm:$0xff]
  %v9200 = vld [vmem:[%s9198 + $0x8] sm:$0xff]
  %9201 = vrot.lane.b32.xlu0 %v8203, 95
  %v9202 = vpop.permute.xlu0 %9201
  %9203 = vrot.lane.b32.xlu0 %v8187, 95
  %v9204 = vpop.permute.xlu0 %9203
  %9205 = vrot.lane.b32.xlu0 %v8207, 95
  %v9206 = vpop.permute.xlu0 %9205
  %9207 = vrot.lane.b32.xlu0 %v8204, 95
  %v9208 = vpop.permute.xlu0 %9207
  %9209 = vrot.lane.b32.xlu0 %v8188, 95
  %v9210 = vpop.permute.xlu0 %9209
  %9211 = vrot.lane.b32.xlu0 %v8208, 95
  %v9212 = vpop.permute.xlu0 %9211
  %v9213 = vsel %vm1094, %v9202, %v9204
  %v9214 = vsel %vm1094, %v9204, %v9206
  %v9215 = vsel %vm1094, %v9208, %v9210
  %v9216 = vsel %vm1094, %v9210, %v9212
  %v9222 = vsel %vm142, %v9199, 0
  %v9225 = vsel %vm142, %v9200, 0
  %9227 = vmatpush.msra.mxu0 0.0
  %9228 = vmatpush.msra.mxu0 0.0
  %9229 = vmatpush.msra.mxu0 0.0
  %9230 = vmatpush.msra.mxu0 0.0
  %9231 = vmatpush.msra.mxu0 0.0
  %9232 = vmatpush.msra.mxu0 0.0
  %9233 = vmatpush.msra.mxu0 0.0
  %9234 = vmatpush.msra.mxu0 0.0
  %9235 = vmatpush.msra.mxu0 0.0
  %9236 = vmatpush.msra.mxu0 0.0
  %9237 = vmatpush.msra.mxu0 0.0
  %9238 = vmatpush.msra.mxu0 0.0
  %9239 = vmatpush.msra.mxu0 0.0
  %9240 = vmatpush.msra.mxu0 0.0
  %9241 = vmatpush.msra.mxu0 %v9215
  %9242 = vmatpush.msra.mxu0 %v9213
  %9243 = vmatmul.f32.gmra.mxu0 %v9222
  %v9244 = vpop.f32.mrf.mxu0
  %v9245 = vadd.f32 0.0, %v9244
  %9246 = vmatmul.f32.gmra.mxu0 %v9225
  %v9247 = vpop.f32.mrf.mxu0
  %9248 = vdwg.mxu0
  %9249 = vmatpush.msra.mxu0 0.0
  %9250 = vmatpush.msra.mxu0 0.0
  %9251 = vmatpush.msra.mxu0 0.0
  %9252 = vmatpush.msra.mxu0 0.0
  %9253 = vmatpush.msra.mxu0 0.0
  %9254 = vmatpush.msra.mxu0 0.0
  %9255 = vmatpush.msra.mxu0 0.0
  %9256 = vmatpush.msra.mxu0 0.0
  %9257 = vmatpush.msra.mxu0 0.0
  %9258 = vmatpush.msra.mxu0 0.0
  %9259 = vmatpush.msra.mxu0 0.0
  %9260 = vmatpush.msra.mxu0 0.0
  %9261 = vmatpush.msra.mxu0 0.0
  %9262 = vmatpush.msra.mxu0 0.0
  %9263 = vmatpush.msra.mxu0 %v9216
  %9264 = vmatpush.msra.mxu0 %v9214
  %9265 = vmatmul.f32.gmra.mxu0 %v9222
  %v9266 = vpop.f32.mrf.mxu0
  %v9267 = vadd.f32 0.0, %v9266
  %9268 = vmatmul.f32.gmra.mxu0 %v9225
  %v9269 = vpop.f32.mrf.mxu0
  %9270 = vdwg.mxu0
  %9271 = vrot.lane.b32.xlu0 %v8205, 95
  %v9272 = vpop.permute.xlu0 %9271
  %9273 = vrot.lane.b32.xlu0 %v8189, 95
  %v9274 = vpop.permute.xlu0 %9273
  %9275 = vrot.lane.b32.xlu0 %v8209, 95
  %v9276 = vpop.permute.xlu0 %9275
  %9277 = vrot.lane.b32.xlu0 %v8206, 95
  %v9278 = vpop.permute.xlu0 %9277
  %9279 = vrot.lane.b32.xlu0 %v8190, 95
  %v9280 = vpop.permute.xlu0 %9279
  %9281 = vrot.lane.b32.xlu0 %v8210, 95
  %v9282 = vpop.permute.xlu0 %9281
  %v9283 = vsel %vm1094, %v9272, %v9274
  %v9284 = vsel %vm1094, %v9274, %v9276
  %v9285 = vsel %vm1094, %v9278, %v9280
  %v9286 = vsel %vm1094, %v9280, %v9282
  %9291 = vmatpush.msra.mxu0 0.0
  %9292 = vmatpush.msra.mxu0 0.0
  %9293 = vmatpush.msra.mxu0 0.0
  %9294 = vmatpush.msra.mxu0 0.0
  %9295 = vmatpush.msra.mxu0 0.0
  %9296 = vmatpush.msra.mxu0 0.0
  %9297 = vmatpush.msra.mxu0 0.0
  %9298 = vmatpush.msra.mxu0 0.0
  %9299 = vmatpush.msra.mxu0 0.0
  %9300 = vmatpush.msra.mxu0 0.0
  %9301 = vmatpush.msra.mxu0 0.0
  %9302 = vmatpush.msra.mxu0 0.0
  %9303 = vmatpush.msra.mxu0 0.0
  %9304 = vmatpush.msra.mxu0 0.0
  %9305 = vmatpush.msra.mxu0 %v9285
  %9306 = vmatpush.msra.mxu0 %v9283
  %9307 = vmatmul.f32.gmra.mxu0 %v9222
  %v9308 = vpop.f32.mrf.mxu0
  %v9309 = vadd.f32 0.0, %v9308
  %9310 = vmatmul.f32.gmra.mxu0 %v9225
  %v9311 = vpop.f32.mrf.mxu0
  %9312 = vdwg.mxu0
  %9313 = vmatpush.msra.mxu0 0.0
  %9314 = vmatpush.msra.mxu0 0.0
  %9315 = vmatpush.msra.mxu0 0.0
  %9316 = vmatpush.msra.mxu0 0.0
  %9317 = vmatpush.msra.mxu0 0.0
  %9318 = vmatpush.msra.mxu0 0.0
  %9319 = vmatpush.msra.mxu0 0.0
  %9320 = vmatpush.msra.mxu0 0.0
  %9321 = vmatpush.msra.mxu0 0.0
  %9322 = vmatpush.msra.mxu0 0.0
  %9323 = vmatpush.msra.mxu0 0.0
  %9324 = vmatpush.msra.mxu0 0.0
  %9325 = vmatpush.msra.mxu0 0.0
  %9326 = vmatpush.msra.mxu0 0.0
  %9327 = vmatpush.msra.mxu0 %v9286
  %9328 = vmatpush.msra.mxu0 %v9284
  %9329 = vmatmul.f32.gmra.mxu0 %v9222
  %v9330 = vpop.f32.mrf.mxu0
  %v9331 = vadd.f32 0.0, %v9330
  %9332 = vmatmul.f32.gmra.mxu0 %v9225
  %v9333 = vpop.f32.mrf.mxu0
  %9334 = vdwg.mxu0
  %v9335 = vadd.f32 %v9194, %v9245
  %v9336 = vadd.f32 %v9195, %v9267
  %v9337 = vadd.f32 %v9196, %v9309
  %v9338 = vadd.f32 %v9197, %v9331
  %9339 = vrot.lane.b32.xlu0 %v8203, 94
  %v9340 = vpop.permute.xlu0 %9339
  %9341 = vrot.lane.b32.xlu0 %v8187, 94
  %v9342 = vpop.permute.xlu0 %9341
  %9343 = vrot.lane.b32.xlu0 %v8207, 94
  %v9344 = vpop.permute.xlu0 %9343
  %9345 = vrot.lane.b32.xlu0 %v8204, 94
  %v9346 = vpop.permute.xlu0 %9345
  %9347 = vrot.lane.b32.xlu0 %v8188, 94
  %v9348 = vpop.permute.xlu0 %9347
  %9349 = vrot.lane.b32.xlu0 %v8208, 94
  %v9350 = vpop.permute.xlu0 %9349
  %9351 = vrot.lane.b32.xlu0 %v8205, 94
  %v9352 = vpop.permute.xlu0 %9351
  %9353 = vrot.lane.b32.xlu0 %v8189, 94
  %v9354 = vpop.permute.xlu0 %9353
  %9355 = vrot.lane.b32.xlu0 %v8209, 94
  %v9356 = vpop.permute.xlu0 %9355
  %9357 = vrot.lane.b32.xlu0 %v8206, 94
  %v9358 = vpop.permute.xlu0 %9357
  %9359 = vrot.lane.b32.xlu0 %v8190, 94
  %v9360 = vpop.permute.xlu0 %9359
  %9361 = vrot.lane.b32.xlu0 %v8210, 94
  %v9362 = vpop.permute.xlu0 %9361
  %v9363 = vsel %vm1237, %v9340, %v9342
  %v9364 = vsel %vm1237, %v9342, %v9344
  %v9365 = vsel %vm1237, %v9346, %v9348
  %v9366 = vsel %vm1237, %v9348, %v9350
  %v9367 = vsel %vm1237, %v9352, %v9354
  %v9368 = vsel %vm1237, %v9354, %v9356
  %v9369 = vsel %vm1237, %v9358, %v9360
  %v9370 = vsel %vm1237, %v9360, %v9362
  %v9379 = vsel %vm353, %v9363, 0.0
  %v9380 = vsel %vm354, %v9364, 0.0
  %v9381 = vsel %vm353, %v9365, 0.0
  %v9382 = vsel %vm354, %v9366, 0.0
  %v9383 = vsel %vm353, %v9367, 0.0
  %v9384 = vsel %vm354, %v9368, 0.0
  %v9385 = vsel %vm353, %v9369, 0.0
  %v9386 = vsel %vm354, %v9370, 0.0
  %s9387 = scalar_lea.vmem %s1, 1280
  %v9388 = vld [vmem:[%s9387] sm:$0xff]
  %v9389 = vld [vmem:[%s9387 + $0x8] sm:$0xff]
  %v9391 = vsel %vm142, %v9388, 0
  %v9394 = vsel %vm142, %v9389, 0
  %9396 = vmatpush.msra.mxu0 0.0
  %9397 = vmatpush.msra.mxu0 0.0
  %9398 = vmatpush.msra.mxu0 0.0
  %9399 = vmatpush.msra.mxu0 0.0
  %9400 = vmatpush.msra.mxu0 0.0
  %9401 = vmatpush.msra.mxu0 0.0
  %9402 = vmatpush.msra.mxu0 0.0
  %9403 = vmatpush.msra.mxu0 0.0
  %9404 = vmatpush.msra.mxu0 0.0
  %9405 = vmatpush.msra.mxu0 0.0
  %9406 = vmatpush.msra.mxu0 0.0
  %9407 = vmatpush.msra.mxu0 0.0
  %9408 = vmatpush.msra.mxu0 0.0
  %9409 = vmatpush.msra.mxu0 0.0
  %9410 = vmatpush.msra.mxu0 %v9381
  %9411 = vmatpush.msra.mxu0 %v9379
  %9412 = vmatmul.f32.gmra.mxu0 %v9391
  %v9413 = vpop.f32.mrf.mxu0
  %v9414 = vadd.f32 0.0, %v9413
  %9415 = vmatmul.f32.gmra.mxu0 %v9394
  %v9416 = vpop.f32.mrf.mxu0
  %9417 = vdwg.mxu0
  %9418 = vmatpush.msra.mxu0 0.0
  %9419 = vmatpush.msra.mxu0 0.0
  %9420 = vmatpush.msra.mxu0 0.0
  %9421 = vmatpush.msra.mxu0 0.0
  %9422 = vmatpush.msra.mxu0 0.0
  %9423 = vmatpush.msra.mxu0 0.0
  %9424 = vmatpush.msra.mxu0 0.0
  %9425 = vmatpush.msra.mxu0 0.0
  %9426 = vmatpush.msra.mxu0 0.0
  %9427 = vmatpush.msra.mxu0 0.0
  %9428 = vmatpush.msra.mxu0 0.0
  %9429 = vmatpush.msra.mxu0 0.0
  %9430 = vmatpush.msra.mxu0 0.0
  %9431 = vmatpush.msra.mxu0 0.0
  %9432 = vmatpush.msra.mxu0 %v9382
  %9433 = vmatpush.msra.mxu0 %v9380
  %9434 = vmatmul.f32.gmra.mxu0 %v9391
  %v9435 = vpop.f32.mrf.mxu0
  %v9436 = vadd.f32 0.0, %v9435
  %9437 = vmatmul.f32.gmra.mxu0 %v9394
  %v9438 = vpop.f32.mrf.mxu0
  %9439 = vdwg.mxu0
  %9440 = vmatpush.msra.mxu0 0.0
  %9441 = vmatpush.msra.mxu0 0.0
  %9442 = vmatpush.msra.mxu0 0.0
  %9443 = vmatpush.msra.mxu0 0.0
  %9444 = vmatpush.msra.mxu0 0.0
  %9445 = vmatpush.msra.mxu0 0.0
  %9446 = vmatpush.msra.mxu0 0.0
  %9447 = vmatpush.msra.mxu0 0.0
  %9448 = vmatpush.msra.mxu0 0.0
  %9449 = vmatpush.msra.mxu0 0.0
  %9450 = vmatpush.msra.mxu0 0.0
  %9451 = vmatpush.msra.mxu0 0.0
  %9452 = vmatpush.msra.mxu0 0.0
  %9453 = vmatpush.msra.mxu0 0.0
  %9454 = vmatpush.msra.mxu0 %v9385
  %9455 = vmatpush.msra.mxu0 %v9383
  %9456 = vmatmul.f32.gmra.mxu0 %v9391
  %v9457 = vpop.f32.mrf.mxu0
  %v9458 = vadd.f32 0.0, %v9457
  %9459 = vmatmul.f32.gmra.mxu0 %v9394
  %v9460 = vpop.f32.mrf.mxu0
  %9461 = vdwg.mxu0
  %9462 = vmatpush.msra.mxu0 0.0
  %9463 = vmatpush.msra.mxu0 0.0
  %9464 = vmatpush.msra.mxu0 0.0
  %9465 = vmatpush.msra.mxu0 0.0
  %9466 = vmatpush.msra.mxu0 0.0
  %9467 = vmatpush.msra.mxu0 0.0
  %9468 = vmatpush.msra.mxu0 0.0
  %9469 = vmatpush.msra.mxu0 0.0
  %9470 = vmatpush.msra.mxu0 0.0
  %9471 = vmatpush.msra.mxu0 0.0
  %9472 = vmatpush.msra.mxu0 0.0
  %9473 = vmatpush.msra.mxu0 0.0
  %9474 = vmatpush.msra.mxu0 0.0
  %9475 = vmatpush.msra.mxu0 0.0
  %9476 = vmatpush.msra.mxu0 %v9386
  %9477 = vmatpush.msra.mxu0 %v9384
  %9478 = vmatmul.f32.gmra.mxu0 %v9391
  %v9479 = vpop.f32.mrf.mxu0
  %v9480 = vadd.f32 0.0, %v9479
  %9481 = vmatmul.f32.gmra.mxu0 %v9394
  %v9482 = vpop.f32.mrf.mxu0
  %9483 = vdwg.mxu0
  %v9484 = vadd.f32 %v9335, %v9414
  %v9485 = vadd.f32 %v9336, %v9436
  %v9486 = vadd.f32 %v9337, %v9458
  %v9487 = vadd.f32 %v9338, %v9480
  %s9488 = scalar_lea.vmem %s2, 160
  %v9489 = vld [vmem:[%s9488] sm:$0xff]
  %9491 = vset.pattern.permute.xlu0 0
  %9492 = vperm.xlu0 %9491, %v9489
  %v9493 = vpop.permute.xlu0 %9492
  %v9495 = vadd.f32 %v9484, %v9493
  %v9496 = vadd.f32 %v9485, %v9493
  %v9497 = vadd.f32 %v9486, %v9493
  %v9498 = vadd.f32 %v9487, %v9493
  %v9503 = vrot.slane %v9496, 6
  %v9504 = vrot.slane %v9498, 6
  %v9505 = vsel %vm50, %v9495, %v9503
  %v9506 = vsel %vm50, %v9497, %v9504
  %vm9507 = vcmask 1044484
  %v9508 = vsel %vm9507, %v9505, %v9505
  %vm9509 = vcmask 1046534
  %v9510 = vsel %vm9509, %v9505, %v9508
  %v9511 = vrot.slane %v9506, 7
  %v9512 = vsel %vm52, %v9511, %v9510
  %v9513 = vsel %vm54, %v9511, %v9512
  %vm9514 = vcmask 1045509
  %v9515 = vsel %vm9514, %v9511, %v9513
  %vm9516 = vcmask 1047559
  %v9517 = vsel %vm9516, %v9511, %v9515
  %9519 = vst [vmem:[%s7] sm:$0xf] %v9517
  // Predicated region
  $region30: #{cae_forward.1} parent=0 // pred_check
    _
  $region31: #{cae_forward.1} parent=0 // pred_check_branch
    %9521 = sbr.rel (0) target = $region33
  $region32: #{cae_forward.1} parent=0 // pred_region
    _
  $region33: #{cae_forward.1} parent=0 // pred_fallthru
    _
  // Predicated region
  $region34: #{cae_forward.1} parent=0 // pred_check
    _
  $region35: #{cae_forward.1} parent=0 // pred_check_branch
    %9523 = sbr.rel (0) target = $region37
  $region36: #{cae_forward.1} parent=0 // pred_region
    _
  $region37: #{cae_forward.1} parent=0 // pred_fallthru
    _

</llo_original>
